<compile_context>
chip_gen: v6e
topology: v6e:2x2x1
jax: 0.10.0
libtpu: 0.0.40
codegen_flags: <defaults>
</compile_context>

<pallas_src>
import numpy as np
import jax
import jax.numpy as jnp
from jax.experimental import pallas as pl
from jax.experimental.pallas import tpu as pltpu

# Full-precision f32 matmuls everywhere (kernel *and* reference) so results match
# to tight tolerance on v5e/v6e/v7x.
jax.config.update("jax_default_matmul_precision", "highest")

# ---------------- model hyper-parameters (synthetic, small) ----------------
L_XYZ = 4                       # xyz positional-encoding octaves -> 3*(1+2*4) = 27
L_DIR = 2                       # dir positional-encoding octaves -> 3*(1+2*2) = 15
EX = 3 * (1 + 2 * L_XYZ)        # 27
ED = 3 * (1 + 2 * L_DIR)        # 15
HID = 64                        # MLP width
HID_DIR = 32                    # dir-branch width
N_STATS = 8                     # packed render stats lanes: [r, g, b, depth, acc, pad, pad, pad]


# ---------------------------------------------------------------------
# small helpers
# ---------------------------------------------------------------------
def _round_up(n, m):
    return ((n + m - 1) // m) * m


def _pick_tile(n, cap):
    return min(cap, _round_up(max(n, 8), 8))


def _pad_rows(x, multiple):
    pad = (-x.shape[0]) % multiple
    if pad == 0:
        return x
    return jnp.concatenate([x, jnp.zeros((pad,) + x.shape[1:], x.dtype)], axis=0)


def positional_embed(x, n_freq):
    # [x, sin(x*2^0), cos(x*2^0), ..., sin(x*2^(L-1)), cos(x*2^(L-1))]
    feats = [x]
    for k in range(n_freq):
        f = jnp.float32(2.0 ** k)
        feats.append(jnp.sin(x * f))
        feats.append(jnp.cos(x * f))
    return jnp.concatenate(feats, axis=-1)


# =====================================================================
# Kernel 1: NeRF field MLP over a tile of points (full-K matmuls)
# =====================================================================
def field_kernel(xe_ref, de_ref,
                 w0_ref, b0_ref, w1_ref, b1_ref,
                 w2x_ref, w2h_ref, b2_ref, w3_ref, b3_ref,
                 wa_ref, ba_ref, wf_ref, bf_ref,
                 wdf_ref, wde_ref, bd_ref, wr_ref, br_ref,
                 sigma_ref, rgb_ref):
    f32 = jnp.float32
    relu = jax.nn.relu

    def dot(a, b):
        return jnp.dot(a, b, preferred_element_type=f32)

    xe = xe_ref[...]          # [P, EX]
    de = de_ref[...]          # [P, ED]

    h = relu(dot(xe, w0_ref[...]) + b0_ref[...])
    h = relu(dot(h, w1_ref[...]) + b1_ref[...])
    # skip connection: concat([xe, h]) @ w2 == xe @ w2[:EX] + h @ w2[EX:]
    h = relu(dot(xe, w2x_ref[...]) + dot(h, w2h_ref[...]) + b2_ref[...])
    h = relu(dot(h, w3_ref[...]) + b3_ref[...])

    sigma_ref[...] = dot(h, wa_ref[...]) + ba_ref[...]          # [P, 1]
    feat = dot(h, wf_ref[...]) + bf_ref[...]                    # [P, HID]
    # dir branch: concat([feat, de]) @ wd == feat @ wd[:HID] + de @ wd[HID:]
    hd = relu(dot(feat, wdf_ref[...]) + dot(de, wde_ref[...]) + bd_ref[...])
    rgb_ref[...] = jax.nn.sigmoid(dot(hd, wr_ref[...]) + br_ref[...])   # [P, 3]


def field_pallas(xe, de, params, tile_cap=1024):
    (w0, b0, w1, b1, w2, b2, w3, b3, wa, ba, wf, bf, wd, bd, wr, br) = params
    # host-side weight splits so the kernel never slices/concats (skip connections
    # become two full-K matmuls)
    w2x, w2h = w2[:EX, :], w2[EX:, :]
    wdf, wde = wd[:HID, :], wd[HID:, :]
    weights = [w0, b0, w1, b1, w2x, w2h, b2, w3, b3,
               wa, ba, wf, bf, wdf, wde, bd, wr, br]

    P = xe.shape[0]
    tile = _pick_tile(P, tile_cap)
    xe_p = _pad_rows(xe, tile)
    de_p = _pad_rows(de, tile)
    P_pad = xe_p.shape[0]
    grid = (P_pad // tile,)

    weight_specs = [pl.BlockSpec(w.shape, lambda i: (0, 0)) for w in weights]
    weight_bytes = int(sum(int(np.prod(w.shape)) * 4 for w in weights))
    flops_pp = 2 * (EX * HID + HID * HID + (EX + HID) * HID + HID * HID
                    + HID + HID * HID + (HID + ED) * HID_DIR + HID_DIR * 3)
    cost = pl.CostEstimate(
        flops=int(P_pad) * flops_pp,
        transcendentals=int(P_pad) * 3,
        bytes_accessed=int(P_pad) * (EX + ED + 1 + 3) * 4 + weight_bytes)

    sigma, rgb = pl.pallas_call(
        field_kernel,
        grid=grid,
        in_specs=[pl.BlockSpec((tile, EX), lambda i: (i, 0)),
                  pl.BlockSpec((tile, ED), lambda i: (i, 0))] + weight_specs,
        out_specs=[pl.BlockSpec((tile, 1), lambda i: (i, 0)),
                   pl.BlockSpec((tile, 3), lambda i: (i, 0))],
        out_shape=[jax.ShapeDtypeStruct((P_pad, 1), jnp.float32),
                   jax.ShapeDtypeStruct((P_pad, 3), jnp.float32)],
        compiler_params=pltpu.CompilerParams(dimension_semantics=("parallel",)),
        cost_estimate=cost,
    )(xe_p, de_p, *weights)
    return sigma[:P], rgb[:P]


# =====================================================================
# Kernel 2: raw2outputs volume rendering over a tile of rays
# (samples on the lane axis; packed [tile, 8] stats output)
# =====================================================================
def render_kernel(sigma_ref, dists_ref, feat_ref, weights_ref, stats_ref):
    f32 = jnp.float32
    sigma = sigma_ref[...]          # [T, S]
    dists = dists_ref[...]          # [T, S]  (already scaled by |rays_dir|)
    feat = feat_ref[...]            # [T, N_STATS, S] = (r, g, b, z, 1, 0, 0, 0)
    T, S = sigma.shape

    # alpha_noise_std == 0 -> no noise
    alpha = 1.0 - jnp.exp(-jax.nn.relu(sigma) * dists)        # [T, S]
    trans = 1.0 - alpha + 1e-10

    # exact exclusive cumprod along samples: unrolled f32 scan (no MXU involved).
    # TODO(synk): for large S (>=64) switch to a log2(S) roll-based scan or a
    # triangular-matrix matmul to avoid O(S) unrolled steps.
    lane = jax.lax.broadcasted_iota(jnp.int32, (T, S), 1)
    running = jnp.ones((T, 1), f32)
    weights = jnp.zeros((T, S), f32)
    for s in range(S):
        w_col = alpha[:, s:s + 1] * running
        weights = jnp.where(lane == s, w_col, weights)
        running = running * trans[:, s:s + 1]

    weights_ref[...] = weights
    # packed reduction: stats[:, c] = sum_s weights[:, s] * feat[:, c, s]
    # -> lanes 0..2 = color, 3 = depth, 4 = acc
    stats_ref[...] = jnp.sum(weights[:, None, :] * feat, axis=-1)


def render_pallas(sigma, dists, feat, tile_cap=256):
    N, S = sigma.shape
    tile = _pick_tile(N, tile_cap)
    sigma_p = _pad_rows(sigma, tile)
    dists_p = _pad_rows(dists, tile)
    feat_p = _pad_rows(feat, tile)
    N_pad = sigma_p.shape[0]
    grid = (N_pad // tile,)

    cost = pl.CostEstimate(
        flops=int(N_pad) * S * (6 + 2 * N_STATS),
        transcendentals=int(N_pad) * S,
        bytes_accessed=int(N_pad) * (S * (3 + N_STATS) + N_STATS) * 4)

    weights, stats = pl.pallas_call(
        render_kernel,
        grid=grid,
        in_specs=[pl.BlockSpec((tile, S), lambda i: (i, 0)),
                  pl.BlockSpec((tile, S), lambda i: (i, 0)),
                  pl.BlockSpec((tile, N_STATS, S), lambda i: (i, 0, 0))],
        out_specs=[pl.BlockSpec((tile, S), lambda i: (i, 0)),
                   pl.BlockSpec((tile, N_STATS), lambda i: (i, 0))],
        out_shape=[jax.ShapeDtypeStruct((N_pad, S), jnp.float32),
                   jax.ShapeDtypeStruct((N_pad, N_STATS), jnp.float32)],
        compiler_params=pltpu.CompilerParams(dimension_semantics=("parallel",)),
        cost_estimate=cost,
    )(sigma_p, dists_p, feat_p)
    return weights[:N], stats[:N]


# =====================================================================
# Wrapper: NeRF.forward (coarse pass) semantics
# =====================================================================
def nerf_forward(rays, render_params, params):
    rays_ori = rays['rays_ori']
    rays_dir = rays['rays_dir']
    rays_color = rays['rays_color']
    n_samples = render_params['n_samples']
    near = render_params.get('near', 0.0)
    far = render_params.get('far', 1.0)
    white_bkgd = render_params.get('white_bkgd', False)
    # TODO(synk): perturb=True (torch.rand stratified jitter), inv_depth z-spacing,
    # alpha_noise_std>0 and n_importance>0 (sample_pdf fine pass) are not implemented;
    # this synthetic config disables them.

    N = rays_ori.shape[0]
    dtype = rays_ori.dtype

    # z_vals: linspace(near, far, S) broadcast over rays (inv_depth=False, perturb=False)
    z_vals = jnp.broadcast_to(jnp.linspace(near, far, n_samples, dtype=dtype),
                              (N, n_samples))
    # use_dirs=True
    viewdirs = rays_dir / jnp.linalg.norm(rays_dir, axis=-1, keepdims=True)

    # points along each ray (glue: trivial broadcast + reshape)
    points = rays_ori[:, None, :] + rays_dir[:, None, :] * z_vals[:, :, None]   # [N, S, 3]
    pts_flat = points.reshape(-1, 3)
    dirs_flat = jnp.broadcast_to(viewdirs[:, None, :], points.shape).reshape(-1, 3)

    # positional embeddings (the module's xyz/dir embedders live outside the field),
    # so the field kernel runs one full-K matmul per layer.
    xe = positional_embed(pts_flat, L_XYZ)      # [N*S, EX]
    de = positional_embed(dirs_flat, L_DIR)     # [N*S, ED]

    # field evaluation (Pallas kernel 1)
    sigma_flat, rgb_flat = field_pallas(xe, de, params)
    sigma = sigma_flat.reshape(N, n_samples)
    rgb = rgb_flat.reshape(N, n_samples, 3)

    # raw2outputs glue: exact forward-difference dists (+1e10 sentinel, scaled by
    # |rays_dir|) and a packed per-sample feature slab [r, g, b, z, 1, 0, 0, 0].
    dists = jnp.concatenate(
        [z_vals[:, 1:] - z_vals[:, :-1],
         jnp.full((N, 1), 1e10, dtype=dtype)], axis=-1)
    dists = dists * jnp.linalg.norm(rays_dir, axis=-1, keepdims=True)
    ones = jnp.ones_like(z_vals)
    zeros = jnp.zeros_like(z_vals)
    feat = jnp.stack([rgb[..., 0], rgb[..., 1], rgb[..., 2],
                      z_vals, ones, zeros, zeros, zeros], axis=1)   # [N, 8, S]

    # raw2outputs (Pallas kernel 2)
    weights, stats = render_pallas(sigma, dists, feat)
    color_map = stats[:, 0:3]
    depth_map = stats[:, 3]
    acc_map = stats[:, 4]
    if white_bkgd:
        color_map = color_map + (1.0 - acc_map[:, None])
    disp_map = 1.0 / jnp.maximum(1e-10, depth_map / jnp.maximum(acc_map, 1e-10))

    coarse = dict(color_map=color_map, depth_map=depth_map, acc_map=acc_map,
                  disp_map=disp_map, weights=weights)
    outputs = {'coarse': coarse, 'fine': None}
    # im2mse
    outputs['coarse_loss'] = jnp.mean((color_map - rays_color) ** 2)
    return outputs


# =====================================================================
# Deterministic parameter init + pure-JAX reference for validation
# =====================================================================
def init_params(key):
    shapes = [(EX, HID), (1, HID),
              (HID, HID), (1, HID),
              (EX + HID, HID), (1, HID),
              (HID, HID), (1, HID),
              (HID, 1), (1, 1),
              (HID, HID), (1, HID),
              (HID + ED, HID_DIR), (1, HID_DIR),
              (HID_DIR, 3), (1, 3)]
    params = []
    for idx, shp in enumerate(shapes):
        key, sub = jax.random.split(key)
        if idx % 2 == 0:  # weight
            params.append(jax.random.normal(sub, shp, jnp.float32) / np.sqrt(shp[0]))
        else:             # bias
            params.append(jnp.zeros(shp, jnp.float32))
    return params


def reference_forward(rays_ori, rays_dir, rays_color, params, n_samples, near=0.0, far=1.0):
    (w0, b0, w1, b1, w2, b2, w3, b3, wa, ba, wf, bf, wd, bd, wr, br) = params
    N = rays_ori.shape[0]
    relu = jax.nn.relu
    z_vals = jnp.broadcast_to(jnp.linspace(near, far, n_samples, dtype=jnp.float32),
                              (N, n_samples))
    viewdirs = rays_dir / jnp.linalg.norm(rays_dir, axis=-1, keepdims=True)
    points = rays_ori[:, None, :] + rays_dir[:, None, :] * z_vals[:, :, None]
    pts = points.reshape(-1, 3)
    dirs = jnp.broadcast_to(viewdirs[:, None, :], points.shape).reshape(-1, 3)
    xe = positional_embed(pts, L_XYZ)
    de = positional_embed(dirs, L_DIR)
    h = relu(xe @ w0 + b0)
    h = relu(h @ w1 + b1)
    h = relu(jnp.concatenate([xe, h], -1) @ w2 + b2)
    h = relu(h @ w3 + b3)
    sigma = (h @ wa + ba).reshape(N, n_samples)
    feat = h @ wf + bf
    hd = relu(jnp.concatenate([feat, de], -1) @ wd + bd)
    rgb = jax.nn.sigmoid(hd @ wr + br).reshape(N, n_samples, 3)
    dists = z_vals[:, 1:] - z_vals[:, :-1]
    dists = jnp.concatenate([dists, jnp.full((N, 1), 1e10, jnp.float32)], -1)
    dists = dists * jnp.linalg.norm(rays_dir, axis=-1, keepdims=True)
    alpha = 1.0 - jnp.exp(-relu(sigma) * dists)
    trans = jnp.cumprod(jnp.concatenate([jnp.ones((N, 1)), 1.0 - alpha + 1e-10], -1), -1)[:, :-1]
    weights = alpha * trans
    color = jnp.sum(weights[..., None] * rgb, axis=-2)
    loss = jnp.mean((color - rays_color) ** 2)
    return color, weights, loss


# =====================================================================
if __name__ == "__main__":
    key = jax.random.PRNGKey(0)
    kp, ko, kd, kc = jax.random.split(key, 4)

    N_RAYS, N_SAMPLES = 16, 8
    params = init_params(kp)
    rays = dict(
        rays_ori=jax.random.normal(ko, (N_RAYS, 3), jnp.float32) * 0.1,
        rays_dir=jax.random.normal(kd, (N_RAYS, 3), jnp.float32),
        rays_color=jax.random.uniform(kc, (N_RAYS, 3), jnp.float32),
    )
    render_params = dict(n_samples=N_SAMPLES, n_importance=0, perturb=False,
                         alpha_noise_std=0.0, inv_depth=False, use_dirs=True,
                         max_rays_num=1024, near=0.0, far=1.0, white_bkgd=False)

    out = nerf_forward(rays, render_params, params)
    jax.block_until_ready(out['coarse']['color_map'])

    # sanity check against a pure-JAX reference
    ref_color, ref_weights, ref_loss = reference_forward(
        rays['rays_ori'], rays['rays_dir'], rays['rays_color'], params, N_SAMPLES)
    assert out['fine'] is None
    assert np.allclose(np.asarray(out['coarse']['color_map']), np.asarray(ref_color),
                       atol=5e-2, rtol=5e-2), "color_map mismatch"
    assert np.allclose(np.asarray(out['coarse']['weights']), np.asarray(ref_weights),
                       atol=5e-2, rtol=5e-2), "weights mismatch"
    assert np.allclose(float(out['coarse_loss']), float(ref_loss), atol=5e-2), "loss mismatch"

    print("KERNEL_OK")
</pallas_src>

<mosaic_0001>
module attributes {stable_mosaic.version = 11 : i64} {
  func.func @field_kernel(%arg0: i32, %arg1: memref<128x27xf32, #tpu.memory_space<vmem>>, %arg2: memref<128x15xf32, #tpu.memory_space<vmem>>, %arg3: memref<27x64xf32, #tpu.memory_space<vmem>>, %arg4: memref<1x64xf32, #tpu.memory_space<vmem>>, %arg5: memref<64x64xf32, #tpu.memory_space<vmem>>, %arg6: memref<1x64xf32, #tpu.memory_space<vmem>>, %arg7: memref<27x64xf32, #tpu.memory_space<vmem>>, %arg8: memref<64x64xf32, #tpu.memory_space<vmem>>, %arg9: memref<1x64xf32, #tpu.memory_space<vmem>>, %arg10: memref<64x64xf32, #tpu.memory_space<vmem>>, %arg11: memref<1x64xf32, #tpu.memory_space<vmem>>, %arg12: memref<64x1xf32, #tpu.memory_space<vmem>>, %arg13: memref<1x1xf32, #tpu.memory_space<vmem>>, %arg14: memref<64x64xf32, #tpu.memory_space<vmem>>, %arg15: memref<1x64xf32, #tpu.memory_space<vmem>>, %arg16: memref<64x32xf32, #tpu.memory_space<vmem>>, %arg17: memref<15x32xf32, #tpu.memory_space<vmem>>, %arg18: memref<1x32xf32, #tpu.memory_space<vmem>>, %arg19: memref<32x3xf32, #tpu.memory_space<vmem>>, %arg20: memref<1x3xf32, #tpu.memory_space<vmem>>, %arg21: memref<128x1xf32, #tpu.memory_space<vmem>>, %arg22: memref<128x3xf32, #tpu.memory_space<vmem>>) attributes {dimension_semantics = [#tpu.dimension_semantics<parallel>], iteration_bounds = array<i64: 1>, scalar_prefetch = 0 : i64, scratch_operands = 0 : i64, tpu.core_type = #tpu.core_type<tc>, window_params = [{transform_indices = @transform_0, window_bounds = array<i64: 128, 27>}, {transform_indices = @transform_1, window_bounds = array<i64: 128, 15>}, {pipeline_mode = #tpu.pipeline_mode<synchronous>, transform_indices = @transform_2, window_bounds = array<i64: 27, 64>}, {pipeline_mode = #tpu.pipeline_mode<synchronous>, transform_indices = @transform_3, window_bounds = array<i64: 1, 64>}, {pipeline_mode = #tpu.pipeline_mode<synchronous>, transform_indices = @transform_4, window_bounds = array<i64: 64, 64>}, {pipeline_mode = #tpu.pipeline_mode<synchronous>, transform_indices = @transform_5, window_bounds = array<i64: 1, 64>}, {pipeline_mode = #tpu.pipeline_mode<synchronous>, transform_indices = @transform_6, window_bounds = array<i64: 27, 64>}, {pipeline_mode = #tpu.pipeline_mode<synchronous>, transform_indices = @transform_7, window_bounds = array<i64: 64, 64>}, {pipeline_mode = #tpu.pipeline_mode<synchronous>, transform_indices = @transform_8, window_bounds = array<i64: 1, 64>}, {pipeline_mode = #tpu.pipeline_mode<synchronous>, transform_indices = @transform_9, window_bounds = array<i64: 64, 64>}, {pipeline_mode = #tpu.pipeline_mode<synchronous>, transform_indices = @transform_10, window_bounds = array<i64: 1, 64>}, {pipeline_mode = #tpu.pipeline_mode<synchronous>, transform_indices = @transform_11, window_bounds = array<i64: 64, 1>}, {pipeline_mode = #tpu.pipeline_mode<synchronous>, transform_indices = @transform_12, window_bounds = array<i64: 1, 1>}, {pipeline_mode = #tpu.pipeline_mode<synchronous>, transform_indices = @transform_13, window_bounds = array<i64: 64, 64>}, {pipeline_mode = #tpu.pipeline_mode<synchronous>, transform_indices = @transform_14, window_bounds = array<i64: 1, 64>}, {pipeline_mode = #tpu.pipeline_mode<synchronous>, transform_indices = @transform_15, window_bounds = array<i64: 64, 32>}, {pipeline_mode = #tpu.pipeline_mode<synchronous>, transform_indices = @transform_16, window_bounds = array<i64: 15, 32>}, {pipeline_mode = #tpu.pipeline_mode<synchronous>, transform_indices = @transform_17, window_bounds = array<i64: 1, 32>}, {pipeline_mode = #tpu.pipeline_mode<synchronous>, transform_indices = @transform_18, window_bounds = array<i64: 32, 3>}, {pipeline_mode = #tpu.pipeline_mode<synchronous>, transform_indices = @transform_19, window_bounds = array<i64: 1, 3>}, {transform_indices = @transform_20, window_bounds = array<i64: 128, 1>}, {transform_indices = @transform_21, window_bounds = array<i64: 128, 3>}]} {
    %c0 = arith.constant 0 : index
    %c0_0 = arith.constant 0 : index
    %0 = vector.load %arg1[%c0, %c0_0] : memref<128x27xf32, #tpu.memory_space<vmem>>, vector<128x27xf32>
    %c0_1 = arith.constant 0 : index
    %c0_2 = arith.constant 0 : index
    %1 = vector.load %arg2[%c0_1, %c0_2] : memref<128x15xf32, #tpu.memory_space<vmem>>, vector<128x15xf32>
    %c0_3 = arith.constant 0 : index
    %c0_4 = arith.constant 0 : index
    %2 = vector.load %arg3[%c0_3, %c0_4] : memref<27x64xf32, #tpu.memory_space<vmem>>, vector<27x64xf32>
    %cst = arith.constant dense<0.000000e+00> : vector<128x64xf32>
    %3 = tpu.matmul %0, %2, %cst {dimension_numbers = #tpu.dot_dimension_numbers<[1], [0], [0], [1], [0, 0, 1, 1], [], []>, precision = #tpu.contract_precision<fp32>} : vector<128x27xf32>, vector<27x64xf32>, vector<128x64xf32> -> vector<128x64xf32>
    %c0_5 = arith.constant 0 : index
    %c0_6 = arith.constant 0 : index
    %4 = vector.load %arg4[%c0_5, %c0_6] : memref<1x64xf32, #tpu.memory_space<vmem>>, vector<1x64xf32>
    %5 = vector.broadcast %4 : vector<1x64xf32> to vector<128x64xf32>
    %6 = arith.addf %3, %5 : vector<128x64xf32>
    %cst_7 = arith.constant 0.000000e+00 : f32
    %7 = vector.broadcast %cst_7 : f32 to vector<128x64xf32>
    %8 = arith.maximumf %6, %7 : vector<128x64xf32>
    %c0_8 = arith.constant 0 : index
    %c0_9 = arith.constant 0 : index
    %9 = vector.load %arg5[%c0_8, %c0_9] : memref<64x64xf32, #tpu.memory_space<vmem>>, vector<64x64xf32>
    %cst_10 = arith.constant dense<0.000000e+00> : vector<128x64xf32>
    %10 = tpu.matmul %8, %9, %cst_10 {dimension_numbers = #tpu.dot_dimension_numbers<[1], [0], [0], [1], [0, 0, 1, 1], [], []>, precision = #tpu.contract_precision<fp32>} : vector<128x64xf32>, vector<64x64xf32>, vector<128x64xf32> -> vector<128x64xf32>
    %c0_11 = arith.constant 0 : index
    %c0_12 = arith.constant 0 : index
    %11 = vector.load %arg6[%c0_11, %c0_12] : memref<1x64xf32, #tpu.memory_space<vmem>>, vector<1x64xf32>
    %12 = vector.broadcast %11 : vector<1x64xf32> to vector<128x64xf32>
    %13 = arith.addf %10, %12 : vector<128x64xf32>
    %cst_13 = arith.constant 0.000000e+00 : f32
    %14 = vector.broadcast %cst_13 : f32 to vector<128x64xf32>
    %15 = arith.maximumf %13, %14 : vector<128x64xf32>
    %c0_14 = arith.constant 0 : index
    %c0_15 = arith.constant 0 : index
    %16 = vector.load %arg7[%c0_14, %c0_15] : memref<27x64xf32, #tpu.memory_space<vmem>>, vector<27x64xf32>
    %cst_16 = arith.constant dense<0.000000e+00> : vector<128x64xf32>
    %17 = tpu.matmul %0, %16, %cst_16 {dimension_numbers = #tpu.dot_dimension_numbers<[1], [0], [0], [1], [0, 0, 1, 1], [], []>, precision = #tpu.contract_precision<fp32>} : vector<128x27xf32>, vector<27x64xf32>, vector<128x64xf32> -> vector<128x64xf32>
    %c0_17 = arith.constant 0 : index
    %c0_18 = arith.constant 0 : index
    %18 = vector.load %arg8[%c0_17, %c0_18] : memref<64x64xf32, #tpu.memory_space<vmem>>, vector<64x64xf32>
    %cst_19 = arith.constant dense<0.000000e+00> : vector<128x64xf32>
    %19 = tpu.matmul %15, %18, %cst_19 {dimension_numbers = #tpu.dot_dimension_numbers<[1], [0], [0], [1], [0, 0, 1, 1], [], []>, precision = #tpu.contract_precision<fp32>} : vector<128x64xf32>, vector<64x64xf32>, vector<128x64xf32> -> vector<128x64xf32>
    %20 = arith.addf %17, %19 : vector<128x64xf32>
    %c0_20 = arith.constant 0 : index
    %c0_21 = arith.constant 0 : index
    %21 = vector.load %arg9[%c0_20, %c0_21] : memref<1x64xf32, #tpu.memory_space<vmem>>, vector<1x64xf32>
    %22 = vector.broadcast %21 : vector<1x64xf32> to vector<128x64xf32>
    %23 = arith.addf %20, %22 : vector<128x64xf32>
    %cst_22 = arith.constant 0.000000e+00 : f32
    %24 = vector.broadcast %cst_22 : f32 to vector<128x64xf32>
    %25 = arith.maximumf %23, %24 : vector<128x64xf32>
    %c0_23 = arith.constant 0 : index
    %c0_24 = arith.constant 0 : index
    %26 = vector.load %arg10[%c0_23, %c0_24] : memref<64x64xf32, #tpu.memory_space<vmem>>, vector<64x64xf32>
    %cst_25 = arith.constant dense<0.000000e+00> : vector<128x64xf32>
    %27 = tpu.matmul %25, %26, %cst_25 {dimension_numbers = #tpu.dot_dimension_numbers<[1], [0], [0], [1], [0, 0, 1, 1], [], []>, precision = #tpu.contract_precision<fp32>} : vector<128x64xf32>, vector<64x64xf32>, vector<128x64xf32> -> vector<128x64xf32>
    %c0_26 = arith.constant 0 : index
    %c0_27 = arith.constant 0 : index
    %28 = vector.load %arg11[%c0_26, %c0_27] : memref<1x64xf32, #tpu.memory_space<vmem>>, vector<1x64xf32>
    %29 = vector.broadcast %28 : vector<1x64xf32> to vector<128x64xf32>
    %30 = arith.addf %27, %29 : vector<128x64xf32>
    %cst_28 = arith.constant 0.000000e+00 : f32
    %31 = vector.broadcast %cst_28 : f32 to vector<128x64xf32>
    %32 = arith.maximumf %30, %31 : vector<128x64xf32>
    %c0_29 = arith.constant 0 : index
    %c0_30 = arith.constant 0 : index
    %33 = vector.load %arg12[%c0_29, %c0_30] : memref<64x1xf32, #tpu.memory_space<vmem>>, vector<64x1xf32>
    %cst_31 = arith.constant dense<0.000000e+00> : vector<128x1xf32>
    %34 = tpu.matmul %32, %33, %cst_31 {dimension_numbers = #tpu.dot_dimension_numbers<[1], [0], [0], [1], [0, 0, 1, 1], [], []>, precision = #tpu.contract_precision<fp32>} : vector<128x64xf32>, vector<64x1xf32>, vector<128x1xf32> -> vector<128x1xf32>
    %c0_32 = arith.constant 0 : index
    %c0_33 = arith.constant 0 : index
    %35 = vector.load %arg13[%c0_32, %c0_33] : memref<1x1xf32, #tpu.memory_space<vmem>>, vector<1x1xf32>
    %36 = vector.broadcast %35 : vector<1x1xf32> to vector<128x1xf32>
    %37 = arith.addf %34, %36 : vector<128x1xf32>
    %c0_34 = arith.constant 0 : index
    %c0_35 = arith.constant 0 : index
    %38 = vector.load %arg21[%c0_34, %c0_35] : memref<128x1xf32, #tpu.memory_space<vmem>>, vector<128x1xf32>
    tpu.vector_store %arg21[%c0_34, %c0_35], %37 {strides = array<i32>} : memref<128x1xf32, #tpu.memory_space<vmem>>, vector<128x1xf32>,
    %c0_36 = arith.constant 0 : index
    %c0_37 = arith.constant 0 : index
    %39 = vector.load %arg14[%c0_36, %c0_37] : memref<64x64xf32, #tpu.memory_space<vmem>>, vector<64x64xf32>
    %cst_38 = arith.constant dense<0.000000e+00> : vector<128x64xf32>
    %40 = tpu.matmul %32, %39, %cst_38 {dimension_numbers = #tpu.dot_dimension_numbers<[1], [0], [0], [1], [0, 0, 1, 1], [], []>, precision = #tpu.contract_precision<fp32>} : vector<128x64xf32>, vector<64x64xf32>, vector<128x64xf32> -> vector<128x64xf32>
    %c0_39 = arith.constant 0 : index
    %c0_40 = arith.constant 0 : index
    %41 = vector.load %arg15[%c0_39, %c0_40] : memref<1x64xf32, #tpu.memory_space<vmem>>, vector<1x64xf32>
    %42 = vector.broadcast %41 : vector<1x64xf32> to vector<128x64xf32>
    %43 = arith.addf %40, %42 : vector<128x64xf32>
    %c0_41 = arith.constant 0 : index
    %c0_42 = arith.constant 0 : index
    %44 = vector.load %arg16[%c0_41, %c0_42] : memref<64x32xf32, #tpu.memory_space<vmem>>, vector<64x32xf32>
    %cst_43 = arith.constant dense<0.000000e+00> : vector<128x32xf32>
    %45 = tpu.matmul %43, %44, %cst_43 {dimension_numbers = #tpu.dot_dimension_numbers<[1], [0], [0], [1], [0, 0, 1, 1], [], []>, precision = #tpu.contract_precision<fp32>} : vector<128x64xf32>, vector<64x32xf32>, vector<128x32xf32> -> vector<128x32xf32>
    %c0_44 = arith.constant 0 : index
    %c0_45 = arith.constant 0 : index
    %46 = vector.load %arg17[%c0_44, %c0_45] : memref<15x32xf32, #tpu.memory_space<vmem>>, vector<15x32xf32>
    %cst_46 = arith.constant dense<0.000000e+00> : vector<128x32xf32>
    %47 = tpu.matmul %1, %46, %cst_46 {dimension_numbers = #tpu.dot_dimension_numbers<[1], [0], [0], [1], [0, 0, 1, 1], [], []>, precision = #tpu.contract_precision<fp32>} : vector<128x15xf32>, vector<15x32xf32>, vector<128x32xf32> -> vector<128x32xf32>
    %48 = arith.addf %45, %47 : vector<128x32xf32>
    %c0_47 = arith.constant 0 : index
    %c0_48 = arith.constant 0 : index
    %49 = vector.load %arg18[%c0_47, %c0_48] : memref<1x32xf32, #tpu.memory_space<vmem>>, vector<1x32xf32>
    %50 = vector.broadcast %49 : vector<1x32xf32> to vector<128x32xf32>
    %51 = arith.addf %48, %50 : vector<128x32xf32>
    %cst_49 = arith.constant 0.000000e+00 : f32
    %52 = vector.broadcast %cst_49 : f32 to vector<128x32xf32>
    %53 = arith.maximumf %51, %52 : vector<128x32xf32>
    %c0_50 = arith.constant 0 : index
    %c0_51 = arith.constant 0 : index
    %54 = vector.load %arg19[%c0_50, %c0_51] : memref<32x3xf32, #tpu.memory_space<vmem>>, vector<32x3xf32>
    %cst_52 = arith.constant dense<0.000000e+00> : vector<128x3xf32>
    %55 = tpu.matmul %53, %54, %cst_52 {dimension_numbers = #tpu.dot_dimension_numbers<[1], [0], [0], [1], [0, 0, 1, 1], [], []>, precision = #tpu.contract_precision<fp32>} : vector<128x32xf32>, vector<32x3xf32>, vector<128x3xf32> -> vector<128x3xf32>
    %c0_53 = arith.constant 0 : index
    %c0_54 = arith.constant 0 : index
    %56 = vector.load %arg20[%c0_53, %c0_54] : memref<1x3xf32, #tpu.memory_space<vmem>>, vector<1x3xf32>
    %57 = vector.broadcast %56 : vector<1x3xf32> to vector<128x3xf32>
    %58 = arith.addf %55, %57 : vector<128x3xf32>
    %59 = arith.negf %58 : vector<128x3xf32>
    %60 = math.exp %59 : vector<128x3xf32>
    %cst_55 = arith.constant 1.000000e+00 : f32
    %61 = vector.broadcast %cst_55 : f32 to vector<128x3xf32>
    %62 = arith.addf %61, %60 : vector<128x3xf32>
    %63 = arith.divf %61, %62 : vector<128x3xf32>
    %c0_56 = arith.constant 0 : index
    %c0_57 = arith.constant 0 : index
    %64 = vector.load %arg22[%c0_56, %c0_57] : memref<128x3xf32, #tpu.memory_space<vmem>>, vector<128x3xf32>
    tpu.vector_store %arg22[%c0_56, %c0_57], %63 {strides = array<i32>} : memref<128x3xf32, #tpu.memory_space<vmem>>, vector<128x3xf32>,
    return
  }
  func.func @transform_0(%arg0: i32) -> (i32, i32) {
    %c0_i32 = arith.constant 0 : i32
    %c0_i32_0 = arith.constant 0 : i32
    return %arg0, %c0_i32 : i32, i32
  }
  func.func @transform_1(%arg0: i32) -> (i32, i32) {
    %c0_i32 = arith.constant 0 : i32
    %c0_i32_0 = arith.constant 0 : i32
    return %arg0, %c0_i32 : i32, i32
  }
  func.func @transform_2(%arg0: i32) -> (i32, i32) {
    %c0_i32 = arith.constant 0 : i32
    %c0_i32_0 = arith.constant 0 : i32
    %c0_i32_1 = arith.constant 0 : i32
    return %c0_i32, %c0_i32_0 : i32, i32
  }
  func.func @transform_3(%arg0: i32) -> (i32, i32) {
    %c0_i32 = arith.constant 0 : i32
    %c0_i32_0 = arith.constant 0 : i32
    %c0_i32_1 = arith.constant 0 : i32
    return %c0_i32, %c0_i32_0 : i32, i32
  }
  func.func @transform_4(%arg0: i32) -> (i32, i32) {
    %c0_i32 = arith.constant 0 : i32
    %c0_i32_0 = arith.constant 0 : i32
    %c0_i32_1 = arith.constant 0 : i32
    return %c0_i32, %c0_i32_0 : i32, i32
  }
  func.func @transform_5(%arg0: i32) -> (i32, i32) {
    %c0_i32 = arith.constant 0 : i32
    %c0_i32_0 = arith.constant 0 : i32
    %c0_i32_1 = arith.constant 0 : i32
    return %c0_i32, %c0_i32_0 : i32, i32
  }
  func.func @transform_6(%arg0: i32) -> (i32, i32) {
    %c0_i32 = arith.constant 0 : i32
    %c0_i32_0 = arith.constant 0 : i32
    %c0_i32_1 = arith.constant 0 : i32
    return %c0_i32, %c0_i32_0 : i32, i32
  }
  func.func @transform_7(%arg0: i32) -> (i32, i32) {
    %c0_i32 = arith.constant 0 : i32
    %c0_i32_0 = arith.constant 0 : i32
    %c0_i32_1 = arith.constant 0 : i32
    return %c0_i32, %c0_i32_0 : i32, i32
  }
  func.func @transform_8(%arg0: i32) -> (i32, i32) {
    %c0_i32 = arith.constant 0 : i32
    %c0_i32_0 = arith.constant 0 : i32
    %c0_i32_1 = arith.constant 0 : i32
    return %c0_i32, %c0_i32_0 : i32, i32
  }
  func.func @transform_9(%arg0: i32) -> (i32, i32) {
    %c0_i32 = arith.constant 0 : i32
    %c0_i32_0 = arith.constant 0 : i32
    %c0_i32_1 = arith.constant 0 : i32
    return %c0_i32, %c0_i32_0 : i32, i32
  }
  func.func @transform_10(%arg0: i32) -> (i32, i32) {
    %c0_i32 = arith.constant 0 : i32
    %c0_i32_0 = arith.constant 0 : i32
    %c0_i32_1 = arith.constant 0 : i32
    return %c0_i32, %c0_i32_0 : i32, i32
  }
  func.func @transform_11(%arg0: i32) -> (i32, i32) {
    %c0_i32 = arith.constant 0 : i32
    %c0_i32_0 = arith.constant 0 : i32
    %c0_i32_1 = arith.constant 0 : i32
    return %c0_i32, %c0_i32_0 : i32, i32
  }
  func.func @transform_12(%arg0: i32) -> (i32, i32) {
    %c0_i32 = arith.constant 0 : i32
    %c0_i32_0 = arith.constant 0 : i32
    %c0_i32_1 = arith.constant 0 : i32
    return %c0_i32, %c0_i32_0 : i32, i32
  }
  func.func @transform_13(%arg0: i32) -> (i32, i32) {
    %c0_i32 = arith.constant 0 : i32
    %c0_i32_0 = arith.constant 0 : i32
    %c0_i32_1 = arith.constant 0 : i32
    return %c0_i32, %c0_i32_0 : i32, i32
  }
  func.func @transform_14(%arg0: i32) -> (i32, i32) {
    %c0_i32 = arith.constant 0 : i32
    %c0_i32_0 = arith.constant 0 : i32
    %c0_i32_1 = arith.constant 0 : i32
    return %c0_i32, %c0_i32_0 : i32, i32
  }
  func.func @transform_15(%arg0: i32) -> (i32, i32) {
    %c0_i32 = arith.constant 0 : i32
    %c0_i32_0 = arith.constant 0 : i32
    %c0_i32_1 = arith.constant 0 : i32
    return %c0_i32, %c0_i32_0 : i32, i32
  }
  func.func @transform_16(%arg0: i32) -> (i32, i32) {
    %c0_i32 = arith.constant 0 : i32
    %c0_i32_0 = arith.constant 0 : i32
    %c0_i32_1 = arith.constant 0 : i32
    return %c0_i32, %c0_i32_0 : i32, i32
  }
  func.func @transform_17(%arg0: i32) -> (i32, i32) {
    %c0_i32 = arith.constant 0 : i32
    %c0_i32_0 = arith.constant 0 : i32
    %c0_i32_1 = arith.constant 0 : i32
    return %c0_i32, %c0_i32_0 : i32, i32
  }
  func.func @transform_18(%arg0: i32) -> (i32, i32) {
    %c0_i32 = arith.constant 0 : i32
    %c0_i32_0 = arith.constant 0 : i32
    %c0_i32_1 = arith.constant 0 : i32
    return %c0_i32, %c0_i32_0 : i32, i32
  }
  func.func @transform_19(%arg0: i32) -> (i32, i32) {
    %c0_i32 = arith.constant 0 : i32
    %c0_i32_0 = arith.constant 0 : i32
    %c0_i32_1 = arith.constant 0 : i32
    return %c0_i32, %c0_i32_0 : i32, i32
  }
  func.func @transform_20(%arg0: i32) -> (i32, i32) {
    %c0_i32 = arith.constant 0 : i32
    %c0_i32_0 = arith.constant 0 : i32
    return %arg0, %c0_i32 : i32, i32
  }
  func.func @transform_21(%arg0: i32) -> (i32, i32) {
    %c0_i32 = arith.constant 0 : i32
    %c0_i32_0 = arith.constant 0 : i32
    return %arg0, %c0_i32 : i32, i32
  }
}

</mosaic_0001>

<llo_original>
// kernel: tpu_custom_call.1
$region0: #{tpu_custom_call.1}
  #allocation0 [shape = 'u32[]', space=smem, size = 0x4, offset = 0x4, fixed_abs, tag = 'smem constant byte address 0x4 - core index']
  #allocation1 [shape = 'u32[144,128]{1,0:T(1,128)}', space=vmem, size = 0x12000, scoped, tag = 'internal scratch']
  #allocation2 [shape = 'f32[1,1]{1,0:T(1,128)S(1)}', space=vmem, size = 0x200, scoped, tag = 'scoped memory for tpu_custom_call.1']
  %s0 = inlined_call_operand.vmem [shape: f32[128,27], index: 0, kind: input, shape index: {}]
  %s1 = inlined_call_operand.vmem [shape: f32[128,15], index: 1, kind: input, shape index: {}]
  %s2 = inlined_call_operand.vmem [shape: f32[27,64], index: 2, kind: input, shape index: {}]
  %s3 = inlined_call_operand.vmem [shape: f32[1,64], index: 3, kind: input, shape index: {}]
  %s4 = inlined_call_operand.vmem [shape: f32[64,64], index: 4, kind: input, shape index: {}]
  %s5 = inlined_call_operand.vmem [shape: f32[1,64], index: 5, kind: input, shape index: {}]
  %s6 = inlined_call_operand.vmem [shape: f32[27,64], index: 6, kind: input, shape index: {}]
  %s7 = inlined_call_operand.vmem [shape: f32[64,64], index: 7, kind: input, shape index: {}]
  %s8 = inlined_call_operand.vmem [shape: f32[1,64], index: 8, kind: input, shape index: {}]
  %s9 = inlined_call_operand.vmem [shape: f32[64,64], index: 9, kind: input, shape index: {}]
  %s10 = inlined_call_operand.vmem [shape: f32[1,64], index: 10, kind: input, shape index: {}]
  %s11 = inlined_call_operand.vmem [shape: f32[64,1], index: 11, kind: input, shape index: {}]
  %s12 = inlined_call_operand.<no memory space> [shape: f32[1,1], index: 12, kind: input, shape index: {}]
  %s13 = inlined_call_operand.vmem [shape: f32[64,64], index: 13, kind: input, shape index: {}]
  %s14 = inlined_call_operand.vmem [shape: f32[1,64], index: 14, kind: input, shape index: {}]
  %s15 = inlined_call_operand.vmem [shape: f32[64,32], index: 15, kind: input, shape index: {}]
  %s16 = inlined_call_operand.vmem [shape: f32[15,32], index: 16, kind: input, shape index: {}]
  %s17 = inlined_call_operand.vmem [shape: f32[1,32], index: 17, kind: input, shape index: {}]
  %s18 = inlined_call_operand.vmem [shape: f32[32,3], index: 18, kind: input, shape index: {}]
  %s19 = inlined_call_operand.vmem [shape: f32[1,3], index: 19, kind: input, shape index: {}]
  %s20 = inlined_call_operand.vmem [shape: f32[128,1], index: 20, kind: output, shape index: {0}]
  %s21 = inlined_call_operand.vmem [shape: f32[128,3], index: 21, kind: output, shape index: {1}]
  %22 = xla_tuple %s20, %s21
  %s23 = sld [smem:[#allocation0]]
  $region98: #{tpu_custom_call.1} parent=0
    _
  %s25 = ssub.s32 1, %s23
  %s26 = scalar_select 0, %s25, %s23
  %v27 = vstv %s12
  %28 = vst [vmem:[#allocation2] sm:$0x1] %v27
  // Predicated region
  $region2: #{tpu_custom_call.1} parent=0 // pred_check
    _
  $region3: #{tpu_custom_call.1} parent=0 // pred_check_branch
    %30 = sbr.rel (0) target = $region5
  $region4: #{tpu_custom_call.1} parent=0 // pred_region
    _
  $region5: #{tpu_custom_call.1} parent=0 // pred_fallthru
    _
  // Predicated region
  $region6: #{tpu_custom_call.1} parent=0 // pred_check
    _
  $region7: #{tpu_custom_call.1} parent=0 // pred_check_branch
    %32 = sbr.rel (0) target = $region9
  $region8: #{tpu_custom_call.1} parent=0 // pred_region
    _
  $region9: #{tpu_custom_call.1} parent=0 // pred_fallthru
    _
  // Predicated region
  $region10: #{tpu_custom_call.1} parent=0 // pred_check
    _
  $region11: #{tpu_custom_call.1} parent=0 // pred_check_branch
    %34 = sbr.rel (0) target = $region13
  $region12: #{tpu_custom_call.1} parent=0 // pred_region
    _
  $region13: #{tpu_custom_call.1} parent=0 // pred_fallthru
    _
  // Predicated region
  $region14: #{tpu_custom_call.1} parent=0 // pred_check
    _
  $region15: #{tpu_custom_call.1} parent=0 // pred_check_branch
    %36 = sbr.rel (0) target = $region17
  $region16: #{tpu_custom_call.1} parent=0 // pred_region
    _
  $region17: #{tpu_custom_call.1} parent=0 // pred_fallthru
    _
  // Predicated region
  $region18: #{tpu_custom_call.1} parent=0 // pred_check
    _
  $region19: #{tpu_custom_call.1} parent=0 // pred_check_branch
    %38 = sbr.rel (0) target = $region21
  $region20: #{tpu_custom_call.1} parent=0 // pred_region
    _
  $region21: #{tpu_custom_call.1} parent=0 // pred_fallthru
    _
  // Predicated region
  $region22: #{tpu_custom_call.1} parent=0 // pred_check
    _
  $region23: #{tpu_custom_call.1} parent=0 // pred_check_branch
    %40 = sbr.rel (0) target = $region25
  $region24: #{tpu_custom_call.1} parent=0 // pred_region
    _
  $region25: #{tpu_custom_call.1} parent=0 // pred_fallthru
    _
  // Predicated region
  $region26: #{tpu_custom_call.1} parent=0 // pred_check
    _
  $region27: #{tpu_custom_call.1} parent=0 // pred_check_branch
    %42 = sbr.rel (0) target = $region29
  $region28: #{tpu_custom_call.1} parent=0 // pred_region
    _
  $region29: #{tpu_custom_call.1} parent=0 // pred_fallthru
    _
  // Predicated region
  $region30: #{tpu_custom_call.1} parent=0 // pred_check
    _
  $region31: #{tpu_custom_call.1} parent=0 // pred_check_branch
    %44 = sbr.rel (0) target = $region33
  $region32: #{tpu_custom_call.1} parent=0 // pred_region
    _
  $region33: #{tpu_custom_call.1} parent=0 // pred_fallthru
    _
  // Predicated region
  $region34: #{tpu_custom_call.1} parent=0 // pred_check
    _
  $region35: #{tpu_custom_call.1} parent=0 // pred_check_branch
    %46 = sbr.rel (0) target = $region37
  $region36: #{tpu_custom_call.1} parent=0 // pred_region
    _
  $region37: #{tpu_custom_call.1} parent=0 // pred_fallthru
    _
  // Predicated region
  $region38: #{tpu_custom_call.1} parent=0 // pred_check
    _
  $region39: #{tpu_custom_call.1} parent=0 // pred_check_branch
    %48 = sbr.rel (0) target = $region41
  $region40: #{tpu_custom_call.1} parent=0 // pred_region
    _
  $region41: #{tpu_custom_call.1} parent=0 // pred_fallthru
    _
  // Predicated region
  $region42: #{tpu_custom_call.1} parent=0 // pred_check
    _
  $region43: #{tpu_custom_call.1} parent=0 // pred_check_branch
    %50 = sbr.rel (0) target = $region45
  $region44: #{tpu_custom_call.1} parent=0 // pred_region
    _
  $region45: #{tpu_custom_call.1} parent=0 // pred_fallthru
    _
  // Predicated region
  $region46: #{tpu_custom_call.1} parent=0 // pred_check
    _
  $region47: #{tpu_custom_call.1} parent=0 // pred_check_branch
    %52 = sbr.rel (0) target = $region49
  $region48: #{tpu_custom_call.1} parent=0 // pred_region
    _
  $region49: #{tpu_custom_call.1} parent=0 // pred_fallthru
    _
  // Predicated region
  $region50: #{tpu_custom_call.1} parent=0 // pred_check
    _
  $region51: #{tpu_custom_call.1} parent=0 // pred_check_branch
    %54 = sbr.rel (0) target = $region53
  $region52: #{tpu_custom_call.1} parent=0 // pred_region
    _
  $region53: #{tpu_custom_call.1} parent=0 // pred_fallthru
    _
  // Predicated region
  $region54: #{tpu_custom_call.1} parent=0 // pred_check
    _
  $region55: #{tpu_custom_call.1} parent=0 // pred_check_branch
    %56 = sbr.rel (0) target = $region57
  $region56: #{tpu_custom_call.1} parent=0 // pred_region
    _
  $region57: #{tpu_custom_call.1} parent=0 // pred_fallthru
    _
  // Predicated region
  $region58: #{tpu_custom_call.1} parent=0 // pred_check
    _
  $region59: #{tpu_custom_call.1} parent=0 // pred_check_branch
    %58 = sbr.rel (0) target = $region61
  $region60: #{tpu_custom_call.1} parent=0 // pred_region
    _
  $region61: #{tpu_custom_call.1} parent=0 // pred_fallthru
    _
  // Predicated region
  $region62: #{tpu_custom_call.1} parent=0 // pred_check
    _
  $region63: #{tpu_custom_call.1} parent=0 // pred_check_branch
    %60 = sbr.rel (0) target = $region65
  $region64: #{tpu_custom_call.1} parent=0 // pred_region
    _
  $region65: #{tpu_custom_call.1} parent=0 // pred_fallthru
    _
  // Predicated region
  $region66: #{tpu_custom_call.1} parent=0 // pred_check
    _
  $region67: #{tpu_custom_call.1} parent=0 // pred_check_branch
    %62 = sbr.rel (0) target = $region69
  $region68: #{tpu_custom_call.1} parent=0 // pred_region
    _
  $region69: #{tpu_custom_call.1} parent=0 // pred_fallthru
    _
  // Predicated region
  $region70: #{tpu_custom_call.1} parent=0 // pred_check
    _
  $region71: #{tpu_custom_call.1} parent=0 // pred_check_branch
    %64 = sbr.rel (0) target = $region73
  $region72: #{tpu_custom_call.1} parent=0 // pred_region
    _
  $region73: #{tpu_custom_call.1} parent=0 // pred_fallthru
    _
  // Predicated region
  $region74: #{tpu_custom_call.1} parent=0 // pred_check
    _
  $region75: #{tpu_custom_call.1} parent=0 // pred_check_branch
    %66 = sbr.rel (0) target = $region77
  $region76: #{tpu_custom_call.1} parent=0 // pred_region
    _
  $region77: #{tpu_custom_call.1} parent=0 // pred_fallthru
    _
  // Predicated region
  $region78: #{tpu_custom_call.1} parent=0 // pred_check
    _
  $region79: #{tpu_custom_call.1} parent=0 // pred_check_branch
    %68 = sbr.rel (0) target = $region81
  $region80: #{tpu_custom_call.1} parent=0 // pred_region
    _
  $region81: #{tpu_custom_call.1} parent=0 // pred_fallthru
    _
  %v69 = vld [vmem:[%s0] sm:$0xff]
  %v70 = vld [vmem:[%s0 + $0x8] sm:$0xff]
  %v71 = vld [vmem:[%s0 + $0x10] sm:$0xff]
  %v72 = vld [vmem:[%s0 + $0x18] sm:$0xff]
  %v73 = vld [vmem:[%s0 + $0x20] sm:$0xff]
  %v74 = vld [vmem:[%s0 + $0x28] sm:$0xff]
  %v75 = vld [vmem:[%s0 + $0x30] sm:$0xff]
  %v76 = vld [vmem:[%s0 + $0x38] sm:$0xff]
  %v77 = vld [vmem:[%s0 + $0x40] sm:$0xff]
  %v78 = vld [vmem:[%s0 + $0x48] sm:$0xff]
  %v79 = vld [vmem:[%s0 + $0x50] sm:$0xff]
  %v80 = vld [vmem:[%s0 + $0x58] sm:$0xff]
  %v81 = vld [vmem:[%s0 + $0x60] sm:$0xff]
  %v82 = vld [vmem:[%s0 + $0x68] sm:$0xff]
  %v83 = vld [vmem:[%s0 + $0x70] sm:$0xff]
  %v84 = vld [vmem:[%s0 + $0x78] sm:$0xff]
  %v85 = vld [vmem:[%s1] sm:$0xff]
  %v86 = vld [vmem:[%s1 + $0x8] sm:$0xff]
  %v87 = vld [vmem:[%s1 + $0x10] sm:$0xff]
  %v88 = vld [vmem:[%s1 + $0x18] sm:$0xff]
  %v89 = vld [vmem:[%s1 + $0x20] sm:$0xff]
  %v90 = vld [vmem:[%s1 + $0x28] sm:$0xff]
  %v91 = vld [vmem:[%s1 + $0x30] sm:$0xff]
  %v92 = vld [vmem:[%s1 + $0x38] sm:$0xff]
  %v93 = vld [vmem:[%s1 + $0x40] sm:$0xff]
  %v94 = vld [vmem:[%s1 + $0x48] sm:$0xff]
  %v95 = vld [vmem:[%s1 + $0x50] sm:$0xff]
  %v96 = vld [vmem:[%s1 + $0x58] sm:$0xff]
  %v97 = vld [vmem:[%s1 + $0x60] sm:$0xff]
  %v98 = vld [vmem:[%s1 + $0x68] sm:$0xff]
  %v99 = vld [vmem:[%s1 + $0x70] sm:$0xff]
  %v100 = vld [vmem:[%s1 + $0x78] sm:$0xff]
  %v101 = vld [vmem:[%s2] sm:$0xff]
  %v102 = vld [vmem:[%s2 + $0x8] sm:$0xff]
  %v103 = vld [vmem:[%s2 + $0x10] sm:$0xff]
  %v104 = vld [vmem:[%s2 + $0x18] sm:$0x7]
  %v105 = vld [vmem:[%s3] sm:$0x1]
  %v107 = vlaneseq
  %v108 = vshrl.u32 %v107, 7
  %v109 = vsub.s32 0, %v108
  %v110 = vrot.slane %v105, %v109
  %vm112 = vcmask 220160
  %v114 = vsel %vm112, %v69, 0
  %v117 = vsel %vm112, %v70, 0
  %v120 = vsel %vm112, %v71, 0
  %v123 = vsel %vm112, %v72, 0
  %v126 = vsel %vm112, %v73, 0
  %v129 = vsel %vm112, %v74, 0
  %v132 = vsel %vm112, %v75, 0
  %v135 = vsel %vm112, %v76, 0
  %v138 = vsel %vm112, %v77, 0
  %v141 = vsel %vm112, %v78, 0
  %v144 = vsel %vm112, %v79, 0
  %v147 = vsel %vm112, %v80, 0
  %v150 = vsel %vm112, %v81, 0
  %v153 = vsel %vm112, %v82, 0
  %v156 = vsel %vm112, %v83, 0
  %v159 = vsel %vm112, %v84, 0
  %vm161 = vcmask 1042432
  %v163 = vsel %vm161, %v104, 0
  %165 = vmatprep.subr.mxu0 0.0
  %166 = vmatpush1.msra.mxu0 0.0
  %167 = vmatprep.subr.mxu0 0.0
  %168 = vmatpush1.msra.mxu0 0.0
  %169 = vmatprep.subr.mxu0 0.0
  %170 = vmatpush1.msra.mxu0 0.0
  %171 = vmatprep.subr.mxu0 0.0
  %172 = vmatpush1.msra.mxu0 0.0
  %173 = vmatprep.subr.mxu0 0.0
  %174 = vmatpush1.msra.mxu0 0.0
  %175 = vmatprep.subr.mxu0 0.0
  %176 = vmatpush1.msra.mxu0 0.0
  %177 = vmatprep.subr.mxu0 0.0
  %178 = vmatpush1.msra.mxu0 0.0
  %179 = vmatprep.subr.mxu0 0.0
  %180 = vmatpush1.msra.mxu0 0.0
  %181 = vmatprep.subr.mxu0 0.0
  %182 = vmatpush1.msra.mxu0 0.0
  %183 = vmatprep.subr.mxu0 0.0
  %184 = vmatpush1.msra.mxu0 0.0
  %185 = vmatprep.subr.mxu0 0.0
  %186 = vmatpush1.msra.mxu0 0.0
  %187 = vmatprep.subr.mxu0 0.0
  %188 = vmatpush1.msra.mxu0 0.0
  %189 = vmatprep.subr.mxu0 0.0
  %v190 = vand.u32 %v163, 4294901760
  %191 = vmatpush1.msra.mxu0 %v190
  %192 = vmatprep.subr.mxu0 0.0
  %v193 = vand.u32 %v103, 4294901760
  %194 = vmatpush1.msra.mxu0 %v193
  %195 = vmatprep.subr.mxu0 0.0
  %v196 = vand.u32 %v102, 4294901760
  %197 = vmatpush1.msra.mxu0 %v196
  %198 = vmatprep.subr.mxu0 0.0
  %v199 = vand.u32 %v101, 4294901760
  %200 = vmatpush1.msra.mxu0 %v199
  %201 = vmatprep.subr.mxu0 0.0
  %202 = vmatpush2.msra.mxu0 0.0
  %203 = vmatprep.subr.mxu0 0.0
  %204 = vmatpush2.msra.mxu0 0.0
  %205 = vmatprep.subr.mxu0 0.0
  %206 = vmatpush2.msra.mxu0 0.0
  %207 = vmatprep.subr.mxu0 0.0
  %208 = vmatpush2.msra.mxu0 0.0
  %209 = vmatprep.subr.mxu0 0.0
  %210 = vmatpush2.msra.mxu0 0.0
  %211 = vmatprep.subr.mxu0 0.0
  %212 = vmatpush2.msra.mxu0 0.0
  %213 = vmatprep.subr.mxu0 0.0
  %214 = vmatpush2.msra.mxu0 0.0
  %215 = vmatprep.subr.mxu0 0.0
  %216 = vmatpush2.msra.mxu0 0.0
  %217 = vmatprep.subr.mxu0 0.0
  %218 = vmatpush2.msra.mxu0 0.0
  %219 = vmatprep.subr.mxu0 0.0
  %220 = vmatpush2.msra.mxu0 0.0
  %221 = vmatprep.subr.mxu0 0.0
  %222 = vmatpush2.msra.mxu0 0.0
  %223 = vmatprep.subr.mxu0 0.0
  %224 = vmatpush2.msra.mxu0 0.0
  %225 = vmatprep.subr.mxu0 0.0
  %226 = vmatpush2.msra.mxu0 0.0
  %227 = vmatprep.subr.mxu0 0.0
  %228 = vmatpush2.msra.mxu0 0.0
  %229 = vmatprep.subr.mxu0 0.0
  %230 = vmatpush2.msra.mxu0 0.0
  %231 = vmatprep.subr.mxu0 0.0
  %232 = vmatpush2.msra.mxu0 0.0
  %233 = vmatprep.mubr.f32.mxu0 0.0
  %v234 = vand.u32 %v114, 4294901760
  %v235 = vsub.f32 %v114, %v234
  %v236 = vand.u32 %v235, 4294901760
  %v237 = vsub.f32 %v235, %v236
  %v238 = vand.u32 %v237, 4294901760
  %239 = vmatmul.mubr.f32.gmra.mxu0 %v238
  %v240 = vpop.f32.mrf.mxu0
  %v241 = vadd.f32 %v110, %v240
  %v242 = vpop.f32.mrf.mxu0
  %243 = vmatprep.mubr.f32.mxu0 0.0
  %v244 = vand.u32 %v117, 4294901760
  %v245 = vsub.f32 %v117, %v244
  %v246 = vand.u32 %v245, 4294901760
  %v247 = vsub.f32 %v245, %v246
  %v248 = vand.u32 %v247, 4294901760
  %249 = vmatmul.mubr.f32.gmra.mxu0 %v248
  %v250 = vpop.f32.mrf.mxu0
  %v251 = vadd.f32 %v110, %v250
  %v252 = vpop.f32.mrf.mxu0
  %253 = vmatprep.mubr.f32.mxu0 0.0
  %v254 = vand.u32 %v120, 4294901760
  %v255 = vsub.f32 %v120, %v254
  %v256 = vand.u32 %v255, 4294901760
  %v257 = vsub.f32 %v255, %v256
  %v258 = vand.u32 %v257, 4294901760
  %259 = vmatmul.mubr.f32.gmra.mxu0 %v258
  %v260 = vpop.f32.mrf.mxu0
  %v261 = vadd.f32 %v110, %v260
  %v262 = vpop.f32.mrf.mxu0
  %263 = vmatprep.mubr.f32.mxu0 0.0
  %v264 = vand.u32 %v123, 4294901760
  %v265 = vsub.f32 %v123, %v264
  %v266 = vand.u32 %v265, 4294901760
  %v267 = vsub.f32 %v265, %v266
  %v268 = vand.u32 %v267, 4294901760
  %269 = vmatmul.mubr.f32.gmra.mxu0 %v268
  %v270 = vpop.f32.mrf.mxu0
  %v271 = vadd.f32 %v110, %v270
  %v272 = vpop.f32.mrf.mxu0
  %273 = vmatprep.mubr.f32.mxu0 0.0
  %v274 = vand.u32 %v126, 4294901760
  %v275 = vsub.f32 %v126, %v274
  %v276 = vand.u32 %v275, 4294901760
  %v277 = vsub.f32 %v275, %v276
  %v278 = vand.u32 %v277, 4294901760
  %279 = vmatmul.mubr.f32.gmra.mxu0 %v278
  %v280 = vpop.f32.mrf.mxu0
  %v281 = vadd.f32 %v110, %v280
  %v282 = vpop.f32.mrf.mxu0
  %283 = vmatprep.mubr.f32.mxu0 0.0
  %v284 = vand.u32 %v129, 4294901760
  %v285 = vsub.f32 %v129, %v284
  %v286 = vand.u32 %v285, 4294901760
  %v287 = vsub.f32 %v285, %v286
  %v288 = vand.u32 %v287, 4294901760
  %289 = vmatmul.mubr.f32.gmra.mxu0 %v288
  %v290 = vpop.f32.mrf.mxu0
  %v291 = vadd.f32 %v110, %v290
  %v292 = vpop.f32.mrf.mxu0
  %293 = vmatprep.mubr.f32.mxu0 0.0
  %v294 = vand.u32 %v132, 4294901760
  %v295 = vsub.f32 %v132, %v294
  %v296 = vand.u32 %v295, 4294901760
  %v297 = vsub.f32 %v295, %v296
  %v298 = vand.u32 %v297, 4294901760
  %299 = vmatmul.mubr.f32.gmra.mxu0 %v298
  %v300 = vpop.f32.mrf.mxu0
  %v301 = vadd.f32 %v110, %v300
  %v302 = vpop.f32.mrf.mxu0
  %303 = vmatprep.mubr.f32.mxu0 0.0
  %v304 = vand.u32 %v135, 4294901760
  %v305 = vsub.f32 %v135, %v304
  %v306 = vand.u32 %v305, 4294901760
  %v307 = vsub.f32 %v305, %v306
  %v308 = vand.u32 %v307, 4294901760
  %309 = vmatmul.mubr.f32.gmra.mxu0 %v308
  %v310 = vpop.f32.mrf.mxu0
  %v311 = vadd.f32 %v110, %v310
  %v312 = vpop.f32.mrf.mxu0
  %313 = vmatprep.mubr.f32.mxu0 0.0
  %v314 = vand.u32 %v138, 4294901760
  %v315 = vsub.f32 %v138, %v314
  %v316 = vand.u32 %v315, 4294901760
  %v317 = vsub.f32 %v315, %v316
  %v318 = vand.u32 %v317, 4294901760
  %319 = vmatmul.mubr.f32.gmra.mxu0 %v318
  %v320 = vpop.f32.mrf.mxu0
  %v321 = vadd.f32 %v110, %v320
  %v322 = vpop.f32.mrf.mxu0
  %323 = vmatprep.mubr.f32.mxu0 0.0
  %v324 = vand.u32 %v141, 4294901760
  %v325 = vsub.f32 %v141, %v324
  %v326 = vand.u32 %v325, 4294901760
  %v327 = vsub.f32 %v325, %v326
  %v328 = vand.u32 %v327, 4294901760
  %329 = vmatmul.mubr.f32.gmra.mxu0 %v328
  %v330 = vpop.f32.mrf.mxu0
  %v331 = vadd.f32 %v110, %v330
  %v332 = vpop.f32.mrf.mxu0
  %333 = vmatprep.mubr.f32.mxu0 0.0
  %v334 = vand.u32 %v144, 4294901760
  %v335 = vsub.f32 %v144, %v334
  %v336 = vand.u32 %v335, 4294901760
  %v337 = vsub.f32 %v335, %v336
  %v338 = vand.u32 %v337, 4294901760
  %339 = vmatmul.mubr.f32.gmra.mxu0 %v338
  %v340 = vpop.f32.mrf.mxu0
  %v341 = vadd.f32 %v110, %v340
  %v342 = vpop.f32.mrf.mxu0
  %343 = vmatprep.mubr.f32.mxu0 0.0
  %v344 = vand.u32 %v147, 4294901760
  %v345 = vsub.f32 %v147, %v344
  %v346 = vand.u32 %v345, 4294901760
  %v347 = vsub.f32 %v345, %v346
  %v348 = vand.u32 %v347, 4294901760
  %349 = vmatmul.mubr.f32.gmra.mxu0 %v348
  %v350 = vpop.f32.mrf.mxu0
  %v351 = vadd.f32 %v110, %v350
  %v352 = vpop.f32.mrf.mxu0
  %353 = vmatprep.mubr.f32.mxu0 0.0
  %v354 = vand.u32 %v150, 4294901760
  %v355 = vsub.f32 %v150, %v354
  %v356 = vand.u32 %v355, 4294901760
  %v357 = vsub.f32 %v355, %v356
  %v358 = vand.u32 %v357, 4294901760
  %359 = vmatmul.mubr.f32.gmra.mxu0 %v358
  %v360 = vpop.f32.mrf.mxu0
  %v361 = vadd.f32 %v110, %v360
  %v362 = vpop.f32.mrf.mxu0
  %363 = vmatprep.mubr.f32.mxu0 0.0
  %v364 = vand.u32 %v153, 4294901760
  %v365 = vsub.f32 %v153, %v364
  %v366 = vand.u32 %v365, 4294901760
  %v367 = vsub.f32 %v365, %v366
  %v368 = vand.u32 %v367, 4294901760
  %369 = vmatmul.mubr.f32.gmra.mxu0 %v368
  %v370 = vpop.f32.mrf.mxu0
  %v371 = vadd.f32 %v110, %v370
  %v372 = vpop.f32.mrf.mxu0
  %373 = vmatprep.mubr.f32.mxu0 0.0
  %v374 = vand.u32 %v156, 4294901760
  %v375 = vsub.f32 %v156, %v374
  %v376 = vand.u32 %v375, 4294901760
  %v377 = vsub.f32 %v375, %v376
  %v378 = vand.u32 %v377, 4294901760
  %379 = vmatmul.mubr.f32.gmra.mxu0 %v378
  %v380 = vpop.f32.mrf.mxu0
  %v381 = vadd.f32 %v110, %v380
  %v382 = vpop.f32.mrf.mxu0
  %383 = vmatprep.mubr.f32.mxu0 0.0
  %v384 = vand.u32 %v159, 4294901760
  %v385 = vsub.f32 %v159, %v384
  %v386 = vand.u32 %v385, 4294901760
  %v387 = vsub.f32 %v385, %v386
  %v388 = vand.u32 %v387, 4294901760
  %389 = vmatmul.mubr.f32.gmra.mxu0 %v388
  %v390 = vpop.f32.mrf.mxu0
  %v391 = vadd.f32 %v110, %v390
  %v392 = vpop.f32.mrf.mxu0
  %393 = vdwg.mxu0
  %394 = vmatprep.subr.mxu0 0.0
  %395 = vmatpush1.msra.mxu0 0.0
  %396 = vmatprep.subr.mxu0 0.0
  %397 = vmatpush1.msra.mxu0 0.0
  %398 = vmatprep.subr.mxu0 0.0
  %399 = vmatpush1.msra.mxu0 0.0
  %400 = vmatprep.subr.mxu0 0.0
  %401 = vmatpush1.msra.mxu0 0.0
  %402 = vmatprep.subr.mxu0 0.0
  %403 = vmatpush1.msra.mxu0 0.0
  %404 = vmatprep.subr.mxu0 0.0
  %405 = vmatpush1.msra.mxu0 0.0
  %406 = vmatprep.subr.mxu0 0.0
  %407 = vmatpush1.msra.mxu0 0.0
  %408 = vmatprep.subr.mxu0 0.0
  %409 = vmatpush1.msra.mxu0 0.0
  %410 = vmatprep.subr.mxu0 0.0
  %411 = vmatpush1.msra.mxu0 0.0
  %412 = vmatprep.subr.mxu0 0.0
  %413 = vmatpush1.msra.mxu0 0.0
  %414 = vmatprep.subr.mxu0 0.0
  %415 = vmatpush1.msra.mxu0 0.0
  %416 = vmatprep.subr.mxu0 0.0
  %417 = vmatpush1.msra.mxu0 0.0
  %418 = vmatprep.subr.mxu0 0.0
  %v419 = vand.u32 %v163, 4294901760
  %v420 = vsub.f32 %v163, %v419
  %v421 = vand.u32 %v420, 4294901760
  %v422 = vsub.f32 %v420, %v421
  %v423 = vand.u32 %v422, 4294901760
  %424 = vmatpush1.msra.mxu0 %v423
  %425 = vmatprep.subr.mxu0 0.0
  %v426 = vand.u32 %v103, 4294901760
  %v427 = vsub.f32 %v103, %v426
  %v428 = vand.u32 %v427, 4294901760
  %v429 = vsub.f32 %v427, %v428
  %v430 = vand.u32 %v429, 4294901760
  %431 = vmatpush1.msra.mxu0 %v430
  %432 = vmatprep.subr.mxu0 0.0
  %v433 = vand.u32 %v102, 4294901760
  %v434 = vsub.f32 %v102, %v433
  %v435 = vand.u32 %v434, 4294901760
  %v436 = vsub.f32 %v434, %v435
  %v437 = vand.u32 %v436, 4294901760
  %438 = vmatpush1.msra.mxu0 %v437
  %439 = vmatprep.subr.mxu0 0.0
  %v440 = vand.u32 %v101, 4294901760
  %v441 = vsub.f32 %v101, %v440
  %v442 = vand.u32 %v441, 4294901760
  %v443 = vsub.f32 %v441, %v442
  %v444 = vand.u32 %v443, 4294901760
  %445 = vmatpush1.msra.mxu0 %v444
  %446 = vmatprep.subr.mxu0 0.0
  %447 = vmatpush2.msra.mxu0 0.0
  %448 = vmatprep.subr.mxu0 0.0
  %449 = vmatpush2.msra.mxu0 0.0
  %450 = vmatprep.subr.mxu0 0.0
  %451 = vmatpush2.msra.mxu0 0.0
  %452 = vmatprep.subr.mxu0 0.0
  %453 = vmatpush2.msra.mxu0 0.0
  %454 = vmatprep.subr.mxu0 0.0
  %455 = vmatpush2.msra.mxu0 0.0
  %456 = vmatprep.subr.mxu0 0.0
  %457 = vmatpush2.msra.mxu0 0.0
  %458 = vmatprep.subr.mxu0 0.0
  %459 = vmatpush2.msra.mxu0 0.0
  %460 = vmatprep.subr.mxu0 0.0
  %461 = vmatpush2.msra.mxu0 0.0
  %462 = vmatprep.subr.mxu0 0.0
  %463 = vmatpush2.msra.mxu0 0.0
  %464 = vmatprep.subr.mxu0 0.0
  %465 = vmatpush2.msra.mxu0 0.0
  %466 = vmatprep.subr.mxu0 0.0
  %467 = vmatpush2.msra.mxu0 0.0
  %468 = vmatprep.subr.mxu0 0.0
  %469 = vmatpush2.msra.mxu0 0.0
  %470 = vmatprep.subr.mxu0 0.0
  %471 = vmatpush2.msra.mxu0 0.0
  %472 = vmatprep.subr.mxu0 0.0
  %473 = vmatpush2.msra.mxu0 0.0
  %474 = vmatprep.subr.mxu0 0.0
  %475 = vmatpush2.msra.mxu0 0.0
  %476 = vmatprep.subr.mxu0 0.0
  %477 = vmatpush2.msra.mxu0 0.0
  %478 = vmatprep.mubr.f32.mxu0 0.0
  %v479 = vand.u32 %v114, 4294901760
  %480 = vmatmul.mubr.f32.gmra.mxu0 %v479
  %v481 = vpop.f32.mrf.mxu0
  %v482 = vadd.f32 %v241, %v481
  %v483 = vpop.f32.mrf.mxu0
  %484 = vmatprep.mubr.f32.mxu0 0.0
  %v485 = vand.u32 %v117, 4294901760
  %486 = vmatmul.mubr.f32.gmra.mxu0 %v485
  %v487 = vpop.f32.mrf.mxu0
  %v488 = vadd.f32 %v251, %v487
  %v489 = vpop.f32.mrf.mxu0
  %490 = vmatprep.mubr.f32.mxu0 0.0
  %v491 = vand.u32 %v120, 4294901760
  %492 = vmatmul.mubr.f32.gmra.mxu0 %v491
  %v493 = vpop.f32.mrf.mxu0
  %v494 = vadd.f32 %v261, %v493
  %v495 = vpop.f32.mrf.mxu0
  %496 = vmatprep.mubr.f32.mxu0 0.0
  %v497 = vand.u32 %v123, 4294901760
  %498 = vmatmul.mubr.f32.gmra.mxu0 %v497
  %v499 = vpop.f32.mrf.mxu0
  %v500 = vadd.f32 %v271, %v499
  %v501 = vpop.f32.mrf.mxu0
  %502 = vmatprep.mubr.f32.mxu0 0.0
  %v503 = vand.u32 %v126, 4294901760
  %504 = vmatmul.mubr.f32.gmra.mxu0 %v503
  %v505 = vpop.f32.mrf.mxu0
  %v506 = vadd.f32 %v281, %v505
  %v507 = vpop.f32.mrf.mxu0
  %508 = vmatprep.mubr.f32.mxu0 0.0
  %v509 = vand.u32 %v129, 4294901760
  %510 = vmatmul.mubr.f32.gmra.mxu0 %v509
  %v511 = vpop.f32.mrf.mxu0
  %v512 = vadd.f32 %v291, %v511
  %v513 = vpop.f32.mrf.mxu0
  %514 = vmatprep.mubr.f32.mxu0 0.0
  %v515 = vand.u32 %v132, 4294901760
  %516 = vmatmul.mubr.f32.gmra.mxu0 %v515
  %v517 = vpop.f32.mrf.mxu0
  %v518 = vadd.f32 %v301, %v517
  %v519 = vpop.f32.mrf.mxu0
  %520 = vmatprep.mubr.f32.mxu0 0.0
  %v521 = vand.u32 %v135, 4294901760
  %522 = vmatmul.mubr.f32.gmra.mxu0 %v521
  %v523 = vpop.f32.mrf.mxu0
  %v524 = vadd.f32 %v311, %v523
  %v525 = vpop.f32.mrf.mxu0
  %526 = vmatprep.mubr.f32.mxu0 0.0
  %v527 = vand.u32 %v138, 4294901760
  %528 = vmatmul.mubr.f32.gmra.mxu0 %v527
  %v529 = vpop.f32.mrf.mxu0
  %v530 = vadd.f32 %v321, %v529
  %v531 = vpop.f32.mrf.mxu0
  %532 = vmatprep.mubr.f32.mxu0 0.0
  %v533 = vand.u32 %v141, 4294901760
  %534 = vmatmul.mubr.f32.gmra.mxu0 %v533
  %v535 = vpop.f32.mrf.mxu0
  %v536 = vadd.f32 %v331, %v535
  %v537 = vpop.f32.mrf.mxu0
  %538 = vmatprep.mubr.f32.mxu0 0.0
  %v539 = vand.u32 %v144, 4294901760
  %540 = vmatmul.mubr.f32.gmra.mxu0 %v539
  %v541 = vpop.f32.mrf.mxu0
  %v542 = vadd.f32 %v341, %v541
  %v543 = vpop.f32.mrf.mxu0
  %544 = vmatprep.mubr.f32.mxu0 0.0
  %v545 = vand.u32 %v147, 4294901760
  %546 = vmatmul.mubr.f32.gmra.mxu0 %v545
  %v547 = vpop.f32.mrf.mxu0
  %v548 = vadd.f32 %v351, %v547
  %v549 = vpop.f32.mrf.mxu0
  %550 = vmatprep.mubr.f32.mxu0 0.0
  %v551 = vand.u32 %v150, 4294901760
  %552 = vmatmul.mubr.f32.gmra.mxu0 %v551
  %v553 = vpop.f32.mrf.mxu0
  %v554 = vadd.f32 %v361, %v553
  %v555 = vpop.f32.mrf.mxu0
  %556 = vmatprep.mubr.f32.mxu0 0.0
  %v557 = vand.u32 %v153, 4294901760
  %558 = vmatmul.mubr.f32.gmra.mxu0 %v557
  %v559 = vpop.f32.mrf.mxu0
  %v560 = vadd.f32 %v371, %v559
  %v561 = vpop.f32.mrf.mxu0
  %562 = vmatprep.mubr.f32.mxu0 0.0
  %v563 = vand.u32 %v156, 4294901760
  %564 = vmatmul.mubr.f32.gmra.mxu0 %v563
  %v565 = vpop.f32.mrf.mxu0
  %v566 = vadd.f32 %v381, %v565
  %v567 = vpop.f32.mrf.mxu0
  %568 = vmatprep.mubr.f32.mxu0 0.0
  %v569 = vand.u32 %v159, 4294901760
  %570 = vmatmul.mubr.f32.gmra.mxu0 %v569
  %v571 = vpop.f32.mrf.mxu0
  %v572 = vadd.f32 %v391, %v571
  %v573 = vpop.f32.mrf.mxu0
  %574 = vdwg.mxu0
  %575 = vmatprep.subr.mxu0 0.0
  %576 = vmatpush1.msra.mxu0 0.0
  %577 = vmatprep.subr.mxu0 0.0
  %578 = vmatpush1.msra.mxu0 0.0
  %579 = vmatprep.subr.mxu0 0.0
  %580 = vmatpush1.msra.mxu0 0.0
  %581 = vmatprep.subr.mxu0 0.0
  %582 = vmatpush1.msra.mxu0 0.0
  %583 = vmatprep.subr.mxu0 0.0
  %584 = vmatpush1.msra.mxu0 0.0
  %585 = vmatprep.subr.mxu0 0.0
  %586 = vmatpush1.msra.mxu0 0.0
  %587 = vmatprep.subr.mxu0 0.0
  %588 = vmatpush1.msra.mxu0 0.0
  %589 = vmatprep.subr.mxu0 0.0
  %590 = vmatpush1.msra.mxu0 0.0
  %591 = vmatprep.subr.mxu0 0.0
  %592 = vmatpush1.msra.mxu0 0.0
  %593 = vmatprep.subr.mxu0 0.0
  %594 = vmatpush1.msra.mxu0 0.0
  %595 = vmatprep.subr.mxu0 0.0
  %596 = vmatpush1.msra.mxu0 0.0
  %597 = vmatprep.subr.mxu0 0.0
  %598 = vmatpush1.msra.mxu0 0.0
  %599 = vmatprep.subr.mxu0 0.0
  %v600 = vand.u32 %v163, 4294901760
  %v601 = vsub.f32 %v163, %v600
  %602 = vmatpush1.msra.mxu0 %v601
  %603 = vmatprep.subr.mxu0 0.0
  %v604 = vand.u32 %v103, 4294901760
  %v605 = vsub.f32 %v103, %v604
  %606 = vmatpush1.msra.mxu0 %v605
  %607 = vmatprep.subr.mxu0 0.0
  %v608 = vand.u32 %v102, 4294901760
  %v609 = vsub.f32 %v102, %v608
  %610 = vmatpush1.msra.mxu0 %v609
  %611 = vmatprep.subr.mxu0 0.0
  %v612 = vand.u32 %v101, 4294901760
  %v613 = vsub.f32 %v101, %v612
  %614 = vmatpush1.msra.mxu0 %v613
  %615 = vmatprep.subr.mxu0 0.0
  %616 = vmatpush2.msra.mxu0 0.0
  %617 = vmatprep.subr.mxu0 0.0
  %618 = vmatpush2.msra.mxu0 0.0
  %619 = vmatprep.subr.mxu0 0.0
  %620 = vmatpush2.msra.mxu0 0.0
  %621 = vmatprep.subr.mxu0 0.0
  %622 = vmatpush2.msra.mxu0 0.0
  %623 = vmatprep.subr.mxu0 0.0
  %624 = vmatpush2.msra.mxu0 0.0
  %625 = vmatprep.subr.mxu0 0.0
  %626 = vmatpush2.msra.mxu0 0.0
  %627 = vmatprep.subr.mxu0 0.0
  %628 = vmatpush2.msra.mxu0 0.0
  %629 = vmatprep.subr.mxu0 0.0
  %630 = vmatpush2.msra.mxu0 0.0
  %631 = vmatprep.subr.mxu0 0.0
  %632 = vmatpush2.msra.mxu0 0.0
  %633 = vmatprep.subr.mxu0 0.0
  %634 = vmatpush2.msra.mxu0 0.0
  %635 = vmatprep.subr.mxu0 0.0
  %636 = vmatpush2.msra.mxu0 0.0
  %637 = vmatprep.subr.mxu0 0.0
  %638 = vmatpush2.msra.mxu0 0.0
  %639 = vmatprep.subr.mxu0 0.0
  %640 = vmatpush2.msra.mxu0 0.0
  %641 = vmatprep.subr.mxu0 0.0
  %642 = vmatpush2.msra.mxu0 0.0
  %643 = vmatprep.subr.mxu0 0.0
  %644 = vmatpush2.msra.mxu0 0.0
  %645 = vmatprep.subr.mxu0 0.0
  %646 = vmatpush2.msra.mxu0 0.0
  %647 = vmatprep.mubr.f32.mxu0 0.0
  %v648 = vand.u32 %v114, 4294901760
  %v649 = vsub.f32 %v114, %v648
  %650 = vmatmul.mubr.f32.gmra.mxu0 %v649
  %v651 = vpop.f32.mrf.mxu0
  %v652 = vadd.f32 %v482, %v651
  %v653 = vpop.f32.mrf.mxu0
  %654 = vmatprep.mubr.f32.mxu0 0.0
  %v655 = vand.u32 %v117, 4294901760
  %v656 = vsub.f32 %v117, %v655
  %657 = vmatmul.mubr.f32.gmra.mxu0 %v656
  %v658 = vpop.f32.mrf.mxu0
  %v659 = vadd.f32 %v488, %v658
  %v660 = vpop.f32.mrf.mxu0
  %661 = vmatprep.mubr.f32.mxu0 0.0
  %v662 = vand.u32 %v120, 4294901760
  %v663 = vsub.f32 %v120, %v662
  %664 = vmatmul.mubr.f32.gmra.mxu0 %v663
  %v665 = vpop.f32.mrf.mxu0
  %v666 = vadd.f32 %v494, %v665
  %v667 = vpop.f32.mrf.mxu0
  %668 = vmatprep.mubr.f32.mxu0 0.0
  %v669 = vand.u32 %v123, 4294901760
  %v670 = vsub.f32 %v123, %v669
  %671 = vmatmul.mubr.f32.gmra.mxu0 %v670
  %v672 = vpop.f32.mrf.mxu0
  %v673 = vadd.f32 %v500, %v672
  %v674 = vpop.f32.mrf.mxu0
  %675 = vmatprep.mubr.f32.mxu0 0.0
  %v676 = vand.u32 %v126, 4294901760
  %v677 = vsub.f32 %v126, %v676
  %678 = vmatmul.mubr.f32.gmra.mxu0 %v677
  %v679 = vpop.f32.mrf.mxu0
  %v680 = vadd.f32 %v506, %v679
  %v681 = vpop.f32.mrf.mxu0
  %682 = vmatprep.mubr.f32.mxu0 0.0
  %v683 = vand.u32 %v129, 4294901760
  %v684 = vsub.f32 %v129, %v683
  %685 = vmatmul.mubr.f32.gmra.mxu0 %v684
  %v686 = vpop.f32.mrf.mxu0
  %v687 = vadd.f32 %v512, %v686
  %v688 = vpop.f32.mrf.mxu0
  %689 = vmatprep.mubr.f32.mxu0 0.0
  %v690 = vand.u32 %v132, 4294901760
  %v691 = vsub.f32 %v132, %v690
  %692 = vmatmul.mubr.f32.gmra.mxu0 %v691
  %v693 = vpop.f32.mrf.mxu0
  %v694 = vadd.f32 %v518, %v693
  %v695 = vpop.f32.mrf.mxu0
  %696 = vmatprep.mubr.f32.mxu0 0.0
  %v697 = vand.u32 %v135, 4294901760
  %v698 = vsub.f32 %v135, %v697
  %699 = vmatmul.mubr.f32.gmra.mxu0 %v698
  %v700 = vpop.f32.mrf.mxu0
  %v701 = vadd.f32 %v524, %v700
  %v702 = vpop.f32.mrf.mxu0
  %703 = vmatprep.mubr.f32.mxu0 0.0
  %v704 = vand.u32 %v138, 4294901760
  %v705 = vsub.f32 %v138, %v704
  %706 = vmatmul.mubr.f32.gmra.mxu0 %v705
  %v707 = vpop.f32.mrf.mxu0
  %v708 = vadd.f32 %v530, %v707
  %v709 = vpop.f32.mrf.mxu0
  %710 = vmatprep.mubr.f32.mxu0 0.0
  %v711 = vand.u32 %v141, 4294901760
  %v712 = vsub.f32 %v141, %v711
  %713 = vmatmul.mubr.f32.gmra.mxu0 %v712
  %v714 = vpop.f32.mrf.mxu0
  %v715 = vadd.f32 %v536, %v714
  %v716 = vpop.f32.mrf.mxu0
  %717 = vmatprep.mubr.f32.mxu0 0.0
  %v718 = vand.u32 %v144, 4294901760
  %v719 = vsub.f32 %v144, %v718
  %720 = vmatmul.mubr.f32.gmra.mxu0 %v719
  %v721 = vpop.f32.mrf.mxu0
  %v722 = vadd.f32 %v542, %v721
  %v723 = vpop.f32.mrf.mxu0
  %724 = vmatprep.mubr.f32.mxu0 0.0
  %v725 = vand.u32 %v147, 4294901760
  %v726 = vsub.f32 %v147, %v725
  %727 = vmatmul.mubr.f32.gmra.mxu0 %v726
  %v728 = vpop.f32.mrf.mxu0
  %v729 = vadd.f32 %v548, %v728
  %v730 = vpop.f32.mrf.mxu0
  %731 = vmatprep.mubr.f32.mxu0 0.0
  %v732 = vand.u32 %v150, 4294901760
  %v733 = vsub.f32 %v150, %v732
  %734 = vmatmul.mubr.f32.gmra.mxu0 %v733
  %v735 = vpop.f32.mrf.mxu0
  %v736 = vadd.f32 %v554, %v735
  %v737 = vpop.f32.mrf.mxu0
  %738 = vmatprep.mubr.f32.mxu0 0.0
  %v739 = vand.u32 %v153, 4294901760
  %v740 = vsub.f32 %v153, %v739
  %741 = vmatmul.mubr.f32.gmra.mxu0 %v740
  %v742 = vpop.f32.mrf.mxu0
  %v743 = vadd.f32 %v560, %v742
  %v744 = vpop.f32.mrf.mxu0
  %745 = vmatprep.mubr.f32.mxu0 0.0
  %v746 = vand.u32 %v156, 4294901760
  %v747 = vsub.f32 %v156, %v746
  %748 = vmatmul.mubr.f32.gmra.mxu0 %v747
  %v749 = vpop.f32.mrf.mxu0
  %v750 = vadd.f32 %v566, %v749
  %v751 = vpop.f32.mrf.mxu0
  %752 = vmatprep.mubr.f32.mxu0 0.0
  %v753 = vand.u32 %v159, 4294901760
  %v754 = vsub.f32 %v159, %v753
  %755 = vmatmul.mubr.f32.gmra.mxu0 %v754
  %v756 = vpop.f32.mrf.mxu0
  %v757 = vadd.f32 %v572, %v756
  %v758 = vpop.f32.mrf.mxu0
  %759 = vdwg.mxu0
  %760 = vmatprep.subr.mxu0 0.0
  %761 = vmatpush1.msra.mxu0 0.0
  %762 = vmatprep.subr.mxu0 0.0
  %763 = vmatpush1.msra.mxu0 0.0
  %764 = vmatprep.subr.mxu0 0.0
  %765 = vmatpush1.msra.mxu0 0.0
  %766 = vmatprep.subr.mxu0 0.0
  %767 = vmatpush1.msra.mxu0 0.0
  %768 = vmatprep.subr.mxu0 0.0
  %769 = vmatpush1.msra.mxu0 0.0
  %770 = vmatprep.subr.mxu0 0.0
  %771 = vmatpush1.msra.mxu0 0.0
  %772 = vmatprep.subr.mxu0 0.0
  %773 = vmatpush1.msra.mxu0 0.0
  %774 = vmatprep.subr.mxu0 0.0
  %775 = vmatpush1.msra.mxu0 0.0
  %776 = vmatprep.subr.mxu0 0.0
  %777 = vmatpush1.msra.mxu0 0.0
  %778 = vmatprep.subr.mxu0 0.0
  %779 = vmatpush1.msra.mxu0 0.0
  %780 = vmatprep.subr.mxu0 0.0
  %781 = vmatpush1.msra.mxu0 0.0
  %782 = vmatprep.subr.mxu0 0.0
  %783 = vmatpush1.msra.mxu0 0.0
  %784 = vmatprep.subr.mxu0 0.0
  %v785 = vand.u32 %v163, 4294901760
  %786 = vmatpush1.msra.mxu0 %v785
  %787 = vmatprep.subr.mxu0 0.0
  %v788 = vand.u32 %v103, 4294901760
  %789 = vmatpush1.msra.mxu0 %v788
  %790 = vmatprep.subr.mxu0 0.0
  %v791 = vand.u32 %v102, 4294901760
  %792 = vmatpush1.msra.mxu0 %v791
  %793 = vmatprep.subr.mxu0 0.0
  %v794 = vand.u32 %v101, 4294901760
  %795 = vmatpush1.msra.mxu0 %v794
  %796 = vmatprep.subr.mxu0 0.0
  %797 = vmatpush2.msra.mxu0 0.0
  %798 = vmatprep.subr.mxu0 0.0
  %799 = vmatpush2.msra.mxu0 0.0
  %800 = vmatprep.subr.mxu0 0.0
  %801 = vmatpush2.msra.mxu0 0.0
  %802 = vmatprep.subr.mxu0 0.0
  %803 = vmatpush2.msra.mxu0 0.0
  %804 = vmatprep.subr.mxu0 0.0
  %805 = vmatpush2.msra.mxu0 0.0
  %806 = vmatprep.subr.mxu0 0.0
  %807 = vmatpush2.msra.mxu0 0.0
  %808 = vmatprep.subr.mxu0 0.0
  %809 = vmatpush2.msra.mxu0 0.0
  %810 = vmatprep.subr.mxu0 0.0
  %811 = vmatpush2.msra.mxu0 0.0
  %812 = vmatprep.subr.mxu0 0.0
  %813 = vmatpush2.msra.mxu0 0.0
  %814 = vmatprep.subr.mxu0 0.0
  %815 = vmatpush2.msra.mxu0 0.0
  %816 = vmatprep.subr.mxu0 0.0
  %817 = vmatpush2.msra.mxu0 0.0
  %818 = vmatprep.subr.mxu0 0.0
  %819 = vmatpush2.msra.mxu0 0.0
  %820 = vmatprep.subr.mxu0 0.0
  %821 = vmatpush2.msra.mxu0 0.0
  %822 = vmatprep.subr.mxu0 0.0
  %823 = vmatpush2.msra.mxu0 0.0
  %824 = vmatprep.subr.mxu0 0.0
  %825 = vmatpush2.msra.mxu0 0.0
  %826 = vmatprep.subr.mxu0 0.0
  %827 = vmatpush2.msra.mxu0 0.0
  %828 = vmatprep.mubr.f32.mxu0 0.0
  %v829 = vand.u32 %v114, 4294901760
  %v830 = vsub.f32 %v114, %v829
  %v831 = vand.u32 %v830, 4294901760
  %832 = vmatmul.mubr.f32.gmra.mxu0 %v831
  %v833 = vpop.f32.mrf.mxu0
  %v834 = vadd.f32 %v652, %v833
  %v835 = vpop.f32.mrf.mxu0
  %836 = vmatprep.mubr.f32.mxu0 0.0
  %v837 = vand.u32 %v117, 4294901760
  %v838 = vsub.f32 %v117, %v837
  %v839 = vand.u32 %v838, 4294901760
  %840 = vmatmul.mubr.f32.gmra.mxu0 %v839
  %v841 = vpop.f32.mrf.mxu0
  %v842 = vadd.f32 %v659, %v841
  %v843 = vpop.f32.mrf.mxu0
  %844 = vmatprep.mubr.f32.mxu0 0.0
  %v845 = vand.u32 %v120, 4294901760
  %v846 = vsub.f32 %v120, %v845
  %v847 = vand.u32 %v846, 4294901760
  %848 = vmatmul.mubr.f32.gmra.mxu0 %v847
  %v849 = vpop.f32.mrf.mxu0
  %v850 = vadd.f32 %v666, %v849
  %v851 = vpop.f32.mrf.mxu0
  %852 = vmatprep.mubr.f32.mxu0 0.0
  %v853 = vand.u32 %v123, 4294901760
  %v854 = vsub.f32 %v123, %v853
  %v855 = vand.u32 %v854, 4294901760
  %856 = vmatmul.mubr.f32.gmra.mxu0 %v855
  %v857 = vpop.f32.mrf.mxu0
  %v858 = vadd.f32 %v673, %v857
  %v859 = vpop.f32.mrf.mxu0
  %860 = vmatprep.mubr.f32.mxu0 0.0
  %v861 = vand.u32 %v126, 4294901760
  %v862 = vsub.f32 %v126, %v861
  %v863 = vand.u32 %v862, 4294901760
  %864 = vmatmul.mubr.f32.gmra.mxu0 %v863
  %v865 = vpop.f32.mrf.mxu0
  %v866 = vadd.f32 %v680, %v865
  %v867 = vpop.f32.mrf.mxu0
  %868 = vmatprep.mubr.f32.mxu0 0.0
  %v869 = vand.u32 %v129, 4294901760
  %v870 = vsub.f32 %v129, %v869
  %v871 = vand.u32 %v870, 4294901760
  %872 = vmatmul.mubr.f32.gmra.mxu0 %v871
  %v873 = vpop.f32.mrf.mxu0
  %v874 = vadd.f32 %v687, %v873
  %v875 = vpop.f32.mrf.mxu0
  %876 = vmatprep.mubr.f32.mxu0 0.0
  %v877 = vand.u32 %v132, 4294901760
  %v878 = vsub.f32 %v132, %v877
  %v879 = vand.u32 %v878, 4294901760
  %880 = vmatmul.mubr.f32.gmra.mxu0 %v879
  %v881 = vpop.f32.mrf.mxu0
  %v882 = vadd.f32 %v694, %v881
  %v883 = vpop.f32.mrf.mxu0
  %884 = vmatprep.mubr.f32.mxu0 0.0
  %v885 = vand.u32 %v135, 4294901760
  %v886 = vsub.f32 %v135, %v885
  %v887 = vand.u32 %v886, 4294901760
  %888 = vmatmul.mubr.f32.gmra.mxu0 %v887
  %v889 = vpop.f32.mrf.mxu0
  %v890 = vadd.f32 %v701, %v889
  %v891 = vpop.f32.mrf.mxu0
  %892 = vmatprep.mubr.f32.mxu0 0.0
  %v893 = vand.u32 %v138, 4294901760
  %v894 = vsub.f32 %v138, %v893
  %v895 = vand.u32 %v894, 4294901760
  %896 = vmatmul.mubr.f32.gmra.mxu0 %v895
  %v897 = vpop.f32.mrf.mxu0
  %v898 = vadd.f32 %v708, %v897
  %v899 = vpop.f32.mrf.mxu0
  %900 = vmatprep.mubr.f32.mxu0 0.0
  %v901 = vand.u32 %v141, 4294901760
  %v902 = vsub.f32 %v141, %v901
  %v903 = vand.u32 %v902, 4294901760
  %904 = vmatmul.mubr.f32.gmra.mxu0 %v903
  %v905 = vpop.f32.mrf.mxu0
  %v906 = vadd.f32 %v715, %v905
  %v907 = vpop.f32.mrf.mxu0
  %908 = vmatprep.mubr.f32.mxu0 0.0
  %v909 = vand.u32 %v144, 4294901760
  %v910 = vsub.f32 %v144, %v909
  %v911 = vand.u32 %v910, 4294901760
  %912 = vmatmul.mubr.f32.gmra.mxu0 %v911
  %v913 = vpop.f32.mrf.mxu0
  %v914 = vadd.f32 %v722, %v913
  %v915 = vpop.f32.mrf.mxu0
  %916 = vmatprep.mubr.f32.mxu0 0.0
  %v917 = vand.u32 %v147, 4294901760
  %v918 = vsub.f32 %v147, %v917
  %v919 = vand.u32 %v918, 4294901760
  %920 = vmatmul.mubr.f32.gmra.mxu0 %v919
  %v921 = vpop.f32.mrf.mxu0
  %v922 = vadd.f32 %v729, %v921
  %v923 = vpop.f32.mrf.mxu0
  %924 = vmatprep.mubr.f32.mxu0 0.0
  %v925 = vand.u32 %v150, 4294901760
  %v926 = vsub.f32 %v150, %v925
  %v927 = vand.u32 %v926, 4294901760
  %928 = vmatmul.mubr.f32.gmra.mxu0 %v927
  %v929 = vpop.f32.mrf.mxu0
  %v930 = vadd.f32 %v736, %v929
  %v931 = vpop.f32.mrf.mxu0
  %932 = vmatprep.mubr.f32.mxu0 0.0
  %v933 = vand.u32 %v153, 4294901760
  %v934 = vsub.f32 %v153, %v933
  %v935 = vand.u32 %v934, 4294901760
  %936 = vmatmul.mubr.f32.gmra.mxu0 %v935
  %v937 = vpop.f32.mrf.mxu0
  %v938 = vadd.f32 %v743, %v937
  %v939 = vpop.f32.mrf.mxu0
  %940 = vmatprep.mubr.f32.mxu0 0.0
  %v941 = vand.u32 %v156, 4294901760
  %v942 = vsub.f32 %v156, %v941
  %v943 = vand.u32 %v942, 4294901760
  %944 = vmatmul.mubr.f32.gmra.mxu0 %v943
  %v945 = vpop.f32.mrf.mxu0
  %v946 = vadd.f32 %v750, %v945
  %v947 = vpop.f32.mrf.mxu0
  %948 = vmatprep.mubr.f32.mxu0 0.0
  %v949 = vand.u32 %v159, 4294901760
  %v950 = vsub.f32 %v159, %v949
  %v951 = vand.u32 %v950, 4294901760
  %952 = vmatmul.mubr.f32.gmra.mxu0 %v951
  %v953 = vpop.f32.mrf.mxu0
  %v954 = vadd.f32 %v757, %v953
  %v955 = vpop.f32.mrf.mxu0
  %956 = vdwg.mxu0
  %957 = vmatprep.subr.mxu0 0.0
  %958 = vmatpush1.msra.mxu0 0.0
  %959 = vmatprep.subr.mxu0 0.0
  %960 = vmatpush1.msra.mxu0 0.0
  %961 = vmatprep.subr.mxu0 0.0
  %962 = vmatpush1.msra.mxu0 0.0
  %963 = vmatprep.subr.mxu0 0.0
  %964 = vmatpush1.msra.mxu0 0.0
  %965 = vmatprep.subr.mxu0 0.0
  %966 = vmatpush1.msra.mxu0 0.0
  %967 = vmatprep.subr.mxu0 0.0
  %968 = vmatpush1.msra.mxu0 0.0
  %969 = vmatprep.subr.mxu0 0.0
  %970 = vmatpush1.msra.mxu0 0.0
  %971 = vmatprep.subr.mxu0 0.0
  %972 = vmatpush1.msra.mxu0 0.0
  %973 = vmatprep.subr.mxu0 0.0
  %974 = vmatpush1.msra.mxu0 0.0
  %975 = vmatprep.subr.mxu0 0.0
  %976 = vmatpush1.msra.mxu0 0.0
  %977 = vmatprep.subr.mxu0 0.0
  %978 = vmatpush1.msra.mxu0 0.0
  %979 = vmatprep.subr.mxu0 0.0
  %980 = vmatpush1.msra.mxu0 0.0
  %981 = vmatprep.subr.mxu0 0.0
  %v982 = vand.u32 %v163, 4294901760
  %v983 = vsub.f32 %v163, %v982
  %v984 = vand.u32 %v983, 4294901760
  %985 = vmatpush1.msra.mxu0 %v984
  %986 = vmatprep.subr.mxu0 0.0
  %v987 = vand.u32 %v103, 4294901760
  %v988 = vsub.f32 %v103, %v987
  %v989 = vand.u32 %v988, 4294901760
  %990 = vmatpush1.msra.mxu0 %v989
  %991 = vmatprep.subr.mxu0 0.0
  %v992 = vand.u32 %v102, 4294901760
  %v993 = vsub.f32 %v102, %v992
  %v994 = vand.u32 %v993, 4294901760
  %995 = vmatpush1.msra.mxu0 %v994
  %996 = vmatprep.subr.mxu0 0.0
  %v997 = vand.u32 %v101, 4294901760
  %v998 = vsub.f32 %v101, %v997
  %v999 = vand.u32 %v998, 4294901760
  %1000 = vmatpush1.msra.mxu0 %v999
  %1001 = vmatprep.subr.mxu0 0.0
  %1002 = vmatpush2.msra.mxu0 0.0
  %1003 = vmatprep.subr.mxu0 0.0
  %1004 = vmatpush2.msra.mxu0 0.0
  %1005 = vmatprep.subr.mxu0 0.0
  %1006 = vmatpush2.msra.mxu0 0.0
  %1007 = vmatprep.subr.mxu0 0.0
  %1008 = vmatpush2.msra.mxu0 0.0
  %1009 = vmatprep.subr.mxu0 0.0
  %1010 = vmatpush2.msra.mxu0 0.0
  %1011 = vmatprep.subr.mxu0 0.0
  %1012 = vmatpush2.msra.mxu0 0.0
  %1013 = vmatprep.subr.mxu0 0.0
  %1014 = vmatpush2.msra.mxu0 0.0
  %1015 = vmatprep.subr.mxu0 0.0
  %1016 = vmatpush2.msra.mxu0 0.0
  %1017 = vmatprep.subr.mxu0 0.0
  %1018 = vmatpush2.msra.mxu0 0.0
  %1019 = vmatprep.subr.mxu0 0.0
  %1020 = vmatpush2.msra.mxu0 0.0
  %1021 = vmatprep.subr.mxu0 0.0
  %1022 = vmatpush2.msra.mxu0 0.0
  %1023 = vmatprep.subr.mxu0 0.0
  %1024 = vmatpush2.msra.mxu0 0.0
  %1025 = vmatprep.subr.mxu0 0.0
  %1026 = vmatpush2.msra.mxu0 0.0
  %1027 = vmatprep.subr.mxu0 0.0
  %1028 = vmatpush2.msra.mxu0 0.0
  %1029 = vmatprep.subr.mxu0 0.0
  %1030 = vmatpush2.msra.mxu0 0.0
  %1031 = vmatprep.subr.mxu0 0.0
  %1032 = vmatpush2.msra.mxu0 0.0
  %1033 = vmatprep.mubr.f32.mxu0 0.0
  %v1034 = vand.u32 %v114, 4294901760
  %1035 = vmatmul.mubr.f32.gmra.mxu0 %v1034
  %v1036 = vpop.f32.mrf.mxu0
  %v1037 = vadd.f32 %v834, %v1036
  %v1038 = vpop.f32.mrf.mxu0
  %1039 = vmatprep.mubr.f32.mxu0 0.0
  %v1040 = vand.u32 %v117, 4294901760
  %1041 = vmatmul.mubr.f32.gmra.mxu0 %v1040
  %v1042 = vpop.f32.mrf.mxu0
  %v1043 = vadd.f32 %v842, %v1042
  %v1044 = vpop.f32.mrf.mxu0
  %1045 = vmatprep.mubr.f32.mxu0 0.0
  %v1046 = vand.u32 %v120, 4294901760
  %1047 = vmatmul.mubr.f32.gmra.mxu0 %v1046
  %v1048 = vpop.f32.mrf.mxu0
  %v1049 = vadd.f32 %v850, %v1048
  %v1050 = vpop.f32.mrf.mxu0
  %1051 = vmatprep.mubr.f32.mxu0 0.0
  %v1052 = vand.u32 %v123, 4294901760
  %1053 = vmatmul.mubr.f32.gmra.mxu0 %v1052
  %v1054 = vpop.f32.mrf.mxu0
  %v1055 = vadd.f32 %v858, %v1054
  %v1056 = vpop.f32.mrf.mxu0
  %1057 = vmatprep.mubr.f32.mxu0 0.0
  %v1058 = vand.u32 %v126, 4294901760
  %1059 = vmatmul.mubr.f32.gmra.mxu0 %v1058
  %v1060 = vpop.f32.mrf.mxu0
  %v1061 = vadd.f32 %v866, %v1060
  %v1062 = vpop.f32.mrf.mxu0
  %1063 = vmatprep.mubr.f32.mxu0 0.0
  %v1064 = vand.u32 %v129, 4294901760
  %1065 = vmatmul.mubr.f32.gmra.mxu0 %v1064
  %v1066 = vpop.f32.mrf.mxu0
  %v1067 = vadd.f32 %v874, %v1066
  %v1068 = vpop.f32.mrf.mxu0
  %1069 = vmatprep.mubr.f32.mxu0 0.0
  %v1070 = vand.u32 %v132, 4294901760
  %1071 = vmatmul.mubr.f32.gmra.mxu0 %v1070
  %v1072 = vpop.f32.mrf.mxu0
  %v1073 = vadd.f32 %v882, %v1072
  %v1074 = vpop.f32.mrf.mxu0
  %1075 = vmatprep.mubr.f32.mxu0 0.0
  %v1076 = vand.u32 %v135, 4294901760
  %1077 = vmatmul.mubr.f32.gmra.mxu0 %v1076
  %v1078 = vpop.f32.mrf.mxu0
  %v1079 = vadd.f32 %v890, %v1078
  %v1080 = vpop.f32.mrf.mxu0
  %1081 = vmatprep.mubr.f32.mxu0 0.0
  %v1082 = vand.u32 %v138, 4294901760
  %1083 = vmatmul.mubr.f32.gmra.mxu0 %v1082
  %v1084 = vpop.f32.mrf.mxu0
  %v1085 = vadd.f32 %v898, %v1084
  %v1086 = vpop.f32.mrf.mxu0
  %1087 = vmatprep.mubr.f32.mxu0 0.0
  %v1088 = vand.u32 %v141, 4294901760
  %1089 = vmatmul.mubr.f32.gmra.mxu0 %v1088
  %v1090 = vpop.f32.mrf.mxu0
  %v1091 = vadd.f32 %v906, %v1090
  %v1092 = vpop.f32.mrf.mxu0
  %1093 = vmatprep.mubr.f32.mxu0 0.0
  %v1094 = vand.u32 %v144, 4294901760
  %1095 = vmatmul.mubr.f32.gmra.mxu0 %v1094
  %v1096 = vpop.f32.mrf.mxu0
  %v1097 = vadd.f32 %v914, %v1096
  %v1098 = vpop.f32.mrf.mxu0
  %1099 = vmatprep.mubr.f32.mxu0 0.0
  %v1100 = vand.u32 %v147, 4294901760
  %1101 = vmatmul.mubr.f32.gmra.mxu0 %v1100
  %v1102 = vpop.f32.mrf.mxu0
  %v1103 = vadd.f32 %v922, %v1102
  %v1104 = vpop.f32.mrf.mxu0
  %1105 = vmatprep.mubr.f32.mxu0 0.0
  %v1106 = vand.u32 %v150, 4294901760
  %1107 = vmatmul.mubr.f32.gmra.mxu0 %v1106
  %v1108 = vpop.f32.mrf.mxu0
  %v1109 = vadd.f32 %v930, %v1108
  %v1110 = vpop.f32.mrf.mxu0
  %1111 = vmatprep.mubr.f32.mxu0 0.0
  %v1112 = vand.u32 %v153, 4294901760
  %1113 = vmatmul.mubr.f32.gmra.mxu0 %v1112
  %v1114 = vpop.f32.mrf.mxu0
  %v1115 = vadd.f32 %v938, %v1114
  %v1116 = vpop.f32.mrf.mxu0
  %1117 = vmatprep.mubr.f32.mxu0 0.0
  %v1118 = vand.u32 %v156, 4294901760
  %1119 = vmatmul.mubr.f32.gmra.mxu0 %v1118
  %v1120 = vpop.f32.mrf.mxu0
  %v1121 = vadd.f32 %v946, %v1120
  %v1122 = vpop.f32.mrf.mxu0
  %1123 = vmatprep.mubr.f32.mxu0 0.0
  %v1124 = vand.u32 %v159, 4294901760
  %1125 = vmatmul.mubr.f32.gmra.mxu0 %v1124
  %v1126 = vpop.f32.mrf.mxu0
  %v1127 = vadd.f32 %v954, %v1126
  %v1128 = vpop.f32.mrf.mxu0
  %1129 = vdwg.mxu0
  %1130 = vmatprep.subr.mxu0 0.0
  %1131 = vmatpush1.msra.mxu0 0.0
  %1132 = vmatprep.subr.mxu0 0.0
  %1133 = vmatpush1.msra.mxu0 0.0
  %1134 = vmatprep.subr.mxu0 0.0
  %1135 = vmatpush1.msra.mxu0 0.0
  %1136 = vmatprep.subr.mxu0 0.0
  %1137 = vmatpush1.msra.mxu0 0.0
  %1138 = vmatprep.subr.mxu0 0.0
  %1139 = vmatpush1.msra.mxu0 0.0
  %1140 = vmatprep.subr.mxu0 0.0
  %1141 = vmatpush1.msra.mxu0 0.0
  %1142 = vmatprep.subr.mxu0 0.0
  %1143 = vmatpush1.msra.mxu0 0.0
  %1144 = vmatprep.subr.mxu0 0.0
  %1145 = vmatpush1.msra.mxu0 0.0
  %1146 = vmatprep.subr.mxu0 0.0
  %1147 = vmatpush1.msra.mxu0 0.0
  %1148 = vmatprep.subr.mxu0 0.0
  %1149 = vmatpush1.msra.mxu0 0.0
  %1150 = vmatprep.subr.mxu0 0.0
  %1151 = vmatpush1.msra.mxu0 0.0
  %1152 = vmatprep.subr.mxu0 0.0
  %1153 = vmatpush1.msra.mxu0 0.0
  %1154 = vmatprep.subr.mxu0 0.0
  %v1155 = vand.u32 %v163, 4294901760
  %1156 = vmatpush1.msra.mxu0 %v1155
  %1157 = vmatprep.subr.mxu0 0.0
  %v1158 = vand.u32 %v103, 4294901760
  %1159 = vmatpush1.msra.mxu0 %v1158
  %1160 = vmatprep.subr.mxu0 0.0
  %v1161 = vand.u32 %v102, 4294901760
  %1162 = vmatpush1.msra.mxu0 %v1161
  %1163 = vmatprep.subr.mxu0 0.0
  %v1164 = vand.u32 %v101, 4294901760
  %1165 = vmatpush1.msra.mxu0 %v1164
  %1166 = vmatprep.subr.mxu0 0.0
  %1167 = vmatpush2.msra.mxu0 0.0
  %1168 = vmatprep.subr.mxu0 0.0
  %1169 = vmatpush2.msra.mxu0 0.0
  %1170 = vmatprep.subr.mxu0 0.0
  %1171 = vmatpush2.msra.mxu0 0.0
  %1172 = vmatprep.subr.mxu0 0.0
  %1173 = vmatpush2.msra.mxu0 0.0
  %1174 = vmatprep.subr.mxu0 0.0
  %1175 = vmatpush2.msra.mxu0 0.0
  %1176 = vmatprep.subr.mxu0 0.0
  %1177 = vmatpush2.msra.mxu0 0.0
  %1178 = vmatprep.subr.mxu0 0.0
  %1179 = vmatpush2.msra.mxu0 0.0
  %1180 = vmatprep.subr.mxu0 0.0
  %1181 = vmatpush2.msra.mxu0 0.0
  %1182 = vmatprep.subr.mxu0 0.0
  %1183 = vmatpush2.msra.mxu0 0.0
  %1184 = vmatprep.subr.mxu0 0.0
  %1185 = vmatpush2.msra.mxu0 0.0
  %1186 = vmatprep.subr.mxu0 0.0
  %1187 = vmatpush2.msra.mxu0 0.0
  %1188 = vmatprep.subr.mxu0 0.0
  %1189 = vmatpush2.msra.mxu0 0.0
  %1190 = vmatprep.subr.mxu0 0.0
  %1191 = vmatpush2.msra.mxu0 0.0
  %1192 = vmatprep.subr.mxu0 0.0
  %1193 = vmatpush2.msra.mxu0 0.0
  %1194 = vmatprep.subr.mxu0 0.0
  %1195 = vmatpush2.msra.mxu0 0.0
  %1196 = vmatprep.subr.mxu0 0.0
  %1197 = vmatpush2.msra.mxu0 0.0
  %1198 = vmatprep.mubr.f32.mxu0 0.0
  %v1199 = vand.u32 %v114, 4294901760
  %1200 = vmatmul.mubr.f32.gmra.mxu0 %v1199
  %v1201 = vpop.f32.mrf.mxu0
  %v1202 = vadd.f32 %v1037, %v1201
  %v1203 = vpop.f32.mrf.mxu0
  %1204 = vmatprep.mubr.f32.mxu0 0.0
  %v1205 = vand.u32 %v117, 4294901760
  %1206 = vmatmul.mubr.f32.gmra.mxu0 %v1205
  %v1207 = vpop.f32.mrf.mxu0
  %v1208 = vadd.f32 %v1043, %v1207
  %v1209 = vpop.f32.mrf.mxu0
  %1210 = vmatprep.mubr.f32.mxu0 0.0
  %v1211 = vand.u32 %v120, 4294901760
  %1212 = vmatmul.mubr.f32.gmra.mxu0 %v1211
  %v1213 = vpop.f32.mrf.mxu0
  %v1214 = vadd.f32 %v1049, %v1213
  %v1215 = vpop.f32.mrf.mxu0
  %1216 = vmatprep.mubr.f32.mxu0 0.0
  %v1217 = vand.u32 %v123, 4294901760
  %1218 = vmatmul.mubr.f32.gmra.mxu0 %v1217
  %v1219 = vpop.f32.mrf.mxu0
  %v1220 = vadd.f32 %v1055, %v1219
  %v1221 = vpop.f32.mrf.mxu0
  %1222 = vmatprep.mubr.f32.mxu0 0.0
  %v1223 = vand.u32 %v126, 4294901760
  %1224 = vmatmul.mubr.f32.gmra.mxu0 %v1223
  %v1225 = vpop.f32.mrf.mxu0
  %v1226 = vadd.f32 %v1061, %v1225
  %v1227 = vpop.f32.mrf.mxu0
  %1228 = vmatprep.mubr.f32.mxu0 0.0
  %v1229 = vand.u32 %v129, 4294901760
  %1230 = vmatmul.mubr.f32.gmra.mxu0 %v1229
  %v1231 = vpop.f32.mrf.mxu0
  %v1232 = vadd.f32 %v1067, %v1231
  %v1233 = vpop.f32.mrf.mxu0
  %1234 = vmatprep.mubr.f32.mxu0 0.0
  %v1235 = vand.u32 %v132, 4294901760
  %1236 = vmatmul.mubr.f32.gmra.mxu0 %v1235
  %v1237 = vpop.f32.mrf.mxu0
  %v1238 = vadd.f32 %v1073, %v1237
  %v1239 = vpop.f32.mrf.mxu0
  %1240 = vmatprep.mubr.f32.mxu0 0.0
  %v1241 = vand.u32 %v135, 4294901760
  %1242 = vmatmul.mubr.f32.gmra.mxu0 %v1241
  %v1243 = vpop.f32.mrf.mxu0
  %v1244 = vadd.f32 %v1079, %v1243
  %v1245 = vpop.f32.mrf.mxu0
  %1246 = vmatprep.mubr.f32.mxu0 0.0
  %v1247 = vand.u32 %v138, 4294901760
  %1248 = vmatmul.mubr.f32.gmra.mxu0 %v1247
  %v1249 = vpop.f32.mrf.mxu0
  %v1250 = vadd.f32 %v1085, %v1249
  %v1251 = vpop.f32.mrf.mxu0
  %1252 = vmatprep.mubr.f32.mxu0 0.0
  %v1253 = vand.u32 %v141, 4294901760
  %1254 = vmatmul.mubr.f32.gmra.mxu0 %v1253
  %v1255 = vpop.f32.mrf.mxu0
  %v1256 = vadd.f32 %v1091, %v1255
  %v1257 = vpop.f32.mrf.mxu0
  %1258 = vmatprep.mubr.f32.mxu0 0.0
  %v1259 = vand.u32 %v144, 4294901760
  %1260 = vmatmul.mubr.f32.gmra.mxu0 %v1259
  %v1261 = vpop.f32.mrf.mxu0
  %v1262 = vadd.f32 %v1097, %v1261
  %v1263 = vpop.f32.mrf.mxu0
  %1264 = vmatprep.mubr.f32.mxu0 0.0
  %v1265 = vand.u32 %v147, 4294901760
  %1266 = vmatmul.mubr.f32.gmra.mxu0 %v1265
  %v1267 = vpop.f32.mrf.mxu0
  %v1268 = vadd.f32 %v1103, %v1267
  %v1269 = vpop.f32.mrf.mxu0
  %1270 = vmatprep.mubr.f32.mxu0 0.0
  %v1271 = vand.u32 %v150, 4294901760
  %1272 = vmatmul.mubr.f32.gmra.mxu0 %v1271
  %v1273 = vpop.f32.mrf.mxu0
  %v1274 = vadd.f32 %v1109, %v1273
  %v1275 = vpop.f32.mrf.mxu0
  %1276 = vmatprep.mubr.f32.mxu0 0.0
  %v1277 = vand.u32 %v153, 4294901760
  %1278 = vmatmul.mubr.f32.gmra.mxu0 %v1277
  %v1279 = vpop.f32.mrf.mxu0
  %v1280 = vadd.f32 %v1115, %v1279
  %v1281 = vpop.f32.mrf.mxu0
  %1282 = vmatprep.mubr.f32.mxu0 0.0
  %v1283 = vand.u32 %v156, 4294901760
  %1284 = vmatmul.mubr.f32.gmra.mxu0 %v1283
  %v1285 = vpop.f32.mrf.mxu0
  %v1286 = vadd.f32 %v1121, %v1285
  %v1287 = vpop.f32.mrf.mxu0
  %1288 = vmatprep.mubr.f32.mxu0 0.0
  %v1289 = vand.u32 %v159, 4294901760
  %1290 = vmatmul.mubr.f32.gmra.mxu0 %v1289
  %v1291 = vpop.f32.mrf.mxu0
  %v1292 = vadd.f32 %v1127, %v1291
  %v1293 = vpop.f32.mrf.mxu0
  %1294 = vdwg.mxu0
  %v1295 = vmax.f32 %v1202, 0.0
  %v1296 = vmax.f32 %v1208, 0.0
  %v1297 = vmax.f32 %v1214, 0.0
  %v1298 = vmax.f32 %v1220, 0.0
  %v1299 = vmax.f32 %v1226, 0.0
  %v1300 = vmax.f32 %v1232, 0.0
  %v1301 = vmax.f32 %v1238, 0.0
  %v1302 = vmax.f32 %v1244, 0.0
  %v1303 = vmax.f32 %v1250, 0.0
  %v1304 = vmax.f32 %v1256, 0.0
  %v1305 = vmax.f32 %v1262, 0.0
  %v1306 = vmax.f32 %v1268, 0.0
  %v1307 = vmax.f32 %v1274, 0.0
  %v1308 = vmax.f32 %v1280, 0.0
  %v1309 = vmax.f32 %v1286, 0.0
  %v1310 = vmax.f32 %v1292, 0.0
  %v1311 = vld [vmem:[%s4] sm:$0xff]
  %v1312 = vld [vmem:[%s4 + $0x8] sm:$0xff]
  %v1313 = vld [vmem:[%s4 + $0x10] sm:$0xff]
  %v1314 = vld [vmem:[%s4 + $0x18] sm:$0xff]
  %v1315 = vld [vmem:[%s4 + $0x20] sm:$0xff]
  %v1316 = vld [vmem:[%s4 + $0x28] sm:$0xff]
  %v1317 = vld [vmem:[%s4 + $0x30] sm:$0xff]
  %v1318 = vld [vmem:[%s4 + $0x38] sm:$0xff]
  %v1319 = vld [vmem:[%s5] sm:$0x1]
  %v1321 = vlaneseq
  %v1322 = vshrl.u32 %v1321, 7
  %v1323 = vsub.s32 0, %v1322
  %v1324 = vrot.slane %v1319, %v1323
  %vm1326 = vcmask 523264
  %v1328 = vsel %vm1326, %v1295, 0
  %v1331 = vsel %vm1326, %v1296, 0
  %v1334 = vsel %vm1326, %v1297, 0
  %v1337 = vsel %vm1326, %v1298, 0
  %v1340 = vsel %vm1326, %v1299, 0
  %v1343 = vsel %vm1326, %v1300, 0
  %v1346 = vsel %vm1326, %v1301, 0
  %v1349 = vsel %vm1326, %v1302, 0
  %v1352 = vsel %vm1326, %v1303, 0
  %v1355 = vsel %vm1326, %v1304, 0
  %v1358 = vsel %vm1326, %v1305, 0
  %v1361 = vsel %vm1326, %v1306, 0
  %v1364 = vsel %vm1326, %v1307, 0
  %v1367 = vsel %vm1326, %v1308, 0
  %v1370 = vsel %vm1326, %v1309, 0
  %v1373 = vsel %vm1326, %v1310, 0
  %1375 = vmatprep.subr.mxu0 0.0
  %1376 = vmatpush1.msra.mxu0 0.0
  %1377 = vmatprep.subr.mxu0 0.0
  %1378 = vmatpush1.msra.mxu0 0.0
  %1379 = vmatprep.subr.mxu0 0.0
  %1380 = vmatpush1.msra.mxu0 0.0
  %1381 = vmatprep.subr.mxu0 0.0
  %1382 = vmatpush1.msra.mxu0 0.0
  %1383 = vmatprep.subr.mxu0 0.0
  %1384 = vmatpush1.msra.mxu0 0.0
  %1385 = vmatprep.subr.mxu0 0.0
  %1386 = vmatpush1.msra.mxu0 0.0
  %1387 = vmatprep.subr.mxu0 0.0
  %1388 = vmatpush1.msra.mxu0 0.0
  %1389 = vmatprep.subr.mxu0 0.0
  %1390 = vmatpush1.msra.mxu0 0.0
  %1391 = vmatprep.subr.mxu0 0.0
  %v1392 = vand.u32 %v1318, 4294901760
  %1393 = vmatpush1.msra.mxu0 %v1392
  %1394 = vmatprep.subr.mxu0 0.0
  %v1395 = vand.u32 %v1317, 4294901760
  %1396 = vmatpush1.msra.mxu0 %v1395
  %1397 = vmatprep.subr.mxu0 0.0
  %v1398 = vand.u32 %v1316, 4294901760
  %1399 = vmatpush1.msra.mxu0 %v1398
  %1400 = vmatprep.subr.mxu0 0.0
  %v1401 = vand.u32 %v1315, 4294901760
  %1402 = vmatpush1.msra.mxu0 %v1401
  %1403 = vmatprep.subr.mxu0 0.0
  %v1404 = vand.u32 %v1314, 4294901760
  %1405 = vmatpush1.msra.mxu0 %v1404
  %1406 = vmatprep.subr.mxu0 0.0
  %v1407 = vand.u32 %v1313, 4294901760
  %1408 = vmatpush1.msra.mxu0 %v1407
  %1409 = vmatprep.subr.mxu0 0.0
  %v1410 = vand.u32 %v1312, 4294901760
  %1411 = vmatpush1.msra.mxu0 %v1410
  %1412 = vmatprep.subr.mxu0 0.0
  %v1413 = vand.u32 %v1311, 4294901760
  %1414 = vmatpush1.msra.mxu0 %v1413
  %1415 = vmatprep.subr.mxu0 0.0
  %1416 = vmatpush2.msra.mxu0 0.0
  %1417 = vmatprep.subr.mxu0 0.0
  %1418 = vmatpush2.msra.mxu0 0.0
  %1419 = vmatprep.subr.mxu0 0.0
  %1420 = vmatpush2.msra.mxu0 0.0
  %1421 = vmatprep.subr.mxu0 0.0
  %1422 = vmatpush2.msra.mxu0 0.0
  %1423 = vmatprep.subr.mxu0 0.0
  %1424 = vmatpush2.msra.mxu0 0.0
  %1425 = vmatprep.subr.mxu0 0.0
  %1426 = vmatpush2.msra.mxu0 0.0
  %1427 = vmatprep.subr.mxu0 0.0
  %1428 = vmatpush2.msra.mxu0 0.0
  %1429 = vmatprep.subr.mxu0 0.0
  %1430 = vmatpush2.msra.mxu0 0.0
  %1431 = vmatprep.subr.mxu0 0.0
  %1432 = vmatpush2.msra.mxu0 0.0
  %1433 = vmatprep.subr.mxu0 0.0
  %1434 = vmatpush2.msra.mxu0 0.0
  %1435 = vmatprep.subr.mxu0 0.0
  %1436 = vmatpush2.msra.mxu0 0.0
  %1437 = vmatprep.subr.mxu0 0.0
  %1438 = vmatpush2.msra.mxu0 0.0
  %1439 = vmatprep.subr.mxu0 0.0
  %1440 = vmatpush2.msra.mxu0 0.0
  %1441 = vmatprep.subr.mxu0 0.0
  %1442 = vmatpush2.msra.mxu0 0.0
  %1443 = vmatprep.subr.mxu0 0.0
  %1444 = vmatpush2.msra.mxu0 0.0
  %1445 = vmatprep.subr.mxu0 0.0
  %1446 = vmatpush2.msra.mxu0 0.0
  %1447 = vmatprep.mubr.f32.mxu0 0.0
  %v1448 = vand.u32 %v1328, 4294901760
  %v1449 = vsub.f32 %v1328, %v1448
  %v1450 = vand.u32 %v1449, 4294901760
  %v1451 = vsub.f32 %v1449, %v1450
  %v1452 = vand.u32 %v1451, 4294901760
  %1453 = vmatmul.mubr.f32.gmra.mxu0 %v1452
  %v1454 = vpop.f32.mrf.mxu0
  %v1455 = vadd.f32 %v1324, %v1454
  %v1456 = vpop.f32.mrf.mxu0
  %1457 = vmatprep.mubr.f32.mxu0 0.0
  %v1458 = vand.u32 %v1331, 4294901760
  %v1459 = vsub.f32 %v1331, %v1458
  %v1460 = vand.u32 %v1459, 4294901760
  %v1461 = vsub.f32 %v1459, %v1460
  %v1462 = vand.u32 %v1461, 4294901760
  %1463 = vmatmul.mubr.f32.gmra.mxu0 %v1462
  %v1464 = vpop.f32.mrf.mxu0
  %v1465 = vadd.f32 %v1324, %v1464
  %v1466 = vpop.f32.mrf.mxu0
  %1467 = vmatprep.mubr.f32.mxu0 0.0
  %v1468 = vand.u32 %v1334, 4294901760
  %v1469 = vsub.f32 %v1334, %v1468
  %v1470 = vand.u32 %v1469, 4294901760
  %v1471 = vsub.f32 %v1469, %v1470
  %v1472 = vand.u32 %v1471, 4294901760
  %1473 = vmatmul.mubr.f32.gmra.mxu0 %v1472
  %v1474 = vpop.f32.mrf.mxu0
  %v1475 = vadd.f32 %v1324, %v1474
  %v1476 = vpop.f32.mrf.mxu0
  %1477 = vmatprep.mubr.f32.mxu0 0.0
  %v1478 = vand.u32 %v1337, 4294901760
  %v1479 = vsub.f32 %v1337, %v1478
  %v1480 = vand.u32 %v1479, 4294901760
  %v1481 = vsub.f32 %v1479, %v1480
  %v1482 = vand.u32 %v1481, 4294901760
  %1483 = vmatmul.mubr.f32.gmra.mxu0 %v1482
  %v1484 = vpop.f32.mrf.mxu0
  %v1485 = vadd.f32 %v1324, %v1484
  %v1486 = vpop.f32.mrf.mxu0
  %1487 = vmatprep.mubr.f32.mxu0 0.0
  %v1488 = vand.u32 %v1340, 4294901760
  %v1489 = vsub.f32 %v1340, %v1488
  %v1490 = vand.u32 %v1489, 4294901760
  %v1491 = vsub.f32 %v1489, %v1490
  %v1492 = vand.u32 %v1491, 4294901760
  %1493 = vmatmul.mubr.f32.gmra.mxu0 %v1492
  %v1494 = vpop.f32.mrf.mxu0
  %v1495 = vadd.f32 %v1324, %v1494
  %v1496 = vpop.f32.mrf.mxu0
  %1497 = vmatprep.mubr.f32.mxu0 0.0
  %v1498 = vand.u32 %v1343, 4294901760
  %v1499 = vsub.f32 %v1343, %v1498
  %v1500 = vand.u32 %v1499, 4294901760
  %v1501 = vsub.f32 %v1499, %v1500
  %v1502 = vand.u32 %v1501, 4294901760
  %1503 = vmatmul.mubr.f32.gmra.mxu0 %v1502
  %v1504 = vpop.f32.mrf.mxu0
  %v1505 = vadd.f32 %v1324, %v1504
  %v1506 = vpop.f32.mrf.mxu0
  %1507 = vmatprep.mubr.f32.mxu0 0.0
  %v1508 = vand.u32 %v1346, 4294901760
  %v1509 = vsub.f32 %v1346, %v1508
  %v1510 = vand.u32 %v1509, 4294901760
  %v1511 = vsub.f32 %v1509, %v1510
  %v1512 = vand.u32 %v1511, 4294901760
  %1513 = vmatmul.mubr.f32.gmra.mxu0 %v1512
  %v1514 = vpop.f32.mrf.mxu0
  %v1515 = vadd.f32 %v1324, %v1514
  %v1516 = vpop.f32.mrf.mxu0
  %1517 = vmatprep.mubr.f32.mxu0 0.0
  %v1518 = vand.u32 %v1349, 4294901760
  %v1519 = vsub.f32 %v1349, %v1518
  %v1520 = vand.u32 %v1519, 4294901760
  %v1521 = vsub.f32 %v1519, %v1520
  %v1522 = vand.u32 %v1521, 4294901760
  %1523 = vmatmul.mubr.f32.gmra.mxu0 %v1522
  %v1524 = vpop.f32.mrf.mxu0
  %v1525 = vadd.f32 %v1324, %v1524
  %v1526 = vpop.f32.mrf.mxu0
  %1527 = vmatprep.mubr.f32.mxu0 0.0
  %v1528 = vand.u32 %v1352, 4294901760
  %v1529 = vsub.f32 %v1352, %v1528
  %v1530 = vand.u32 %v1529, 4294901760
  %v1531 = vsub.f32 %v1529, %v1530
  %v1532 = vand.u32 %v1531, 4294901760
  %1533 = vmatmul.mubr.f32.gmra.mxu0 %v1532
  %v1534 = vpop.f32.mrf.mxu0
  %v1535 = vadd.f32 %v1324, %v1534
  %v1536 = vpop.f32.mrf.mxu0
  %1537 = vmatprep.mubr.f32.mxu0 0.0
  %v1538 = vand.u32 %v1355, 4294901760
  %v1539 = vsub.f32 %v1355, %v1538
  %v1540 = vand.u32 %v1539, 4294901760
  %v1541 = vsub.f32 %v1539, %v1540
  %v1542 = vand.u32 %v1541, 4294901760
  %1543 = vmatmul.mubr.f32.gmra.mxu0 %v1542
  %v1544 = vpop.f32.mrf.mxu0
  %v1545 = vadd.f32 %v1324, %v1544
  %v1546 = vpop.f32.mrf.mxu0
  %1547 = vmatprep.mubr.f32.mxu0 0.0
  %v1548 = vand.u32 %v1358, 4294901760
  %v1549 = vsub.f32 %v1358, %v1548
  %v1550 = vand.u32 %v1549, 4294901760
  %v1551 = vsub.f32 %v1549, %v1550
  %v1552 = vand.u32 %v1551, 4294901760
  %1553 = vmatmul.mubr.f32.gmra.mxu0 %v1552
  %v1554 = vpop.f32.mrf.mxu0
  %v1555 = vadd.f32 %v1324, %v1554
  %v1556 = vpop.f32.mrf.mxu0
  %1557 = vmatprep.mubr.f32.mxu0 0.0
  %v1558 = vand.u32 %v1361, 4294901760
  %v1559 = vsub.f32 %v1361, %v1558
  %v1560 = vand.u32 %v1559, 4294901760
  %v1561 = vsub.f32 %v1559, %v1560
  %v1562 = vand.u32 %v1561, 4294901760
  %1563 = vmatmul.mubr.f32.gmra.mxu0 %v1562
  %v1564 = vpop.f32.mrf.mxu0
  %v1565 = vadd.f32 %v1324, %v1564
  %v1566 = vpop.f32.mrf.mxu0
  %1567 = vmatprep.mubr.f32.mxu0 0.0
  %v1568 = vand.u32 %v1364, 4294901760
  %v1569 = vsub.f32 %v1364, %v1568
  %v1570 = vand.u32 %v1569, 4294901760
  %v1571 = vsub.f32 %v1569, %v1570
  %v1572 = vand.u32 %v1571, 4294901760
  %1573 = vmatmul.mubr.f32.gmra.mxu0 %v1572
  %v1574 = vpop.f32.mrf.mxu0
  %v1575 = vadd.f32 %v1324, %v1574
  %v1576 = vpop.f32.mrf.mxu0
  %1577 = vmatprep.mubr.f32.mxu0 0.0
  %v1578 = vand.u32 %v1367, 4294901760
  %v1579 = vsub.f32 %v1367, %v1578
  %v1580 = vand.u32 %v1579, 4294901760
  %v1581 = vsub.f32 %v1579, %v1580
  %v1582 = vand.u32 %v1581, 4294901760
  %1583 = vmatmul.mubr.f32.gmra.mxu0 %v1582
  %v1584 = vpop.f32.mrf.mxu0
  %v1585 = vadd.f32 %v1324, %v1584
  %v1586 = vpop.f32.mrf.mxu0
  %1587 = vmatprep.mubr.f32.mxu0 0.0
  %v1588 = vand.u32 %v1370, 4294901760
  %v1589 = vsub.f32 %v1370, %v1588
  %v1590 = vand.u32 %v1589, 4294901760
  %v1591 = vsub.f32 %v1589, %v1590
  %v1592 = vand.u32 %v1591, 4294901760
  %1593 = vmatmul.mubr.f32.gmra.mxu0 %v1592
  %v1594 = vpop.f32.mrf.mxu0
  %v1595 = vadd.f32 %v1324, %v1594
  %v1596 = vpop.f32.mrf.mxu0
  %1597 = vmatprep.mubr.f32.mxu0 0.0
  %v1598 = vand.u32 %v1373, 4294901760
  %v1599 = vsub.f32 %v1373, %v1598
  %v1600 = vand.u32 %v1599, 4294901760
  %v1601 = vsub.f32 %v1599, %v1600
  %v1602 = vand.u32 %v1601, 4294901760
  %1603 = vmatmul.mubr.f32.gmra.mxu0 %v1602
  %v1604 = vpop.f32.mrf.mxu0
  %v1605 = vadd.f32 %v1324, %v1604
  %v1606 = vpop.f32.mrf.mxu0
  %1607 = vdwg.mxu0
  %1608 = vmatprep.subr.mxu0 0.0
  %1609 = vmatpush1.msra.mxu0 0.0
  %1610 = vmatprep.subr.mxu0 0.0
  %1611 = vmatpush1.msra.mxu0 0.0
  %1612 = vmatprep.subr.mxu0 0.0
  %1613 = vmatpush1.msra.mxu0 0.0
  %1614 = vmatprep.subr.mxu0 0.0
  %1615 = vmatpush1.msra.mxu0 0.0
  %1616 = vmatprep.subr.mxu0 0.0
  %1617 = vmatpush1.msra.mxu0 0.0
  %1618 = vmatprep.subr.mxu0 0.0
  %1619 = vmatpush1.msra.mxu0 0.0
  %1620 = vmatprep.subr.mxu0 0.0
  %1621 = vmatpush1.msra.mxu0 0.0
  %1622 = vmatprep.subr.mxu0 0.0
  %1623 = vmatpush1.msra.mxu0 0.0
  %1624 = vmatprep.subr.mxu0 0.0
  %v1625 = vand.u32 %v1318, 4294901760
  %v1626 = vsub.f32 %v1318, %v1625
  %v1627 = vand.u32 %v1626, 4294901760
  %v1628 = vsub.f32 %v1626, %v1627
  %v1629 = vand.u32 %v1628, 4294901760
  %1630 = vmatpush1.msra.mxu0 %v1629
  %1631 = vmatprep.subr.mxu0 0.0
  %v1632 = vand.u32 %v1317, 4294901760
  %v1633 = vsub.f32 %v1317, %v1632
  %v1634 = vand.u32 %v1633, 4294901760
  %v1635 = vsub.f32 %v1633, %v1634
  %v1636 = vand.u32 %v1635, 4294901760
  %1637 = vmatpush1.msra.mxu0 %v1636
  %1638 = vmatprep.subr.mxu0 0.0
  %v1639 = vand.u32 %v1316, 4294901760
  %v1640 = vsub.f32 %v1316, %v1639
  %v1641 = vand.u32 %v1640, 4294901760
  %v1642 = vsub.f32 %v1640, %v1641
  %v1643 = vand.u32 %v1642, 4294901760
  %1644 = vmatpush1.msra.mxu0 %v1643
  %1645 = vmatprep.subr.mxu0 0.0
  %v1646 = vand.u32 %v1315, 4294901760
  %v1647 = vsub.f32 %v1315, %v1646
  %v1648 = vand.u32 %v1647, 4294901760
  %v1649 = vsub.f32 %v1647, %v1648
  %v1650 = vand.u32 %v1649, 4294901760
  %1651 = vmatpush1.msra.mxu0 %v1650
  %1652 = vmatprep.subr.mxu0 0.0
  %v1653 = vand.u32 %v1314, 4294901760
  %v1654 = vsub.f32 %v1314, %v1653
  %v1655 = vand.u32 %v1654, 4294901760
  %v1656 = vsub.f32 %v1654, %v1655
  %v1657 = vand.u32 %v1656, 4294901760
  %1658 = vmatpush1.msra.mxu0 %v1657
  %1659 = vmatprep.subr.mxu0 0.0
  %v1660 = vand.u32 %v1313, 4294901760
  %v1661 = vsub.f32 %v1313, %v1660
  %v1662 = vand.u32 %v1661, 4294901760
  %v1663 = vsub.f32 %v1661, %v1662
  %v1664 = vand.u32 %v1663, 4294901760
  %1665 = vmatpush1.msra.mxu0 %v1664
  %1666 = vmatprep.subr.mxu0 0.0
  %v1667 = vand.u32 %v1312, 4294901760
  %v1668 = vsub.f32 %v1312, %v1667
  %v1669 = vand.u32 %v1668, 4294901760
  %v1670 = vsub.f32 %v1668, %v1669
  %v1671 = vand.u32 %v1670, 4294901760
  %1672 = vmatpush1.msra.mxu0 %v1671
  %1673 = vmatprep.subr.mxu0 0.0
  %v1674 = vand.u32 %v1311, 4294901760
  %v1675 = vsub.f32 %v1311, %v1674
  %v1676 = vand.u32 %v1675, 4294901760
  %v1677 = vsub.f32 %v1675, %v1676
  %v1678 = vand.u32 %v1677, 4294901760
  %1679 = vmatpush1.msra.mxu0 %v1678
  %1680 = vmatprep.subr.mxu0 0.0
  %1681 = vmatpush2.msra.mxu0 0.0
  %1682 = vmatprep.subr.mxu0 0.0
  %1683 = vmatpush2.msra.mxu0 0.0
  %1684 = vmatprep.subr.mxu0 0.0
  %1685 = vmatpush2.msra.mxu0 0.0
  %1686 = vmatprep.subr.mxu0 0.0
  %1687 = vmatpush2.msra.mxu0 0.0
  %1688 = vmatprep.subr.mxu0 0.0
  %1689 = vmatpush2.msra.mxu0 0.0
  %1690 = vmatprep.subr.mxu0 0.0
  %1691 = vmatpush2.msra.mxu0 0.0
  %1692 = vmatprep.subr.mxu0 0.0
  %1693 = vmatpush2.msra.mxu0 0.0
  %1694 = vmatprep.subr.mxu0 0.0
  %1695 = vmatpush2.msra.mxu0 0.0
  %1696 = vmatprep.subr.mxu0 0.0
  %1697 = vmatpush2.msra.mxu0 0.0
  %1698 = vmatprep.subr.mxu0 0.0
  %1699 = vmatpush2.msra.mxu0 0.0
  %1700 = vmatprep.subr.mxu0 0.0
  %1701 = vmatpush2.msra.mxu0 0.0
  %1702 = vmatprep.subr.mxu0 0.0
  %1703 = vmatpush2.msra.mxu0 0.0
  %1704 = vmatprep.subr.mxu0 0.0
  %1705 = vmatpush2.msra.mxu0 0.0
  %1706 = vmatprep.subr.mxu0 0.0
  %1707 = vmatpush2.msra.mxu0 0.0
  %1708 = vmatprep.subr.mxu0 0.0
  %1709 = vmatpush2.msra.mxu0 0.0
  %1710 = vmatprep.subr.mxu0 0.0
  %1711 = vmatpush2.msra.mxu0 0.0
  %1712 = vmatprep.mubr.f32.mxu0 0.0
  %v1713 = vand.u32 %v1328, 4294901760
  %1714 = vmatmul.mubr.f32.gmra.mxu0 %v1713
  %v1715 = vpop.f32.mrf.mxu0
  %v1716 = vadd.f32 %v1455, %v1715
  %v1717 = vpop.f32.mrf.mxu0
  %1718 = vmatprep.mubr.f32.mxu0 0.0
  %v1719 = vand.u32 %v1331, 4294901760
  %1720 = vmatmul.mubr.f32.gmra.mxu0 %v1719
  %v1721 = vpop.f32.mrf.mxu0
  %v1722 = vadd.f32 %v1465, %v1721
  %v1723 = vpop.f32.mrf.mxu0
  %1724 = vmatprep.mubr.f32.mxu0 0.0
  %v1725 = vand.u32 %v1334, 4294901760
  %1726 = vmatmul.mubr.f32.gmra.mxu0 %v1725
  %v1727 = vpop.f32.mrf.mxu0
  %v1728 = vadd.f32 %v1475, %v1727
  %v1729 = vpop.f32.mrf.mxu0
  %1730 = vmatprep.mubr.f32.mxu0 0.0
  %v1731 = vand.u32 %v1337, 4294901760
  %1732 = vmatmul.mubr.f32.gmra.mxu0 %v1731
  %v1733 = vpop.f32.mrf.mxu0
  %v1734 = vadd.f32 %v1485, %v1733
  %v1735 = vpop.f32.mrf.mxu0
  %1736 = vmatprep.mubr.f32.mxu0 0.0
  %v1737 = vand.u32 %v1340, 4294901760
  %1738 = vmatmul.mubr.f32.gmra.mxu0 %v1737
  %v1739 = vpop.f32.mrf.mxu0
  %v1740 = vadd.f32 %v1495, %v1739
  %v1741 = vpop.f32.mrf.mxu0
  %1742 = vmatprep.mubr.f32.mxu0 0.0
  %v1743 = vand.u32 %v1343, 4294901760
  %1744 = vmatmul.mubr.f32.gmra.mxu0 %v1743
  %v1745 = vpop.f32.mrf.mxu0
  %v1746 = vadd.f32 %v1505, %v1745
  %v1747 = vpop.f32.mrf.mxu0
  %1748 = vmatprep.mubr.f32.mxu0 0.0
  %v1749 = vand.u32 %v1346, 4294901760
  %1750 = vmatmul.mubr.f32.gmra.mxu0 %v1749
  %v1751 = vpop.f32.mrf.mxu0
  %v1752 = vadd.f32 %v1515, %v1751
  %v1753 = vpop.f32.mrf.mxu0
  %1754 = vmatprep.mubr.f32.mxu0 0.0
  %v1755 = vand.u32 %v1349, 4294901760
  %1756 = vmatmul.mubr.f32.gmra.mxu0 %v1755
  %v1757 = vpop.f32.mrf.mxu0
  %v1758 = vadd.f32 %v1525, %v1757
  %v1759 = vpop.f32.mrf.mxu0
  %1760 = vmatprep.mubr.f32.mxu0 0.0
  %v1761 = vand.u32 %v1352, 4294901760
  %1762 = vmatmul.mubr.f32.gmra.mxu0 %v1761
  %v1763 = vpop.f32.mrf.mxu0
  %v1764 = vadd.f32 %v1535, %v1763
  %v1765 = vpop.f32.mrf.mxu0
  %1766 = vmatprep.mubr.f32.mxu0 0.0
  %v1767 = vand.u32 %v1355, 4294901760
  %1768 = vmatmul.mubr.f32.gmra.mxu0 %v1767
  %v1769 = vpop.f32.mrf.mxu0
  %v1770 = vadd.f32 %v1545, %v1769
  %v1771 = vpop.f32.mrf.mxu0
  %1772 = vmatprep.mubr.f32.mxu0 0.0
  %v1773 = vand.u32 %v1358, 4294901760
  %1774 = vmatmul.mubr.f32.gmra.mxu0 %v1773
  %v1775 = vpop.f32.mrf.mxu0
  %v1776 = vadd.f32 %v1555, %v1775
  %v1777 = vpop.f32.mrf.mxu0
  %1778 = vmatprep.mubr.f32.mxu0 0.0
  %v1779 = vand.u32 %v1361, 4294901760
  %1780 = vmatmul.mubr.f32.gmra.mxu0 %v1779
  %v1781 = vpop.f32.mrf.mxu0
  %v1782 = vadd.f32 %v1565, %v1781
  %v1783 = vpop.f32.mrf.mxu0
  %1784 = vmatprep.mubr.f32.mxu0 0.0
  %v1785 = vand.u32 %v1364, 4294901760
  %1786 = vmatmul.mubr.f32.gmra.mxu0 %v1785
  %v1787 = vpop.f32.mrf.mxu0
  %v1788 = vadd.f32 %v1575, %v1787
  %v1789 = vpop.f32.mrf.mxu0
  %1790 = vmatprep.mubr.f32.mxu0 0.0
  %v1791 = vand.u32 %v1367, 4294901760
  %1792 = vmatmul.mubr.f32.gmra.mxu0 %v1791
  %v1793 = vpop.f32.mrf.mxu0
  %v1794 = vadd.f32 %v1585, %v1793
  %v1795 = vpop.f32.mrf.mxu0
  %1796 = vmatprep.mubr.f32.mxu0 0.0
  %v1797 = vand.u32 %v1370, 4294901760
  %1798 = vmatmul.mubr.f32.gmra.mxu0 %v1797
  %v1799 = vpop.f32.mrf.mxu0
  %v1800 = vadd.f32 %v1595, %v1799
  %v1801 = vpop.f32.mrf.mxu0
  %1802 = vmatprep.mubr.f32.mxu0 0.0
  %v1803 = vand.u32 %v1373, 4294901760
  %1804 = vmatmul.mubr.f32.gmra.mxu0 %v1803
  %v1805 = vpop.f32.mrf.mxu0
  %v1806 = vadd.f32 %v1605, %v1805
  %v1807 = vpop.f32.mrf.mxu0
  %1808 = vdwg.mxu0
  %1809 = vmatprep.subr.mxu0 0.0
  %1810 = vmatpush1.msra.mxu0 0.0
  %1811 = vmatprep.subr.mxu0 0.0
  %1812 = vmatpush1.msra.mxu0 0.0
  %1813 = vmatprep.subr.mxu0 0.0
  %1814 = vmatpush1.msra.mxu0 0.0
  %1815 = vmatprep.subr.mxu0 0.0
  %1816 = vmatpush1.msra.mxu0 0.0
  %1817 = vmatprep.subr.mxu0 0.0
  %1818 = vmatpush1.msra.mxu0 0.0
  %1819 = vmatprep.subr.mxu0 0.0
  %1820 = vmatpush1.msra.mxu0 0.0
  %1821 = vmatprep.subr.mxu0 0.0
  %1822 = vmatpush1.msra.mxu0 0.0
  %1823 = vmatprep.subr.mxu0 0.0
  %1824 = vmatpush1.msra.mxu0 0.0
  %1825 = vmatprep.subr.mxu0 0.0
  %v1826 = vand.u32 %v1318, 4294901760
  %v1827 = vsub.f32 %v1318, %v1826
  %1828 = vmatpush1.msra.mxu0 %v1827
  %1829 = vmatprep.subr.mxu0 0.0
  %v1830 = vand.u32 %v1317, 4294901760
  %v1831 = vsub.f32 %v1317, %v1830
  %1832 = vmatpush1.msra.mxu0 %v1831
  %1833 = vmatprep.subr.mxu0 0.0
  %v1834 = vand.u32 %v1316, 4294901760
  %v1835 = vsub.f32 %v1316, %v1834
  %1836 = vmatpush1.msra.mxu0 %v1835
  %1837 = vmatprep.subr.mxu0 0.0
  %v1838 = vand.u32 %v1315, 4294901760
  %v1839 = vsub.f32 %v1315, %v1838
  %1840 = vmatpush1.msra.mxu0 %v1839
  %1841 = vmatprep.subr.mxu0 0.0
  %v1842 = vand.u32 %v1314, 4294901760
  %v1843 = vsub.f32 %v1314, %v1842
  %1844 = vmatpush1.msra.mxu0 %v1843
  %1845 = vmatprep.subr.mxu0 0.0
  %v1846 = vand.u32 %v1313, 4294901760
  %v1847 = vsub.f32 %v1313, %v1846
  %1848 = vmatpush1.msra.mxu0 %v1847
  %1849 = vmatprep.subr.mxu0 0.0
  %v1850 = vand.u32 %v1312, 4294901760
  %v1851 = vsub.f32 %v1312, %v1850
  %1852 = vmatpush1.msra.mxu0 %v1851
  %1853 = vmatprep.subr.mxu0 0.0
  %v1854 = vand.u32 %v1311, 4294901760
  %v1855 = vsub.f32 %v1311, %v1854
  %1856 = vmatpush1.msra.mxu0 %v1855
  %1857 = vmatprep.subr.mxu0 0.0
  %1858 = vmatpush2.msra.mxu0 0.0
  %1859 = vmatprep.subr.mxu0 0.0
  %1860 = vmatpush2.msra.mxu0 0.0
  %1861 = vmatprep.subr.mxu0 0.0
  %1862 = vmatpush2.msra.mxu0 0.0
  %1863 = vmatprep.subr.mxu0 0.0
  %1864 = vmatpush2.msra.mxu0 0.0
  %1865 = vmatprep.subr.mxu0 0.0
  %1866 = vmatpush2.msra.mxu0 0.0
  %1867 = vmatprep.subr.mxu0 0.0
  %1868 = vmatpush2.msra.mxu0 0.0
  %1869 = vmatprep.subr.mxu0 0.0
  %1870 = vmatpush2.msra.mxu0 0.0
  %1871 = vmatprep.subr.mxu0 0.0
  %1872 = vmatpush2.msra.mxu0 0.0
  %1873 = vmatprep.subr.mxu0 0.0
  %1874 = vmatpush2.msra.mxu0 0.0
  %1875 = vmatprep.subr.mxu0 0.0
  %1876 = vmatpush2.msra.mxu0 0.0
  %1877 = vmatprep.subr.mxu0 0.0
  %1878 = vmatpush2.msra.mxu0 0.0
  %1879 = vmatprep.subr.mxu0 0.0
  %1880 = vmatpush2.msra.mxu0 0.0
  %1881 = vmatprep.subr.mxu0 0.0
  %1882 = vmatpush2.msra.mxu0 0.0
  %1883 = vmatprep.subr.mxu0 0.0
  %1884 = vmatpush2.msra.mxu0 0.0
  %1885 = vmatprep.subr.mxu0 0.0
  %1886 = vmatpush2.msra.mxu0 0.0
  %1887 = vmatprep.subr.mxu0 0.0
  %1888 = vmatpush2.msra.mxu0 0.0
  %1889 = vmatprep.mubr.f32.mxu0 0.0
  %v1890 = vand.u32 %v1328, 4294901760
  %v1891 = vsub.f32 %v1328, %v1890
  %1892 = vmatmul.mubr.f32.gmra.mxu0 %v1891
  %v1893 = vpop.f32.mrf.mxu0
  %v1894 = vadd.f32 %v1716, %v1893
  %v1895 = vpop.f32.mrf.mxu0
  %1896 = vmatprep.mubr.f32.mxu0 0.0
  %v1897 = vand.u32 %v1331, 4294901760
  %v1898 = vsub.f32 %v1331, %v1897
  %1899 = vmatmul.mubr.f32.gmra.mxu0 %v1898
  %v1900 = vpop.f32.mrf.mxu0
  %v1901 = vadd.f32 %v1722, %v1900
  %v1902 = vpop.f32.mrf.mxu0
  %1903 = vmatprep.mubr.f32.mxu0 0.0
  %v1904 = vand.u32 %v1334, 4294901760
  %v1905 = vsub.f32 %v1334, %v1904
  %1906 = vmatmul.mubr.f32.gmra.mxu0 %v1905
  %v1907 = vpop.f32.mrf.mxu0
  %v1908 = vadd.f32 %v1728, %v1907
  %v1909 = vpop.f32.mrf.mxu0
  %1910 = vmatprep.mubr.f32.mxu0 0.0
  %v1911 = vand.u32 %v1337, 4294901760
  %v1912 = vsub.f32 %v1337, %v1911
  %1913 = vmatmul.mubr.f32.gmra.mxu0 %v1912
  %v1914 = vpop.f32.mrf.mxu0
  %v1915 = vadd.f32 %v1734, %v1914
  %v1916 = vpop.f32.mrf.mxu0
  %1917 = vmatprep.mubr.f32.mxu0 0.0
  %v1918 = vand.u32 %v1340, 4294901760
  %v1919 = vsub.f32 %v1340, %v1918
  %1920 = vmatmul.mubr.f32.gmra.mxu0 %v1919
  %v1921 = vpop.f32.mrf.mxu0
  %v1922 = vadd.f32 %v1740, %v1921
  %v1923 = vpop.f32.mrf.mxu0
  %1924 = vmatprep.mubr.f32.mxu0 0.0
  %v1925 = vand.u32 %v1343, 4294901760
  %v1926 = vsub.f32 %v1343, %v1925
  %1927 = vmatmul.mubr.f32.gmra.mxu0 %v1926
  %v1928 = vpop.f32.mrf.mxu0
  %v1929 = vadd.f32 %v1746, %v1928
  %v1930 = vpop.f32.mrf.mxu0
  %1931 = vmatprep.mubr.f32.mxu0 0.0
  %v1932 = vand.u32 %v1346, 4294901760
  %v1933 = vsub.f32 %v1346, %v1932
  %1934 = vmatmul.mubr.f32.gmra.mxu0 %v1933
  %v1935 = vpop.f32.mrf.mxu0
  %v1936 = vadd.f32 %v1752, %v1935
  %v1937 = vpop.f32.mrf.mxu0
  %1938 = vmatprep.mubr.f32.mxu0 0.0
  %v1939 = vand.u32 %v1349, 4294901760
  %v1940 = vsub.f32 %v1349, %v1939
  %1941 = vmatmul.mubr.f32.gmra.mxu0 %v1940
  %v1942 = vpop.f32.mrf.mxu0
  %v1943 = vadd.f32 %v1758, %v1942
  %v1944 = vpop.f32.mrf.mxu0
  %1945 = vmatprep.mubr.f32.mxu0 0.0
  %v1946 = vand.u32 %v1352, 4294901760
  %v1947 = vsub.f32 %v1352, %v1946
  %1948 = vmatmul.mubr.f32.gmra.mxu0 %v1947
  %v1949 = vpop.f32.mrf.mxu0
  %v1950 = vadd.f32 %v1764, %v1949
  %v1951 = vpop.f32.mrf.mxu0
  %1952 = vmatprep.mubr.f32.mxu0 0.0
  %v1953 = vand.u32 %v1355, 4294901760
  %v1954 = vsub.f32 %v1355, %v1953
  %1955 = vmatmul.mubr.f32.gmra.mxu0 %v1954
  %v1956 = vpop.f32.mrf.mxu0
  %v1957 = vadd.f32 %v1770, %v1956
  %v1958 = vpop.f32.mrf.mxu0
  %1959 = vmatprep.mubr.f32.mxu0 0.0
  %v1960 = vand.u32 %v1358, 4294901760
  %v1961 = vsub.f32 %v1358, %v1960
  %1962 = vmatmul.mubr.f32.gmra.mxu0 %v1961
  %v1963 = vpop.f32.mrf.mxu0
  %v1964 = vadd.f32 %v1776, %v1963
  %v1965 = vpop.f32.mrf.mxu0
  %1966 = vmatprep.mubr.f32.mxu0 0.0
  %v1967 = vand.u32 %v1361, 4294901760
  %v1968 = vsub.f32 %v1361, %v1967
  %1969 = vmatmul.mubr.f32.gmra.mxu0 %v1968
  %v1970 = vpop.f32.mrf.mxu0
  %v1971 = vadd.f32 %v1782, %v1970
  %v1972 = vpop.f32.mrf.mxu0
  %1973 = vmatprep.mubr.f32.mxu0 0.0
  %v1974 = vand.u32 %v1364, 4294901760
  %v1975 = vsub.f32 %v1364, %v1974
  %1976 = vmatmul.mubr.f32.gmra.mxu0 %v1975
  %v1977 = vpop.f32.mrf.mxu0
  %v1978 = vadd.f32 %v1788, %v1977
  %v1979 = vpop.f32.mrf.mxu0
  %1980 = vmatprep.mubr.f32.mxu0 0.0
  %v1981 = vand.u32 %v1367, 4294901760
  %v1982 = vsub.f32 %v1367, %v1981
  %1983 = vmatmul.mubr.f32.gmra.mxu0 %v1982
  %v1984 = vpop.f32.mrf.mxu0
  %v1985 = vadd.f32 %v1794, %v1984
  %v1986 = vpop.f32.mrf.mxu0
  %1987 = vmatprep.mubr.f32.mxu0 0.0
  %v1988 = vand.u32 %v1370, 4294901760
  %v1989 = vsub.f32 %v1370, %v1988
  %1990 = vmatmul.mubr.f32.gmra.mxu0 %v1989
  %v1991 = vpop.f32.mrf.mxu0
  %v1992 = vadd.f32 %v1800, %v1991
  %v1993 = vpop.f32.mrf.mxu0
  %1994 = vmatprep.mubr.f32.mxu0 0.0
  %v1995 = vand.u32 %v1373, 4294901760
  %v1996 = vsub.f32 %v1373, %v1995
  %1997 = vmatmul.mubr.f32.gmra.mxu0 %v1996
  %v1998 = vpop.f32.mrf.mxu0
  %v1999 = vadd.f32 %v1806, %v1998
  %v2000 = vpop.f32.mrf.mxu0
  %2001 = vdwg.mxu0
  %2002 = vmatprep.subr.mxu0 0.0
  %2003 = vmatpush1.msra.mxu0 0.0
  %2004 = vmatprep.subr.mxu0 0.0
  %2005 = vmatpush1.msra.mxu0 0.0
  %2006 = vmatprep.subr.mxu0 0.0
  %2007 = vmatpush1.msra.mxu0 0.0
  %2008 = vmatprep.subr.mxu0 0.0
  %2009 = vmatpush1.msra.mxu0 0.0
  %2010 = vmatprep.subr.mxu0 0.0
  %2011 = vmatpush1.msra.mxu0 0.0
  %2012 = vmatprep.subr.mxu0 0.0
  %2013 = vmatpush1.msra.mxu0 0.0
  %2014 = vmatprep.subr.mxu0 0.0
  %2015 = vmatpush1.msra.mxu0 0.0
  %2016 = vmatprep.subr.mxu0 0.0
  %2017 = vmatpush1.msra.mxu0 0.0
  %2018 = vmatprep.subr.mxu0 0.0
  %v2019 = vand.u32 %v1318, 4294901760
  %2020 = vmatpush1.msra.mxu0 %v2019
  %2021 = vmatprep.subr.mxu0 0.0
  %v2022 = vand.u32 %v1317, 4294901760
  %2023 = vmatpush1.msra.mxu0 %v2022
  %2024 = vmatprep.subr.mxu0 0.0
  %v2025 = vand.u32 %v1316, 4294901760
  %2026 = vmatpush1.msra.mxu0 %v2025
  %2027 = vmatprep.subr.mxu0 0.0
  %v2028 = vand.u32 %v1315, 4294901760
  %2029 = vmatpush1.msra.mxu0 %v2028
  %2030 = vmatprep.subr.mxu0 0.0
  %v2031 = vand.u32 %v1314, 4294901760
  %2032 = vmatpush1.msra.mxu0 %v2031
  %2033 = vmatprep.subr.mxu0 0.0
  %v2034 = vand.u32 %v1313, 4294901760
  %2035 = vmatpush1.msra.mxu0 %v2034
  %2036 = vmatprep.subr.mxu0 0.0
  %v2037 = vand.u32 %v1312, 4294901760
  %2038 = vmatpush1.msra.mxu0 %v2037
  %2039 = vmatprep.subr.mxu0 0.0
  %v2040 = vand.u32 %v1311, 4294901760
  %2041 = vmatpush1.msra.mxu0 %v2040
  %2042 = vmatprep.subr.mxu0 0.0
  %2043 = vmatpush2.msra.mxu0 0.0
  %2044 = vmatprep.subr.mxu0 0.0
  %2045 = vmatpush2.msra.mxu0 0.0
  %2046 = vmatprep.subr.mxu0 0.0
  %2047 = vmatpush2.msra.mxu0 0.0
  %2048 = vmatprep.subr.mxu0 0.0
  %2049 = vmatpush2.msra.mxu0 0.0
  %2050 = vmatprep.subr.mxu0 0.0
  %2051 = vmatpush2.msra.mxu0 0.0
  %2052 = vmatprep.subr.mxu0 0.0
  %2053 = vmatpush2.msra.mxu0 0.0
  %2054 = vmatprep.subr.mxu0 0.0
  %2055 = vmatpush2.msra.mxu0 0.0
  %2056 = vmatprep.subr.mxu0 0.0
  %2057 = vmatpush2.msra.mxu0 0.0
  %2058 = vmatprep.subr.mxu0 0.0
  %2059 = vmatpush2.msra.mxu0 0.0
  %2060 = vmatprep.subr.mxu0 0.0
  %2061 = vmatpush2.msra.mxu0 0.0
  %2062 = vmatprep.subr.mxu0 0.0
  %2063 = vmatpush2.msra.mxu0 0.0
  %2064 = vmatprep.subr.mxu0 0.0
  %2065 = vmatpush2.msra.mxu0 0.0
  %2066 = vmatprep.subr.mxu0 0.0
  %2067 = vmatpush2.msra.mxu0 0.0
  %2068 = vmatprep.subr.mxu0 0.0
  %2069 = vmatpush2.msra.mxu0 0.0
  %2070 = vmatprep.subr.mxu0 0.0
  %2071 = vmatpush2.msra.mxu0 0.0
  %2072 = vmatprep.subr.mxu0 0.0
  %2073 = vmatpush2.msra.mxu0 0.0
  %2074 = vmatprep.mubr.f32.mxu0 0.0
  %v2075 = vand.u32 %v1328, 4294901760
  %v2076 = vsub.f32 %v1328, %v2075
  %v2077 = vand.u32 %v2076, 4294901760
  %2078 = vmatmul.mubr.f32.gmra.mxu0 %v2077
  %v2079 = vpop.f32.mrf.mxu0
  %v2080 = vadd.f32 %v1894, %v2079
  %v2081 = vpop.f32.mrf.mxu0
  %2082 = vmatprep.mubr.f32.mxu0 0.0
  %v2083 = vand.u32 %v1331, 4294901760
  %v2084 = vsub.f32 %v1331, %v2083
  %v2085 = vand.u32 %v2084, 4294901760
  %2086 = vmatmul.mubr.f32.gmra.mxu0 %v2085
  %v2087 = vpop.f32.mrf.mxu0
  %v2088 = vadd.f32 %v1901, %v2087
  %v2089 = vpop.f32.mrf.mxu0
  %2090 = vmatprep.mubr.f32.mxu0 0.0
  %v2091 = vand.u32 %v1334, 4294901760
  %v2092 = vsub.f32 %v1334, %v2091
  %v2093 = vand.u32 %v2092, 4294901760
  %2094 = vmatmul.mubr.f32.gmra.mxu0 %v2093
  %v2095 = vpop.f32.mrf.mxu0
  %v2096 = vadd.f32 %v1908, %v2095
  %v2097 = vpop.f32.mrf.mxu0
  %2098 = vmatprep.mubr.f32.mxu0 0.0
  %v2099 = vand.u32 %v1337, 4294901760
  %v2100 = vsub.f32 %v1337, %v2099
  %v2101 = vand.u32 %v2100, 4294901760
  %2102 = vmatmul.mubr.f32.gmra.mxu0 %v2101
  %v2103 = vpop.f32.mrf.mxu0
  %v2104 = vadd.f32 %v1915, %v2103
  %v2105 = vpop.f32.mrf.mxu0
  %2106 = vmatprep.mubr.f32.mxu0 0.0
  %v2107 = vand.u32 %v1340, 4294901760
  %v2108 = vsub.f32 %v1340, %v2107
  %v2109 = vand.u32 %v2108, 4294901760
  %2110 = vmatmul.mubr.f32.gmra.mxu0 %v2109
  %v2111 = vpop.f32.mrf.mxu0
  %v2112 = vadd.f32 %v1922, %v2111
  %v2113 = vpop.f32.mrf.mxu0
  %2114 = vmatprep.mubr.f32.mxu0 0.0
  %v2115 = vand.u32 %v1343, 4294901760
  %v2116 = vsub.f32 %v1343, %v2115
  %v2117 = vand.u32 %v2116, 4294901760
  %2118 = vmatmul.mubr.f32.gmra.mxu0 %v2117
  %v2119 = vpop.f32.mrf.mxu0
  %v2120 = vadd.f32 %v1929, %v2119
  %v2121 = vpop.f32.mrf.mxu0
  %2122 = vmatprep.mubr.f32.mxu0 0.0
  %v2123 = vand.u32 %v1346, 4294901760
  %v2124 = vsub.f32 %v1346, %v2123
  %v2125 = vand.u32 %v2124, 4294901760
  %2126 = vmatmul.mubr.f32.gmra.mxu0 %v2125
  %v2127 = vpop.f32.mrf.mxu0
  %v2128 = vadd.f32 %v1936, %v2127
  %v2129 = vpop.f32.mrf.mxu0
  %2130 = vmatprep.mubr.f32.mxu0 0.0
  %v2131 = vand.u32 %v1349, 4294901760
  %v2132 = vsub.f32 %v1349, %v2131
  %v2133 = vand.u32 %v2132, 4294901760
  %2134 = vmatmul.mubr.f32.gmra.mxu0 %v2133
  %v2135 = vpop.f32.mrf.mxu0
  %v2136 = vadd.f32 %v1943, %v2135
  %v2137 = vpop.f32.mrf.mxu0
  %2138 = vmatprep.mubr.f32.mxu0 0.0
  %v2139 = vand.u32 %v1352, 4294901760
  %v2140 = vsub.f32 %v1352, %v2139
  %v2141 = vand.u32 %v2140, 4294901760
  %2142 = vmatmul.mubr.f32.gmra.mxu0 %v2141
  %v2143 = vpop.f32.mrf.mxu0
  %v2144 = vadd.f32 %v1950, %v2143
  %v2145 = vpop.f32.mrf.mxu0
  %2146 = vmatprep.mubr.f32.mxu0 0.0
  %v2147 = vand.u32 %v1355, 4294901760
  %v2148 = vsub.f32 %v1355, %v2147
  %v2149 = vand.u32 %v2148, 4294901760
  %2150 = vmatmul.mubr.f32.gmra.mxu0 %v2149
  %v2151 = vpop.f32.mrf.mxu0
  %v2152 = vadd.f32 %v1957, %v2151
  %v2153 = vpop.f32.mrf.mxu0
  %2154 = vmatprep.mubr.f32.mxu0 0.0
  %v2155 = vand.u32 %v1358, 4294901760
  %v2156 = vsub.f32 %v1358, %v2155
  %v2157 = vand.u32 %v2156, 4294901760
  %2158 = vmatmul.mubr.f32.gmra.mxu0 %v2157
  %v2159 = vpop.f32.mrf.mxu0
  %v2160 = vadd.f32 %v1964, %v2159
  %v2161 = vpop.f32.mrf.mxu0
  %2162 = vmatprep.mubr.f32.mxu0 0.0
  %v2163 = vand.u32 %v1361, 4294901760
  %v2164 = vsub.f32 %v1361, %v2163
  %v2165 = vand.u32 %v2164, 4294901760
  %2166 = vmatmul.mubr.f32.gmra.mxu0 %v2165
  %v2167 = vpop.f32.mrf.mxu0
  %v2168 = vadd.f32 %v1971, %v2167
  %v2169 = vpop.f32.mrf.mxu0
  %2170 = vmatprep.mubr.f32.mxu0 0.0
  %v2171 = vand.u32 %v1364, 4294901760
  %v2172 = vsub.f32 %v1364, %v2171
  %v2173 = vand.u32 %v2172, 4294901760
  %2174 = vmatmul.mubr.f32.gmra.mxu0 %v2173
  %v2175 = vpop.f32.mrf.mxu0
  %v2176 = vadd.f32 %v1978, %v2175
  %v2177 = vpop.f32.mrf.mxu0
  %2178 = vmatprep.mubr.f32.mxu0 0.0
  %v2179 = vand.u32 %v1367, 4294901760
  %v2180 = vsub.f32 %v1367, %v2179
  %v2181 = vand.u32 %v2180, 4294901760
  %2182 = vmatmul.mubr.f32.gmra.mxu0 %v2181
  %v2183 = vpop.f32.mrf.mxu0
  %v2184 = vadd.f32 %v1985, %v2183
  %v2185 = vpop.f32.mrf.mxu0
  %2186 = vmatprep.mubr.f32.mxu0 0.0
  %v2187 = vand.u32 %v1370, 4294901760
  %v2188 = vsub.f32 %v1370, %v2187
  %v2189 = vand.u32 %v2188, 4294901760
  %2190 = vmatmul.mubr.f32.gmra.mxu0 %v2189
  %v2191 = vpop.f32.mrf.mxu0
  %v2192 = vadd.f32 %v1992, %v2191
  %v2193 = vpop.f32.mrf.mxu0
  %2194 = vmatprep.mubr.f32.mxu0 0.0
  %v2195 = vand.u32 %v1373, 4294901760
  %v2196 = vsub.f32 %v1373, %v2195
  %v2197 = vand.u32 %v2196, 4294901760
  %2198 = vmatmul.mubr.f32.gmra.mxu0 %v2197
  %v2199 = vpop.f32.mrf.mxu0
  %v2200 = vadd.f32 %v1999, %v2199
  %v2201 = vpop.f32.mrf.mxu0
  %2202 = vdwg.mxu0
  %2203 = vmatprep.subr.mxu0 0.0
  %2204 = vmatpush1.msra.mxu0 0.0
  %2205 = vmatprep.subr.mxu0 0.0
  %2206 = vmatpush1.msra.mxu0 0.0
  %2207 = vmatprep.subr.mxu0 0.0
  %2208 = vmatpush1.msra.mxu0 0.0
  %2209 = vmatprep.subr.mxu0 0.0
  %2210 = vmatpush1.msra.mxu0 0.0
  %2211 = vmatprep.subr.mxu0 0.0
  %2212 = vmatpush1.msra.mxu0 0.0
  %2213 = vmatprep.subr.mxu0 0.0
  %2214 = vmatpush1.msra.mxu0 0.0
  %2215 = vmatprep.subr.mxu0 0.0
  %2216 = vmatpush1.msra.mxu0 0.0
  %2217 = vmatprep.subr.mxu0 0.0
  %2218 = vmatpush1.msra.mxu0 0.0
  %2219 = vmatprep.subr.mxu0 0.0
  %v2220 = vand.u32 %v1318, 4294901760
  %v2221 = vsub.f32 %v1318, %v2220
  %v2222 = vand.u32 %v2221, 4294901760
  %2223 = vmatpush1.msra.mxu0 %v2222
  %2224 = vmatprep.subr.mxu0 0.0
  %v2225 = vand.u32 %v1317, 4294901760
  %v2226 = vsub.f32 %v1317, %v2225
  %v2227 = vand.u32 %v2226, 4294901760
  %2228 = vmatpush1.msra.mxu0 %v2227
  %2229 = vmatprep.subr.mxu0 0.0
  %v2230 = vand.u32 %v1316, 4294901760
  %v2231 = vsub.f32 %v1316, %v2230
  %v2232 = vand.u32 %v2231, 4294901760
  %2233 = vmatpush1.msra.mxu0 %v2232
  %2234 = vmatprep.subr.mxu0 0.0
  %v2235 = vand.u32 %v1315, 4294901760
  %v2236 = vsub.f32 %v1315, %v2235
  %v2237 = vand.u32 %v2236, 4294901760
  %2238 = vmatpush1.msra.mxu0 %v2237
  %2239 = vmatprep.subr.mxu0 0.0
  %v2240 = vand.u32 %v1314, 4294901760
  %v2241 = vsub.f32 %v1314, %v2240
  %v2242 = vand.u32 %v2241, 4294901760
  %2243 = vmatpush1.msra.mxu0 %v2242
  %2244 = vmatprep.subr.mxu0 0.0
  %v2245 = vand.u32 %v1313, 4294901760
  %v2246 = vsub.f32 %v1313, %v2245
  %v2247 = vand.u32 %v2246, 4294901760
  %2248 = vmatpush1.msra.mxu0 %v2247
  %2249 = vmatprep.subr.mxu0 0.0
  %v2250 = vand.u32 %v1312, 4294901760
  %v2251 = vsub.f32 %v1312, %v2250
  %v2252 = vand.u32 %v2251, 4294901760
  %2253 = vmatpush1.msra.mxu0 %v2252
  %2254 = vmatprep.subr.mxu0 0.0
  %v2255 = vand.u32 %v1311, 4294901760
  %v2256 = vsub.f32 %v1311, %v2255
  %v2257 = vand.u32 %v2256, 4294901760
  %2258 = vmatpush1.msra.mxu0 %v2257
  %2259 = vmatprep.subr.mxu0 0.0
  %2260 = vmatpush2.msra.mxu0 0.0
  %2261 = vmatprep.subr.mxu0 0.0
  %2262 = vmatpush2.msra.mxu0 0.0
  %2263 = vmatprep.subr.mxu0 0.0
  %2264 = vmatpush2.msra.mxu0 0.0
  %2265 = vmatprep.subr.mxu0 0.0
  %2266 = vmatpush2.msra.mxu0 0.0
  %2267 = vmatprep.subr.mxu0 0.0
  %2268 = vmatpush2.msra.mxu0 0.0
  %2269 = vmatprep.subr.mxu0 0.0
  %2270 = vmatpush2.msra.mxu0 0.0
  %2271 = vmatprep.subr.mxu0 0.0
  %2272 = vmatpush2.msra.mxu0 0.0
  %2273 = vmatprep.subr.mxu0 0.0
  %2274 = vmatpush2.msra.mxu0 0.0
  %2275 = vmatprep.subr.mxu0 0.0
  %2276 = vmatpush2.msra.mxu0 0.0
  %2277 = vmatprep.subr.mxu0 0.0
  %2278 = vmatpush2.msra.mxu0 0.0
  %2279 = vmatprep.subr.mxu0 0.0
  %2280 = vmatpush2.msra.mxu0 0.0
  %2281 = vmatprep.subr.mxu0 0.0
  %2282 = vmatpush2.msra.mxu0 0.0
  %2283 = vmatprep.subr.mxu0 0.0
  %2284 = vmatpush2.msra.mxu0 0.0
  %2285 = vmatprep.subr.mxu0 0.0
  %2286 = vmatpush2.msra.mxu0 0.0
  %2287 = vmatprep.subr.mxu0 0.0
  %2288 = vmatpush2.msra.mxu0 0.0
  %2289 = vmatprep.subr.mxu0 0.0
  %2290 = vmatpush2.msra.mxu0 0.0
  %2291 = vmatprep.mubr.f32.mxu0 0.0
  %v2292 = vand.u32 %v1328, 4294901760
  %2293 = vmatmul.mubr.f32.gmra.mxu0 %v2292
  %v2294 = vpop.f32.mrf.mxu0
  %v2295 = vadd.f32 %v2080, %v2294
  %v2296 = vpop.f32.mrf.mxu0
  %2297 = vmatprep.mubr.f32.mxu0 0.0
  %v2298 = vand.u32 %v1331, 4294901760
  %2299 = vmatmul.mubr.f32.gmra.mxu0 %v2298
  %v2300 = vpop.f32.mrf.mxu0
  %v2301 = vadd.f32 %v2088, %v2300
  %v2302 = vpop.f32.mrf.mxu0
  %2303 = vmatprep.mubr.f32.mxu0 0.0
  %v2304 = vand.u32 %v1334, 4294901760
  %2305 = vmatmul.mubr.f32.gmra.mxu0 %v2304
  %v2306 = vpop.f32.mrf.mxu0
  %v2307 = vadd.f32 %v2096, %v2306
  %v2308 = vpop.f32.mrf.mxu0
  %2309 = vmatprep.mubr.f32.mxu0 0.0
  %v2310 = vand.u32 %v1337, 4294901760
  %2311 = vmatmul.mubr.f32.gmra.mxu0 %v2310
  %v2312 = vpop.f32.mrf.mxu0
  %v2313 = vadd.f32 %v2104, %v2312
  %v2314 = vpop.f32.mrf.mxu0
  %2315 = vmatprep.mubr.f32.mxu0 0.0
  %v2316 = vand.u32 %v1340, 4294901760
  %2317 = vmatmul.mubr.f32.gmra.mxu0 %v2316
  %v2318 = vpop.f32.mrf.mxu0
  %v2319 = vadd.f32 %v2112, %v2318
  %v2320 = vpop.f32.mrf.mxu0
  %2321 = vmatprep.mubr.f32.mxu0 0.0
  %v2322 = vand.u32 %v1343, 4294901760
  %2323 = vmatmul.mubr.f32.gmra.mxu0 %v2322
  %v2324 = vpop.f32.mrf.mxu0
  %v2325 = vadd.f32 %v2120, %v2324
  %v2326 = vpop.f32.mrf.mxu0
  %2327 = vmatprep.mubr.f32.mxu0 0.0
  %v2328 = vand.u32 %v1346, 4294901760
  %2329 = vmatmul.mubr.f32.gmra.mxu0 %v2328
  %v2330 = vpop.f32.mrf.mxu0
  %v2331 = vadd.f32 %v2128, %v2330
  %v2332 = vpop.f32.mrf.mxu0
  %2333 = vmatprep.mubr.f32.mxu0 0.0
  %v2334 = vand.u32 %v1349, 4294901760
  %2335 = vmatmul.mubr.f32.gmra.mxu0 %v2334
  %v2336 = vpop.f32.mrf.mxu0
  %v2337 = vadd.f32 %v2136, %v2336
  %v2338 = vpop.f32.mrf.mxu0
  %2339 = vmatprep.mubr.f32.mxu0 0.0
  %v2340 = vand.u32 %v1352, 4294901760
  %2341 = vmatmul.mubr.f32.gmra.mxu0 %v2340
  %v2342 = vpop.f32.mrf.mxu0
  %v2343 = vadd.f32 %v2144, %v2342
  %v2344 = vpop.f32.mrf.mxu0
  %2345 = vmatprep.mubr.f32.mxu0 0.0
  %v2346 = vand.u32 %v1355, 4294901760
  %2347 = vmatmul.mubr.f32.gmra.mxu0 %v2346
  %v2348 = vpop.f32.mrf.mxu0
  %v2349 = vadd.f32 %v2152, %v2348
  %v2350 = vpop.f32.mrf.mxu0
  %2351 = vmatprep.mubr.f32.mxu0 0.0
  %v2352 = vand.u32 %v1358, 4294901760
  %2353 = vmatmul.mubr.f32.gmra.mxu0 %v2352
  %v2354 = vpop.f32.mrf.mxu0
  %v2355 = vadd.f32 %v2160, %v2354
  %v2356 = vpop.f32.mrf.mxu0
  %2357 = vmatprep.mubr.f32.mxu0 0.0
  %v2358 = vand.u32 %v1361, 4294901760
  %2359 = vmatmul.mubr.f32.gmra.mxu0 %v2358
  %v2360 = vpop.f32.mrf.mxu0
  %v2361 = vadd.f32 %v2168, %v2360
  %v2362 = vpop.f32.mrf.mxu0
  %2363 = vmatprep.mubr.f32.mxu0 0.0
  %v2364 = vand.u32 %v1364, 4294901760
  %2365 = vmatmul.mubr.f32.gmra.mxu0 %v2364
  %v2366 = vpop.f32.mrf.mxu0
  %v2367 = vadd.f32 %v2176, %v2366
  %v2368 = vpop.f32.mrf.mxu0
  %2369 = vmatprep.mubr.f32.mxu0 0.0
  %v2370 = vand.u32 %v1367, 4294901760
  %2371 = vmatmul.mubr.f32.gmra.mxu0 %v2370
  %v2372 = vpop.f32.mrf.mxu0
  %v2373 = vadd.f32 %v2184, %v2372
  %v2374 = vpop.f32.mrf.mxu0
  %2375 = vmatprep.mubr.f32.mxu0 0.0
  %v2376 = vand.u32 %v1370, 4294901760
  %2377 = vmatmul.mubr.f32.gmra.mxu0 %v2376
  %v2378 = vpop.f32.mrf.mxu0
  %v2379 = vadd.f32 %v2192, %v2378
  %v2380 = vpop.f32.mrf.mxu0
  %2381 = vmatprep.mubr.f32.mxu0 0.0
  %v2382 = vand.u32 %v1373, 4294901760
  %2383 = vmatmul.mubr.f32.gmra.mxu0 %v2382
  %v2384 = vpop.f32.mrf.mxu0
  %v2385 = vadd.f32 %v2200, %v2384
  %v2386 = vpop.f32.mrf.mxu0
  %2387 = vdwg.mxu0
  %2388 = vmatprep.subr.mxu0 0.0
  %2389 = vmatpush1.msra.mxu0 0.0
  %2390 = vmatprep.subr.mxu0 0.0
  %2391 = vmatpush1.msra.mxu0 0.0
  %2392 = vmatprep.subr.mxu0 0.0
  %2393 = vmatpush1.msra.mxu0 0.0
  %2394 = vmatprep.subr.mxu0 0.0
  %2395 = vmatpush1.msra.mxu0 0.0
  %2396 = vmatprep.subr.mxu0 0.0
  %2397 = vmatpush1.msra.mxu0 0.0
  %2398 = vmatprep.subr.mxu0 0.0
  %2399 = vmatpush1.msra.mxu0 0.0
  %2400 = vmatprep.subr.mxu0 0.0
  %2401 = vmatpush1.msra.mxu0 0.0
  %2402 = vmatprep.subr.mxu0 0.0
  %2403 = vmatpush1.msra.mxu0 0.0
  %2404 = vmatprep.subr.mxu0 0.0
  %v2405 = vand.u32 %v1318, 4294901760
  %2406 = vmatpush1.msra.mxu0 %v2405
  %2407 = vmatprep.subr.mxu0 0.0
  %v2408 = vand.u32 %v1317, 4294901760
  %2409 = vmatpush1.msra.mxu0 %v2408
  %2410 = vmatprep.subr.mxu0 0.0
  %v2411 = vand.u32 %v1316, 4294901760
  %2412 = vmatpush1.msra.mxu0 %v2411
  %2413 = vmatprep.subr.mxu0 0.0
  %v2414 = vand.u32 %v1315, 4294901760
  %2415 = vmatpush1.msra.mxu0 %v2414
  %2416 = vmatprep.subr.mxu0 0.0
  %v2417 = vand.u32 %v1314, 4294901760
  %2418 = vmatpush1.msra.mxu0 %v2417
  %2419 = vmatprep.subr.mxu0 0.0
  %v2420 = vand.u32 %v1313, 4294901760
  %2421 = vmatpush1.msra.mxu0 %v2420
  %2422 = vmatprep.subr.mxu0 0.0
  %v2423 = vand.u32 %v1312, 4294901760
  %2424 = vmatpush1.msra.mxu0 %v2423
  %2425 = vmatprep.subr.mxu0 0.0
  %v2426 = vand.u32 %v1311, 4294901760
  %2427 = vmatpush1.msra.mxu0 %v2426
  %2428 = vmatprep.subr.mxu0 0.0
  %2429 = vmatpush2.msra.mxu0 0.0
  %2430 = vmatprep.subr.mxu0 0.0
  %2431 = vmatpush2.msra.mxu0 0.0
  %2432 = vmatprep.subr.mxu0 0.0
  %2433 = vmatpush2.msra.mxu0 0.0
  %2434 = vmatprep.subr.mxu0 0.0
  %2435 = vmatpush2.msra.mxu0 0.0
  %2436 = vmatprep.subr.mxu0 0.0
  %2437 = vmatpush2.msra.mxu0 0.0
  %2438 = vmatprep.subr.mxu0 0.0
  %2439 = vmatpush2.msra.mxu0 0.0
  %2440 = vmatprep.subr.mxu0 0.0
  %2441 = vmatpush2.msra.mxu0 0.0
  %2442 = vmatprep.subr.mxu0 0.0
  %2443 = vmatpush2.msra.mxu0 0.0
  %2444 = vmatprep.subr.mxu0 0.0
  %2445 = vmatpush2.msra.mxu0 0.0
  %2446 = vmatprep.subr.mxu0 0.0
  %2447 = vmatpush2.msra.mxu0 0.0
  %2448 = vmatprep.subr.mxu0 0.0
  %2449 = vmatpush2.msra.mxu0 0.0
  %2450 = vmatprep.subr.mxu0 0.0
  %2451 = vmatpush2.msra.mxu0 0.0
  %2452 = vmatprep.subr.mxu0 0.0
  %2453 = vmatpush2.msra.mxu0 0.0
  %2454 = vmatprep.subr.mxu0 0.0
  %2455 = vmatpush2.msra.mxu0 0.0
  %2456 = vmatprep.subr.mxu0 0.0
  %2457 = vmatpush2.msra.mxu0 0.0
  %2458 = vmatprep.subr.mxu0 0.0
  %2459 = vmatpush2.msra.mxu0 0.0
  %2460 = vmatprep.mubr.f32.mxu0 0.0
  %v2461 = vand.u32 %v1328, 4294901760
  %2462 = vmatmul.mubr.f32.gmra.mxu0 %v2461
  %v2463 = vpop.f32.mrf.mxu0
  %v2464 = vadd.f32 %v2295, %v2463
  %v2465 = vpop.f32.mrf.mxu0
  %2466 = vmatprep.mubr.f32.mxu0 0.0
  %v2467 = vand.u32 %v1331, 4294901760
  %2468 = vmatmul.mubr.f32.gmra.mxu0 %v2467
  %v2469 = vpop.f32.mrf.mxu0
  %v2470 = vadd.f32 %v2301, %v2469
  %v2471 = vpop.f32.mrf.mxu0
  %2472 = vmatprep.mubr.f32.mxu0 0.0
  %v2473 = vand.u32 %v1334, 4294901760
  %2474 = vmatmul.mubr.f32.gmra.mxu0 %v2473
  %v2475 = vpop.f32.mrf.mxu0
  %v2476 = vadd.f32 %v2307, %v2475
  %v2477 = vpop.f32.mrf.mxu0
  %2478 = vmatprep.mubr.f32.mxu0 0.0
  %v2479 = vand.u32 %v1337, 4294901760
  %2480 = vmatmul.mubr.f32.gmra.mxu0 %v2479
  %v2481 = vpop.f32.mrf.mxu0
  %v2482 = vadd.f32 %v2313, %v2481
  %v2483 = vpop.f32.mrf.mxu0
  %2484 = vmatprep.mubr.f32.mxu0 0.0
  %v2485 = vand.u32 %v1340, 4294901760
  %2486 = vmatmul.mubr.f32.gmra.mxu0 %v2485
  %v2487 = vpop.f32.mrf.mxu0
  %v2488 = vadd.f32 %v2319, %v2487
  %v2489 = vpop.f32.mrf.mxu0
  %2490 = vmatprep.mubr.f32.mxu0 0.0
  %v2491 = vand.u32 %v1343, 4294901760
  %2492 = vmatmul.mubr.f32.gmra.mxu0 %v2491
  %v2493 = vpop.f32.mrf.mxu0
  %v2494 = vadd.f32 %v2325, %v2493
  %v2495 = vpop.f32.mrf.mxu0
  %2496 = vmatprep.mubr.f32.mxu0 0.0
  %v2497 = vand.u32 %v1346, 4294901760
  %2498 = vmatmul.mubr.f32.gmra.mxu0 %v2497
  %v2499 = vpop.f32.mrf.mxu0
  %v2500 = vadd.f32 %v2331, %v2499
  %v2501 = vpop.f32.mrf.mxu0
  %2502 = vmatprep.mubr.f32.mxu0 0.0
  %v2503 = vand.u32 %v1349, 4294901760
  %2504 = vmatmul.mubr.f32.gmra.mxu0 %v2503
  %v2505 = vpop.f32.mrf.mxu0
  %v2506 = vadd.f32 %v2337, %v2505
  %v2507 = vpop.f32.mrf.mxu0
  %2508 = vmatprep.mubr.f32.mxu0 0.0
  %v2509 = vand.u32 %v1352, 4294901760
  %2510 = vmatmul.mubr.f32.gmra.mxu0 %v2509
  %v2511 = vpop.f32.mrf.mxu0
  %v2512 = vadd.f32 %v2343, %v2511
  %v2513 = vpop.f32.mrf.mxu0
  %2514 = vmatprep.mubr.f32.mxu0 0.0
  %v2515 = vand.u32 %v1355, 4294901760
  %2516 = vmatmul.mubr.f32.gmra.mxu0 %v2515
  %v2517 = vpop.f32.mrf.mxu0
  %v2518 = vadd.f32 %v2349, %v2517
  %v2519 = vpop.f32.mrf.mxu0
  %2520 = vmatprep.mubr.f32.mxu0 0.0
  %v2521 = vand.u32 %v1358, 4294901760
  %2522 = vmatmul.mubr.f32.gmra.mxu0 %v2521
  %v2523 = vpop.f32.mrf.mxu0
  %v2524 = vadd.f32 %v2355, %v2523
  %v2525 = vpop.f32.mrf.mxu0
  %2526 = vmatprep.mubr.f32.mxu0 0.0
  %v2527 = vand.u32 %v1361, 4294901760
  %2528 = vmatmul.mubr.f32.gmra.mxu0 %v2527
  %v2529 = vpop.f32.mrf.mxu0
  %v2530 = vadd.f32 %v2361, %v2529
  %v2531 = vpop.f32.mrf.mxu0
  %2532 = vmatprep.mubr.f32.mxu0 0.0
  %v2533 = vand.u32 %v1364, 4294901760
  %2534 = vmatmul.mubr.f32.gmra.mxu0 %v2533
  %v2535 = vpop.f32.mrf.mxu0
  %v2536 = vadd.f32 %v2367, %v2535
  %v2537 = vpop.f32.mrf.mxu0
  %2538 = vmatprep.mubr.f32.mxu0 0.0
  %v2539 = vand.u32 %v1367, 4294901760
  %2540 = vmatmul.mubr.f32.gmra.mxu0 %v2539
  %v2541 = vpop.f32.mrf.mxu0
  %v2542 = vadd.f32 %v2373, %v2541
  %v2543 = vpop.f32.mrf.mxu0
  %2544 = vmatprep.mubr.f32.mxu0 0.0
  %v2545 = vand.u32 %v1370, 4294901760
  %2546 = vmatmul.mubr.f32.gmra.mxu0 %v2545
  %v2547 = vpop.f32.mrf.mxu0
  %v2548 = vadd.f32 %v2379, %v2547
  %v2549 = vpop.f32.mrf.mxu0
  %2550 = vmatprep.mubr.f32.mxu0 0.0
  %v2551 = vand.u32 %v1373, 4294901760
  %2552 = vmatmul.mubr.f32.gmra.mxu0 %v2551
  %v2553 = vpop.f32.mrf.mxu0
  %v2554 = vadd.f32 %v2385, %v2553
  %v2555 = vpop.f32.mrf.mxu0
  %2556 = vdwg.mxu0
  %v2557 = vmax.f32 %v2464, 0.0
  %v2558 = vmax.f32 %v2470, 0.0
  %v2559 = vmax.f32 %v2476, 0.0
  %v2560 = vmax.f32 %v2482, 0.0
  %v2561 = vmax.f32 %v2488, 0.0
  %v2562 = vmax.f32 %v2494, 0.0
  %v2563 = vmax.f32 %v2500, 0.0
  %v2564 = vmax.f32 %v2506, 0.0
  %v2565 = vmax.f32 %v2512, 0.0
  %v2566 = vmax.f32 %v2518, 0.0
  %v2567 = vmax.f32 %v2524, 0.0
  %v2568 = vmax.f32 %v2530, 0.0
  %v2569 = vmax.f32 %v2536, 0.0
  %v2570 = vmax.f32 %v2542, 0.0
  %v2571 = vmax.f32 %v2548, 0.0
  %v2572 = vmax.f32 %v2554, 0.0
  %v2573 = vld [vmem:[%s6] sm:$0xff]
  %v2574 = vld [vmem:[%s6 + $0x8] sm:$0xff]
  %v2575 = vld [vmem:[%s6 + $0x10] sm:$0xff]
  %v2576 = vld [vmem:[%s6 + $0x18] sm:$0x7]
  %v2577 = vld [vmem:[%s7] sm:$0xff]
  %v2578 = vld [vmem:[%s7 + $0x8] sm:$0xff]
  %v2579 = vld [vmem:[%s7 + $0x10] sm:$0xff]
  %v2580 = vld [vmem:[%s7 + $0x18] sm:$0xff]
  %v2581 = vld [vmem:[%s7 + $0x20] sm:$0xff]
  %v2582 = vld [vmem:[%s7 + $0x28] sm:$0xff]
  %v2583 = vld [vmem:[%s7 + $0x30] sm:$0xff]
  %v2584 = vld [vmem:[%s7 + $0x38] sm:$0xff]
  %v2586 = vsel %vm1326, %v2557, 0
  %v2589 = vsel %vm1326, %v2558, 0
  %v2592 = vsel %vm1326, %v2559, 0
  %v2595 = vsel %vm1326, %v2560, 0
  %v2598 = vsel %vm1326, %v2561, 0
  %v2601 = vsel %vm1326, %v2562, 0
  %v2604 = vsel %vm1326, %v2563, 0
  %v2607 = vsel %vm1326, %v2564, 0
  %v2610 = vsel %vm1326, %v2565, 0
  %v2613 = vsel %vm1326, %v2566, 0
  %v2616 = vsel %vm1326, %v2567, 0
  %v2619 = vsel %vm1326, %v2568, 0
  %v2622 = vsel %vm1326, %v2569, 0
  %v2625 = vsel %vm1326, %v2570, 0
  %v2628 = vsel %vm1326, %v2571, 0
  %v2631 = vsel %vm1326, %v2572, 0
  %2633 = vmatprep.subr.mxu0 0.0
  %2634 = vmatpush1.msra.mxu0 0.0
  %2635 = vmatprep.subr.mxu0 0.0
  %2636 = vmatpush1.msra.mxu0 0.0
  %2637 = vmatprep.subr.mxu0 0.0
  %2638 = vmatpush1.msra.mxu0 0.0
  %2639 = vmatprep.subr.mxu0 0.0
  %2640 = vmatpush1.msra.mxu0 0.0
  %2641 = vmatprep.subr.mxu0 0.0
  %2642 = vmatpush1.msra.mxu0 0.0
  %2643 = vmatprep.subr.mxu0 0.0
  %2644 = vmatpush1.msra.mxu0 0.0
  %2645 = vmatprep.subr.mxu0 0.0
  %2646 = vmatpush1.msra.mxu0 0.0
  %2647 = vmatprep.subr.mxu0 0.0
  %2648 = vmatpush1.msra.mxu0 0.0
  %2649 = vmatprep.subr.mxu0 0.0
  %v2650 = vand.u32 %v2584, 4294901760
  %2651 = vmatpush1.msra.mxu0 %v2650
  %2652 = vmatprep.subr.mxu0 0.0
  %v2653 = vand.u32 %v2583, 4294901760
  %2654 = vmatpush1.msra.mxu0 %v2653
  %2655 = vmatprep.subr.mxu0 0.0
  %v2656 = vand.u32 %v2582, 4294901760
  %2657 = vmatpush1.msra.mxu0 %v2656
  %2658 = vmatprep.subr.mxu0 0.0
  %v2659 = vand.u32 %v2581, 4294901760
  %2660 = vmatpush1.msra.mxu0 %v2659
  %2661 = vmatprep.subr.mxu0 0.0
  %v2662 = vand.u32 %v2580, 4294901760
  %2663 = vmatpush1.msra.mxu0 %v2662
  %2664 = vmatprep.subr.mxu0 0.0
  %v2665 = vand.u32 %v2579, 4294901760
  %2666 = vmatpush1.msra.mxu0 %v2665
  %2667 = vmatprep.subr.mxu0 0.0
  %v2668 = vand.u32 %v2578, 4294901760
  %2669 = vmatpush1.msra.mxu0 %v2668
  %2670 = vmatprep.subr.mxu0 0.0
  %v2671 = vand.u32 %v2577, 4294901760
  %2672 = vmatpush1.msra.mxu0 %v2671
  %2673 = vmatprep.subr.mxu0 0.0
  %2674 = vmatpush2.msra.mxu0 0.0
  %2675 = vmatprep.subr.mxu0 0.0
  %2676 = vmatpush2.msra.mxu0 0.0
  %2677 = vmatprep.subr.mxu0 0.0
  %2678 = vmatpush2.msra.mxu0 0.0
  %2679 = vmatprep.subr.mxu0 0.0
  %2680 = vmatpush2.msra.mxu0 0.0
  %2681 = vmatprep.subr.mxu0 0.0
  %2682 = vmatpush2.msra.mxu0 0.0
  %2683 = vmatprep.subr.mxu0 0.0
  %2684 = vmatpush2.msra.mxu0 0.0
  %2685 = vmatprep.subr.mxu0 0.0
  %2686 = vmatpush2.msra.mxu0 0.0
  %2687 = vmatprep.subr.mxu0 0.0
  %2688 = vmatpush2.msra.mxu0 0.0
  %2689 = vmatprep.subr.mxu0 0.0
  %2690 = vmatpush2.msra.mxu0 0.0
  %2691 = vmatprep.subr.mxu0 0.0
  %2692 = vmatpush2.msra.mxu0 0.0
  %2693 = vmatprep.subr.mxu0 0.0
  %2694 = vmatpush2.msra.mxu0 0.0
  %2695 = vmatprep.subr.mxu0 0.0
  %2696 = vmatpush2.msra.mxu0 0.0
  %2697 = vmatprep.subr.mxu0 0.0
  %2698 = vmatpush2.msra.mxu0 0.0
  %2699 = vmatprep.subr.mxu0 0.0
  %2700 = vmatpush2.msra.mxu0 0.0
  %2701 = vmatprep.subr.mxu0 0.0
  %2702 = vmatpush2.msra.mxu0 0.0
  %2703 = vmatprep.subr.mxu0 0.0
  %2704 = vmatpush2.msra.mxu0 0.0
  %2705 = vmatprep.mubr.f32.mxu0 0.0
  %v2706 = vand.u32 %v2586, 4294901760
  %v2707 = vsub.f32 %v2586, %v2706
  %v2708 = vand.u32 %v2707, 4294901760
  %v2709 = vsub.f32 %v2707, %v2708
  %v2710 = vand.u32 %v2709, 4294901760
  %2711 = vmatmul.mubr.f32.gmra.mxu0 %v2710
  %v2712 = vpop.f32.mrf.mxu0
  %v2713 = vadd.f32 0.0, %v2712
  %v2714 = vpop.f32.mrf.mxu0
  %2715 = vmatprep.mubr.f32.mxu0 0.0
  %v2716 = vand.u32 %v2589, 4294901760
  %v2717 = vsub.f32 %v2589, %v2716
  %v2718 = vand.u32 %v2717, 4294901760
  %v2719 = vsub.f32 %v2717, %v2718
  %v2720 = vand.u32 %v2719, 4294901760
  %2721 = vmatmul.mubr.f32.gmra.mxu0 %v2720
  %v2722 = vpop.f32.mrf.mxu0
  %v2723 = vadd.f32 0.0, %v2722
  %v2724 = vpop.f32.mrf.mxu0
  %2725 = vmatprep.mubr.f32.mxu0 0.0
  %v2726 = vand.u32 %v2592, 4294901760
  %v2727 = vsub.f32 %v2592, %v2726
  %v2728 = vand.u32 %v2727, 4294901760
  %v2729 = vsub.f32 %v2727, %v2728
  %v2730 = vand.u32 %v2729, 4294901760
  %2731 = vmatmul.mubr.f32.gmra.mxu0 %v2730
  %v2732 = vpop.f32.mrf.mxu0
  %v2733 = vadd.f32 0.0, %v2732
  %v2734 = vpop.f32.mrf.mxu0
  %2735 = vmatprep.mubr.f32.mxu0 0.0
  %v2736 = vand.u32 %v2595, 4294901760
  %v2737 = vsub.f32 %v2595, %v2736
  %v2738 = vand.u32 %v2737, 4294901760
  %v2739 = vsub.f32 %v2737, %v2738
  %v2740 = vand.u32 %v2739, 4294901760
  %2741 = vmatmul.mubr.f32.gmra.mxu0 %v2740
  %v2742 = vpop.f32.mrf.mxu0
  %v2743 = vadd.f32 0.0, %v2742
  %v2744 = vpop.f32.mrf.mxu0
  %2745 = vmatprep.mubr.f32.mxu0 0.0
  %v2746 = vand.u32 %v2598, 4294901760
  %v2747 = vsub.f32 %v2598, %v2746
  %v2748 = vand.u32 %v2747, 4294901760
  %v2749 = vsub.f32 %v2747, %v2748
  %v2750 = vand.u32 %v2749, 4294901760
  %2751 = vmatmul.mubr.f32.gmra.mxu0 %v2750
  %v2752 = vpop.f32.mrf.mxu0
  %v2753 = vadd.f32 0.0, %v2752
  %v2754 = vpop.f32.mrf.mxu0
  %2755 = vmatprep.mubr.f32.mxu0 0.0
  %v2756 = vand.u32 %v2601, 4294901760
  %v2757 = vsub.f32 %v2601, %v2756
  %v2758 = vand.u32 %v2757, 4294901760
  %v2759 = vsub.f32 %v2757, %v2758
  %v2760 = vand.u32 %v2759, 4294901760
  %2761 = vmatmul.mubr.f32.gmra.mxu0 %v2760
  %v2762 = vpop.f32.mrf.mxu0
  %v2763 = vadd.f32 0.0, %v2762
  %v2764 = vpop.f32.mrf.mxu0
  %2765 = vmatprep.mubr.f32.mxu0 0.0
  %v2766 = vand.u32 %v2604, 4294901760
  %v2767 = vsub.f32 %v2604, %v2766
  %v2768 = vand.u32 %v2767, 4294901760
  %v2769 = vsub.f32 %v2767, %v2768
  %v2770 = vand.u32 %v2769, 4294901760
  %2771 = vmatmul.mubr.f32.gmra.mxu0 %v2770
  %v2772 = vpop.f32.mrf.mxu0
  %v2773 = vadd.f32 0.0, %v2772
  %v2774 = vpop.f32.mrf.mxu0
  %2775 = vmatprep.mubr.f32.mxu0 0.0
  %v2776 = vand.u32 %v2607, 4294901760
  %v2777 = vsub.f32 %v2607, %v2776
  %v2778 = vand.u32 %v2777, 4294901760
  %v2779 = vsub.f32 %v2777, %v2778
  %v2780 = vand.u32 %v2779, 4294901760
  %2781 = vmatmul.mubr.f32.gmra.mxu0 %v2780
  %v2782 = vpop.f32.mrf.mxu0
  %v2783 = vadd.f32 0.0, %v2782
  %v2784 = vpop.f32.mrf.mxu0
  %2785 = vmatprep.mubr.f32.mxu0 0.0
  %v2786 = vand.u32 %v2610, 4294901760
  %v2787 = vsub.f32 %v2610, %v2786
  %v2788 = vand.u32 %v2787, 4294901760
  %v2789 = vsub.f32 %v2787, %v2788
  %v2790 = vand.u32 %v2789, 4294901760
  %2791 = vmatmul.mubr.f32.gmra.mxu0 %v2790
  %v2792 = vpop.f32.mrf.mxu0
  %v2793 = vadd.f32 0.0, %v2792
  %v2794 = vpop.f32.mrf.mxu0
  %2795 = vmatprep.mubr.f32.mxu0 0.0
  %v2796 = vand.u32 %v2613, 4294901760
  %v2797 = vsub.f32 %v2613, %v2796
  %v2798 = vand.u32 %v2797, 4294901760
  %v2799 = vsub.f32 %v2797, %v2798
  %v2800 = vand.u32 %v2799, 4294901760
  %2801 = vmatmul.mubr.f32.gmra.mxu0 %v2800
  %v2802 = vpop.f32.mrf.mxu0
  %v2803 = vadd.f32 0.0, %v2802
  %v2804 = vpop.f32.mrf.mxu0
  %2805 = vmatprep.mubr.f32.mxu0 0.0
  %v2806 = vand.u32 %v2616, 4294901760
  %v2807 = vsub.f32 %v2616, %v2806
  %v2808 = vand.u32 %v2807, 4294901760
  %v2809 = vsub.f32 %v2807, %v2808
  %v2810 = vand.u32 %v2809, 4294901760
  %2811 = vmatmul.mubr.f32.gmra.mxu0 %v2810
  %v2812 = vpop.f32.mrf.mxu0
  %v2813 = vadd.f32 0.0, %v2812
  %v2814 = vpop.f32.mrf.mxu0
  %2815 = vmatprep.mubr.f32.mxu0 0.0
  %v2816 = vand.u32 %v2619, 4294901760
  %v2817 = vsub.f32 %v2619, %v2816
  %v2818 = vand.u32 %v2817, 4294901760
  %v2819 = vsub.f32 %v2817, %v2818
  %v2820 = vand.u32 %v2819, 4294901760
  %2821 = vmatmul.mubr.f32.gmra.mxu0 %v2820
  %v2822 = vpop.f32.mrf.mxu0
  %v2823 = vadd.f32 0.0, %v2822
  %v2824 = vpop.f32.mrf.mxu0
  %2825 = vmatprep.mubr.f32.mxu0 0.0
  %v2826 = vand.u32 %v2622, 4294901760
  %v2827 = vsub.f32 %v2622, %v2826
  %v2828 = vand.u32 %v2827, 4294901760
  %v2829 = vsub.f32 %v2827, %v2828
  %v2830 = vand.u32 %v2829, 4294901760
  %2831 = vmatmul.mubr.f32.gmra.mxu0 %v2830
  %v2832 = vpop.f32.mrf.mxu0
  %v2833 = vadd.f32 0.0, %v2832
  %v2834 = vpop.f32.mrf.mxu0
  %2835 = vmatprep.mubr.f32.mxu0 0.0
  %v2836 = vand.u32 %v2625, 4294901760
  %v2837 = vsub.f32 %v2625, %v2836
  %v2838 = vand.u32 %v2837, 4294901760
  %v2839 = vsub.f32 %v2837, %v2838
  %v2840 = vand.u32 %v2839, 4294901760
  %2841 = vmatmul.mubr.f32.gmra.mxu0 %v2840
  %v2842 = vpop.f32.mrf.mxu0
  %v2843 = vadd.f32 0.0, %v2842
  %v2844 = vpop.f32.mrf.mxu0
  %2845 = vmatprep.mubr.f32.mxu0 0.0
  %v2846 = vand.u32 %v2628, 4294901760
  %v2847 = vsub.f32 %v2628, %v2846
  %v2848 = vand.u32 %v2847, 4294901760
  %v2849 = vsub.f32 %v2847, %v2848
  %v2850 = vand.u32 %v2849, 4294901760
  %2851 = vmatmul.mubr.f32.gmra.mxu0 %v2850
  %v2852 = vpop.f32.mrf.mxu0
  %v2853 = vadd.f32 0.0, %v2852
  %v2854 = vpop.f32.mrf.mxu0
  %2855 = vmatprep.mubr.f32.mxu0 0.0
  %v2856 = vand.u32 %v2631, 4294901760
  %v2857 = vsub.f32 %v2631, %v2856
  %v2858 = vand.u32 %v2857, 4294901760
  %v2859 = vsub.f32 %v2857, %v2858
  %v2860 = vand.u32 %v2859, 4294901760
  %2861 = vmatmul.mubr.f32.gmra.mxu0 %v2860
  %v2862 = vpop.f32.mrf.mxu0
  %v2863 = vadd.f32 0.0, %v2862
  %v2864 = vpop.f32.mrf.mxu0
  %2865 = vdwg.mxu0
  %2866 = vmatprep.subr.mxu0 0.0
  %2867 = vmatpush1.msra.mxu0 0.0
  %2868 = vmatprep.subr.mxu0 0.0
  %2869 = vmatpush1.msra.mxu0 0.0
  %2870 = vmatprep.subr.mxu0 0.0
  %2871 = vmatpush1.msra.mxu0 0.0
  %2872 = vmatprep.subr.mxu0 0.0
  %2873 = vmatpush1.msra.mxu0 0.0
  %2874 = vmatprep.subr.mxu0 0.0
  %2875 = vmatpush1.msra.mxu0 0.0
  %2876 = vmatprep.subr.mxu0 0.0
  %2877 = vmatpush1.msra.mxu0 0.0
  %2878 = vmatprep.subr.mxu0 0.0
  %2879 = vmatpush1.msra.mxu0 0.0
  %2880 = vmatprep.subr.mxu0 0.0
  %2881 = vmatpush1.msra.mxu0 0.0
  %2882 = vmatprep.subr.mxu0 0.0
  %v2883 = vand.u32 %v2584, 4294901760
  %v2884 = vsub.f32 %v2584, %v2883
  %v2885 = vand.u32 %v2884, 4294901760
  %v2886 = vsub.f32 %v2884, %v2885
  %v2887 = vand.u32 %v2886, 4294901760
  %2888 = vmatpush1.msra.mxu0 %v2887
  %2889 = vmatprep.subr.mxu0 0.0
  %v2890 = vand.u32 %v2583, 4294901760
  %v2891 = vsub.f32 %v2583, %v2890
  %v2892 = vand.u32 %v2891, 4294901760
  %v2893 = vsub.f32 %v2891, %v2892
  %v2894 = vand.u32 %v2893, 4294901760
  %2895 = vmatpush1.msra.mxu0 %v2894
  %2896 = vmatprep.subr.mxu0 0.0
  %v2897 = vand.u32 %v2582, 4294901760
  %v2898 = vsub.f32 %v2582, %v2897
  %v2899 = vand.u32 %v2898, 4294901760
  %v2900 = vsub.f32 %v2898, %v2899
  %v2901 = vand.u32 %v2900, 4294901760
  %2902 = vmatpush1.msra.mxu0 %v2901
  %2903 = vmatprep.subr.mxu0 0.0
  %v2904 = vand.u32 %v2581, 4294901760
  %v2905 = vsub.f32 %v2581, %v2904
  %v2906 = vand.u32 %v2905, 4294901760
  %v2907 = vsub.f32 %v2905, %v2906
  %v2908 = vand.u32 %v2907, 4294901760
  %2909 = vmatpush1.msra.mxu0 %v2908
  %2910 = vmatprep.subr.mxu0 0.0
  %v2911 = vand.u32 %v2580, 4294901760
  %v2912 = vsub.f32 %v2580, %v2911
  %v2913 = vand.u32 %v2912, 4294901760
  %v2914 = vsub.f32 %v2912, %v2913
  %v2915 = vand.u32 %v2914, 4294901760
  %2916 = vmatpush1.msra.mxu0 %v2915
  %2917 = vmatprep.subr.mxu0 0.0
  %v2918 = vand.u32 %v2579, 4294901760
  %v2919 = vsub.f32 %v2579, %v2918
  %v2920 = vand.u32 %v2919, 4294901760
  %v2921 = vsub.f32 %v2919, %v2920
  %v2922 = vand.u32 %v2921, 4294901760
  %2923 = vmatpush1.msra.mxu0 %v2922
  %2924 = vmatprep.subr.mxu0 0.0
  %v2925 = vand.u32 %v2578, 4294901760
  %v2926 = vsub.f32 %v2578, %v2925
  %v2927 = vand.u32 %v2926, 4294901760
  %v2928 = vsub.f32 %v2926, %v2927
  %v2929 = vand.u32 %v2928, 4294901760
  %2930 = vmatpush1.msra.mxu0 %v2929
  %2931 = vmatprep.subr.mxu0 0.0
  %v2932 = vand.u32 %v2577, 4294901760
  %v2933 = vsub.f32 %v2577, %v2932
  %v2934 = vand.u32 %v2933, 4294901760
  %v2935 = vsub.f32 %v2933, %v2934
  %v2936 = vand.u32 %v2935, 4294901760
  %2937 = vmatpush1.msra.mxu0 %v2936
  %2938 = vmatprep.subr.mxu0 0.0
  %2939 = vmatpush2.msra.mxu0 0.0
  %2940 = vmatprep.subr.mxu0 0.0
  %2941 = vmatpush2.msra.mxu0 0.0
  %2942 = vmatprep.subr.mxu0 0.0
  %2943 = vmatpush2.msra.mxu0 0.0
  %2944 = vmatprep.subr.mxu0 0.0
  %2945 = vmatpush2.msra.mxu0 0.0
  %2946 = vmatprep.subr.mxu0 0.0
  %2947 = vmatpush2.msra.mxu0 0.0
  %2948 = vmatprep.subr.mxu0 0.0
  %2949 = vmatpush2.msra.mxu0 0.0
  %2950 = vmatprep.subr.mxu0 0.0
  %2951 = vmatpush2.msra.mxu0 0.0
  %2952 = vmatprep.subr.mxu0 0.0
  %2953 = vmatpush2.msra.mxu0 0.0
  %2954 = vmatprep.subr.mxu0 0.0
  %2955 = vmatpush2.msra.mxu0 0.0
  %2956 = vmatprep.subr.mxu0 0.0
  %2957 = vmatpush2.msra.mxu0 0.0
  %2958 = vmatprep.subr.mxu0 0.0
  %2959 = vmatpush2.msra.mxu0 0.0
  %2960 = vmatprep.subr.mxu0 0.0
  %2961 = vmatpush2.msra.mxu0 0.0
  %2962 = vmatprep.subr.mxu0 0.0
  %2963 = vmatpush2.msra.mxu0 0.0
  %2964 = vmatprep.subr.mxu0 0.0
  %2965 = vmatpush2.msra.mxu0 0.0
  %2966 = vmatprep.subr.mxu0 0.0
  %2967 = vmatpush2.msra.mxu0 0.0
  %2968 = vmatprep.subr.mxu0 0.0
  %2969 = vmatpush2.msra.mxu0 0.0
  %2970 = vmatprep.mubr.f32.mxu0 0.0
  %v2971 = vand.u32 %v2586, 4294901760
  %2972 = vmatmul.mubr.f32.gmra.mxu0 %v2971
  %v2973 = vpop.f32.mrf.mxu0
  %v2974 = vadd.f32 %v2713, %v2973
  %v2975 = vpop.f32.mrf.mxu0
  %2976 = vmatprep.mubr.f32.mxu0 0.0
  %v2977 = vand.u32 %v2589, 4294901760
  %2978 = vmatmul.mubr.f32.gmra.mxu0 %v2977
  %v2979 = vpop.f32.mrf.mxu0
  %v2980 = vadd.f32 %v2723, %v2979
  %v2981 = vpop.f32.mrf.mxu0
  %2982 = vmatprep.mubr.f32.mxu0 0.0
  %v2983 = vand.u32 %v2592, 4294901760
  %2984 = vmatmul.mubr.f32.gmra.mxu0 %v2983
  %v2985 = vpop.f32.mrf.mxu0
  %v2986 = vadd.f32 %v2733, %v2985
  %v2987 = vpop.f32.mrf.mxu0
  %2988 = vmatprep.mubr.f32.mxu0 0.0
  %v2989 = vand.u32 %v2595, 4294901760
  %2990 = vmatmul.mubr.f32.gmra.mxu0 %v2989
  %v2991 = vpop.f32.mrf.mxu0
  %v2992 = vadd.f32 %v2743, %v2991
  %v2993 = vpop.f32.mrf.mxu0
  %2994 = vmatprep.mubr.f32.mxu0 0.0
  %v2995 = vand.u32 %v2598, 4294901760
  %2996 = vmatmul.mubr.f32.gmra.mxu0 %v2995
  %v2997 = vpop.f32.mrf.mxu0
  %v2998 = vadd.f32 %v2753, %v2997
  %v2999 = vpop.f32.mrf.mxu0
  %3000 = vmatprep.mubr.f32.mxu0 0.0
  %v3001 = vand.u32 %v2601, 4294901760
  %3002 = vmatmul.mubr.f32.gmra.mxu0 %v3001
  %v3003 = vpop.f32.mrf.mxu0
  %v3004 = vadd.f32 %v2763, %v3003
  %v3005 = vpop.f32.mrf.mxu0
  %3006 = vmatprep.mubr.f32.mxu0 0.0
  %v3007 = vand.u32 %v2604, 4294901760
  %3008 = vmatmul.mubr.f32.gmra.mxu0 %v3007
  %v3009 = vpop.f32.mrf.mxu0
  %v3010 = vadd.f32 %v2773, %v3009
  %v3011 = vpop.f32.mrf.mxu0
  %3012 = vmatprep.mubr.f32.mxu0 0.0
  %v3013 = vand.u32 %v2607, 4294901760
  %3014 = vmatmul.mubr.f32.gmra.mxu0 %v3013
  %v3015 = vpop.f32.mrf.mxu0
  %v3016 = vadd.f32 %v2783, %v3015
  %v3017 = vpop.f32.mrf.mxu0
  %3018 = vmatprep.mubr.f32.mxu0 0.0
  %v3019 = vand.u32 %v2610, 4294901760
  %3020 = vmatmul.mubr.f32.gmra.mxu0 %v3019
  %v3021 = vpop.f32.mrf.mxu0
  %v3022 = vadd.f32 %v2793, %v3021
  %v3023 = vpop.f32.mrf.mxu0
  %3024 = vmatprep.mubr.f32.mxu0 0.0
  %v3025 = vand.u32 %v2613, 4294901760
  %3026 = vmatmul.mubr.f32.gmra.mxu0 %v3025
  %v3027 = vpop.f32.mrf.mxu0
  %v3028 = vadd.f32 %v2803, %v3027
  %v3029 = vpop.f32.mrf.mxu0
  %3030 = vmatprep.mubr.f32.mxu0 0.0
  %v3031 = vand.u32 %v2616, 4294901760
  %3032 = vmatmul.mubr.f32.gmra.mxu0 %v3031
  %v3033 = vpop.f32.mrf.mxu0
  %v3034 = vadd.f32 %v2813, %v3033
  %v3035 = vpop.f32.mrf.mxu0
  %3036 = vmatprep.mubr.f32.mxu0 0.0
  %v3037 = vand.u32 %v2619, 4294901760
  %3038 = vmatmul.mubr.f32.gmra.mxu0 %v3037
  %v3039 = vpop.f32.mrf.mxu0
  %v3040 = vadd.f32 %v2823, %v3039
  %v3041 = vpop.f32.mrf.mxu0
  %3042 = vmatprep.mubr.f32.mxu0 0.0
  %v3043 = vand.u32 %v2622, 4294901760
  %3044 = vmatmul.mubr.f32.gmra.mxu0 %v3043
  %v3045 = vpop.f32.mrf.mxu0
  %v3046 = vadd.f32 %v2833, %v3045
  %v3047 = vpop.f32.mrf.mxu0
  %3048 = vmatprep.mubr.f32.mxu0 0.0
  %v3049 = vand.u32 %v2625, 4294901760
  %3050 = vmatmul.mubr.f32.gmra.mxu0 %v3049
  %v3051 = vpop.f32.mrf.mxu0
  %v3052 = vadd.f32 %v2843, %v3051
  %v3053 = vpop.f32.mrf.mxu0
  %3054 = vmatprep.mubr.f32.mxu0 0.0
  %v3055 = vand.u32 %v2628, 4294901760
  %3056 = vmatmul.mubr.f32.gmra.mxu0 %v3055
  %v3057 = vpop.f32.mrf.mxu0
  %v3058 = vadd.f32 %v2853, %v3057
  %v3059 = vpop.f32.mrf.mxu0
  %3060 = vmatprep.mubr.f32.mxu0 0.0
  %v3061 = vand.u32 %v2631, 4294901760
  %3062 = vmatmul.mubr.f32.gmra.mxu0 %v3061
  %v3063 = vpop.f32.mrf.mxu0
  %v3064 = vadd.f32 %v2863, %v3063
  %v3065 = vpop.f32.mrf.mxu0
  %3066 = vdwg.mxu0
  %3067 = vmatprep.subr.mxu0 0.0
  %3068 = vmatpush1.msra.mxu0 0.0
  %3069 = vmatprep.subr.mxu0 0.0
  %3070 = vmatpush1.msra.mxu0 0.0
  %3071 = vmatprep.subr.mxu0 0.0
  %3072 = vmatpush1.msra.mxu0 0.0
  %3073 = vmatprep.subr.mxu0 0.0
  %3074 = vmatpush1.msra.mxu0 0.0
  %3075 = vmatprep.subr.mxu0 0.0
  %3076 = vmatpush1.msra.mxu0 0.0
  %3077 = vmatprep.subr.mxu0 0.0
  %3078 = vmatpush1.msra.mxu0 0.0
  %3079 = vmatprep.subr.mxu0 0.0
  %3080 = vmatpush1.msra.mxu0 0.0
  %3081 = vmatprep.subr.mxu0 0.0
  %3082 = vmatpush1.msra.mxu0 0.0
  %3083 = vmatprep.subr.mxu0 0.0
  %v3084 = vand.u32 %v2584, 4294901760
  %v3085 = vsub.f32 %v2584, %v3084
  %3086 = vmatpush1.msra.mxu0 %v3085
  %3087 = vmatprep.subr.mxu0 0.0
  %v3088 = vand.u32 %v2583, 4294901760
  %v3089 = vsub.f32 %v2583, %v3088
  %3090 = vmatpush1.msra.mxu0 %v3089
  %3091 = vmatprep.subr.mxu0 0.0
  %v3092 = vand.u32 %v2582, 4294901760
  %v3093 = vsub.f32 %v2582, %v3092
  %3094 = vmatpush1.msra.mxu0 %v3093
  %3095 = vmatprep.subr.mxu0 0.0
  %v3096 = vand.u32 %v2581, 4294901760
  %v3097 = vsub.f32 %v2581, %v3096
  %3098 = vmatpush1.msra.mxu0 %v3097
  %3099 = vmatprep.subr.mxu0 0.0
  %v3100 = vand.u32 %v2580, 4294901760
  %v3101 = vsub.f32 %v2580, %v3100
  %3102 = vmatpush1.msra.mxu0 %v3101
  %3103 = vmatprep.subr.mxu0 0.0
  %v3104 = vand.u32 %v2579, 4294901760
  %v3105 = vsub.f32 %v2579, %v3104
  %3106 = vmatpush1.msra.mxu0 %v3105
  %3107 = vmatprep.subr.mxu0 0.0
  %v3108 = vand.u32 %v2578, 4294901760
  %v3109 = vsub.f32 %v2578, %v3108
  %3110 = vmatpush1.msra.mxu0 %v3109
  %3111 = vmatprep.subr.mxu0 0.0
  %v3112 = vand.u32 %v2577, 4294901760
  %v3113 = vsub.f32 %v2577, %v3112
  %3114 = vmatpush1.msra.mxu0 %v3113
  %3115 = vmatprep.subr.mxu0 0.0
  %3116 = vmatpush2.msra.mxu0 0.0
  %3117 = vmatprep.subr.mxu0 0.0
  %3118 = vmatpush2.msra.mxu0 0.0
  %3119 = vmatprep.subr.mxu0 0.0
  %3120 = vmatpush2.msra.mxu0 0.0
  %3121 = vmatprep.subr.mxu0 0.0
  %3122 = vmatpush2.msra.mxu0 0.0
  %3123 = vmatprep.subr.mxu0 0.0
  %3124 = vmatpush2.msra.mxu0 0.0
  %3125 = vmatprep.subr.mxu0 0.0
  %3126 = vmatpush2.msra.mxu0 0.0
  %3127 = vmatprep.subr.mxu0 0.0
  %3128 = vmatpush2.msra.mxu0 0.0
  %3129 = vmatprep.subr.mxu0 0.0
  %3130 = vmatpush2.msra.mxu0 0.0
  %3131 = vmatprep.subr.mxu0 0.0
  %3132 = vmatpush2.msra.mxu0 0.0
  %3133 = vmatprep.subr.mxu0 0.0
  %3134 = vmatpush2.msra.mxu0 0.0
  %3135 = vmatprep.subr.mxu0 0.0
  %3136 = vmatpush2.msra.mxu0 0.0
  %3137 = vmatprep.subr.mxu0 0.0
  %3138 = vmatpush2.msra.mxu0 0.0
  %3139 = vmatprep.subr.mxu0 0.0
  %3140 = vmatpush2.msra.mxu0 0.0
  %3141 = vmatprep.subr.mxu0 0.0
  %3142 = vmatpush2.msra.mxu0 0.0
  %3143 = vmatprep.subr.mxu0 0.0
  %3144 = vmatpush2.msra.mxu0 0.0
  %3145 = vmatprep.subr.mxu0 0.0
  %3146 = vmatpush2.msra.mxu0 0.0
  %3147 = vmatprep.mubr.f32.mxu0 0.0
  %v3148 = vand.u32 %v2586, 4294901760
  %v3149 = vsub.f32 %v2586, %v3148
  %3150 = vmatmul.mubr.f32.gmra.mxu0 %v3149
  %v3151 = vpop.f32.mrf.mxu0
  %v3152 = vadd.f32 %v2974, %v3151
  %v3153 = vpop.f32.mrf.mxu0
  %3154 = vmatprep.mubr.f32.mxu0 0.0
  %v3155 = vand.u32 %v2589, 4294901760
  %v3156 = vsub.f32 %v2589, %v3155
  %3157 = vmatmul.mubr.f32.gmra.mxu0 %v3156
  %v3158 = vpop.f32.mrf.mxu0
  %v3159 = vadd.f32 %v2980, %v3158
  %v3160 = vpop.f32.mrf.mxu0
  %3161 = vmatprep.mubr.f32.mxu0 0.0
  %v3162 = vand.u32 %v2592, 4294901760
  %v3163 = vsub.f32 %v2592, %v3162
  %3164 = vmatmul.mubr.f32.gmra.mxu0 %v3163
  %v3165 = vpop.f32.mrf.mxu0
  %v3166 = vadd.f32 %v2986, %v3165
  %v3167 = vpop.f32.mrf.mxu0
  %3168 = vmatprep.mubr.f32.mxu0 0.0
  %v3169 = vand.u32 %v2595, 4294901760
  %v3170 = vsub.f32 %v2595, %v3169
  %3171 = vmatmul.mubr.f32.gmra.mxu0 %v3170
  %v3172 = vpop.f32.mrf.mxu0
  %v3173 = vadd.f32 %v2992, %v3172
  %v3174 = vpop.f32.mrf.mxu0
  %3175 = vmatprep.mubr.f32.mxu0 0.0
  %v3176 = vand.u32 %v2598, 4294901760
  %v3177 = vsub.f32 %v2598, %v3176
  %3178 = vmatmul.mubr.f32.gmra.mxu0 %v3177
  %v3179 = vpop.f32.mrf.mxu0
  %v3180 = vadd.f32 %v2998, %v3179
  %v3181 = vpop.f32.mrf.mxu0
  %3182 = vmatprep.mubr.f32.mxu0 0.0
  %v3183 = vand.u32 %v2601, 4294901760
  %v3184 = vsub.f32 %v2601, %v3183
  %3185 = vmatmul.mubr.f32.gmra.mxu0 %v3184
  %v3186 = vpop.f32.mrf.mxu0
  %v3187 = vadd.f32 %v3004, %v3186
  %v3188 = vpop.f32.mrf.mxu0
  %3189 = vmatprep.mubr.f32.mxu0 0.0
  %v3190 = vand.u32 %v2604, 4294901760
  %v3191 = vsub.f32 %v2604, %v3190
  %3192 = vmatmul.mubr.f32.gmra.mxu0 %v3191
  %v3193 = vpop.f32.mrf.mxu0
  %v3194 = vadd.f32 %v3010, %v3193
  %v3195 = vpop.f32.mrf.mxu0
  %3196 = vmatprep.mubr.f32.mxu0 0.0
  %v3197 = vand.u32 %v2607, 4294901760
  %v3198 = vsub.f32 %v2607, %v3197
  %3199 = vmatmul.mubr.f32.gmra.mxu0 %v3198
  %v3200 = vpop.f32.mrf.mxu0
  %v3201 = vadd.f32 %v3016, %v3200
  %v3202 = vpop.f32.mrf.mxu0
  %3203 = vmatprep.mubr.f32.mxu0 0.0
  %v3204 = vand.u32 %v2610, 4294901760
  %v3205 = vsub.f32 %v2610, %v3204
  %3206 = vmatmul.mubr.f32.gmra.mxu0 %v3205
  %v3207 = vpop.f32.mrf.mxu0
  %v3208 = vadd.f32 %v3022, %v3207
  %v3209 = vpop.f32.mrf.mxu0
  %3210 = vmatprep.mubr.f32.mxu0 0.0
  %v3211 = vand.u32 %v2613, 4294901760
  %v3212 = vsub.f32 %v2613, %v3211
  %3213 = vmatmul.mubr.f32.gmra.mxu0 %v3212
  %v3214 = vpop.f32.mrf.mxu0
  %v3215 = vadd.f32 %v3028, %v3214
  %v3216 = vpop.f32.mrf.mxu0
  %3217 = vmatprep.mubr.f32.mxu0 0.0
  %v3218 = vand.u32 %v2616, 4294901760
  %v3219 = vsub.f32 %v2616, %v3218
  %3220 = vmatmul.mubr.f32.gmra.mxu0 %v3219
  %v3221 = vpop.f32.mrf.mxu0
  %v3222 = vadd.f32 %v3034, %v3221
  %v3223 = vpop.f32.mrf.mxu0
  %3224 = vmatprep.mubr.f32.mxu0 0.0
  %v3225 = vand.u32 %v2619, 4294901760
  %v3226 = vsub.f32 %v2619, %v3225
  %3227 = vmatmul.mubr.f32.gmra.mxu0 %v3226
  %v3228 = vpop.f32.mrf.mxu0
  %v3229 = vadd.f32 %v3040, %v3228
  %v3230 = vpop.f32.mrf.mxu0
  %3231 = vmatprep.mubr.f32.mxu0 0.0
  %v3232 = vand.u32 %v2622, 4294901760
  %v3233 = vsub.f32 %v2622, %v3232
  %3234 = vmatmul.mubr.f32.gmra.mxu0 %v3233
  %v3235 = vpop.f32.mrf.mxu0
  %v3236 = vadd.f32 %v3046, %v3235
  %v3237 = vpop.f32.mrf.mxu0
  %3238 = vmatprep.mubr.f32.mxu0 0.0
  %v3239 = vand.u32 %v2625, 4294901760
  %v3240 = vsub.f32 %v2625, %v3239
  %3241 = vmatmul.mubr.f32.gmra.mxu0 %v3240
  %v3242 = vpop.f32.mrf.mxu0
  %v3243 = vadd.f32 %v3052, %v3242
  %v3244 = vpop.f32.mrf.mxu0
  %3245 = vmatprep.mubr.f32.mxu0 0.0
  %v3246 = vand.u32 %v2628, 4294901760
  %v3247 = vsub.f32 %v2628, %v3246
  %3248 = vmatmul.mubr.f32.gmra.mxu0 %v3247
  %v3249 = vpop.f32.mrf.mxu0
  %v3250 = vadd.f32 %v3058, %v3249
  %v3251 = vpop.f32.mrf.mxu0
  %3252 = vmatprep.mubr.f32.mxu0 0.0
  %v3253 = vand.u32 %v2631, 4294901760
  %v3254 = vsub.f32 %v2631, %v3253
  %3255 = vmatmul.mubr.f32.gmra.mxu0 %v3254
  %v3256 = vpop.f32.mrf.mxu0
  %v3257 = vadd.f32 %v3064, %v3256
  %v3258 = vpop.f32.mrf.mxu0
  %3259 = vdwg.mxu0
  %3260 = vmatprep.subr.mxu0 0.0
  %3261 = vmatpush1.msra.mxu0 0.0
  %3262 = vmatprep.subr.mxu0 0.0
  %3263 = vmatpush1.msra.mxu0 0.0
  %3264 = vmatprep.subr.mxu0 0.0
  %3265 = vmatpush1.msra.mxu0 0.0
  %3266 = vmatprep.subr.mxu0 0.0
  %3267 = vmatpush1.msra.mxu0 0.0
  %3268 = vmatprep.subr.mxu0 0.0
  %3269 = vmatpush1.msra.mxu0 0.0
  %3270 = vmatprep.subr.mxu0 0.0
  %3271 = vmatpush1.msra.mxu0 0.0
  %3272 = vmatprep.subr.mxu0 0.0
  %3273 = vmatpush1.msra.mxu0 0.0
  %3274 = vmatprep.subr.mxu0 0.0
  %3275 = vmatpush1.msra.mxu0 0.0
  %3276 = vmatprep.subr.mxu0 0.0
  %v3277 = vand.u32 %v2584, 4294901760
  %3278 = vmatpush1.msra.mxu0 %v3277
  %3279 = vmatprep.subr.mxu0 0.0
  %v3280 = vand.u32 %v2583, 4294901760
  %3281 = vmatpush1.msra.mxu0 %v3280
  %3282 = vmatprep.subr.mxu0 0.0
  %v3283 = vand.u32 %v2582, 4294901760
  %3284 = vmatpush1.msra.mxu0 %v3283
  %3285 = vmatprep.subr.mxu0 0.0
  %v3286 = vand.u32 %v2581, 4294901760
  %3287 = vmatpush1.msra.mxu0 %v3286
  %3288 = vmatprep.subr.mxu0 0.0
  %v3289 = vand.u32 %v2580, 4294901760
  %3290 = vmatpush1.msra.mxu0 %v3289
  %3291 = vmatprep.subr.mxu0 0.0
  %v3292 = vand.u32 %v2579, 4294901760
  %3293 = vmatpush1.msra.mxu0 %v3292
  %3294 = vmatprep.subr.mxu0 0.0
  %v3295 = vand.u32 %v2578, 4294901760
  %3296 = vmatpush1.msra.mxu0 %v3295
  %3297 = vmatprep.subr.mxu0 0.0
  %v3298 = vand.u32 %v2577, 4294901760
  %3299 = vmatpush1.msra.mxu0 %v3298
  %3300 = vmatprep.subr.mxu0 0.0
  %3301 = vmatpush2.msra.mxu0 0.0
  %3302 = vmatprep.subr.mxu0 0.0
  %3303 = vmatpush2.msra.mxu0 0.0
  %3304 = vmatprep.subr.mxu0 0.0
  %3305 = vmatpush2.msra.mxu0 0.0
  %3306 = vmatprep.subr.mxu0 0.0
  %3307 = vmatpush2.msra.mxu0 0.0
  %3308 = vmatprep.subr.mxu0 0.0
  %3309 = vmatpush2.msra.mxu0 0.0
  %3310 = vmatprep.subr.mxu0 0.0
  %3311 = vmatpush2.msra.mxu0 0.0
  %3312 = vmatprep.subr.mxu0 0.0
  %3313 = vmatpush2.msra.mxu0 0.0
  %3314 = vmatprep.subr.mxu0 0.0
  %3315 = vmatpush2.msra.mxu0 0.0
  %3316 = vmatprep.subr.mxu0 0.0
  %3317 = vmatpush2.msra.mxu0 0.0
  %3318 = vmatprep.subr.mxu0 0.0
  %3319 = vmatpush2.msra.mxu0 0.0
  %3320 = vmatprep.subr.mxu0 0.0
  %3321 = vmatpush2.msra.mxu0 0.0
  %3322 = vmatprep.subr.mxu0 0.0
  %3323 = vmatpush2.msra.mxu0 0.0
  %3324 = vmatprep.subr.mxu0 0.0
  %3325 = vmatpush2.msra.mxu0 0.0
  %3326 = vmatprep.subr.mxu0 0.0
  %3327 = vmatpush2.msra.mxu0 0.0
  %3328 = vmatprep.subr.mxu0 0.0
  %3329 = vmatpush2.msra.mxu0 0.0
  %3330 = vmatprep.subr.mxu0 0.0
  %3331 = vmatpush2.msra.mxu0 0.0
  %3332 = vmatprep.mubr.f32.mxu0 0.0
  %v3333 = vand.u32 %v2586, 4294901760
  %v3334 = vsub.f32 %v2586, %v3333
  %v3335 = vand.u32 %v3334, 4294901760
  %3336 = vmatmul.mubr.f32.gmra.mxu0 %v3335
  %v3337 = vpop.f32.mrf.mxu0
  %v3338 = vadd.f32 %v3152, %v3337
  %v3339 = vpop.f32.mrf.mxu0
  %3340 = vmatprep.mubr.f32.mxu0 0.0
  %v3341 = vand.u32 %v2589, 4294901760
  %v3342 = vsub.f32 %v2589, %v3341
  %v3343 = vand.u32 %v3342, 4294901760
  %3344 = vmatmul.mubr.f32.gmra.mxu0 %v3343
  %v3345 = vpop.f32.mrf.mxu0
  %v3346 = vadd.f32 %v3159, %v3345
  %v3347 = vpop.f32.mrf.mxu0
  %3348 = vmatprep.mubr.f32.mxu0 0.0
  %v3349 = vand.u32 %v2592, 4294901760
  %v3350 = vsub.f32 %v2592, %v3349
  %v3351 = vand.u32 %v3350, 4294901760
  %3352 = vmatmul.mubr.f32.gmra.mxu0 %v3351
  %v3353 = vpop.f32.mrf.mxu0
  %v3354 = vadd.f32 %v3166, %v3353
  %v3355 = vpop.f32.mrf.mxu0
  %3356 = vmatprep.mubr.f32.mxu0 0.0
  %v3357 = vand.u32 %v2595, 4294901760
  %v3358 = vsub.f32 %v2595, %v3357
  %v3359 = vand.u32 %v3358, 4294901760
  %3360 = vmatmul.mubr.f32.gmra.mxu0 %v3359
  %v3361 = vpop.f32.mrf.mxu0
  %v3362 = vadd.f32 %v3173, %v3361
  %v3363 = vpop.f32.mrf.mxu0
  %3364 = vmatprep.mubr.f32.mxu0 0.0
  %v3365 = vand.u32 %v2598, 4294901760
  %v3366 = vsub.f32 %v2598, %v3365
  %v3367 = vand.u32 %v3366, 4294901760
  %3368 = vmatmul.mubr.f32.gmra.mxu0 %v3367
  %v3369 = vpop.f32.mrf.mxu0
  %v3370 = vadd.f32 %v3180, %v3369
  %v3371 = vpop.f32.mrf.mxu0
  %3372 = vmatprep.mubr.f32.mxu0 0.0
  %v3373 = vand.u32 %v2601, 4294901760
  %v3374 = vsub.f32 %v2601, %v3373
  %v3375 = vand.u32 %v3374, 4294901760
  %3376 = vmatmul.mubr.f32.gmra.mxu0 %v3375
  %v3377 = vpop.f32.mrf.mxu0
  %v3378 = vadd.f32 %v3187, %v3377
  %v3379 = vpop.f32.mrf.mxu0
  %3380 = vmatprep.mubr.f32.mxu0 0.0
  %v3381 = vand.u32 %v2604, 4294901760
  %v3382 = vsub.f32 %v2604, %v3381
  %v3383 = vand.u32 %v3382, 4294901760
  %3384 = vmatmul.mubr.f32.gmra.mxu0 %v3383
  %v3385 = vpop.f32.mrf.mxu0
  %v3386 = vadd.f32 %v3194, %v3385
  %v3387 = vpop.f32.mrf.mxu0
  %3388 = vmatprep.mubr.f32.mxu0 0.0
  %v3389 = vand.u32 %v2607, 4294901760
  %v3390 = vsub.f32 %v2607, %v3389
  %v3391 = vand.u32 %v3390, 4294901760
  %3392 = vmatmul.mubr.f32.gmra.mxu0 %v3391
  %v3393 = vpop.f32.mrf.mxu0
  %v3394 = vadd.f32 %v3201, %v3393
  %v3395 = vpop.f32.mrf.mxu0
  %3396 = vmatprep.mubr.f32.mxu0 0.0
  %v3397 = vand.u32 %v2610, 4294901760
  %v3398 = vsub.f32 %v2610, %v3397
  %v3399 = vand.u32 %v3398, 4294901760
  %3400 = vmatmul.mubr.f32.gmra.mxu0 %v3399
  %v3401 = vpop.f32.mrf.mxu0
  %v3402 = vadd.f32 %v3208, %v3401
  %v3403 = vpop.f32.mrf.mxu0
  %3404 = vmatprep.mubr.f32.mxu0 0.0
  %v3405 = vand.u32 %v2613, 4294901760
  %v3406 = vsub.f32 %v2613, %v3405
  %v3407 = vand.u32 %v3406, 4294901760
  %3408 = vmatmul.mubr.f32.gmra.mxu0 %v3407
  %v3409 = vpop.f32.mrf.mxu0
  %v3410 = vadd.f32 %v3215, %v3409
  %v3411 = vpop.f32.mrf.mxu0
  %3412 = vmatprep.mubr.f32.mxu0 0.0
  %v3413 = vand.u32 %v2616, 4294901760
  %v3414 = vsub.f32 %v2616, %v3413
  %v3415 = vand.u32 %v3414, 4294901760
  %3416 = vmatmul.mubr.f32.gmra.mxu0 %v3415
  %v3417 = vpop.f32.mrf.mxu0
  %v3418 = vadd.f32 %v3222, %v3417
  %v3419 = vpop.f32.mrf.mxu0
  %3420 = vmatprep.mubr.f32.mxu0 0.0
  %v3421 = vand.u32 %v2619, 4294901760
  %v3422 = vsub.f32 %v2619, %v3421
  %v3423 = vand.u32 %v3422, 4294901760
  %3424 = vmatmul.mubr.f32.gmra.mxu0 %v3423
  %v3425 = vpop.f32.mrf.mxu0
  %v3426 = vadd.f32 %v3229, %v3425
  %v3427 = vpop.f32.mrf.mxu0
  %3428 = vmatprep.mubr.f32.mxu0 0.0
  %v3429 = vand.u32 %v2622, 4294901760
  %v3430 = vsub.f32 %v2622, %v3429
  %v3431 = vand.u32 %v3430, 4294901760
  %3432 = vmatmul.mubr.f32.gmra.mxu0 %v3431
  %v3433 = vpop.f32.mrf.mxu0
  %v3434 = vadd.f32 %v3236, %v3433
  %v3435 = vpop.f32.mrf.mxu0
  %3436 = vmatprep.mubr.f32.mxu0 0.0
  %v3437 = vand.u32 %v2625, 4294901760
  %v3438 = vsub.f32 %v2625, %v3437
  %v3439 = vand.u32 %v3438, 4294901760
  %3440 = vmatmul.mubr.f32.gmra.mxu0 %v3439
  %v3441 = vpop.f32.mrf.mxu0
  %v3442 = vadd.f32 %v3243, %v3441
  %v3443 = vpop.f32.mrf.mxu0
  %3444 = vmatprep.mubr.f32.mxu0 0.0
  %v3445 = vand.u32 %v2628, 4294901760
  %v3446 = vsub.f32 %v2628, %v3445
  %v3447 = vand.u32 %v3446, 4294901760
  %3448 = vmatmul.mubr.f32.gmra.mxu0 %v3447
  %v3449 = vpop.f32.mrf.mxu0
  %v3450 = vadd.f32 %v3250, %v3449
  %v3451 = vpop.f32.mrf.mxu0
  %3452 = vmatprep.mubr.f32.mxu0 0.0
  %v3453 = vand.u32 %v2631, 4294901760
  %v3454 = vsub.f32 %v2631, %v3453
  %v3455 = vand.u32 %v3454, 4294901760
  %3456 = vmatmul.mubr.f32.gmra.mxu0 %v3455
  %v3457 = vpop.f32.mrf.mxu0
  %v3458 = vadd.f32 %v3257, %v3457
  %v3459 = vpop.f32.mrf.mxu0
  %3460 = vdwg.mxu0
  %3461 = vmatprep.subr.mxu0 0.0
  %3462 = vmatpush1.msra.mxu0 0.0
  %3463 = vmatprep.subr.mxu0 0.0
  %3464 = vmatpush1.msra.mxu0 0.0
  %3465 = vmatprep.subr.mxu0 0.0
  %3466 = vmatpush1.msra.mxu0 0.0
  %3467 = vmatprep.subr.mxu0 0.0
  %3468 = vmatpush1.msra.mxu0 0.0
  %3469 = vmatprep.subr.mxu0 0.0
  %3470 = vmatpush1.msra.mxu0 0.0
  %3471 = vmatprep.subr.mxu0 0.0
  %3472 = vmatpush1.msra.mxu0 0.0
  %3473 = vmatprep.subr.mxu0 0.0
  %3474 = vmatpush1.msra.mxu0 0.0
  %3475 = vmatprep.subr.mxu0 0.0
  %3476 = vmatpush1.msra.mxu0 0.0
  %3477 = vmatprep.subr.mxu0 0.0
  %v3478 = vand.u32 %v2584, 4294901760
  %v3479 = vsub.f32 %v2584, %v3478
  %v3480 = vand.u32 %v3479, 4294901760
  %3481 = vmatpush1.msra.mxu0 %v3480
  %3482 = vmatprep.subr.mxu0 0.0
  %v3483 = vand.u32 %v2583, 4294901760
  %v3484 = vsub.f32 %v2583, %v3483
  %v3485 = vand.u32 %v3484, 4294901760
  %3486 = vmatpush1.msra.mxu0 %v3485
  %3487 = vmatprep.subr.mxu0 0.0
  %v3488 = vand.u32 %v2582, 4294901760
  %v3489 = vsub.f32 %v2582, %v3488
  %v3490 = vand.u32 %v3489, 4294901760
  %3491 = vmatpush1.msra.mxu0 %v3490
  %3492 = vmatprep.subr.mxu0 0.0
  %v3493 = vand.u32 %v2581, 4294901760
  %v3494 = vsub.f32 %v2581, %v3493
  %v3495 = vand.u32 %v3494, 4294901760
  %3496 = vmatpush1.msra.mxu0 %v3495
  %3497 = vmatprep.subr.mxu0 0.0
  %v3498 = vand.u32 %v2580, 4294901760
  %v3499 = vsub.f32 %v2580, %v3498
  %v3500 = vand.u32 %v3499, 4294901760
  %3501 = vmatpush1.msra.mxu0 %v3500
  %3502 = vmatprep.subr.mxu0 0.0
  %v3503 = vand.u32 %v2579, 4294901760
  %v3504 = vsub.f32 %v2579, %v3503
  %v3505 = vand.u32 %v3504, 4294901760
  %3506 = vmatpush1.msra.mxu0 %v3505
  %3507 = vmatprep.subr.mxu0 0.0
  %v3508 = vand.u32 %v2578, 4294901760
  %v3509 = vsub.f32 %v2578, %v3508
  %v3510 = vand.u32 %v3509, 4294901760
  %3511 = vmatpush1.msra.mxu0 %v3510
  %3512 = vmatprep.subr.mxu0 0.0
  %v3513 = vand.u32 %v2577, 4294901760
  %v3514 = vsub.f32 %v2577, %v3513
  %v3515 = vand.u32 %v3514, 4294901760
  %3516 = vmatpush1.msra.mxu0 %v3515
  %3517 = vmatprep.subr.mxu0 0.0
  %3518 = vmatpush2.msra.mxu0 0.0
  %3519 = vmatprep.subr.mxu0 0.0
  %3520 = vmatpush2.msra.mxu0 0.0
  %3521 = vmatprep.subr.mxu0 0.0
  %3522 = vmatpush2.msra.mxu0 0.0
  %3523 = vmatprep.subr.mxu0 0.0
  %3524 = vmatpush2.msra.mxu0 0.0
  %3525 = vmatprep.subr.mxu0 0.0
  %3526 = vmatpush2.msra.mxu0 0.0
  %3527 = vmatprep.subr.mxu0 0.0
  %3528 = vmatpush2.msra.mxu0 0.0
  %3529 = vmatprep.subr.mxu0 0.0
  %3530 = vmatpush2.msra.mxu0 0.0
  %3531 = vmatprep.subr.mxu0 0.0
  %3532 = vmatpush2.msra.mxu0 0.0
  %3533 = vmatprep.subr.mxu0 0.0
  %3534 = vmatpush2.msra.mxu0 0.0
  %3535 = vmatprep.subr.mxu0 0.0
  %3536 = vmatpush2.msra.mxu0 0.0
  %3537 = vmatprep.subr.mxu0 0.0
  %3538 = vmatpush2.msra.mxu0 0.0
  %3539 = vmatprep.subr.mxu0 0.0
  %3540 = vmatpush2.msra.mxu0 0.0
  %3541 = vmatprep.subr.mxu0 0.0
  %3542 = vmatpush2.msra.mxu0 0.0
  %3543 = vmatprep.subr.mxu0 0.0
  %3544 = vmatpush2.msra.mxu0 0.0
  %3545 = vmatprep.subr.mxu0 0.0
  %3546 = vmatpush2.msra.mxu0 0.0
  %3547 = vmatprep.subr.mxu0 0.0
  %3548 = vmatpush2.msra.mxu0 0.0
  %3549 = vmatprep.mubr.f32.mxu0 0.0
  %v3550 = vand.u32 %v2586, 4294901760
  %3551 = vmatmul.mubr.f32.gmra.mxu0 %v3550
  %v3552 = vpop.f32.mrf.mxu0
  %v3553 = vadd.f32 %v3338, %v3552
  %v3554 = vpop.f32.mrf.mxu0
  %3555 = vmatprep.mubr.f32.mxu0 0.0
  %v3556 = vand.u32 %v2589, 4294901760
  %3557 = vmatmul.mubr.f32.gmra.mxu0 %v3556
  %v3558 = vpop.f32.mrf.mxu0
  %v3559 = vadd.f32 %v3346, %v3558
  %v3560 = vpop.f32.mrf.mxu0
  %3561 = vmatprep.mubr.f32.mxu0 0.0
  %v3562 = vand.u32 %v2592, 4294901760
  %3563 = vmatmul.mubr.f32.gmra.mxu0 %v3562
  %v3564 = vpop.f32.mrf.mxu0
  %v3565 = vadd.f32 %v3354, %v3564
  %v3566 = vpop.f32.mrf.mxu0
  %3567 = vmatprep.mubr.f32.mxu0 0.0
  %v3568 = vand.u32 %v2595, 4294901760
  %3569 = vmatmul.mubr.f32.gmra.mxu0 %v3568
  %v3570 = vpop.f32.mrf.mxu0
  %v3571 = vadd.f32 %v3362, %v3570
  %v3572 = vpop.f32.mrf.mxu0
  %3573 = vmatprep.mubr.f32.mxu0 0.0
  %v3574 = vand.u32 %v2598, 4294901760
  %3575 = vmatmul.mubr.f32.gmra.mxu0 %v3574
  %v3576 = vpop.f32.mrf.mxu0
  %v3577 = vadd.f32 %v3370, %v3576
  %v3578 = vpop.f32.mrf.mxu0
  %3579 = vmatprep.mubr.f32.mxu0 0.0
  %v3580 = vand.u32 %v2601, 4294901760
  %3581 = vmatmul.mubr.f32.gmra.mxu0 %v3580
  %v3582 = vpop.f32.mrf.mxu0
  %v3583 = vadd.f32 %v3378, %v3582
  %v3584 = vpop.f32.mrf.mxu0
  %3585 = vmatprep.mubr.f32.mxu0 0.0
  %v3586 = vand.u32 %v2604, 4294901760
  %3587 = vmatmul.mubr.f32.gmra.mxu0 %v3586
  %v3588 = vpop.f32.mrf.mxu0
  %v3589 = vadd.f32 %v3386, %v3588
  %v3590 = vpop.f32.mrf.mxu0
  %3591 = vmatprep.mubr.f32.mxu0 0.0
  %v3592 = vand.u32 %v2607, 4294901760
  %3593 = vmatmul.mubr.f32.gmra.mxu0 %v3592
  %v3594 = vpop.f32.mrf.mxu0
  %v3595 = vadd.f32 %v3394, %v3594
  %v3596 = vpop.f32.mrf.mxu0
  %3597 = vmatprep.mubr.f32.mxu0 0.0
  %v3598 = vand.u32 %v2610, 4294901760
  %3599 = vmatmul.mubr.f32.gmra.mxu0 %v3598
  %v3600 = vpop.f32.mrf.mxu0
  %v3601 = vadd.f32 %v3402, %v3600
  %v3602 = vpop.f32.mrf.mxu0
  %3603 = vmatprep.mubr.f32.mxu0 0.0
  %v3604 = vand.u32 %v2613, 4294901760
  %3605 = vmatmul.mubr.f32.gmra.mxu0 %v3604
  %v3606 = vpop.f32.mrf.mxu0
  %v3607 = vadd.f32 %v3410, %v3606
  %v3608 = vpop.f32.mrf.mxu0
  %3609 = vmatprep.mubr.f32.mxu0 0.0
  %v3610 = vand.u32 %v2616, 4294901760
  %3611 = vmatmul.mubr.f32.gmra.mxu0 %v3610
  %v3612 = vpop.f32.mrf.mxu0
  %v3613 = vadd.f32 %v3418, %v3612
  %v3614 = vpop.f32.mrf.mxu0
  %3615 = vmatprep.mubr.f32.mxu0 0.0
  %v3616 = vand.u32 %v2619, 4294901760
  %3617 = vmatmul.mubr.f32.gmra.mxu0 %v3616
  %v3618 = vpop.f32.mrf.mxu0
  %v3619 = vadd.f32 %v3426, %v3618
  %v3620 = vpop.f32.mrf.mxu0
  %3621 = vmatprep.mubr.f32.mxu0 0.0
  %v3622 = vand.u32 %v2622, 4294901760
  %3623 = vmatmul.mubr.f32.gmra.mxu0 %v3622
  %v3624 = vpop.f32.mrf.mxu0
  %v3625 = vadd.f32 %v3434, %v3624
  %v3626 = vpop.f32.mrf.mxu0
  %3627 = vmatprep.mubr.f32.mxu0 0.0
  %v3628 = vand.u32 %v2625, 4294901760
  %3629 = vmatmul.mubr.f32.gmra.mxu0 %v3628
  %v3630 = vpop.f32.mrf.mxu0
  %v3631 = vadd.f32 %v3442, %v3630
  %v3632 = vpop.f32.mrf.mxu0
  %3633 = vmatprep.mubr.f32.mxu0 0.0
  %v3634 = vand.u32 %v2628, 4294901760
  %3635 = vmatmul.mubr.f32.gmra.mxu0 %v3634
  %v3636 = vpop.f32.mrf.mxu0
  %v3637 = vadd.f32 %v3450, %v3636
  %v3638 = vpop.f32.mrf.mxu0
  %3639 = vmatprep.mubr.f32.mxu0 0.0
  %v3640 = vand.u32 %v2631, 4294901760
  %3641 = vmatmul.mubr.f32.gmra.mxu0 %v3640
  %v3642 = vpop.f32.mrf.mxu0
  %v3643 = vadd.f32 %v3458, %v3642
  %v3644 = vpop.f32.mrf.mxu0
  %3645 = vdwg.mxu0
  %3646 = vmatprep.subr.mxu0 0.0
  %3647 = vmatpush1.msra.mxu0 0.0
  %3648 = vmatprep.subr.mxu0 0.0
  %3649 = vmatpush1.msra.mxu0 0.0
  %3650 = vmatprep.subr.mxu0 0.0
  %3651 = vmatpush1.msra.mxu0 0.0
  %3652 = vmatprep.subr.mxu0 0.0
  %3653 = vmatpush1.msra.mxu0 0.0
  %3654 = vmatprep.subr.mxu0 0.0
  %3655 = vmatpush1.msra.mxu0 0.0
  %3656 = vmatprep.subr.mxu0 0.0
  %3657 = vmatpush1.msra.mxu0 0.0
  %3658 = vmatprep.subr.mxu0 0.0
  %3659 = vmatpush1.msra.mxu0 0.0
  %3660 = vmatprep.subr.mxu0 0.0
  %3661 = vmatpush1.msra.mxu0 0.0
  %3662 = vmatprep.subr.mxu0 0.0
  %v3663 = vand.u32 %v2584, 4294901760
  %3664 = vmatpush1.msra.mxu0 %v3663
  %3665 = vmatprep.subr.mxu0 0.0
  %v3666 = vand.u32 %v2583, 4294901760
  %3667 = vmatpush1.msra.mxu0 %v3666
  %3668 = vmatprep.subr.mxu0 0.0
  %v3669 = vand.u32 %v2582, 4294901760
  %3670 = vmatpush1.msra.mxu0 %v3669
  %3671 = vmatprep.subr.mxu0 0.0
  %v3672 = vand.u32 %v2581, 4294901760
  %3673 = vmatpush1.msra.mxu0 %v3672
  %3674 = vmatprep.subr.mxu0 0.0
  %v3675 = vand.u32 %v2580, 4294901760
  %3676 = vmatpush1.msra.mxu0 %v3675
  %3677 = vmatprep.subr.mxu0 0.0
  %v3678 = vand.u32 %v2579, 4294901760
  %3679 = vmatpush1.msra.mxu0 %v3678
  %3680 = vmatprep.subr.mxu0 0.0
  %v3681 = vand.u32 %v2578, 4294901760
  %3682 = vmatpush1.msra.mxu0 %v3681
  %3683 = vmatprep.subr.mxu0 0.0
  %v3684 = vand.u32 %v2577, 4294901760
  %3685 = vmatpush1.msra.mxu0 %v3684
  %3686 = vmatprep.subr.mxu0 0.0
  %3687 = vmatpush2.msra.mxu0 0.0
  %3688 = vmatprep.subr.mxu0 0.0
  %3689 = vmatpush2.msra.mxu0 0.0
  %3690 = vmatprep.subr.mxu0 0.0
  %3691 = vmatpush2.msra.mxu0 0.0
  %3692 = vmatprep.subr.mxu0 0.0
  %3693 = vmatpush2.msra.mxu0 0.0
  %3694 = vmatprep.subr.mxu0 0.0
  %3695 = vmatpush2.msra.mxu0 0.0
  %3696 = vmatprep.subr.mxu0 0.0
  %3697 = vmatpush2.msra.mxu0 0.0
  %3698 = vmatprep.subr.mxu0 0.0
  %3699 = vmatpush2.msra.mxu0 0.0
  %3700 = vmatprep.subr.mxu0 0.0
  %3701 = vmatpush2.msra.mxu0 0.0
  %3702 = vmatprep.subr.mxu0 0.0
  %3703 = vmatpush2.msra.mxu0 0.0
  %3704 = vmatprep.subr.mxu0 0.0
  %3705 = vmatpush2.msra.mxu0 0.0
  %3706 = vmatprep.subr.mxu0 0.0
  %3707 = vmatpush2.msra.mxu0 0.0
  %3708 = vmatprep.subr.mxu0 0.0
  %3709 = vmatpush2.msra.mxu0 0.0
  %3710 = vmatprep.subr.mxu0 0.0
  %3711 = vmatpush2.msra.mxu0 0.0
  %3712 = vmatprep.subr.mxu0 0.0
  %3713 = vmatpush2.msra.mxu0 0.0
  %3714 = vmatprep.subr.mxu0 0.0
  %3715 = vmatpush2.msra.mxu0 0.0
  %3716 = vmatprep.subr.mxu0 0.0
  %3717 = vmatpush2.msra.mxu0 0.0
  %3718 = vmatprep.mubr.f32.mxu0 0.0
  %v3719 = vand.u32 %v2586, 4294901760
  %3720 = vmatmul.mubr.f32.gmra.mxu0 %v3719
  %v3721 = vpop.f32.mrf.mxu0
  %v3722 = vadd.f32 %v3553, %v3721
  %v3723 = vpop.f32.mrf.mxu0
  %3724 = vmatprep.mubr.f32.mxu0 0.0
  %v3725 = vand.u32 %v2589, 4294901760
  %3726 = vmatmul.mubr.f32.gmra.mxu0 %v3725
  %v3727 = vpop.f32.mrf.mxu0
  %v3728 = vadd.f32 %v3559, %v3727
  %v3729 = vpop.f32.mrf.mxu0
  %3730 = vmatprep.mubr.f32.mxu0 0.0
  %v3731 = vand.u32 %v2592, 4294901760
  %3732 = vmatmul.mubr.f32.gmra.mxu0 %v3731
  %v3733 = vpop.f32.mrf.mxu0
  %v3734 = vadd.f32 %v3565, %v3733
  %v3735 = vpop.f32.mrf.mxu0
  %3736 = vmatprep.mubr.f32.mxu0 0.0
  %v3737 = vand.u32 %v2595, 4294901760
  %3738 = vmatmul.mubr.f32.gmra.mxu0 %v3737
  %v3739 = vpop.f32.mrf.mxu0
  %v3740 = vadd.f32 %v3571, %v3739
  %v3741 = vpop.f32.mrf.mxu0
  %3742 = vmatprep.mubr.f32.mxu0 0.0
  %v3743 = vand.u32 %v2598, 4294901760
  %3744 = vmatmul.mubr.f32.gmra.mxu0 %v3743
  %v3745 = vpop.f32.mrf.mxu0
  %v3746 = vadd.f32 %v3577, %v3745
  %v3747 = vpop.f32.mrf.mxu0
  %3748 = vmatprep.mubr.f32.mxu0 0.0
  %v3749 = vand.u32 %v2601, 4294901760
  %3750 = vmatmul.mubr.f32.gmra.mxu0 %v3749
  %v3751 = vpop.f32.mrf.mxu0
  %v3752 = vadd.f32 %v3583, %v3751
  %v3753 = vpop.f32.mrf.mxu0
  %3754 = vmatprep.mubr.f32.mxu0 0.0
  %v3755 = vand.u32 %v2604, 4294901760
  %3756 = vmatmul.mubr.f32.gmra.mxu0 %v3755
  %v3757 = vpop.f32.mrf.mxu0
  %v3758 = vadd.f32 %v3589, %v3757
  %v3759 = vpop.f32.mrf.mxu0
  %3760 = vmatprep.mubr.f32.mxu0 0.0
  %v3761 = vand.u32 %v2607, 4294901760
  %3762 = vmatmul.mubr.f32.gmra.mxu0 %v3761
  %v3763 = vpop.f32.mrf.mxu0
  %v3764 = vadd.f32 %v3595, %v3763
  %v3765 = vpop.f32.mrf.mxu0
  %3766 = vmatprep.mubr.f32.mxu0 0.0
  %v3767 = vand.u32 %v2610, 4294901760
  %3768 = vmatmul.mubr.f32.gmra.mxu0 %v3767
  %v3769 = vpop.f32.mrf.mxu0
  %v3770 = vadd.f32 %v3601, %v3769
  %v3771 = vpop.f32.mrf.mxu0
  %3772 = vmatprep.mubr.f32.mxu0 0.0
  %v3773 = vand.u32 %v2613, 4294901760
  %3774 = vmatmul.mubr.f32.gmra.mxu0 %v3773
  %v3775 = vpop.f32.mrf.mxu0
  %v3776 = vadd.f32 %v3607, %v3775
  %v3777 = vpop.f32.mrf.mxu0
  %3778 = vmatprep.mubr.f32.mxu0 0.0
  %v3779 = vand.u32 %v2616, 4294901760
  %3780 = vmatmul.mubr.f32.gmra.mxu0 %v3779
  %v3781 = vpop.f32.mrf.mxu0
  %v3782 = vadd.f32 %v3613, %v3781
  %v3783 = vpop.f32.mrf.mxu0
  %3784 = vmatprep.mubr.f32.mxu0 0.0
  %v3785 = vand.u32 %v2619, 4294901760
  %3786 = vmatmul.mubr.f32.gmra.mxu0 %v3785
  %v3787 = vpop.f32.mrf.mxu0
  %v3788 = vadd.f32 %v3619, %v3787
  %v3789 = vpop.f32.mrf.mxu0
  %3790 = vmatprep.mubr.f32.mxu0 0.0
  %v3791 = vand.u32 %v2622, 4294901760
  %3792 = vmatmul.mubr.f32.gmra.mxu0 %v3791
  %v3793 = vpop.f32.mrf.mxu0
  %v3794 = vadd.f32 %v3625, %v3793
  %v3795 = vpop.f32.mrf.mxu0
  %3796 = vmatprep.mubr.f32.mxu0 0.0
  %v3797 = vand.u32 %v2625, 4294901760
  %3798 = vmatmul.mubr.f32.gmra.mxu0 %v3797
  %v3799 = vpop.f32.mrf.mxu0
  %v3800 = vadd.f32 %v3631, %v3799
  %v3801 = vpop.f32.mrf.mxu0
  %3802 = vmatprep.mubr.f32.mxu0 0.0
  %v3803 = vand.u32 %v2628, 4294901760
  %3804 = vmatmul.mubr.f32.gmra.mxu0 %v3803
  %v3805 = vpop.f32.mrf.mxu0
  %v3806 = vadd.f32 %v3637, %v3805
  %v3807 = vpop.f32.mrf.mxu0
  %3808 = vmatprep.mubr.f32.mxu0 0.0
  %v3809 = vand.u32 %v2631, 4294901760
  %3810 = vmatmul.mubr.f32.gmra.mxu0 %v3809
  %v3811 = vpop.f32.mrf.mxu0
  %v3812 = vadd.f32 %v3643, %v3811
  %v3813 = vpop.f32.mrf.mxu0
  %3814 = vdwg.mxu0
  %v3816 = vsel %vm161, %v2576, 0
  %3818 = vmatprep.subr.mxu0 0.0
  %3819 = vmatpush1.msra.mxu0 0.0
  %3820 = vmatprep.subr.mxu0 0.0
  %3821 = vmatpush1.msra.mxu0 0.0
  %3822 = vmatprep.subr.mxu0 0.0
  %3823 = vmatpush1.msra.mxu0 0.0
  %3824 = vmatprep.subr.mxu0 0.0
  %3825 = vmatpush1.msra.mxu0 0.0
  %3826 = vmatprep.subr.mxu0 0.0
  %3827 = vmatpush1.msra.mxu0 0.0
  %3828 = vmatprep.subr.mxu0 0.0
  %3829 = vmatpush1.msra.mxu0 0.0
  %3830 = vmatprep.subr.mxu0 0.0
  %3831 = vmatpush1.msra.mxu0 0.0
  %3832 = vmatprep.subr.mxu0 0.0
  %3833 = vmatpush1.msra.mxu0 0.0
  %3834 = vmatprep.subr.mxu0 0.0
  %3835 = vmatpush1.msra.mxu0 0.0
  %3836 = vmatprep.subr.mxu0 0.0
  %3837 = vmatpush1.msra.mxu0 0.0
  %3838 = vmatprep.subr.mxu0 0.0
  %3839 = vmatpush1.msra.mxu0 0.0
  %3840 = vmatprep.subr.mxu0 0.0
  %3841 = vmatpush1.msra.mxu0 0.0
  %3842 = vmatprep.subr.mxu0 0.0
  %v3843 = vand.u32 %v3816, 4294901760
  %3844 = vmatpush1.msra.mxu0 %v3843
  %3845 = vmatprep.subr.mxu0 0.0
  %v3846 = vand.u32 %v2575, 4294901760
  %3847 = vmatpush1.msra.mxu0 %v3846
  %3848 = vmatprep.subr.mxu0 0.0
  %v3849 = vand.u32 %v2574, 4294901760
  %3850 = vmatpush1.msra.mxu0 %v3849
  %3851 = vmatprep.subr.mxu0 0.0
  %v3852 = vand.u32 %v2573, 4294901760
  %3853 = vmatpush1.msra.mxu0 %v3852
  %3854 = vmatprep.subr.mxu0 0.0
  %3855 = vmatpush2.msra.mxu0 0.0
  %3856 = vmatprep.subr.mxu0 0.0
  %3857 = vmatpush2.msra.mxu0 0.0
  %3858 = vmatprep.subr.mxu0 0.0
  %3859 = vmatpush2.msra.mxu0 0.0
  %3860 = vmatprep.subr.mxu0 0.0
  %3861 = vmatpush2.msra.mxu0 0.0
  %3862 = vmatprep.subr.mxu0 0.0
  %3863 = vmatpush2.msra.mxu0 0.0
  %3864 = vmatprep.subr.mxu0 0.0
  %3865 = vmatpush2.msra.mxu0 0.0
  %3866 = vmatprep.subr.mxu0 0.0
  %3867 = vmatpush2.msra.mxu0 0.0
  %3868 = vmatprep.subr.mxu0 0.0
  %3869 = vmatpush2.msra.mxu0 0.0
  %3870 = vmatprep.subr.mxu0 0.0
  %3871 = vmatpush2.msra.mxu0 0.0
  %3872 = vmatprep.subr.mxu0 0.0
  %3873 = vmatpush2.msra.mxu0 0.0
  %3874 = vmatprep.subr.mxu0 0.0
  %3875 = vmatpush2.msra.mxu0 0.0
  %3876 = vmatprep.subr.mxu0 0.0
  %3877 = vmatpush2.msra.mxu0 0.0
  %3878 = vmatprep.subr.mxu0 0.0
  %3879 = vmatpush2.msra.mxu0 0.0
  %3880 = vmatprep.subr.mxu0 0.0
  %3881 = vmatpush2.msra.mxu0 0.0
  %3882 = vmatprep.subr.mxu0 0.0
  %3883 = vmatpush2.msra.mxu0 0.0
  %3884 = vmatprep.subr.mxu0 0.0
  %3885 = vmatpush2.msra.mxu0 0.0
  %3886 = vmatprep.mubr.f32.mxu0 0.0
  %v3887 = vand.u32 %v114, 4294901760
  %v3888 = vsub.f32 %v114, %v3887
  %v3889 = vand.u32 %v3888, 4294901760
  %v3890 = vsub.f32 %v3888, %v3889
  %v3891 = vand.u32 %v3890, 4294901760
  %3892 = vmatmul.mubr.f32.gmra.mxu0 %v3891
  %v3893 = vpop.f32.mrf.mxu0
  %v3894 = vadd.f32 %v3722, %v3893
  %v3895 = vpop.f32.mrf.mxu0
  %3896 = vmatprep.mubr.f32.mxu0 0.0
  %v3897 = vand.u32 %v117, 4294901760
  %v3898 = vsub.f32 %v117, %v3897
  %v3899 = vand.u32 %v3898, 4294901760
  %v3900 = vsub.f32 %v3898, %v3899
  %v3901 = vand.u32 %v3900, 4294901760
  %3902 = vmatmul.mubr.f32.gmra.mxu0 %v3901
  %v3903 = vpop.f32.mrf.mxu0
  %v3904 = vadd.f32 %v3728, %v3903
  %v3905 = vpop.f32.mrf.mxu0
  %3906 = vmatprep.mubr.f32.mxu0 0.0
  %v3907 = vand.u32 %v120, 4294901760
  %v3908 = vsub.f32 %v120, %v3907
  %v3909 = vand.u32 %v3908, 4294901760
  %v3910 = vsub.f32 %v3908, %v3909
  %v3911 = vand.u32 %v3910, 4294901760
  %3912 = vmatmul.mubr.f32.gmra.mxu0 %v3911
  %v3913 = vpop.f32.mrf.mxu0
  %v3914 = vadd.f32 %v3734, %v3913
  %v3915 = vpop.f32.mrf.mxu0
  %3916 = vmatprep.mubr.f32.mxu0 0.0
  %v3917 = vand.u32 %v123, 4294901760
  %v3918 = vsub.f32 %v123, %v3917
  %v3919 = vand.u32 %v3918, 4294901760
  %v3920 = vsub.f32 %v3918, %v3919
  %v3921 = vand.u32 %v3920, 4294901760
  %3922 = vmatmul.mubr.f32.gmra.mxu0 %v3921
  %v3923 = vpop.f32.mrf.mxu0
  %v3924 = vadd.f32 %v3740, %v3923
  %v3925 = vpop.f32.mrf.mxu0
  %3926 = vmatprep.mubr.f32.mxu0 0.0
  %v3927 = vand.u32 %v126, 4294901760
  %v3928 = vsub.f32 %v126, %v3927
  %v3929 = vand.u32 %v3928, 4294901760
  %v3930 = vsub.f32 %v3928, %v3929
  %v3931 = vand.u32 %v3930, 4294901760
  %3932 = vmatmul.mubr.f32.gmra.mxu0 %v3931
  %v3933 = vpop.f32.mrf.mxu0
  %v3934 = vadd.f32 %v3746, %v3933
  %v3935 = vpop.f32.mrf.mxu0
  %3936 = vmatprep.mubr.f32.mxu0 0.0
  %v3937 = vand.u32 %v129, 4294901760
  %v3938 = vsub.f32 %v129, %v3937
  %v3939 = vand.u32 %v3938, 4294901760
  %v3940 = vsub.f32 %v3938, %v3939
  %v3941 = vand.u32 %v3940, 4294901760
  %3942 = vmatmul.mubr.f32.gmra.mxu0 %v3941
  %v3943 = vpop.f32.mrf.mxu0
  %v3944 = vadd.f32 %v3752, %v3943
  %v3945 = vpop.f32.mrf.mxu0
  %3946 = vmatprep.mubr.f32.mxu0 0.0
  %v3947 = vand.u32 %v132, 4294901760
  %v3948 = vsub.f32 %v132, %v3947
  %v3949 = vand.u32 %v3948, 4294901760
  %v3950 = vsub.f32 %v3948, %v3949
  %v3951 = vand.u32 %v3950, 4294901760
  %3952 = vmatmul.mubr.f32.gmra.mxu0 %v3951
  %v3953 = vpop.f32.mrf.mxu0
  %v3954 = vadd.f32 %v3758, %v3953
  %v3955 = vpop.f32.mrf.mxu0
  %3956 = vmatprep.mubr.f32.mxu0 0.0
  %v3957 = vand.u32 %v135, 4294901760
  %v3958 = vsub.f32 %v135, %v3957
  %v3959 = vand.u32 %v3958, 4294901760
  %v3960 = vsub.f32 %v3958, %v3959
  %v3961 = vand.u32 %v3960, 4294901760
  %3962 = vmatmul.mubr.f32.gmra.mxu0 %v3961
  %v3963 = vpop.f32.mrf.mxu0
  %v3964 = vadd.f32 %v3764, %v3963
  %v3965 = vpop.f32.mrf.mxu0
  %3966 = vmatprep.mubr.f32.mxu0 0.0
  %v3967 = vand.u32 %v138, 4294901760
  %v3968 = vsub.f32 %v138, %v3967
  %v3969 = vand.u32 %v3968, 4294901760
  %v3970 = vsub.f32 %v3968, %v3969
  %v3971 = vand.u32 %v3970, 4294901760
  %3972 = vmatmul.mubr.f32.gmra.mxu0 %v3971
  %v3973 = vpop.f32.mrf.mxu0
  %v3974 = vadd.f32 %v3770, %v3973
  %v3975 = vpop.f32.mrf.mxu0
  %3976 = vmatprep.mubr.f32.mxu0 0.0
  %v3977 = vand.u32 %v141, 4294901760
  %v3978 = vsub.f32 %v141, %v3977
  %v3979 = vand.u32 %v3978, 4294901760
  %v3980 = vsub.f32 %v3978, %v3979
  %v3981 = vand.u32 %v3980, 4294901760
  %3982 = vmatmul.mubr.f32.gmra.mxu0 %v3981
  %v3983 = vpop.f32.mrf.mxu0
  %v3984 = vadd.f32 %v3776, %v3983
  %v3985 = vpop.f32.mrf.mxu0
  %3986 = vmatprep.mubr.f32.mxu0 0.0
  %v3987 = vand.u32 %v144, 4294901760
  %v3988 = vsub.f32 %v144, %v3987
  %v3989 = vand.u32 %v3988, 4294901760
  %v3990 = vsub.f32 %v3988, %v3989
  %v3991 = vand.u32 %v3990, 4294901760
  %3992 = vmatmul.mubr.f32.gmra.mxu0 %v3991
  %v3993 = vpop.f32.mrf.mxu0
  %v3994 = vadd.f32 %v3782, %v3993
  %v3995 = vpop.f32.mrf.mxu0
  %3996 = vmatprep.mubr.f32.mxu0 0.0
  %v3997 = vand.u32 %v147, 4294901760
  %v3998 = vsub.f32 %v147, %v3997
  %v3999 = vand.u32 %v3998, 4294901760
  %v4000 = vsub.f32 %v3998, %v3999
  %v4001 = vand.u32 %v4000, 4294901760
  %4002 = vmatmul.mubr.f32.gmra.mxu0 %v4001
  %v4003 = vpop.f32.mrf.mxu0
  %v4004 = vadd.f32 %v3788, %v4003
  %v4005 = vpop.f32.mrf.mxu0
  %4006 = vmatprep.mubr.f32.mxu0 0.0
  %v4007 = vand.u32 %v150, 4294901760
  %v4008 = vsub.f32 %v150, %v4007
  %v4009 = vand.u32 %v4008, 4294901760
  %v4010 = vsub.f32 %v4008, %v4009
  %v4011 = vand.u32 %v4010, 4294901760
  %4012 = vmatmul.mubr.f32.gmra.mxu0 %v4011
  %v4013 = vpop.f32.mrf.mxu0
  %v4014 = vadd.f32 %v3794, %v4013
  %v4015 = vpop.f32.mrf.mxu0
  %4016 = vmatprep.mubr.f32.mxu0 0.0
  %v4017 = vand.u32 %v153, 4294901760
  %v4018 = vsub.f32 %v153, %v4017
  %v4019 = vand.u32 %v4018, 4294901760
  %v4020 = vsub.f32 %v4018, %v4019
  %v4021 = vand.u32 %v4020, 4294901760
  %4022 = vmatmul.mubr.f32.gmra.mxu0 %v4021
  %v4023 = vpop.f32.mrf.mxu0
  %v4024 = vadd.f32 %v3800, %v4023
  %v4025 = vpop.f32.mrf.mxu0
  %4026 = vmatprep.mubr.f32.mxu0 0.0
  %v4027 = vand.u32 %v156, 4294901760
  %v4028 = vsub.f32 %v156, %v4027
  %v4029 = vand.u32 %v4028, 4294901760
  %v4030 = vsub.f32 %v4028, %v4029
  %v4031 = vand.u32 %v4030, 4294901760
  %4032 = vmatmul.mubr.f32.gmra.mxu0 %v4031
  %v4033 = vpop.f32.mrf.mxu0
  %v4034 = vadd.f32 %v3806, %v4033
  %v4035 = vpop.f32.mrf.mxu0
  %4036 = vmatprep.mubr.f32.mxu0 0.0
  %v4037 = vand.u32 %v159, 4294901760
  %v4038 = vsub.f32 %v159, %v4037
  %v4039 = vand.u32 %v4038, 4294901760
  %v4040 = vsub.f32 %v4038, %v4039
  %v4041 = vand.u32 %v4040, 4294901760
  %4042 = vmatmul.mubr.f32.gmra.mxu0 %v4041
  %v4043 = vpop.f32.mrf.mxu0
  %v4044 = vadd.f32 %v3812, %v4043
  %v4045 = vpop.f32.mrf.mxu0
  %4046 = vdwg.mxu0
  %4047 = vmatprep.subr.mxu0 0.0
  %4048 = vmatpush1.msra.mxu0 0.0
  %4049 = vmatprep.subr.mxu0 0.0
  %4050 = vmatpush1.msra.mxu0 0.0
  %4051 = vmatprep.subr.mxu0 0.0
  %4052 = vmatpush1.msra.mxu0 0.0
  %4053 = vmatprep.subr.mxu0 0.0
  %4054 = vmatpush1.msra.mxu0 0.0
  %4055 = vmatprep.subr.mxu0 0.0
  %4056 = vmatpush1.msra.mxu0 0.0
  %4057 = vmatprep.subr.mxu0 0.0
  %4058 = vmatpush1.msra.mxu0 0.0
  %4059 = vmatprep.subr.mxu0 0.0
  %4060 = vmatpush1.msra.mxu0 0.0
  %4061 = vmatprep.subr.mxu0 0.0
  %4062 = vmatpush1.msra.mxu0 0.0
  %4063 = vmatprep.subr.mxu0 0.0
  %4064 = vmatpush1.msra.mxu0 0.0
  %4065 = vmatprep.subr.mxu0 0.0
  %4066 = vmatpush1.msra.mxu0 0.0
  %4067 = vmatprep.subr.mxu0 0.0
  %4068 = vmatpush1.msra.mxu0 0.0
  %4069 = vmatprep.subr.mxu0 0.0
  %4070 = vmatpush1.msra.mxu0 0.0
  %4071 = vmatprep.subr.mxu0 0.0
  %v4072 = vand.u32 %v3816, 4294901760
  %v4073 = vsub.f32 %v3816, %v4072
  %v4074 = vand.u32 %v4073, 4294901760
  %v4075 = vsub.f32 %v4073, %v4074
  %v4076 = vand.u32 %v4075, 4294901760
  %4077 = vmatpush1.msra.mxu0 %v4076
  %4078 = vmatprep.subr.mxu0 0.0
  %v4079 = vand.u32 %v2575, 4294901760
  %v4080 = vsub.f32 %v2575, %v4079
  %v4081 = vand.u32 %v4080, 4294901760
  %v4082 = vsub.f32 %v4080, %v4081
  %v4083 = vand.u32 %v4082, 4294901760
  %4084 = vmatpush1.msra.mxu0 %v4083
  %4085 = vmatprep.subr.mxu0 0.0
  %v4086 = vand.u32 %v2574, 4294901760
  %v4087 = vsub.f32 %v2574, %v4086
  %v4088 = vand.u32 %v4087, 4294901760
  %v4089 = vsub.f32 %v4087, %v4088
  %v4090 = vand.u32 %v4089, 4294901760
  %4091 = vmatpush1.msra.mxu0 %v4090
  %4092 = vmatprep.subr.mxu0 0.0
  %v4093 = vand.u32 %v2573, 4294901760
  %v4094 = vsub.f32 %v2573, %v4093
  %v4095 = vand.u32 %v4094, 4294901760
  %v4096 = vsub.f32 %v4094, %v4095
  %v4097 = vand.u32 %v4096, 4294901760
  %4098 = vmatpush1.msra.mxu0 %v4097
  %4099 = vmatprep.subr.mxu0 0.0
  %4100 = vmatpush2.msra.mxu0 0.0
  %4101 = vmatprep.subr.mxu0 0.0
  %4102 = vmatpush2.msra.mxu0 0.0
  %4103 = vmatprep.subr.mxu0 0.0
  %4104 = vmatpush2.msra.mxu0 0.0
  %4105 = vmatprep.subr.mxu0 0.0
  %4106 = vmatpush2.msra.mxu0 0.0
  %4107 = vmatprep.subr.mxu0 0.0
  %4108 = vmatpush2.msra.mxu0 0.0
  %4109 = vmatprep.subr.mxu0 0.0
  %4110 = vmatpush2.msra.mxu0 0.0
  %4111 = vmatprep.subr.mxu0 0.0
  %4112 = vmatpush2.msra.mxu0 0.0
  %4113 = vmatprep.subr.mxu0 0.0
  %4114 = vmatpush2.msra.mxu0 0.0
  %4115 = vmatprep.subr.mxu0 0.0
  %4116 = vmatpush2.msra.mxu0 0.0
  %4117 = vmatprep.subr.mxu0 0.0
  %4118 = vmatpush2.msra.mxu0 0.0
  %4119 = vmatprep.subr.mxu0 0.0
  %4120 = vmatpush2.msra.mxu0 0.0
  %4121 = vmatprep.subr.mxu0 0.0
  %4122 = vmatpush2.msra.mxu0 0.0
  %4123 = vmatprep.subr.mxu0 0.0
  %4124 = vmatpush2.msra.mxu0 0.0
  %4125 = vmatprep.subr.mxu0 0.0
  %4126 = vmatpush2.msra.mxu0 0.0
  %4127 = vmatprep.subr.mxu0 0.0
  %4128 = vmatpush2.msra.mxu0 0.0
  %4129 = vmatprep.subr.mxu0 0.0
  %4130 = vmatpush2.msra.mxu0 0.0
  %4131 = vmatprep.mubr.f32.mxu0 0.0
  %v4132 = vand.u32 %v114, 4294901760
  %4133 = vmatmul.mubr.f32.gmra.mxu0 %v4132
  %v4134 = vpop.f32.mrf.mxu0
  %v4135 = vadd.f32 %v3894, %v4134
  %v4136 = vpop.f32.mrf.mxu0
  %4137 = vmatprep.mubr.f32.mxu0 0.0
  %v4138 = vand.u32 %v117, 4294901760
  %4139 = vmatmul.mubr.f32.gmra.mxu0 %v4138
  %v4140 = vpop.f32.mrf.mxu0
  %v4141 = vadd.f32 %v3904, %v4140
  %v4142 = vpop.f32.mrf.mxu0
  %4143 = vmatprep.mubr.f32.mxu0 0.0
  %v4144 = vand.u32 %v120, 4294901760
  %4145 = vmatmul.mubr.f32.gmra.mxu0 %v4144
  %v4146 = vpop.f32.mrf.mxu0
  %v4147 = vadd.f32 %v3914, %v4146
  %v4148 = vpop.f32.mrf.mxu0
  %4149 = vmatprep.mubr.f32.mxu0 0.0
  %v4150 = vand.u32 %v123, 4294901760
  %4151 = vmatmul.mubr.f32.gmra.mxu0 %v4150
  %v4152 = vpop.f32.mrf.mxu0
  %v4153 = vadd.f32 %v3924, %v4152
  %v4154 = vpop.f32.mrf.mxu0
  %4155 = vmatprep.mubr.f32.mxu0 0.0
  %v4156 = vand.u32 %v126, 4294901760
  %4157 = vmatmul.mubr.f32.gmra.mxu0 %v4156
  %v4158 = vpop.f32.mrf.mxu0
  %v4159 = vadd.f32 %v3934, %v4158
  %v4160 = vpop.f32.mrf.mxu0
  %4161 = vmatprep.mubr.f32.mxu0 0.0
  %v4162 = vand.u32 %v129, 4294901760
  %4163 = vmatmul.mubr.f32.gmra.mxu0 %v4162
  %v4164 = vpop.f32.mrf.mxu0
  %v4165 = vadd.f32 %v3944, %v4164
  %v4166 = vpop.f32.mrf.mxu0
  %4167 = vmatprep.mubr.f32.mxu0 0.0
  %v4168 = vand.u32 %v132, 4294901760
  %4169 = vmatmul.mubr.f32.gmra.mxu0 %v4168
  %v4170 = vpop.f32.mrf.mxu0
  %v4171 = vadd.f32 %v3954, %v4170
  %v4172 = vpop.f32.mrf.mxu0
  %4173 = vmatprep.mubr.f32.mxu0 0.0
  %v4174 = vand.u32 %v135, 4294901760
  %4175 = vmatmul.mubr.f32.gmra.mxu0 %v4174
  %v4176 = vpop.f32.mrf.mxu0
  %v4177 = vadd.f32 %v3964, %v4176
  %v4178 = vpop.f32.mrf.mxu0
  %4179 = vmatprep.mubr.f32.mxu0 0.0
  %v4180 = vand.u32 %v138, 4294901760
  %4181 = vmatmul.mubr.f32.gmra.mxu0 %v4180
  %v4182 = vpop.f32.mrf.mxu0
  %v4183 = vadd.f32 %v3974, %v4182
  %v4184 = vpop.f32.mrf.mxu0
  %4185 = vmatprep.mubr.f32.mxu0 0.0
  %v4186 = vand.u32 %v141, 4294901760
  %4187 = vmatmul.mubr.f32.gmra.mxu0 %v4186
  %v4188 = vpop.f32.mrf.mxu0
  %v4189 = vadd.f32 %v3984, %v4188
  %v4190 = vpop.f32.mrf.mxu0
  %4191 = vmatprep.mubr.f32.mxu0 0.0
  %v4192 = vand.u32 %v144, 4294901760
  %4193 = vmatmul.mubr.f32.gmra.mxu0 %v4192
  %v4194 = vpop.f32.mrf.mxu0
  %v4195 = vadd.f32 %v3994, %v4194
  %v4196 = vpop.f32.mrf.mxu0
  %4197 = vmatprep.mubr.f32.mxu0 0.0
  %v4198 = vand.u32 %v147, 4294901760
  %4199 = vmatmul.mubr.f32.gmra.mxu0 %v4198
  %v4200 = vpop.f32.mrf.mxu0
  %v4201 = vadd.f32 %v4004, %v4200
  %v4202 = vpop.f32.mrf.mxu0
  %4203 = vmatprep.mubr.f32.mxu0 0.0
  %v4204 = vand.u32 %v150, 4294901760
  %4205 = vmatmul.mubr.f32.gmra.mxu0 %v4204
  %v4206 = vpop.f32.mrf.mxu0
  %v4207 = vadd.f32 %v4014, %v4206
  %v4208 = vpop.f32.mrf.mxu0
  %4209 = vmatprep.mubr.f32.mxu0 0.0
  %v4210 = vand.u32 %v153, 4294901760
  %4211 = vmatmul.mubr.f32.gmra.mxu0 %v4210
  %v4212 = vpop.f32.mrf.mxu0
  %v4213 = vadd.f32 %v4024, %v4212
  %v4214 = vpop.f32.mrf.mxu0
  %4215 = vmatprep.mubr.f32.mxu0 0.0
  %v4216 = vand.u32 %v156, 4294901760
  %4217 = vmatmul.mubr.f32.gmra.mxu0 %v4216
  %v4218 = vpop.f32.mrf.mxu0
  %v4219 = vadd.f32 %v4034, %v4218
  %v4220 = vpop.f32.mrf.mxu0
  %4221 = vmatprep.mubr.f32.mxu0 0.0
  %v4222 = vand.u32 %v159, 4294901760
  %4223 = vmatmul.mubr.f32.gmra.mxu0 %v4222
  %v4224 = vpop.f32.mrf.mxu0
  %v4225 = vadd.f32 %v4044, %v4224
  %v4226 = vpop.f32.mrf.mxu0
  %4227 = vdwg.mxu0
  %4228 = vmatprep.subr.mxu0 0.0
  %4229 = vmatpush1.msra.mxu0 0.0
  %4230 = vmatprep.subr.mxu0 0.0
  %4231 = vmatpush1.msra.mxu0 0.0
  %4232 = vmatprep.subr.mxu0 0.0
  %4233 = vmatpush1.msra.mxu0 0.0
  %4234 = vmatprep.subr.mxu0 0.0
  %4235 = vmatpush1.msra.mxu0 0.0
  %4236 = vmatprep.subr.mxu0 0.0
  %4237 = vmatpush1.msra.mxu0 0.0
  %4238 = vmatprep.subr.mxu0 0.0
  %4239 = vmatpush1.msra.mxu0 0.0
  %4240 = vmatprep.subr.mxu0 0.0
  %4241 = vmatpush1.msra.mxu0 0.0
  %4242 = vmatprep.subr.mxu0 0.0
  %4243 = vmatpush1.msra.mxu0 0.0
  %4244 = vmatprep.subr.mxu0 0.0
  %4245 = vmatpush1.msra.mxu0 0.0
  %4246 = vmatprep.subr.mxu0 0.0
  %4247 = vmatpush1.msra.mxu0 0.0
  %4248 = vmatprep.subr.mxu0 0.0
  %4249 = vmatpush1.msra.mxu0 0.0
  %4250 = vmatprep.subr.mxu0 0.0
  %4251 = vmatpush1.msra.mxu0 0.0
  %4252 = vmatprep.subr.mxu0 0.0
  %v4253 = vand.u32 %v3816, 4294901760
  %v4254 = vsub.f32 %v3816, %v4253
  %4255 = vmatpush1.msra.mxu0 %v4254
  %4256 = vmatprep.subr.mxu0 0.0
  %v4257 = vand.u32 %v2575, 4294901760
  %v4258 = vsub.f32 %v2575, %v4257
  %4259 = vmatpush1.msra.mxu0 %v4258
  %4260 = vmatprep.subr.mxu0 0.0
  %v4261 = vand.u32 %v2574, 4294901760
  %v4262 = vsub.f32 %v2574, %v4261
  %4263 = vmatpush1.msra.mxu0 %v4262
  %4264 = vmatprep.subr.mxu0 0.0
  %v4265 = vand.u32 %v2573, 4294901760
  %v4266 = vsub.f32 %v2573, %v4265
  %4267 = vmatpush1.msra.mxu0 %v4266
  %4268 = vmatprep.subr.mxu0 0.0
  %4269 = vmatpush2.msra.mxu0 0.0
  %4270 = vmatprep.subr.mxu0 0.0
  %4271 = vmatpush2.msra.mxu0 0.0
  %4272 = vmatprep.subr.mxu0 0.0
  %4273 = vmatpush2.msra.mxu0 0.0
  %4274 = vmatprep.subr.mxu0 0.0
  %4275 = vmatpush2.msra.mxu0 0.0
  %4276 = vmatprep.subr.mxu0 0.0
  %4277 = vmatpush2.msra.mxu0 0.0
  %4278 = vmatprep.subr.mxu0 0.0
  %4279 = vmatpush2.msra.mxu0 0.0
  %4280 = vmatprep.subr.mxu0 0.0
  %4281 = vmatpush2.msra.mxu0 0.0
  %4282 = vmatprep.subr.mxu0 0.0
  %4283 = vmatpush2.msra.mxu0 0.0
  %4284 = vmatprep.subr.mxu0 0.0
  %4285 = vmatpush2.msra.mxu0 0.0
  %4286 = vmatprep.subr.mxu0 0.0
  %4287 = vmatpush2.msra.mxu0 0.0
  %4288 = vmatprep.subr.mxu0 0.0
  %4289 = vmatpush2.msra.mxu0 0.0
  %4290 = vmatprep.subr.mxu0 0.0
  %4291 = vmatpush2.msra.mxu0 0.0
  %4292 = vmatprep.subr.mxu0 0.0
  %4293 = vmatpush2.msra.mxu0 0.0
  %4294 = vmatprep.subr.mxu0 0.0
  %4295 = vmatpush2.msra.mxu0 0.0
  %4296 = vmatprep.subr.mxu0 0.0
  %4297 = vmatpush2.msra.mxu0 0.0
  %4298 = vmatprep.subr.mxu0 0.0
  %4299 = vmatpush2.msra.mxu0 0.0
  %4300 = vmatprep.mubr.f32.mxu0 0.0
  %v4301 = vand.u32 %v114, 4294901760
  %v4302 = vsub.f32 %v114, %v4301
  %4303 = vmatmul.mubr.f32.gmra.mxu0 %v4302
  %v4304 = vpop.f32.mrf.mxu0
  %v4305 = vadd.f32 %v4135, %v4304
  %v4306 = vpop.f32.mrf.mxu0
  %4307 = vmatprep.mubr.f32.mxu0 0.0
  %v4308 = vand.u32 %v117, 4294901760
  %v4309 = vsub.f32 %v117, %v4308
  %4310 = vmatmul.mubr.f32.gmra.mxu0 %v4309
  %v4311 = vpop.f32.mrf.mxu0
  %v4312 = vadd.f32 %v4141, %v4311
  %v4313 = vpop.f32.mrf.mxu0
  %4314 = vmatprep.mubr.f32.mxu0 0.0
  %v4315 = vand.u32 %v120, 4294901760
  %v4316 = vsub.f32 %v120, %v4315
  %4317 = vmatmul.mubr.f32.gmra.mxu0 %v4316
  %v4318 = vpop.f32.mrf.mxu0
  %v4319 = vadd.f32 %v4147, %v4318
  %v4320 = vpop.f32.mrf.mxu0
  %4321 = vmatprep.mubr.f32.mxu0 0.0
  %v4322 = vand.u32 %v123, 4294901760
  %v4323 = vsub.f32 %v123, %v4322
  %4324 = vmatmul.mubr.f32.gmra.mxu0 %v4323
  %v4325 = vpop.f32.mrf.mxu0
  %v4326 = vadd.f32 %v4153, %v4325
  %v4327 = vpop.f32.mrf.mxu0
  %4328 = vmatprep.mubr.f32.mxu0 0.0
  %v4329 = vand.u32 %v126, 4294901760
  %v4330 = vsub.f32 %v126, %v4329
  %4331 = vmatmul.mubr.f32.gmra.mxu0 %v4330
  %v4332 = vpop.f32.mrf.mxu0
  %v4333 = vadd.f32 %v4159, %v4332
  %v4334 = vpop.f32.mrf.mxu0
  %4335 = vmatprep.mubr.f32.mxu0 0.0
  %v4336 = vand.u32 %v129, 4294901760
  %v4337 = vsub.f32 %v129, %v4336
  %4338 = vmatmul.mubr.f32.gmra.mxu0 %v4337
  %v4339 = vpop.f32.mrf.mxu0
  %v4340 = vadd.f32 %v4165, %v4339
  %v4341 = vpop.f32.mrf.mxu0
  %4342 = vmatprep.mubr.f32.mxu0 0.0
  %v4343 = vand.u32 %v132, 4294901760
  %v4344 = vsub.f32 %v132, %v4343
  %4345 = vmatmul.mubr.f32.gmra.mxu0 %v4344
  %v4346 = vpop.f32.mrf.mxu0
  %v4347 = vadd.f32 %v4171, %v4346
  %v4348 = vpop.f32.mrf.mxu0
  %4349 = vmatprep.mubr.f32.mxu0 0.0
  %v4350 = vand.u32 %v135, 4294901760
  %v4351 = vsub.f32 %v135, %v4350
  %4352 = vmatmul.mubr.f32.gmra.mxu0 %v4351
  %v4353 = vpop.f32.mrf.mxu0
  %v4354 = vadd.f32 %v4177, %v4353
  %v4355 = vpop.f32.mrf.mxu0
  %4356 = vmatprep.mubr.f32.mxu0 0.0
  %v4357 = vand.u32 %v138, 4294901760
  %v4358 = vsub.f32 %v138, %v4357
  %4359 = vmatmul.mubr.f32.gmra.mxu0 %v4358
  %v4360 = vpop.f32.mrf.mxu0
  %v4361 = vadd.f32 %v4183, %v4360
  %v4362 = vpop.f32.mrf.mxu0
  %4363 = vmatprep.mubr.f32.mxu0 0.0
  %v4364 = vand.u32 %v141, 4294901760
  %v4365 = vsub.f32 %v141, %v4364
  %4366 = vmatmul.mubr.f32.gmra.mxu0 %v4365
  %v4367 = vpop.f32.mrf.mxu0
  %v4368 = vadd.f32 %v4189, %v4367
  %v4369 = vpop.f32.mrf.mxu0
  %4370 = vmatprep.mubr.f32.mxu0 0.0
  %v4371 = vand.u32 %v144, 4294901760
  %v4372 = vsub.f32 %v144, %v4371
  %4373 = vmatmul.mubr.f32.gmra.mxu0 %v4372
  %v4374 = vpop.f32.mrf.mxu0
  %v4375 = vadd.f32 %v4195, %v4374
  %v4376 = vpop.f32.mrf.mxu0
  %4377 = vmatprep.mubr.f32.mxu0 0.0
  %v4378 = vand.u32 %v147, 4294901760
  %v4379 = vsub.f32 %v147, %v4378
  %4380 = vmatmul.mubr.f32.gmra.mxu0 %v4379
  %v4381 = vpop.f32.mrf.mxu0
  %v4382 = vadd.f32 %v4201, %v4381
  %v4383 = vpop.f32.mrf.mxu0
  %4384 = vmatprep.mubr.f32.mxu0 0.0
  %v4385 = vand.u32 %v150, 4294901760
  %v4386 = vsub.f32 %v150, %v4385
  %4387 = vmatmul.mubr.f32.gmra.mxu0 %v4386
  %v4388 = vpop.f32.mrf.mxu0
  %v4389 = vadd.f32 %v4207, %v4388
  %v4390 = vpop.f32.mrf.mxu0
  %4391 = vmatprep.mubr.f32.mxu0 0.0
  %v4392 = vand.u32 %v153, 4294901760
  %v4393 = vsub.f32 %v153, %v4392
  %4394 = vmatmul.mubr.f32.gmra.mxu0 %v4393
  %v4395 = vpop.f32.mrf.mxu0
  %v4396 = vadd.f32 %v4213, %v4395
  %v4397 = vpop.f32.mrf.mxu0
  %4398 = vmatprep.mubr.f32.mxu0 0.0
  %v4399 = vand.u32 %v156, 4294901760
  %v4400 = vsub.f32 %v156, %v4399
  %4401 = vmatmul.mubr.f32.gmra.mxu0 %v4400
  %v4402 = vpop.f32.mrf.mxu0
  %v4403 = vadd.f32 %v4219, %v4402
  %v4404 = vpop.f32.mrf.mxu0
  %4405 = vmatprep.mubr.f32.mxu0 0.0
  %v4406 = vand.u32 %v159, 4294901760
  %v4407 = vsub.f32 %v159, %v4406
  %4408 = vmatmul.mubr.f32.gmra.mxu0 %v4407
  %v4409 = vpop.f32.mrf.mxu0
  %v4410 = vadd.f32 %v4225, %v4409
  %v4411 = vpop.f32.mrf.mxu0
  %4412 = vdwg.mxu0
  %4413 = vmatprep.subr.mxu0 0.0
  %4414 = vmatpush1.msra.mxu0 0.0
  %4415 = vmatprep.subr.mxu0 0.0
  %4416 = vmatpush1.msra.mxu0 0.0
  %4417 = vmatprep.subr.mxu0 0.0
  %4418 = vmatpush1.msra.mxu0 0.0
  %4419 = vmatprep.subr.mxu0 0.0
  %4420 = vmatpush1.msra.mxu0 0.0
  %4421 = vmatprep.subr.mxu0 0.0
  %4422 = vmatpush1.msra.mxu0 0.0
  %4423 = vmatprep.subr.mxu0 0.0
  %4424 = vmatpush1.msra.mxu0 0.0
  %4425 = vmatprep.subr.mxu0 0.0
  %4426 = vmatpush1.msra.mxu0 0.0
  %4427 = vmatprep.subr.mxu0 0.0
  %4428 = vmatpush1.msra.mxu0 0.0
  %4429 = vmatprep.subr.mxu0 0.0
  %4430 = vmatpush1.msra.mxu0 0.0
  %4431 = vmatprep.subr.mxu0 0.0
  %4432 = vmatpush1.msra.mxu0 0.0
  %4433 = vmatprep.subr.mxu0 0.0
  %4434 = vmatpush1.msra.mxu0 0.0
  %4435 = vmatprep.subr.mxu0 0.0
  %4436 = vmatpush1.msra.mxu0 0.0
  %4437 = vmatprep.subr.mxu0 0.0
  %v4438 = vand.u32 %v3816, 4294901760
  %4439 = vmatpush1.msra.mxu0 %v4438
  %4440 = vmatprep.subr.mxu0 0.0
  %v4441 = vand.u32 %v2575, 4294901760
  %4442 = vmatpush1.msra.mxu0 %v4441
  %4443 = vmatprep.subr.mxu0 0.0
  %v4444 = vand.u32 %v2574, 4294901760
  %4445 = vmatpush1.msra.mxu0 %v4444
  %4446 = vmatprep.subr.mxu0 0.0
  %v4447 = vand.u32 %v2573, 4294901760
  %4448 = vmatpush1.msra.mxu0 %v4447
  %4449 = vmatprep.subr.mxu0 0.0
  %4450 = vmatpush2.msra.mxu0 0.0
  %4451 = vmatprep.subr.mxu0 0.0
  %4452 = vmatpush2.msra.mxu0 0.0
  %4453 = vmatprep.subr.mxu0 0.0
  %4454 = vmatpush2.msra.mxu0 0.0
  %4455 = vmatprep.subr.mxu0 0.0
  %4456 = vmatpush2.msra.mxu0 0.0
  %4457 = vmatprep.subr.mxu0 0.0
  %4458 = vmatpush2.msra.mxu0 0.0
  %4459 = vmatprep.subr.mxu0 0.0
  %4460 = vmatpush2.msra.mxu0 0.0
  %4461 = vmatprep.subr.mxu0 0.0
  %4462 = vmatpush2.msra.mxu0 0.0
  %4463 = vmatprep.subr.mxu0 0.0
  %4464 = vmatpush2.msra.mxu0 0.0
  %4465 = vmatprep.subr.mxu0 0.0
  %4466 = vmatpush2.msra.mxu0 0.0
  %4467 = vmatprep.subr.mxu0 0.0
  %4468 = vmatpush2.msra.mxu0 0.0
  %4469 = vmatprep.subr.mxu0 0.0
  %4470 = vmatpush2.msra.mxu0 0.0
  %4471 = vmatprep.subr.mxu0 0.0
  %4472 = vmatpush2.msra.mxu0 0.0
  %4473 = vmatprep.subr.mxu0 0.0
  %4474 = vmatpush2.msra.mxu0 0.0
  %4475 = vmatprep.subr.mxu0 0.0
  %4476 = vmatpush2.msra.mxu0 0.0
  %4477 = vmatprep.subr.mxu0 0.0
  %4478 = vmatpush2.msra.mxu0 0.0
  %4479 = vmatprep.subr.mxu0 0.0
  %4480 = vmatpush2.msra.mxu0 0.0
  %4481 = vmatprep.mubr.f32.mxu0 0.0
  %v4482 = vand.u32 %v114, 4294901760
  %v4483 = vsub.f32 %v114, %v4482
  %v4484 = vand.u32 %v4483, 4294901760
  %4485 = vmatmul.mubr.f32.gmra.mxu0 %v4484
  %v4486 = vpop.f32.mrf.mxu0
  %v4487 = vadd.f32 %v4305, %v4486
  %v4488 = vpop.f32.mrf.mxu0
  %4489 = vmatprep.mubr.f32.mxu0 0.0
  %v4490 = vand.u32 %v117, 4294901760
  %v4491 = vsub.f32 %v117, %v4490
  %v4492 = vand.u32 %v4491, 4294901760
  %4493 = vmatmul.mubr.f32.gmra.mxu0 %v4492
  %v4494 = vpop.f32.mrf.mxu0
  %v4495 = vadd.f32 %v4312, %v4494
  %v4496 = vpop.f32.mrf.mxu0
  %4497 = vmatprep.mubr.f32.mxu0 0.0
  %v4498 = vand.u32 %v120, 4294901760
  %v4499 = vsub.f32 %v120, %v4498
  %v4500 = vand.u32 %v4499, 4294901760
  %4501 = vmatmul.mubr.f32.gmra.mxu0 %v4500
  %v4502 = vpop.f32.mrf.mxu0
  %v4503 = vadd.f32 %v4319, %v4502
  %v4504 = vpop.f32.mrf.mxu0
  %4505 = vmatprep.mubr.f32.mxu0 0.0
  %v4506 = vand.u32 %v123, 4294901760
  %v4507 = vsub.f32 %v123, %v4506
  %v4508 = vand.u32 %v4507, 4294901760
  %4509 = vmatmul.mubr.f32.gmra.mxu0 %v4508
  %v4510 = vpop.f32.mrf.mxu0
  %v4511 = vadd.f32 %v4326, %v4510
  %v4512 = vpop.f32.mrf.mxu0
  %4513 = vmatprep.mubr.f32.mxu0 0.0
  %v4514 = vand.u32 %v126, 4294901760
  %v4515 = vsub.f32 %v126, %v4514
  %v4516 = vand.u32 %v4515, 4294901760
  %4517 = vmatmul.mubr.f32.gmra.mxu0 %v4516
  %v4518 = vpop.f32.mrf.mxu0
  %v4519 = vadd.f32 %v4333, %v4518
  %v4520 = vpop.f32.mrf.mxu0
  %4521 = vmatprep.mubr.f32.mxu0 0.0
  %v4522 = vand.u32 %v129, 4294901760
  %v4523 = vsub.f32 %v129, %v4522
  %v4524 = vand.u32 %v4523, 4294901760
  %4525 = vmatmul.mubr.f32.gmra.mxu0 %v4524
  %v4526 = vpop.f32.mrf.mxu0
  %v4527 = vadd.f32 %v4340, %v4526
  %v4528 = vpop.f32.mrf.mxu0
  %4529 = vmatprep.mubr.f32.mxu0 0.0
  %v4530 = vand.u32 %v132, 4294901760
  %v4531 = vsub.f32 %v132, %v4530
  %v4532 = vand.u32 %v4531, 4294901760
  %4533 = vmatmul.mubr.f32.gmra.mxu0 %v4532
  %v4534 = vpop.f32.mrf.mxu0
  %v4535 = vadd.f32 %v4347, %v4534
  %v4536 = vpop.f32.mrf.mxu0
  %4537 = vmatprep.mubr.f32.mxu0 0.0
  %v4538 = vand.u32 %v135, 4294901760
  %v4539 = vsub.f32 %v135, %v4538
  %v4540 = vand.u32 %v4539, 4294901760
  %4541 = vmatmul.mubr.f32.gmra.mxu0 %v4540
  %v4542 = vpop.f32.mrf.mxu0
  %v4543 = vadd.f32 %v4354, %v4542
  %v4544 = vpop.f32.mrf.mxu0
  %4545 = vmatprep.mubr.f32.mxu0 0.0
  %v4546 = vand.u32 %v138, 4294901760
  %v4547 = vsub.f32 %v138, %v4546
  %v4548 = vand.u32 %v4547, 4294901760
  %4549 = vmatmul.mubr.f32.gmra.mxu0 %v4548
  %v4550 = vpop.f32.mrf.mxu0
  %v4551 = vadd.f32 %v4361, %v4550
  %v4552 = vpop.f32.mrf.mxu0
  %4553 = vmatprep.mubr.f32.mxu0 0.0
  %v4554 = vand.u32 %v141, 4294901760
  %v4555 = vsub.f32 %v141, %v4554
  %v4556 = vand.u32 %v4555, 4294901760
  %4557 = vmatmul.mubr.f32.gmra.mxu0 %v4556
  %v4558 = vpop.f32.mrf.mxu0
  %v4559 = vadd.f32 %v4368, %v4558
  %v4560 = vpop.f32.mrf.mxu0
  %4561 = vmatprep.mubr.f32.mxu0 0.0
  %v4562 = vand.u32 %v144, 4294901760
  %v4563 = vsub.f32 %v144, %v4562
  %v4564 = vand.u32 %v4563, 4294901760
  %4565 = vmatmul.mubr.f32.gmra.mxu0 %v4564
  %v4566 = vpop.f32.mrf.mxu0
  %v4567 = vadd.f32 %v4375, %v4566
  %v4568 = vpop.f32.mrf.mxu0
  %4569 = vmatprep.mubr.f32.mxu0 0.0
  %v4570 = vand.u32 %v147, 4294901760
  %v4571 = vsub.f32 %v147, %v4570
  %v4572 = vand.u32 %v4571, 4294901760
  %4573 = vmatmul.mubr.f32.gmra.mxu0 %v4572
  %v4574 = vpop.f32.mrf.mxu0
  %v4575 = vadd.f32 %v4382, %v4574
  %v4576 = vpop.f32.mrf.mxu0
  %4577 = vmatprep.mubr.f32.mxu0 0.0
  %v4578 = vand.u32 %v150, 4294901760
  %v4579 = vsub.f32 %v150, %v4578
  %v4580 = vand.u32 %v4579, 4294901760
  %4581 = vmatmul.mubr.f32.gmra.mxu0 %v4580
  %v4582 = vpop.f32.mrf.mxu0
  %v4583 = vadd.f32 %v4389, %v4582
  %v4584 = vpop.f32.mrf.mxu0
  %4585 = vmatprep.mubr.f32.mxu0 0.0
  %v4586 = vand.u32 %v153, 4294901760
  %v4587 = vsub.f32 %v153, %v4586
  %v4588 = vand.u32 %v4587, 4294901760
  %4589 = vmatmul.mubr.f32.gmra.mxu0 %v4588
  %v4590 = vpop.f32.mrf.mxu0
  %v4591 = vadd.f32 %v4396, %v4590
  %v4592 = vpop.f32.mrf.mxu0
  %4593 = vmatprep.mubr.f32.mxu0 0.0
  %v4594 = vand.u32 %v156, 4294901760
  %v4595 = vsub.f32 %v156, %v4594
  %v4596 = vand.u32 %v4595, 4294901760
  %4597 = vmatmul.mubr.f32.gmra.mxu0 %v4596
  %v4598 = vpop.f32.mrf.mxu0
  %v4599 = vadd.f32 %v4403, %v4598
  %v4600 = vpop.f32.mrf.mxu0
  %4601 = vmatprep.mubr.f32.mxu0 0.0
  %v4602 = vand.u32 %v159, 4294901760
  %v4603 = vsub.f32 %v159, %v4602
  %v4604 = vand.u32 %v4603, 4294901760
  %4605 = vmatmul.mubr.f32.gmra.mxu0 %v4604
  %v4606 = vpop.f32.mrf.mxu0
  %v4607 = vadd.f32 %v4410, %v4606
  %v4608 = vpop.f32.mrf.mxu0
  %4609 = vdwg.mxu0
  %4610 = vmatprep.subr.mxu0 0.0
  %4611 = vmatpush1.msra.mxu0 0.0
  %4612 = vmatprep.subr.mxu0 0.0
  %4613 = vmatpush1.msra.mxu0 0.0
  %4614 = vmatprep.subr.mxu0 0.0
  %4615 = vmatpush1.msra.mxu0 0.0
  %4616 = vmatprep.subr.mxu0 0.0
  %4617 = vmatpush1.msra.mxu0 0.0
  %4618 = vmatprep.subr.mxu0 0.0
  %4619 = vmatpush1.msra.mxu0 0.0
  %4620 = vmatprep.subr.mxu0 0.0
  %4621 = vmatpush1.msra.mxu0 0.0
  %4622 = vmatprep.subr.mxu0 0.0
  %4623 = vmatpush1.msra.mxu0 0.0
  %4624 = vmatprep.subr.mxu0 0.0
  %4625 = vmatpush1.msra.mxu0 0.0
  %4626 = vmatprep.subr.mxu0 0.0
  %4627 = vmatpush1.msra.mxu0 0.0
  %4628 = vmatprep.subr.mxu0 0.0
  %4629 = vmatpush1.msra.mxu0 0.0
  %4630 = vmatprep.subr.mxu0 0.0
  %4631 = vmatpush1.msra.mxu0 0.0
  %4632 = vmatprep.subr.mxu0 0.0
  %4633 = vmatpush1.msra.mxu0 0.0
  %4634 = vmatprep.subr.mxu0 0.0
  %v4635 = vand.u32 %v3816, 4294901760
  %v4636 = vsub.f32 %v3816, %v4635
  %v4637 = vand.u32 %v4636, 4294901760
  %4638 = vmatpush1.msra.mxu0 %v4637
  %4639 = vmatprep.subr.mxu0 0.0
  %v4640 = vand.u32 %v2575, 4294901760
  %v4641 = vsub.f32 %v2575, %v4640
  %v4642 = vand.u32 %v4641, 4294901760
  %4643 = vmatpush1.msra.mxu0 %v4642
  %4644 = vmatprep.subr.mxu0 0.0
  %v4645 = vand.u32 %v2574, 4294901760
  %v4646 = vsub.f32 %v2574, %v4645
  %v4647 = vand.u32 %v4646, 4294901760
  %4648 = vmatpush1.msra.mxu0 %v4647
  %4649 = vmatprep.subr.mxu0 0.0
  %v4650 = vand.u32 %v2573, 4294901760
  %v4651 = vsub.f32 %v2573, %v4650
  %v4652 = vand.u32 %v4651, 4294901760
  %4653 = vmatpush1.msra.mxu0 %v4652
  %4654 = vmatprep.subr.mxu0 0.0
  %4655 = vmatpush2.msra.mxu0 0.0
  %4656 = vmatprep.subr.mxu0 0.0
  %4657 = vmatpush2.msra.mxu0 0.0
  %4658 = vmatprep.subr.mxu0 0.0
  %4659 = vmatpush2.msra.mxu0 0.0
  %4660 = vmatprep.subr.mxu0 0.0
  %4661 = vmatpush2.msra.mxu0 0.0
  %4662 = vmatprep.subr.mxu0 0.0
  %4663 = vmatpush2.msra.mxu0 0.0
  %4664 = vmatprep.subr.mxu0 0.0
  %4665 = vmatpush2.msra.mxu0 0.0
  %4666 = vmatprep.subr.mxu0 0.0
  %4667 = vmatpush2.msra.mxu0 0.0
  %4668 = vmatprep.subr.mxu0 0.0
  %4669 = vmatpush2.msra.mxu0 0.0
  %4670 = vmatprep.subr.mxu0 0.0
  %4671 = vmatpush2.msra.mxu0 0.0
  %4672 = vmatprep.subr.mxu0 0.0
  %4673 = vmatpush2.msra.mxu0 0.0
  %4674 = vmatprep.subr.mxu0 0.0
  %4675 = vmatpush2.msra.mxu0 0.0
  %4676 = vmatprep.subr.mxu0 0.0
  %4677 = vmatpush2.msra.mxu0 0.0
  %4678 = vmatprep.subr.mxu0 0.0
  %4679 = vmatpush2.msra.mxu0 0.0
  %4680 = vmatprep.subr.mxu0 0.0
  %4681 = vmatpush2.msra.mxu0 0.0
  %4682 = vmatprep.subr.mxu0 0.0
  %4683 = vmatpush2.msra.mxu0 0.0
  %4684 = vmatprep.subr.mxu0 0.0
  %4685 = vmatpush2.msra.mxu0 0.0
  %4686 = vmatprep.mubr.f32.mxu0 0.0
  %v4687 = vand.u32 %v114, 4294901760
  %4688 = vmatmul.mubr.f32.gmra.mxu0 %v4687
  %v4689 = vpop.f32.mrf.mxu0
  %v4690 = vadd.f32 %v4487, %v4689
  %v4691 = vpop.f32.mrf.mxu0
  %4692 = vmatprep.mubr.f32.mxu0 0.0
  %v4693 = vand.u32 %v117, 4294901760
  %4694 = vmatmul.mubr.f32.gmra.mxu0 %v4693
  %v4695 = vpop.f32.mrf.mxu0
  %v4696 = vadd.f32 %v4495, %v4695
  %v4697 = vpop.f32.mrf.mxu0
  %4698 = vmatprep.mubr.f32.mxu0 0.0
  %v4699 = vand.u32 %v120, 4294901760
  %4700 = vmatmul.mubr.f32.gmra.mxu0 %v4699
  %v4701 = vpop.f32.mrf.mxu0
  %v4702 = vadd.f32 %v4503, %v4701
  %v4703 = vpop.f32.mrf.mxu0
  %4704 = vmatprep.mubr.f32.mxu0 0.0
  %v4705 = vand.u32 %v123, 4294901760
  %4706 = vmatmul.mubr.f32.gmra.mxu0 %v4705
  %v4707 = vpop.f32.mrf.mxu0
  %v4708 = vadd.f32 %v4511, %v4707
  %v4709 = vpop.f32.mrf.mxu0
  %4710 = vmatprep.mubr.f32.mxu0 0.0
  %v4711 = vand.u32 %v126, 4294901760
  %4712 = vmatmul.mubr.f32.gmra.mxu0 %v4711
  %v4713 = vpop.f32.mrf.mxu0
  %v4714 = vadd.f32 %v4519, %v4713
  %v4715 = vpop.f32.mrf.mxu0
  %4716 = vmatprep.mubr.f32.mxu0 0.0
  %v4717 = vand.u32 %v129, 4294901760
  %4718 = vmatmul.mubr.f32.gmra.mxu0 %v4717
  %v4719 = vpop.f32.mrf.mxu0
  %v4720 = vadd.f32 %v4527, %v4719
  %v4721 = vpop.f32.mrf.mxu0
  %4722 = vmatprep.mubr.f32.mxu0 0.0
  %v4723 = vand.u32 %v132, 4294901760
  %4724 = vmatmul.mubr.f32.gmra.mxu0 %v4723
  %v4725 = vpop.f32.mrf.mxu0
  %v4726 = vadd.f32 %v4535, %v4725
  %v4727 = vpop.f32.mrf.mxu0
  %4728 = vmatprep.mubr.f32.mxu0 0.0
  %v4729 = vand.u32 %v135, 4294901760
  %4730 = vmatmul.mubr.f32.gmra.mxu0 %v4729
  %v4731 = vpop.f32.mrf.mxu0
  %v4732 = vadd.f32 %v4543, %v4731
  %v4733 = vpop.f32.mrf.mxu0
  %4734 = vmatprep.mubr.f32.mxu0 0.0
  %v4735 = vand.u32 %v138, 4294901760
  %4736 = vmatmul.mubr.f32.gmra.mxu0 %v4735
  %v4737 = vpop.f32.mrf.mxu0
  %v4738 = vadd.f32 %v4551, %v4737
  %v4739 = vpop.f32.mrf.mxu0
  %4740 = vmatprep.mubr.f32.mxu0 0.0
  %v4741 = vand.u32 %v141, 4294901760
  %4742 = vmatmul.mubr.f32.gmra.mxu0 %v4741
  %v4743 = vpop.f32.mrf.mxu0
  %v4744 = vadd.f32 %v4559, %v4743
  %v4745 = vpop.f32.mrf.mxu0
  %4746 = vmatprep.mubr.f32.mxu0 0.0
  %v4747 = vand.u32 %v144, 4294901760
  %4748 = vmatmul.mubr.f32.gmra.mxu0 %v4747
  %v4749 = vpop.f32.mrf.mxu0
  %v4750 = vadd.f32 %v4567, %v4749
  %v4751 = vpop.f32.mrf.mxu0
  %4752 = vmatprep.mubr.f32.mxu0 0.0
  %v4753 = vand.u32 %v147, 4294901760
  %4754 = vmatmul.mubr.f32.gmra.mxu0 %v4753
  %v4755 = vpop.f32.mrf.mxu0
  %v4756 = vadd.f32 %v4575, %v4755
  %v4757 = vpop.f32.mrf.mxu0
  %4758 = vmatprep.mubr.f32.mxu0 0.0
  %v4759 = vand.u32 %v150, 4294901760
  %4760 = vmatmul.mubr.f32.gmra.mxu0 %v4759
  %v4761 = vpop.f32.mrf.mxu0
  %v4762 = vadd.f32 %v4583, %v4761
  %v4763 = vpop.f32.mrf.mxu0
  %4764 = vmatprep.mubr.f32.mxu0 0.0
  %v4765 = vand.u32 %v153, 4294901760
  %4766 = vmatmul.mubr.f32.gmra.mxu0 %v4765
  %v4767 = vpop.f32.mrf.mxu0
  %v4768 = vadd.f32 %v4591, %v4767
  %v4769 = vpop.f32.mrf.mxu0
  %4770 = vmatprep.mubr.f32.mxu0 0.0
  %v4771 = vand.u32 %v156, 4294901760
  %4772 = vmatmul.mubr.f32.gmra.mxu0 %v4771
  %v4773 = vpop.f32.mrf.mxu0
  %v4774 = vadd.f32 %v4599, %v4773
  %v4775 = vpop.f32.mrf.mxu0
  %4776 = vmatprep.mubr.f32.mxu0 0.0
  %v4777 = vand.u32 %v159, 4294901760
  %4778 = vmatmul.mubr.f32.gmra.mxu0 %v4777
  %v4779 = vpop.f32.mrf.mxu0
  %v4780 = vadd.f32 %v4607, %v4779
  %v4781 = vpop.f32.mrf.mxu0
  %4782 = vdwg.mxu0
  %4783 = vmatprep.subr.mxu0 0.0
  %4784 = vmatpush1.msra.mxu0 0.0
  %4785 = vmatprep.subr.mxu0 0.0
  %4786 = vmatpush1.msra.mxu0 0.0
  %4787 = vmatprep.subr.mxu0 0.0
  %4788 = vmatpush1.msra.mxu0 0.0
  %4789 = vmatprep.subr.mxu0 0.0
  %4790 = vmatpush1.msra.mxu0 0.0
  %4791 = vmatprep.subr.mxu0 0.0
  %4792 = vmatpush1.msra.mxu0 0.0
  %4793 = vmatprep.subr.mxu0 0.0
  %4794 = vmatpush1.msra.mxu0 0.0
  %4795 = vmatprep.subr.mxu0 0.0
  %4796 = vmatpush1.msra.mxu0 0.0
  %4797 = vmatprep.subr.mxu0 0.0
  %4798 = vmatpush1.msra.mxu0 0.0
  %4799 = vmatprep.subr.mxu0 0.0
  %4800 = vmatpush1.msra.mxu0 0.0
  %4801 = vmatprep.subr.mxu0 0.0
  %4802 = vmatpush1.msra.mxu0 0.0
  %4803 = vmatprep.subr.mxu0 0.0
  %4804 = vmatpush1.msra.mxu0 0.0
  %4805 = vmatprep.subr.mxu0 0.0
  %4806 = vmatpush1.msra.mxu0 0.0
  %4807 = vmatprep.subr.mxu0 0.0
  %v4808 = vand.u32 %v3816, 4294901760
  %4809 = vmatpush1.msra.mxu0 %v4808
  %4810 = vmatprep.subr.mxu0 0.0
  %v4811 = vand.u32 %v2575, 4294901760
  %4812 = vmatpush1.msra.mxu0 %v4811
  %4813 = vmatprep.subr.mxu0 0.0
  %v4814 = vand.u32 %v2574, 4294901760
  %4815 = vmatpush1.msra.mxu0 %v4814
  %4816 = vmatprep.subr.mxu0 0.0
  %v4817 = vand.u32 %v2573, 4294901760
  %4818 = vmatpush1.msra.mxu0 %v4817
  %4819 = vmatprep.subr.mxu0 0.0
  %4820 = vmatpush2.msra.mxu0 0.0
  %4821 = vmatprep.subr.mxu0 0.0
  %4822 = vmatpush2.msra.mxu0 0.0
  %4823 = vmatprep.subr.mxu0 0.0
  %4824 = vmatpush2.msra.mxu0 0.0
  %4825 = vmatprep.subr.mxu0 0.0
  %4826 = vmatpush2.msra.mxu0 0.0
  %4827 = vmatprep.subr.mxu0 0.0
  %4828 = vmatpush2.msra.mxu0 0.0
  %4829 = vmatprep.subr.mxu0 0.0
  %4830 = vmatpush2.msra.mxu0 0.0
  %4831 = vmatprep.subr.mxu0 0.0
  %4832 = vmatpush2.msra.mxu0 0.0
  %4833 = vmatprep.subr.mxu0 0.0
  %4834 = vmatpush2.msra.mxu0 0.0
  %4835 = vmatprep.subr.mxu0 0.0
  %4836 = vmatpush2.msra.mxu0 0.0
  %4837 = vmatprep.subr.mxu0 0.0
  %4838 = vmatpush2.msra.mxu0 0.0
  %4839 = vmatprep.subr.mxu0 0.0
  %4840 = vmatpush2.msra.mxu0 0.0
  %4841 = vmatprep.subr.mxu0 0.0
  %4842 = vmatpush2.msra.mxu0 0.0
  %4843 = vmatprep.subr.mxu0 0.0
  %4844 = vmatpush2.msra.mxu0 0.0
  %4845 = vmatprep.subr.mxu0 0.0
  %4846 = vmatpush2.msra.mxu0 0.0
  %4847 = vmatprep.subr.mxu0 0.0
  %4848 = vmatpush2.msra.mxu0 0.0
  %4849 = vmatprep.subr.mxu0 0.0
  %4850 = vmatpush2.msra.mxu0 0.0
  %4851 = vmatprep.mubr.f32.mxu0 0.0
  %v4852 = vand.u32 %v114, 4294901760
  %4853 = vmatmul.mubr.f32.gmra.mxu0 %v4852
  %v4854 = vpop.f32.mrf.mxu0
  %v4855 = vadd.f32 %v4690, %v4854
  %v4856 = vpop.f32.mrf.mxu0
  %4857 = vmatprep.mubr.f32.mxu0 0.0
  %v4858 = vand.u32 %v117, 4294901760
  %4859 = vmatmul.mubr.f32.gmra.mxu0 %v4858
  %v4860 = vpop.f32.mrf.mxu0
  %v4861 = vadd.f32 %v4696, %v4860
  %v4862 = vpop.f32.mrf.mxu0
  %4863 = vmatprep.mubr.f32.mxu0 0.0
  %v4864 = vand.u32 %v120, 4294901760
  %4865 = vmatmul.mubr.f32.gmra.mxu0 %v4864
  %v4866 = vpop.f32.mrf.mxu0
  %v4867 = vadd.f32 %v4702, %v4866
  %v4868 = vpop.f32.mrf.mxu0
  %4869 = vmatprep.mubr.f32.mxu0 0.0
  %v4870 = vand.u32 %v123, 4294901760
  %4871 = vmatmul.mubr.f32.gmra.mxu0 %v4870
  %v4872 = vpop.f32.mrf.mxu0
  %v4873 = vadd.f32 %v4708, %v4872
  %v4874 = vpop.f32.mrf.mxu0
  %4875 = vmatprep.mubr.f32.mxu0 0.0
  %v4876 = vand.u32 %v126, 4294901760
  %4877 = vmatmul.mubr.f32.gmra.mxu0 %v4876
  %v4878 = vpop.f32.mrf.mxu0
  %v4879 = vadd.f32 %v4714, %v4878
  %v4880 = vpop.f32.mrf.mxu0
  %4881 = vmatprep.mubr.f32.mxu0 0.0
  %v4882 = vand.u32 %v129, 4294901760
  %4883 = vmatmul.mubr.f32.gmra.mxu0 %v4882
  %v4884 = vpop.f32.mrf.mxu0
  %v4885 = vadd.f32 %v4720, %v4884
  %v4886 = vpop.f32.mrf.mxu0
  %4887 = vmatprep.mubr.f32.mxu0 0.0
  %v4888 = vand.u32 %v132, 4294901760
  %4889 = vmatmul.mubr.f32.gmra.mxu0 %v4888
  %v4890 = vpop.f32.mrf.mxu0
  %v4891 = vadd.f32 %v4726, %v4890
  %v4892 = vpop.f32.mrf.mxu0
  %4893 = vmatprep.mubr.f32.mxu0 0.0
  %v4894 = vand.u32 %v135, 4294901760
  %4895 = vmatmul.mubr.f32.gmra.mxu0 %v4894
  %v4896 = vpop.f32.mrf.mxu0
  %v4897 = vadd.f32 %v4732, %v4896
  %v4898 = vpop.f32.mrf.mxu0
  %4899 = vmatprep.mubr.f32.mxu0 0.0
  %v4900 = vand.u32 %v138, 4294901760
  %4901 = vmatmul.mubr.f32.gmra.mxu0 %v4900
  %v4902 = vpop.f32.mrf.mxu0
  %v4903 = vadd.f32 %v4738, %v4902
  %v4904 = vpop.f32.mrf.mxu0
  %4905 = vmatprep.mubr.f32.mxu0 0.0
  %v4906 = vand.u32 %v141, 4294901760
  %4907 = vmatmul.mubr.f32.gmra.mxu0 %v4906
  %v4908 = vpop.f32.mrf.mxu0
  %v4909 = vadd.f32 %v4744, %v4908
  %v4910 = vpop.f32.mrf.mxu0
  %4911 = vmatprep.mubr.f32.mxu0 0.0
  %v4912 = vand.u32 %v144, 4294901760
  %4913 = vmatmul.mubr.f32.gmra.mxu0 %v4912
  %v4914 = vpop.f32.mrf.mxu0
  %v4915 = vadd.f32 %v4750, %v4914
  %v4916 = vpop.f32.mrf.mxu0
  %4917 = vmatprep.mubr.f32.mxu0 0.0
  %v4918 = vand.u32 %v147, 4294901760
  %4919 = vmatmul.mubr.f32.gmra.mxu0 %v4918
  %v4920 = vpop.f32.mrf.mxu0
  %v4921 = vadd.f32 %v4756, %v4920
  %v4922 = vpop.f32.mrf.mxu0
  %4923 = vmatprep.mubr.f32.mxu0 0.0
  %v4924 = vand.u32 %v150, 4294901760
  %4925 = vmatmul.mubr.f32.gmra.mxu0 %v4924
  %v4926 = vpop.f32.mrf.mxu0
  %v4927 = vadd.f32 %v4762, %v4926
  %v4928 = vpop.f32.mrf.mxu0
  %4929 = vmatprep.mubr.f32.mxu0 0.0
  %v4930 = vand.u32 %v153, 4294901760
  %4931 = vmatmul.mubr.f32.gmra.mxu0 %v4930
  %v4932 = vpop.f32.mrf.mxu0
  %v4933 = vadd.f32 %v4768, %v4932
  %v4934 = vpop.f32.mrf.mxu0
  %4935 = vmatprep.mubr.f32.mxu0 0.0
  %v4936 = vand.u32 %v156, 4294901760
  %4937 = vmatmul.mubr.f32.gmra.mxu0 %v4936
  %v4938 = vpop.f32.mrf.mxu0
  %v4939 = vadd.f32 %v4774, %v4938
  %v4940 = vpop.f32.mrf.mxu0
  %4941 = vmatprep.mubr.f32.mxu0 0.0
  %v4942 = vand.u32 %v159, 4294901760
  %4943 = vmatmul.mubr.f32.gmra.mxu0 %v4942
  %v4944 = vpop.f32.mrf.mxu0
  %v4945 = vadd.f32 %v4780, %v4944
  %v4946 = vpop.f32.mrf.mxu0
  %4947 = vdwg.mxu0
  %v4948 = vld [vmem:[%s8] sm:$0x1]
  %v4950 = vlaneseq
  %v4951 = vshrl.u32 %v4950, 7
  %v4952 = vsub.s32 0, %v4951
  %v4953 = vrot.slane %v4948, %v4952
  %v4955 = vadd.f32 %v4855, %v4953
  %v4956 = vadd.f32 %v4861, %v4953
  %v4957 = vadd.f32 %v4867, %v4953
  %v4958 = vadd.f32 %v4873, %v4953
  %v4959 = vadd.f32 %v4879, %v4953
  %v4960 = vadd.f32 %v4885, %v4953
  %v4961 = vadd.f32 %v4891, %v4953
  %v4962 = vadd.f32 %v4897, %v4953
  %v4963 = vadd.f32 %v4903, %v4953
  %v4964 = vadd.f32 %v4909, %v4953
  %v4965 = vadd.f32 %v4915, %v4953
  %v4966 = vadd.f32 %v4921, %v4953
  %v4967 = vadd.f32 %v4927, %v4953
  %v4968 = vadd.f32 %v4933, %v4953
  %v4969 = vadd.f32 %v4939, %v4953
  %v4970 = vadd.f32 %v4945, %v4953
  %v4971 = vmax.f32 %v4955, 0.0
  %v4972 = vmax.f32 %v4956, 0.0
  %v4973 = vmax.f32 %v4957, 0.0
  %v4974 = vmax.f32 %v4958, 0.0
  %v4975 = vmax.f32 %v4959, 0.0
  %v4976 = vmax.f32 %v4960, 0.0
  %v4977 = vmax.f32 %v4961, 0.0
  %v4978 = vmax.f32 %v4962, 0.0
  %v4979 = vmax.f32 %v4963, 0.0
  %v4980 = vmax.f32 %v4964, 0.0
  %v4981 = vmax.f32 %v4965, 0.0
  %v4982 = vmax.f32 %v4966, 0.0
  %v4983 = vmax.f32 %v4967, 0.0
  %v4984 = vmax.f32 %v4968, 0.0
  %v4985 = vmax.f32 %v4969, 0.0
  %v4986 = vmax.f32 %v4970, 0.0
  %v4987 = vld [vmem:[%s9] sm:$0xff]
  %v4988 = vld [vmem:[%s9 + $0x8] sm:$0xff]
  %v4989 = vld [vmem:[%s9 + $0x10] sm:$0xff]
  %v4990 = vld [vmem:[%s9 + $0x18] sm:$0xff]
  %v4991 = vld [vmem:[%s9 + $0x20] sm:$0xff]
  %v4992 = vld [vmem:[%s9 + $0x28] sm:$0xff]
  %v4993 = vld [vmem:[%s9 + $0x30] sm:$0xff]
  %v4994 = vld [vmem:[%s9 + $0x38] sm:$0xff]
  %v4995 = vld [vmem:[%s10] sm:$0x1]
  %v4997 = vlaneseq
  %v4998 = vshrl.u32 %v4997, 7
  %v4999 = vsub.s32 0, %v4998
  %v5000 = vrot.slane %v4995, %v4999
  %v5003 = vsel %vm1326, %v4971, 0
  %v5006 = vsel %vm1326, %v4972, 0
  %v5009 = vsel %vm1326, %v4973, 0
  %v5012 = vsel %vm1326, %v4974, 0
  %v5015 = vsel %vm1326, %v4975, 0
  %v5018 = vsel %vm1326, %v4976, 0
  %v5021 = vsel %vm1326, %v4977, 0
  %v5024 = vsel %vm1326, %v4978, 0
  %v5027 = vsel %vm1326, %v4979, 0
  %v5030 = vsel %vm1326, %v4980, 0
  %v5033 = vsel %vm1326, %v4981, 0
  %v5036 = vsel %vm1326, %v4982, 0
  %v5039 = vsel %vm1326, %v4983, 0
  %v5042 = vsel %vm1326, %v4984, 0
  %v5045 = vsel %vm1326, %v4985, 0
  %v5048 = vsel %vm1326, %v4986, 0
  %5050 = vmatprep.subr.mxu0 0.0
  %5051 = vmatpush1.msra.mxu0 0.0
  %5052 = vmatprep.subr.mxu0 0.0
  %5053 = vmatpush1.msra.mxu0 0.0
  %5054 = vmatprep.subr.mxu0 0.0
  %5055 = vmatpush1.msra.mxu0 0.0
  %5056 = vmatprep.subr.mxu0 0.0
  %5057 = vmatpush1.msra.mxu0 0.0
  %5058 = vmatprep.subr.mxu0 0.0
  %5059 = vmatpush1.msra.mxu0 0.0
  %5060 = vmatprep.subr.mxu0 0.0
  %5061 = vmatpush1.msra.mxu0 0.0
  %5062 = vmatprep.subr.mxu0 0.0
  %5063 = vmatpush1.msra.mxu0 0.0
  %5064 = vmatprep.subr.mxu0 0.0
  %5065 = vmatpush1.msra.mxu0 0.0
  %5066 = vmatprep.subr.mxu0 0.0
  %v5067 = vand.u32 %v4994, 4294901760
  %5068 = vmatpush1.msra.mxu0 %v5067
  %5069 = vmatprep.subr.mxu0 0.0
  %v5070 = vand.u32 %v4993, 4294901760
  %5071 = vmatpush1.msra.mxu0 %v5070
  %5072 = vmatprep.subr.mxu0 0.0
  %v5073 = vand.u32 %v4992, 4294901760
  %5074 = vmatpush1.msra.mxu0 %v5073
  %5075 = vmatprep.subr.mxu0 0.0
  %v5076 = vand.u32 %v4991, 4294901760
  %5077 = vmatpush1.msra.mxu0 %v5076
  %5078 = vmatprep.subr.mxu0 0.0
  %v5079 = vand.u32 %v4990, 4294901760
  %5080 = vmatpush1.msra.mxu0 %v5079
  %5081 = vmatprep.subr.mxu0 0.0
  %v5082 = vand.u32 %v4989, 4294901760
  %5083 = vmatpush1.msra.mxu0 %v5082
  %5084 = vmatprep.subr.mxu0 0.0
  %v5085 = vand.u32 %v4988, 4294901760
  %5086 = vmatpush1.msra.mxu0 %v5085
  %5087 = vmatprep.subr.mxu0 0.0
  %v5088 = vand.u32 %v4987, 4294901760
  %5089 = vmatpush1.msra.mxu0 %v5088
  %5090 = vmatprep.subr.mxu0 0.0
  %5091 = vmatpush2.msra.mxu0 0.0
  %5092 = vmatprep.subr.mxu0 0.0
  %5093 = vmatpush2.msra.mxu0 0.0
  %5094 = vmatprep.subr.mxu0 0.0
  %5095 = vmatpush2.msra.mxu0 0.0
  %5096 = vmatprep.subr.mxu0 0.0
  %5097 = vmatpush2.msra.mxu0 0.0
  %5098 = vmatprep.subr.mxu0 0.0
  %5099 = vmatpush2.msra.mxu0 0.0
  %5100 = vmatprep.subr.mxu0 0.0
  %5101 = vmatpush2.msra.mxu0 0.0
  %5102 = vmatprep.subr.mxu0 0.0
  %5103 = vmatpush2.msra.mxu0 0.0
  %5104 = vmatprep.subr.mxu0 0.0
  %5105 = vmatpush2.msra.mxu0 0.0
  %5106 = vmatprep.subr.mxu0 0.0
  %5107 = vmatpush2.msra.mxu0 0.0
  %5108 = vmatprep.subr.mxu0 0.0
  %5109 = vmatpush2.msra.mxu0 0.0
  %5110 = vmatprep.subr.mxu0 0.0
  %5111 = vmatpush2.msra.mxu0 0.0
  %5112 = vmatprep.subr.mxu0 0.0
  %5113 = vmatpush2.msra.mxu0 0.0
  %5114 = vmatprep.subr.mxu0 0.0
  %5115 = vmatpush2.msra.mxu0 0.0
  %5116 = vmatprep.subr.mxu0 0.0
  %5117 = vmatpush2.msra.mxu0 0.0
  %5118 = vmatprep.subr.mxu0 0.0
  %5119 = vmatpush2.msra.mxu0 0.0
  %5120 = vmatprep.subr.mxu0 0.0
  %5121 = vmatpush2.msra.mxu0 0.0
  %5122 = vmatprep.mubr.f32.mxu0 0.0
  %v5123 = vand.u32 %v5003, 4294901760
  %v5124 = vsub.f32 %v5003, %v5123
  %v5125 = vand.u32 %v5124, 4294901760
  %v5126 = vsub.f32 %v5124, %v5125
  %v5127 = vand.u32 %v5126, 4294901760
  %5128 = vmatmul.mubr.f32.gmra.mxu0 %v5127
  %v5129 = vpop.f32.mrf.mxu0
  %v5130 = vadd.f32 %v5000, %v5129
  %v5131 = vpop.f32.mrf.mxu0
  %5132 = vmatprep.mubr.f32.mxu0 0.0
  %v5133 = vand.u32 %v5006, 4294901760
  %v5134 = vsub.f32 %v5006, %v5133
  %v5135 = vand.u32 %v5134, 4294901760
  %v5136 = vsub.f32 %v5134, %v5135
  %v5137 = vand.u32 %v5136, 4294901760
  %5138 = vmatmul.mubr.f32.gmra.mxu0 %v5137
  %v5139 = vpop.f32.mrf.mxu0
  %v5140 = vadd.f32 %v5000, %v5139
  %v5141 = vpop.f32.mrf.mxu0
  %5142 = vmatprep.mubr.f32.mxu0 0.0
  %v5143 = vand.u32 %v5009, 4294901760
  %v5144 = vsub.f32 %v5009, %v5143
  %v5145 = vand.u32 %v5144, 4294901760
  %v5146 = vsub.f32 %v5144, %v5145
  %v5147 = vand.u32 %v5146, 4294901760
  %5148 = vmatmul.mubr.f32.gmra.mxu0 %v5147
  %v5149 = vpop.f32.mrf.mxu0
  %v5150 = vadd.f32 %v5000, %v5149
  %v5151 = vpop.f32.mrf.mxu0
  %5152 = vmatprep.mubr.f32.mxu0 0.0
  %v5153 = vand.u32 %v5012, 4294901760
  %v5154 = vsub.f32 %v5012, %v5153
  %v5155 = vand.u32 %v5154, 4294901760
  %v5156 = vsub.f32 %v5154, %v5155
  %v5157 = vand.u32 %v5156, 4294901760
  %5158 = vmatmul.mubr.f32.gmra.mxu0 %v5157
  %v5159 = vpop.f32.mrf.mxu0
  %v5160 = vadd.f32 %v5000, %v5159
  %v5161 = vpop.f32.mrf.mxu0
  %5162 = vmatprep.mubr.f32.mxu0 0.0
  %v5163 = vand.u32 %v5015, 4294901760
  %v5164 = vsub.f32 %v5015, %v5163
  %v5165 = vand.u32 %v5164, 4294901760
  %v5166 = vsub.f32 %v5164, %v5165
  %v5167 = vand.u32 %v5166, 4294901760
  %5168 = vmatmul.mubr.f32.gmra.mxu0 %v5167
  %v5169 = vpop.f32.mrf.mxu0
  %v5170 = vadd.f32 %v5000, %v5169
  %v5171 = vpop.f32.mrf.mxu0
  %5172 = vmatprep.mubr.f32.mxu0 0.0
  %v5173 = vand.u32 %v5018, 4294901760
  %v5174 = vsub.f32 %v5018, %v5173
  %v5175 = vand.u32 %v5174, 4294901760
  %v5176 = vsub.f32 %v5174, %v5175
  %v5177 = vand.u32 %v5176, 4294901760
  %5178 = vmatmul.mubr.f32.gmra.mxu0 %v5177
  %v5179 = vpop.f32.mrf.mxu0
  %v5180 = vadd.f32 %v5000, %v5179
  %v5181 = vpop.f32.mrf.mxu0
  %5182 = vmatprep.mubr.f32.mxu0 0.0
  %v5183 = vand.u32 %v5021, 4294901760
  %v5184 = vsub.f32 %v5021, %v5183
  %v5185 = vand.u32 %v5184, 4294901760
  %v5186 = vsub.f32 %v5184, %v5185
  %v5187 = vand.u32 %v5186, 4294901760
  %5188 = vmatmul.mubr.f32.gmra.mxu0 %v5187
  %v5189 = vpop.f32.mrf.mxu0
  %v5190 = vadd.f32 %v5000, %v5189
  %v5191 = vpop.f32.mrf.mxu0
  %5192 = vmatprep.mubr.f32.mxu0 0.0
  %v5193 = vand.u32 %v5024, 4294901760
  %v5194 = vsub.f32 %v5024, %v5193
  %v5195 = vand.u32 %v5194, 4294901760
  %v5196 = vsub.f32 %v5194, %v5195
  %v5197 = vand.u32 %v5196, 4294901760
  %5198 = vmatmul.mubr.f32.gmra.mxu0 %v5197
  %v5199 = vpop.f32.mrf.mxu0
  %v5200 = vadd.f32 %v5000, %v5199
  %v5201 = vpop.f32.mrf.mxu0
  %5202 = vmatprep.mubr.f32.mxu0 0.0
  %v5203 = vand.u32 %v5027, 4294901760
  %v5204 = vsub.f32 %v5027, %v5203
  %v5205 = vand.u32 %v5204, 4294901760
  %v5206 = vsub.f32 %v5204, %v5205
  %v5207 = vand.u32 %v5206, 4294901760
  %5208 = vmatmul.mubr.f32.gmra.mxu0 %v5207
  %v5209 = vpop.f32.mrf.mxu0
  %v5210 = vadd.f32 %v5000, %v5209
  %v5211 = vpop.f32.mrf.mxu0
  %5212 = vmatprep.mubr.f32.mxu0 0.0
  %v5213 = vand.u32 %v5030, 4294901760
  %v5214 = vsub.f32 %v5030, %v5213
  %v5215 = vand.u32 %v5214, 4294901760
  %v5216 = vsub.f32 %v5214, %v5215
  %v5217 = vand.u32 %v5216, 4294901760
  %5218 = vmatmul.mubr.f32.gmra.mxu0 %v5217
  %v5219 = vpop.f32.mrf.mxu0
  %v5220 = vadd.f32 %v5000, %v5219
  %v5221 = vpop.f32.mrf.mxu0
  %5222 = vmatprep.mubr.f32.mxu0 0.0
  %v5223 = vand.u32 %v5033, 4294901760
  %v5224 = vsub.f32 %v5033, %v5223
  %v5225 = vand.u32 %v5224, 4294901760
  %v5226 = vsub.f32 %v5224, %v5225
  %v5227 = vand.u32 %v5226, 4294901760
  %5228 = vmatmul.mubr.f32.gmra.mxu0 %v5227
  %v5229 = vpop.f32.mrf.mxu0
  %v5230 = vadd.f32 %v5000, %v5229
  %v5231 = vpop.f32.mrf.mxu0
  %5232 = vmatprep.mubr.f32.mxu0 0.0
  %v5233 = vand.u32 %v5036, 4294901760
  %v5234 = vsub.f32 %v5036, %v5233
  %v5235 = vand.u32 %v5234, 4294901760
  %v5236 = vsub.f32 %v5234, %v5235
  %v5237 = vand.u32 %v5236, 4294901760
  %5238 = vmatmul.mubr.f32.gmra.mxu0 %v5237
  %v5239 = vpop.f32.mrf.mxu0
  %v5240 = vadd.f32 %v5000, %v5239
  %v5241 = vpop.f32.mrf.mxu0
  %5242 = vmatprep.mubr.f32.mxu0 0.0
  %v5243 = vand.u32 %v5039, 4294901760
  %v5244 = vsub.f32 %v5039, %v5243
  %v5245 = vand.u32 %v5244, 4294901760
  %v5246 = vsub.f32 %v5244, %v5245
  %v5247 = vand.u32 %v5246, 4294901760
  %5248 = vmatmul.mubr.f32.gmra.mxu0 %v5247
  %v5249 = vpop.f32.mrf.mxu0
  %v5250 = vadd.f32 %v5000, %v5249
  %v5251 = vpop.f32.mrf.mxu0
  %5252 = vmatprep.mubr.f32.mxu0 0.0
  %v5253 = vand.u32 %v5042, 4294901760
  %v5254 = vsub.f32 %v5042, %v5253
  %v5255 = vand.u32 %v5254, 4294901760
  %v5256 = vsub.f32 %v5254, %v5255
  %v5257 = vand.u32 %v5256, 4294901760
  %5258 = vmatmul.mubr.f32.gmra.mxu0 %v5257
  %v5259 = vpop.f32.mrf.mxu0
  %v5260 = vadd.f32 %v5000, %v5259
  %v5261 = vpop.f32.mrf.mxu0
  %5262 = vmatprep.mubr.f32.mxu0 0.0
  %v5263 = vand.u32 %v5045, 4294901760
  %v5264 = vsub.f32 %v5045, %v5263
  %v5265 = vand.u32 %v5264, 4294901760
  %v5266 = vsub.f32 %v5264, %v5265
  %v5267 = vand.u32 %v5266, 4294901760
  %5268 = vmatmul.mubr.f32.gmra.mxu0 %v5267
  %v5269 = vpop.f32.mrf.mxu0
  %v5270 = vadd.f32 %v5000, %v5269
  %v5271 = vpop.f32.mrf.mxu0
  %5272 = vmatprep.mubr.f32.mxu0 0.0
  %v5273 = vand.u32 %v5048, 4294901760
  %v5274 = vsub.f32 %v5048, %v5273
  %v5275 = vand.u32 %v5274, 4294901760
  %v5276 = vsub.f32 %v5274, %v5275
  %v5277 = vand.u32 %v5276, 4294901760
  %5278 = vmatmul.mubr.f32.gmra.mxu0 %v5277
  %v5279 = vpop.f32.mrf.mxu0
  %v5280 = vadd.f32 %v5000, %v5279
  %v5281 = vpop.f32.mrf.mxu0
  %5282 = vdwg.mxu0
  %5283 = vmatprep.subr.mxu0 0.0
  %5284 = vmatpush1.msra.mxu0 0.0
  %5285 = vmatprep.subr.mxu0 0.0
  %5286 = vmatpush1.msra.mxu0 0.0
  %5287 = vmatprep.subr.mxu0 0.0
  %5288 = vmatpush1.msra.mxu0 0.0
  %5289 = vmatprep.subr.mxu0 0.0
  %5290 = vmatpush1.msra.mxu0 0.0
  %5291 = vmatprep.subr.mxu0 0.0
  %5292 = vmatpush1.msra.mxu0 0.0
  %5293 = vmatprep.subr.mxu0 0.0
  %5294 = vmatpush1.msra.mxu0 0.0
  %5295 = vmatprep.subr.mxu0 0.0
  %5296 = vmatpush1.msra.mxu0 0.0
  %5297 = vmatprep.subr.mxu0 0.0
  %5298 = vmatpush1.msra.mxu0 0.0
  %5299 = vmatprep.subr.mxu0 0.0
  %v5300 = vand.u32 %v4994, 4294901760
  %v5301 = vsub.f32 %v4994, %v5300
  %v5302 = vand.u32 %v5301, 4294901760
  %v5303 = vsub.f32 %v5301, %v5302
  %v5304 = vand.u32 %v5303, 4294901760
  %5305 = vmatpush1.msra.mxu0 %v5304
  %5306 = vmatprep.subr.mxu0 0.0
  %v5307 = vand.u32 %v4993, 4294901760
  %v5308 = vsub.f32 %v4993, %v5307
  %v5309 = vand.u32 %v5308, 4294901760
  %v5310 = vsub.f32 %v5308, %v5309
  %v5311 = vand.u32 %v5310, 4294901760
  %5312 = vmatpush1.msra.mxu0 %v5311
  %5313 = vmatprep.subr.mxu0 0.0
  %v5314 = vand.u32 %v4992, 4294901760
  %v5315 = vsub.f32 %v4992, %v5314
  %v5316 = vand.u32 %v5315, 4294901760
  %v5317 = vsub.f32 %v5315, %v5316
  %v5318 = vand.u32 %v5317, 4294901760
  %5319 = vmatpush1.msra.mxu0 %v5318
  %5320 = vmatprep.subr.mxu0 0.0
  %v5321 = vand.u32 %v4991, 4294901760
  %v5322 = vsub.f32 %v4991, %v5321
  %v5323 = vand.u32 %v5322, 4294901760
  %v5324 = vsub.f32 %v5322, %v5323
  %v5325 = vand.u32 %v5324, 4294901760
  %5326 = vmatpush1.msra.mxu0 %v5325
  %5327 = vmatprep.subr.mxu0 0.0
  %v5328 = vand.u32 %v4990, 4294901760
  %v5329 = vsub.f32 %v4990, %v5328
  %v5330 = vand.u32 %v5329, 4294901760
  %v5331 = vsub.f32 %v5329, %v5330
  %v5332 = vand.u32 %v5331, 4294901760
  %5333 = vmatpush1.msra.mxu0 %v5332
  %5334 = vmatprep.subr.mxu0 0.0
  %v5335 = vand.u32 %v4989, 4294901760
  %v5336 = vsub.f32 %v4989, %v5335
  %v5337 = vand.u32 %v5336, 4294901760
  %v5338 = vsub.f32 %v5336, %v5337
  %v5339 = vand.u32 %v5338, 4294901760
  %5340 = vmatpush1.msra.mxu0 %v5339
  %5341 = vmatprep.subr.mxu0 0.0
  %v5342 = vand.u32 %v4988, 4294901760
  %v5343 = vsub.f32 %v4988, %v5342
  %v5344 = vand.u32 %v5343, 4294901760
  %v5345 = vsub.f32 %v5343, %v5344
  %v5346 = vand.u32 %v5345, 4294901760
  %5347 = vmatpush1.msra.mxu0 %v5346
  %5348 = vmatprep.subr.mxu0 0.0
  %v5349 = vand.u32 %v4987, 4294901760
  %v5350 = vsub.f32 %v4987, %v5349
  %v5351 = vand.u32 %v5350, 4294901760
  %v5352 = vsub.f32 %v5350, %v5351
  %v5353 = vand.u32 %v5352, 4294901760
  %5354 = vmatpush1.msra.mxu0 %v5353
  %5355 = vmatprep.subr.mxu0 0.0
  %5356 = vmatpush2.msra.mxu0 0.0
  %5357 = vmatprep.subr.mxu0 0.0
  %5358 = vmatpush2.msra.mxu0 0.0
  %5359 = vmatprep.subr.mxu0 0.0
  %5360 = vmatpush2.msra.mxu0 0.0
  %5361 = vmatprep.subr.mxu0 0.0
  %5362 = vmatpush2.msra.mxu0 0.0
  %5363 = vmatprep.subr.mxu0 0.0
  %5364 = vmatpush2.msra.mxu0 0.0
  %5365 = vmatprep.subr.mxu0 0.0
  %5366 = vmatpush2.msra.mxu0 0.0
  %5367 = vmatprep.subr.mxu0 0.0
  %5368 = vmatpush2.msra.mxu0 0.0
  %5369 = vmatprep.subr.mxu0 0.0
  %5370 = vmatpush2.msra.mxu0 0.0
  %5371 = vmatprep.subr.mxu0 0.0
  %5372 = vmatpush2.msra.mxu0 0.0
  %5373 = vmatprep.subr.mxu0 0.0
  %5374 = vmatpush2.msra.mxu0 0.0
  %5375 = vmatprep.subr.mxu0 0.0
  %5376 = vmatpush2.msra.mxu0 0.0
  %5377 = vmatprep.subr.mxu0 0.0
  %5378 = vmatpush2.msra.mxu0 0.0
  %5379 = vmatprep.subr.mxu0 0.0
  %5380 = vmatpush2.msra.mxu0 0.0
  %5381 = vmatprep.subr.mxu0 0.0
  %5382 = vmatpush2.msra.mxu0 0.0
  %5383 = vmatprep.subr.mxu0 0.0
  %5384 = vmatpush2.msra.mxu0 0.0
  %5385 = vmatprep.subr.mxu0 0.0
  %5386 = vmatpush2.msra.mxu0 0.0
  %5387 = vmatprep.mubr.f32.mxu0 0.0
  %v5388 = vand.u32 %v5003, 4294901760
  %5389 = vmatmul.mubr.f32.gmra.mxu0 %v5388
  %v5390 = vpop.f32.mrf.mxu0
  %v5391 = vadd.f32 %v5130, %v5390
  %v5392 = vpop.f32.mrf.mxu0
  %5393 = vmatprep.mubr.f32.mxu0 0.0
  %v5394 = vand.u32 %v5006, 4294901760
  %5395 = vmatmul.mubr.f32.gmra.mxu0 %v5394
  %v5396 = vpop.f32.mrf.mxu0
  %v5397 = vadd.f32 %v5140, %v5396
  %v5398 = vpop.f32.mrf.mxu0
  %5399 = vmatprep.mubr.f32.mxu0 0.0
  %v5400 = vand.u32 %v5009, 4294901760
  %5401 = vmatmul.mubr.f32.gmra.mxu0 %v5400
  %v5402 = vpop.f32.mrf.mxu0
  %v5403 = vadd.f32 %v5150, %v5402
  %v5404 = vpop.f32.mrf.mxu0
  %5405 = vmatprep.mubr.f32.mxu0 0.0
  %v5406 = vand.u32 %v5012, 4294901760
  %5407 = vmatmul.mubr.f32.gmra.mxu0 %v5406
  %v5408 = vpop.f32.mrf.mxu0
  %v5409 = vadd.f32 %v5160, %v5408
  %v5410 = vpop.f32.mrf.mxu0
  %5411 = vmatprep.mubr.f32.mxu0 0.0
  %v5412 = vand.u32 %v5015, 4294901760
  %5413 = vmatmul.mubr.f32.gmra.mxu0 %v5412
  %v5414 = vpop.f32.mrf.mxu0
  %v5415 = vadd.f32 %v5170, %v5414
  %v5416 = vpop.f32.mrf.mxu0
  %5417 = vmatprep.mubr.f32.mxu0 0.0
  %v5418 = vand.u32 %v5018, 4294901760
  %5419 = vmatmul.mubr.f32.gmra.mxu0 %v5418
  %v5420 = vpop.f32.mrf.mxu0
  %v5421 = vadd.f32 %v5180, %v5420
  %v5422 = vpop.f32.mrf.mxu0
  %5423 = vmatprep.mubr.f32.mxu0 0.0
  %v5424 = vand.u32 %v5021, 4294901760
  %5425 = vmatmul.mubr.f32.gmra.mxu0 %v5424
  %v5426 = vpop.f32.mrf.mxu0
  %v5427 = vadd.f32 %v5190, %v5426
  %v5428 = vpop.f32.mrf.mxu0
  %5429 = vmatprep.mubr.f32.mxu0 0.0
  %v5430 = vand.u32 %v5024, 4294901760
  %5431 = vmatmul.mubr.f32.gmra.mxu0 %v5430
  %v5432 = vpop.f32.mrf.mxu0
  %v5433 = vadd.f32 %v5200, %v5432
  %v5434 = vpop.f32.mrf.mxu0
  %5435 = vmatprep.mubr.f32.mxu0 0.0
  %v5436 = vand.u32 %v5027, 4294901760
  %5437 = vmatmul.mubr.f32.gmra.mxu0 %v5436
  %v5438 = vpop.f32.mrf.mxu0
  %v5439 = vadd.f32 %v5210, %v5438
  %v5440 = vpop.f32.mrf.mxu0
  %5441 = vmatprep.mubr.f32.mxu0 0.0
  %v5442 = vand.u32 %v5030, 4294901760
  %5443 = vmatmul.mubr.f32.gmra.mxu0 %v5442
  %v5444 = vpop.f32.mrf.mxu0
  %v5445 = vadd.f32 %v5220, %v5444
  %v5446 = vpop.f32.mrf.mxu0
  %5447 = vmatprep.mubr.f32.mxu0 0.0
  %v5448 = vand.u32 %v5033, 4294901760
  %5449 = vmatmul.mubr.f32.gmra.mxu0 %v5448
  %v5450 = vpop.f32.mrf.mxu0
  %v5451 = vadd.f32 %v5230, %v5450
  %v5452 = vpop.f32.mrf.mxu0
  %5453 = vmatprep.mubr.f32.mxu0 0.0
  %v5454 = vand.u32 %v5036, 4294901760
  %5455 = vmatmul.mubr.f32.gmra.mxu0 %v5454
  %v5456 = vpop.f32.mrf.mxu0
  %v5457 = vadd.f32 %v5240, %v5456
  %v5458 = vpop.f32.mrf.mxu0
  %5459 = vmatprep.mubr.f32.mxu0 0.0
  %v5460 = vand.u32 %v5039, 4294901760
  %5461 = vmatmul.mubr.f32.gmra.mxu0 %v5460
  %v5462 = vpop.f32.mrf.mxu0
  %v5463 = vadd.f32 %v5250, %v5462
  %v5464 = vpop.f32.mrf.mxu0
  %5465 = vmatprep.mubr.f32.mxu0 0.0
  %v5466 = vand.u32 %v5042, 4294901760
  %5467 = vmatmul.mubr.f32.gmra.mxu0 %v5466
  %v5468 = vpop.f32.mrf.mxu0
  %v5469 = vadd.f32 %v5260, %v5468
  %v5470 = vpop.f32.mrf.mxu0
  %5471 = vmatprep.mubr.f32.mxu0 0.0
  %v5472 = vand.u32 %v5045, 4294901760
  %5473 = vmatmul.mubr.f32.gmra.mxu0 %v5472
  %v5474 = vpop.f32.mrf.mxu0
  %v5475 = vadd.f32 %v5270, %v5474
  %v5476 = vpop.f32.mrf.mxu0
  %5477 = vmatprep.mubr.f32.mxu0 0.0
  %v5478 = vand.u32 %v5048, 4294901760
  %5479 = vmatmul.mubr.f32.gmra.mxu0 %v5478
  %v5480 = vpop.f32.mrf.mxu0
  %v5481 = vadd.f32 %v5280, %v5480
  %v5482 = vpop.f32.mrf.mxu0
  %5483 = vdwg.mxu0
  %5484 = vmatprep.subr.mxu0 0.0
  %5485 = vmatpush1.msra.mxu0 0.0
  %5486 = vmatprep.subr.mxu0 0.0
  %5487 = vmatpush1.msra.mxu0 0.0
  %5488 = vmatprep.subr.mxu0 0.0
  %5489 = vmatpush1.msra.mxu0 0.0
  %5490 = vmatprep.subr.mxu0 0.0
  %5491 = vmatpush1.msra.mxu0 0.0
  %5492 = vmatprep.subr.mxu0 0.0
  %5493 = vmatpush1.msra.mxu0 0.0
  %5494 = vmatprep.subr.mxu0 0.0
  %5495 = vmatpush1.msra.mxu0 0.0
  %5496 = vmatprep.subr.mxu0 0.0
  %5497 = vmatpush1.msra.mxu0 0.0
  %5498 = vmatprep.subr.mxu0 0.0
  %5499 = vmatpush1.msra.mxu0 0.0
  %5500 = vmatprep.subr.mxu0 0.0
  %v5501 = vand.u32 %v4994, 4294901760
  %v5502 = vsub.f32 %v4994, %v5501
  %5503 = vmatpush1.msra.mxu0 %v5502
  %5504 = vmatprep.subr.mxu0 0.0
  %v5505 = vand.u32 %v4993, 4294901760
  %v5506 = vsub.f32 %v4993, %v5505
  %5507 = vmatpush1.msra.mxu0 %v5506
  %5508 = vmatprep.subr.mxu0 0.0
  %v5509 = vand.u32 %v4992, 4294901760
  %v5510 = vsub.f32 %v4992, %v5509
  %5511 = vmatpush1.msra.mxu0 %v5510
  %5512 = vmatprep.subr.mxu0 0.0
  %v5513 = vand.u32 %v4991, 4294901760
  %v5514 = vsub.f32 %v4991, %v5513
  %5515 = vmatpush1.msra.mxu0 %v5514
  %5516 = vmatprep.subr.mxu0 0.0
  %v5517 = vand.u32 %v4990, 4294901760
  %v5518 = vsub.f32 %v4990, %v5517
  %5519 = vmatpush1.msra.mxu0 %v5518
  %5520 = vmatprep.subr.mxu0 0.0
  %v5521 = vand.u32 %v4989, 4294901760
  %v5522 = vsub.f32 %v4989, %v5521
  %5523 = vmatpush1.msra.mxu0 %v5522
  %5524 = vmatprep.subr.mxu0 0.0
  %v5525 = vand.u32 %v4988, 4294901760
  %v5526 = vsub.f32 %v4988, %v5525
  %5527 = vmatpush1.msra.mxu0 %v5526
  %5528 = vmatprep.subr.mxu0 0.0
  %v5529 = vand.u32 %v4987, 4294901760
  %v5530 = vsub.f32 %v4987, %v5529
  %5531 = vmatpush1.msra.mxu0 %v5530
  %5532 = vmatprep.subr.mxu0 0.0
  %5533 = vmatpush2.msra.mxu0 0.0
  %5534 = vmatprep.subr.mxu0 0.0
  %5535 = vmatpush2.msra.mxu0 0.0
  %5536 = vmatprep.subr.mxu0 0.0
  %5537 = vmatpush2.msra.mxu0 0.0
  %5538 = vmatprep.subr.mxu0 0.0
  %5539 = vmatpush2.msra.mxu0 0.0
  %5540 = vmatprep.subr.mxu0 0.0
  %5541 = vmatpush2.msra.mxu0 0.0
  %5542 = vmatprep.subr.mxu0 0.0
  %5543 = vmatpush2.msra.mxu0 0.0
  %5544 = vmatprep.subr.mxu0 0.0
  %5545 = vmatpush2.msra.mxu0 0.0
  %5546 = vmatprep.subr.mxu0 0.0
  %5547 = vmatpush2.msra.mxu0 0.0
  %5548 = vmatprep.subr.mxu0 0.0
  %5549 = vmatpush2.msra.mxu0 0.0
  %5550 = vmatprep.subr.mxu0 0.0
  %5551 = vmatpush2.msra.mxu0 0.0
  %5552 = vmatprep.subr.mxu0 0.0
  %5553 = vmatpush2.msra.mxu0 0.0
  %5554 = vmatprep.subr.mxu0 0.0
  %5555 = vmatpush2.msra.mxu0 0.0
  %5556 = vmatprep.subr.mxu0 0.0
  %5557 = vmatpush2.msra.mxu0 0.0
  %5558 = vmatprep.subr.mxu0 0.0
  %5559 = vmatpush2.msra.mxu0 0.0
  %5560 = vmatprep.subr.mxu0 0.0
  %5561 = vmatpush2.msra.mxu0 0.0
  %5562 = vmatprep.subr.mxu0 0.0
  %5563 = vmatpush2.msra.mxu0 0.0
  %5564 = vmatprep.mubr.f32.mxu0 0.0
  %v5565 = vand.u32 %v5003, 4294901760
  %v5566 = vsub.f32 %v5003, %v5565
  %5567 = vmatmul.mubr.f32.gmra.mxu0 %v5566
  %v5568 = vpop.f32.mrf.mxu0
  %v5569 = vadd.f32 %v5391, %v5568
  %v5570 = vpop.f32.mrf.mxu0
  %5571 = vmatprep.mubr.f32.mxu0 0.0
  %v5572 = vand.u32 %v5006, 4294901760
  %v5573 = vsub.f32 %v5006, %v5572
  %5574 = vmatmul.mubr.f32.gmra.mxu0 %v5573
  %v5575 = vpop.f32.mrf.mxu0
  %v5576 = vadd.f32 %v5397, %v5575
  %v5577 = vpop.f32.mrf.mxu0
  %5578 = vmatprep.mubr.f32.mxu0 0.0
  %v5579 = vand.u32 %v5009, 4294901760
  %v5580 = vsub.f32 %v5009, %v5579
  %5581 = vmatmul.mubr.f32.gmra.mxu0 %v5580
  %v5582 = vpop.f32.mrf.mxu0
  %v5583 = vadd.f32 %v5403, %v5582
  %v5584 = vpop.f32.mrf.mxu0
  %5585 = vmatprep.mubr.f32.mxu0 0.0
  %v5586 = vand.u32 %v5012, 4294901760
  %v5587 = vsub.f32 %v5012, %v5586
  %5588 = vmatmul.mubr.f32.gmra.mxu0 %v5587
  %v5589 = vpop.f32.mrf.mxu0
  %v5590 = vadd.f32 %v5409, %v5589
  %v5591 = vpop.f32.mrf.mxu0
  %5592 = vmatprep.mubr.f32.mxu0 0.0
  %v5593 = vand.u32 %v5015, 4294901760
  %v5594 = vsub.f32 %v5015, %v5593
  %5595 = vmatmul.mubr.f32.gmra.mxu0 %v5594
  %v5596 = vpop.f32.mrf.mxu0
  %v5597 = vadd.f32 %v5415, %v5596
  %v5598 = vpop.f32.mrf.mxu0
  %5599 = vmatprep.mubr.f32.mxu0 0.0
  %v5600 = vand.u32 %v5018, 4294901760
  %v5601 = vsub.f32 %v5018, %v5600
  %5602 = vmatmul.mubr.f32.gmra.mxu0 %v5601
  %v5603 = vpop.f32.mrf.mxu0
  %v5604 = vadd.f32 %v5421, %v5603
  %v5605 = vpop.f32.mrf.mxu0
  %5606 = vmatprep.mubr.f32.mxu0 0.0
  %v5607 = vand.u32 %v5021, 4294901760
  %v5608 = vsub.f32 %v5021, %v5607
  %5609 = vmatmul.mubr.f32.gmra.mxu0 %v5608
  %v5610 = vpop.f32.mrf.mxu0
  %v5611 = vadd.f32 %v5427, %v5610
  %v5612 = vpop.f32.mrf.mxu0
  %5613 = vmatprep.mubr.f32.mxu0 0.0
  %v5614 = vand.u32 %v5024, 4294901760
  %v5615 = vsub.f32 %v5024, %v5614
  %5616 = vmatmul.mubr.f32.gmra.mxu0 %v5615
  %v5617 = vpop.f32.mrf.mxu0
  %v5618 = vadd.f32 %v5433, %v5617
  %v5619 = vpop.f32.mrf.mxu0
  %5620 = vmatprep.mubr.f32.mxu0 0.0
  %v5621 = vand.u32 %v5027, 4294901760
  %v5622 = vsub.f32 %v5027, %v5621
  %5623 = vmatmul.mubr.f32.gmra.mxu0 %v5622
  %v5624 = vpop.f32.mrf.mxu0
  %v5625 = vadd.f32 %v5439, %v5624
  %v5626 = vpop.f32.mrf.mxu0
  %5627 = vmatprep.mubr.f32.mxu0 0.0
  %v5628 = vand.u32 %v5030, 4294901760
  %v5629 = vsub.f32 %v5030, %v5628
  %5630 = vmatmul.mubr.f32.gmra.mxu0 %v5629
  %v5631 = vpop.f32.mrf.mxu0
  %v5632 = vadd.f32 %v5445, %v5631
  %v5633 = vpop.f32.mrf.mxu0
  %5634 = vmatprep.mubr.f32.mxu0 0.0
  %v5635 = vand.u32 %v5033, 4294901760
  %v5636 = vsub.f32 %v5033, %v5635
  %5637 = vmatmul.mubr.f32.gmra.mxu0 %v5636
  %v5638 = vpop.f32.mrf.mxu0
  %v5639 = vadd.f32 %v5451, %v5638
  %v5640 = vpop.f32.mrf.mxu0
  %5641 = vmatprep.mubr.f32.mxu0 0.0
  %v5642 = vand.u32 %v5036, 4294901760
  %v5643 = vsub.f32 %v5036, %v5642
  %5644 = vmatmul.mubr.f32.gmra.mxu0 %v5643
  %v5645 = vpop.f32.mrf.mxu0
  %v5646 = vadd.f32 %v5457, %v5645
  %v5647 = vpop.f32.mrf.mxu0
  %5648 = vmatprep.mubr.f32.mxu0 0.0
  %v5649 = vand.u32 %v5039, 4294901760
  %v5650 = vsub.f32 %v5039, %v5649
  %5651 = vmatmul.mubr.f32.gmra.mxu0 %v5650
  %v5652 = vpop.f32.mrf.mxu0
  %v5653 = vadd.f32 %v5463, %v5652
  %v5654 = vpop.f32.mrf.mxu0
  %5655 = vmatprep.mubr.f32.mxu0 0.0
  %v5656 = vand.u32 %v5042, 4294901760
  %v5657 = vsub.f32 %v5042, %v5656
  %5658 = vmatmul.mubr.f32.gmra.mxu0 %v5657
  %v5659 = vpop.f32.mrf.mxu0
  %v5660 = vadd.f32 %v5469, %v5659
  %v5661 = vpop.f32.mrf.mxu0
  %5662 = vmatprep.mubr.f32.mxu0 0.0
  %v5663 = vand.u32 %v5045, 4294901760
  %v5664 = vsub.f32 %v5045, %v5663
  %5665 = vmatmul.mubr.f32.gmra.mxu0 %v5664
  %v5666 = vpop.f32.mrf.mxu0
  %v5667 = vadd.f32 %v5475, %v5666
  %v5668 = vpop.f32.mrf.mxu0
  %5669 = vmatprep.mubr.f32.mxu0 0.0
  %v5670 = vand.u32 %v5048, 4294901760
  %v5671 = vsub.f32 %v5048, %v5670
  %5672 = vmatmul.mubr.f32.gmra.mxu0 %v5671
  %v5673 = vpop.f32.mrf.mxu0
  %v5674 = vadd.f32 %v5481, %v5673
  %v5675 = vpop.f32.mrf.mxu0
  %5676 = vdwg.mxu0
  %5677 = vmatprep.subr.mxu0 0.0
  %5678 = vmatpush1.msra.mxu0 0.0
  %5679 = vmatprep.subr.mxu0 0.0
  %5680 = vmatpush1.msra.mxu0 0.0
  %5681 = vmatprep.subr.mxu0 0.0
  %5682 = vmatpush1.msra.mxu0 0.0
  %5683 = vmatprep.subr.mxu0 0.0
  %5684 = vmatpush1.msra.mxu0 0.0
  %5685 = vmatprep.subr.mxu0 0.0
  %5686 = vmatpush1.msra.mxu0 0.0
  %5687 = vmatprep.subr.mxu0 0.0
  %5688 = vmatpush1.msra.mxu0 0.0
  %5689 = vmatprep.subr.mxu0 0.0
  %5690 = vmatpush1.msra.mxu0 0.0
  %5691 = vmatprep.subr.mxu0 0.0
  %5692 = vmatpush1.msra.mxu0 0.0
  %5693 = vmatprep.subr.mxu0 0.0
  %v5694 = vand.u32 %v4994, 4294901760
  %5695 = vmatpush1.msra.mxu0 %v5694
  %5696 = vmatprep.subr.mxu0 0.0
  %v5697 = vand.u32 %v4993, 4294901760
  %5698 = vmatpush1.msra.mxu0 %v5697
  %5699 = vmatprep.subr.mxu0 0.0
  %v5700 = vand.u32 %v4992, 4294901760
  %5701 = vmatpush1.msra.mxu0 %v5700
  %5702 = vmatprep.subr.mxu0 0.0
  %v5703 = vand.u32 %v4991, 4294901760
  %5704 = vmatpush1.msra.mxu0 %v5703
  %5705 = vmatprep.subr.mxu0 0.0
  %v5706 = vand.u32 %v4990, 4294901760
  %5707 = vmatpush1.msra.mxu0 %v5706
  %5708 = vmatprep.subr.mxu0 0.0
  %v5709 = vand.u32 %v4989, 4294901760
  %5710 = vmatpush1.msra.mxu0 %v5709
  %5711 = vmatprep.subr.mxu0 0.0
  %v5712 = vand.u32 %v4988, 4294901760
  %5713 = vmatpush1.msra.mxu0 %v5712
  %5714 = vmatprep.subr.mxu0 0.0
  %v5715 = vand.u32 %v4987, 4294901760
  %5716 = vmatpush1.msra.mxu0 %v5715
  %5717 = vmatprep.subr.mxu0 0.0
  %5718 = vmatpush2.msra.mxu0 0.0
  %5719 = vmatprep.subr.mxu0 0.0
  %5720 = vmatpush2.msra.mxu0 0.0
  %5721 = vmatprep.subr.mxu0 0.0
  %5722 = vmatpush2.msra.mxu0 0.0
  %5723 = vmatprep.subr.mxu0 0.0
  %5724 = vmatpush2.msra.mxu0 0.0
  %5725 = vmatprep.subr.mxu0 0.0
  %5726 = vmatpush2.msra.mxu0 0.0
  %5727 = vmatprep.subr.mxu0 0.0
  %5728 = vmatpush2.msra.mxu0 0.0
  %5729 = vmatprep.subr.mxu0 0.0
  %5730 = vmatpush2.msra.mxu0 0.0
  %5731 = vmatprep.subr.mxu0 0.0
  %5732 = vmatpush2.msra.mxu0 0.0
  %5733 = vmatprep.subr.mxu0 0.0
  %5734 = vmatpush2.msra.mxu0 0.0
  %5735 = vmatprep.subr.mxu0 0.0
  %5736 = vmatpush2.msra.mxu0 0.0
  %5737 = vmatprep.subr.mxu0 0.0
  %5738 = vmatpush2.msra.mxu0 0.0
  %5739 = vmatprep.subr.mxu0 0.0
  %5740 = vmatpush2.msra.mxu0 0.0
  %5741 = vmatprep.subr.mxu0 0.0
  %5742 = vmatpush2.msra.mxu0 0.0
  %5743 = vmatprep.subr.mxu0 0.0
  %5744 = vmatpush2.msra.mxu0 0.0
  %5745 = vmatprep.subr.mxu0 0.0
  %5746 = vmatpush2.msra.mxu0 0.0
  %5747 = vmatprep.subr.mxu0 0.0
  %5748 = vmatpush2.msra.mxu0 0.0
  %5749 = vmatprep.mubr.f32.mxu0 0.0
  %v5750 = vand.u32 %v5003, 4294901760
  %v5751 = vsub.f32 %v5003, %v5750
  %v5752 = vand.u32 %v5751, 4294901760
  %5753 = vmatmul.mubr.f32.gmra.mxu0 %v5752
  %v5754 = vpop.f32.mrf.mxu0
  %v5755 = vadd.f32 %v5569, %v5754
  %v5756 = vpop.f32.mrf.mxu0
  %5757 = vmatprep.mubr.f32.mxu0 0.0
  %v5758 = vand.u32 %v5006, 4294901760
  %v5759 = vsub.f32 %v5006, %v5758
  %v5760 = vand.u32 %v5759, 4294901760
  %5761 = vmatmul.mubr.f32.gmra.mxu0 %v5760
  %v5762 = vpop.f32.mrf.mxu0
  %v5763 = vadd.f32 %v5576, %v5762
  %v5764 = vpop.f32.mrf.mxu0
  %5765 = vmatprep.mubr.f32.mxu0 0.0
  %v5766 = vand.u32 %v5009, 4294901760
  %v5767 = vsub.f32 %v5009, %v5766
  %v5768 = vand.u32 %v5767, 4294901760
  %5769 = vmatmul.mubr.f32.gmra.mxu0 %v5768
  %v5770 = vpop.f32.mrf.mxu0
  %v5771 = vadd.f32 %v5583, %v5770
  %v5772 = vpop.f32.mrf.mxu0
  %5773 = vmatprep.mubr.f32.mxu0 0.0
  %v5774 = vand.u32 %v5012, 4294901760
  %v5775 = vsub.f32 %v5012, %v5774
  %v5776 = vand.u32 %v5775, 4294901760
  %5777 = vmatmul.mubr.f32.gmra.mxu0 %v5776
  %v5778 = vpop.f32.mrf.mxu0
  %v5779 = vadd.f32 %v5590, %v5778
  %v5780 = vpop.f32.mrf.mxu0
  %5781 = vmatprep.mubr.f32.mxu0 0.0
  %v5782 = vand.u32 %v5015, 4294901760
  %v5783 = vsub.f32 %v5015, %v5782
  %v5784 = vand.u32 %v5783, 4294901760
  %5785 = vmatmul.mubr.f32.gmra.mxu0 %v5784
  %v5786 = vpop.f32.mrf.mxu0
  %v5787 = vadd.f32 %v5597, %v5786
  %v5788 = vpop.f32.mrf.mxu0
  %5789 = vmatprep.mubr.f32.mxu0 0.0
  %v5790 = vand.u32 %v5018, 4294901760
  %v5791 = vsub.f32 %v5018, %v5790
  %v5792 = vand.u32 %v5791, 4294901760
  %5793 = vmatmul.mubr.f32.gmra.mxu0 %v5792
  %v5794 = vpop.f32.mrf.mxu0
  %v5795 = vadd.f32 %v5604, %v5794
  %v5796 = vpop.f32.mrf.mxu0
  %5797 = vmatprep.mubr.f32.mxu0 0.0
  %v5798 = vand.u32 %v5021, 4294901760
  %v5799 = vsub.f32 %v5021, %v5798
  %v5800 = vand.u32 %v5799, 4294901760
  %5801 = vmatmul.mubr.f32.gmra.mxu0 %v5800
  %v5802 = vpop.f32.mrf.mxu0
  %v5803 = vadd.f32 %v5611, %v5802
  %v5804 = vpop.f32.mrf.mxu0
  %5805 = vmatprep.mubr.f32.mxu0 0.0
  %v5806 = vand.u32 %v5024, 4294901760
  %v5807 = vsub.f32 %v5024, %v5806
  %v5808 = vand.u32 %v5807, 4294901760
  %5809 = vmatmul.mubr.f32.gmra.mxu0 %v5808
  %v5810 = vpop.f32.mrf.mxu0
  %v5811 = vadd.f32 %v5618, %v5810
  %v5812 = vpop.f32.mrf.mxu0
  %5813 = vmatprep.mubr.f32.mxu0 0.0
  %v5814 = vand.u32 %v5027, 4294901760
  %v5815 = vsub.f32 %v5027, %v5814
  %v5816 = vand.u32 %v5815, 4294901760
  %5817 = vmatmul.mubr.f32.gmra.mxu0 %v5816
  %v5818 = vpop.f32.mrf.mxu0
  %v5819 = vadd.f32 %v5625, %v5818
  %v5820 = vpop.f32.mrf.mxu0
  %5821 = vmatprep.mubr.f32.mxu0 0.0
  %v5822 = vand.u32 %v5030, 4294901760
  %v5823 = vsub.f32 %v5030, %v5822
  %v5824 = vand.u32 %v5823, 4294901760
  %5825 = vmatmul.mubr.f32.gmra.mxu0 %v5824
  %v5826 = vpop.f32.mrf.mxu0
  %v5827 = vadd.f32 %v5632, %v5826
  %v5828 = vpop.f32.mrf.mxu0
  %5829 = vmatprep.mubr.f32.mxu0 0.0
  %v5830 = vand.u32 %v5033, 4294901760
  %v5831 = vsub.f32 %v5033, %v5830
  %v5832 = vand.u32 %v5831, 4294901760
  %5833 = vmatmul.mubr.f32.gmra.mxu0 %v5832
  %v5834 = vpop.f32.mrf.mxu0
  %v5835 = vadd.f32 %v5639, %v5834
  %v5836 = vpop.f32.mrf.mxu0
  %5837 = vmatprep.mubr.f32.mxu0 0.0
  %v5838 = vand.u32 %v5036, 4294901760
  %v5839 = vsub.f32 %v5036, %v5838
  %v5840 = vand.u32 %v5839, 4294901760
  %5841 = vmatmul.mubr.f32.gmra.mxu0 %v5840
  %v5842 = vpop.f32.mrf.mxu0
  %v5843 = vadd.f32 %v5646, %v5842
  %v5844 = vpop.f32.mrf.mxu0
  %5845 = vmatprep.mubr.f32.mxu0 0.0
  %v5846 = vand.u32 %v5039, 4294901760
  %v5847 = vsub.f32 %v5039, %v5846
  %v5848 = vand.u32 %v5847, 4294901760
  %5849 = vmatmul.mubr.f32.gmra.mxu0 %v5848
  %v5850 = vpop.f32.mrf.mxu0
  %v5851 = vadd.f32 %v5653, %v5850
  %v5852 = vpop.f32.mrf.mxu0
  %5853 = vmatprep.mubr.f32.mxu0 0.0
  %v5854 = vand.u32 %v5042, 4294901760
  %v5855 = vsub.f32 %v5042, %v5854
  %v5856 = vand.u32 %v5855, 4294901760
  %5857 = vmatmul.mubr.f32.gmra.mxu0 %v5856
  %v5858 = vpop.f32.mrf.mxu0
  %v5859 = vadd.f32 %v5660, %v5858
  %v5860 = vpop.f32.mrf.mxu0
  %5861 = vmatprep.mubr.f32.mxu0 0.0
  %v5862 = vand.u32 %v5045, 4294901760
  %v5863 = vsub.f32 %v5045, %v5862
  %v5864 = vand.u32 %v5863, 4294901760
  %5865 = vmatmul.mubr.f32.gmra.mxu0 %v5864
  %v5866 = vpop.f32.mrf.mxu0
  %v5867 = vadd.f32 %v5667, %v5866
  %v5868 = vpop.f32.mrf.mxu0
  %5869 = vmatprep.mubr.f32.mxu0 0.0
  %v5870 = vand.u32 %v5048, 4294901760
  %v5871 = vsub.f32 %v5048, %v5870
  %v5872 = vand.u32 %v5871, 4294901760
  %5873 = vmatmul.mubr.f32.gmra.mxu0 %v5872
  %v5874 = vpop.f32.mrf.mxu0
  %v5875 = vadd.f32 %v5674, %v5874
  %v5876 = vpop.f32.mrf.mxu0
  %5877 = vdwg.mxu0
  %5878 = vmatprep.subr.mxu0 0.0
  %5879 = vmatpush1.msra.mxu0 0.0
  %5880 = vmatprep.subr.mxu0 0.0
  %5881 = vmatpush1.msra.mxu0 0.0
  %5882 = vmatprep.subr.mxu0 0.0
  %5883 = vmatpush1.msra.mxu0 0.0
  %5884 = vmatprep.subr.mxu0 0.0
  %5885 = vmatpush1.msra.mxu0 0.0
  %5886 = vmatprep.subr.mxu0 0.0
  %5887 = vmatpush1.msra.mxu0 0.0
  %5888 = vmatprep.subr.mxu0 0.0
  %5889 = vmatpush1.msra.mxu0 0.0
  %5890 = vmatprep.subr.mxu0 0.0
  %5891 = vmatpush1.msra.mxu0 0.0
  %5892 = vmatprep.subr.mxu0 0.0
  %5893 = vmatpush1.msra.mxu0 0.0
  %5894 = vmatprep.subr.mxu0 0.0
  %v5895 = vand.u32 %v4994, 4294901760
  %v5896 = vsub.f32 %v4994, %v5895
  %v5897 = vand.u32 %v5896, 4294901760
  %5898 = vmatpush1.msra.mxu0 %v5897
  %5899 = vmatprep.subr.mxu0 0.0
  %v5900 = vand.u32 %v4993, 4294901760
  %v5901 = vsub.f32 %v4993, %v5900
  %v5902 = vand.u32 %v5901, 4294901760
  %5903 = vmatpush1.msra.mxu0 %v5902
  %5904 = vmatprep.subr.mxu0 0.0
  %v5905 = vand.u32 %v4992, 4294901760
  %v5906 = vsub.f32 %v4992, %v5905
  %v5907 = vand.u32 %v5906, 4294901760
  %5908 = vmatpush1.msra.mxu0 %v5907
  %5909 = vmatprep.subr.mxu0 0.0
  %v5910 = vand.u32 %v4991, 4294901760
  %v5911 = vsub.f32 %v4991, %v5910
  %v5912 = vand.u32 %v5911, 4294901760
  %5913 = vmatpush1.msra.mxu0 %v5912
  %5914 = vmatprep.subr.mxu0 0.0
  %v5915 = vand.u32 %v4990, 4294901760
  %v5916 = vsub.f32 %v4990, %v5915
  %v5917 = vand.u32 %v5916, 4294901760
  %5918 = vmatpush1.msra.mxu0 %v5917
  %5919 = vmatprep.subr.mxu0 0.0
  %v5920 = vand.u32 %v4989, 4294901760
  %v5921 = vsub.f32 %v4989, %v5920
  %v5922 = vand.u32 %v5921, 4294901760
  %5923 = vmatpush1.msra.mxu0 %v5922
  %5924 = vmatprep.subr.mxu0 0.0
  %v5925 = vand.u32 %v4988, 4294901760
  %v5926 = vsub.f32 %v4988, %v5925
  %v5927 = vand.u32 %v5926, 4294901760
  %5928 = vmatpush1.msra.mxu0 %v5927
  %5929 = vmatprep.subr.mxu0 0.0
  %v5930 = vand.u32 %v4987, 4294901760
  %v5931 = vsub.f32 %v4987, %v5930
  %v5932 = vand.u32 %v5931, 4294901760
  %5933 = vmatpush1.msra.mxu0 %v5932
  %5934 = vmatprep.subr.mxu0 0.0
  %5935 = vmatpush2.msra.mxu0 0.0
  %5936 = vmatprep.subr.mxu0 0.0
  %5937 = vmatpush2.msra.mxu0 0.0
  %5938 = vmatprep.subr.mxu0 0.0
  %5939 = vmatpush2.msra.mxu0 0.0
  %5940 = vmatprep.subr.mxu0 0.0
  %5941 = vmatpush2.msra.mxu0 0.0
  %5942 = vmatprep.subr.mxu0 0.0
  %5943 = vmatpush2.msra.mxu0 0.0
  %5944 = vmatprep.subr.mxu0 0.0
  %5945 = vmatpush2.msra.mxu0 0.0
  %5946 = vmatprep.subr.mxu0 0.0
  %5947 = vmatpush2.msra.mxu0 0.0
  %5948 = vmatprep.subr.mxu0 0.0
  %5949 = vmatpush2.msra.mxu0 0.0
  %5950 = vmatprep.subr.mxu0 0.0
  %5951 = vmatpush2.msra.mxu0 0.0
  %5952 = vmatprep.subr.mxu0 0.0
  %5953 = vmatpush2.msra.mxu0 0.0
  %5954 = vmatprep.subr.mxu0 0.0
  %5955 = vmatpush2.msra.mxu0 0.0
  %5956 = vmatprep.subr.mxu0 0.0
  %5957 = vmatpush2.msra.mxu0 0.0
  %5958 = vmatprep.subr.mxu0 0.0
  %5959 = vmatpush2.msra.mxu0 0.0
  %5960 = vmatprep.subr.mxu0 0.0
  %5961 = vmatpush2.msra.mxu0 0.0
  %5962 = vmatprep.subr.mxu0 0.0
  %5963 = vmatpush2.msra.mxu0 0.0
  %5964 = vmatprep.subr.mxu0 0.0
  %5965 = vmatpush2.msra.mxu0 0.0
  %5966 = vmatprep.mubr.f32.mxu0 0.0
  %v5967 = vand.u32 %v5003, 4294901760
  %5968 = vmatmul.mubr.f32.gmra.mxu0 %v5967
  %v5969 = vpop.f32.mrf.mxu0
  %v5970 = vadd.f32 %v5755, %v5969
  %v5971 = vpop.f32.mrf.mxu0
  %5972 = vmatprep.mubr.f32.mxu0 0.0
  %v5973 = vand.u32 %v5006, 4294901760
  %5974 = vmatmul.mubr.f32.gmra.mxu0 %v5973
  %v5975 = vpop.f32.mrf.mxu0
  %v5976 = vadd.f32 %v5763, %v5975
  %v5977 = vpop.f32.mrf.mxu0
  %5978 = vmatprep.mubr.f32.mxu0 0.0
  %v5979 = vand.u32 %v5009, 4294901760
  %5980 = vmatmul.mubr.f32.gmra.mxu0 %v5979
  %v5981 = vpop.f32.mrf.mxu0
  %v5982 = vadd.f32 %v5771, %v5981
  %v5983 = vpop.f32.mrf.mxu0
  %5984 = vmatprep.mubr.f32.mxu0 0.0
  %v5985 = vand.u32 %v5012, 4294901760
  %5986 = vmatmul.mubr.f32.gmra.mxu0 %v5985
  %v5987 = vpop.f32.mrf.mxu0
  %v5988 = vadd.f32 %v5779, %v5987
  %v5989 = vpop.f32.mrf.mxu0
  %5990 = vmatprep.mubr.f32.mxu0 0.0
  %v5991 = vand.u32 %v5015, 4294901760
  %5992 = vmatmul.mubr.f32.gmra.mxu0 %v5991
  %v5993 = vpop.f32.mrf.mxu0
  %v5994 = vadd.f32 %v5787, %v5993
  %v5995 = vpop.f32.mrf.mxu0
  %5996 = vmatprep.mubr.f32.mxu0 0.0
  %v5997 = vand.u32 %v5018, 4294901760
  %5998 = vmatmul.mubr.f32.gmra.mxu0 %v5997
  %v5999 = vpop.f32.mrf.mxu0
  %v6000 = vadd.f32 %v5795, %v5999
  %v6001 = vpop.f32.mrf.mxu0
  %6002 = vmatprep.mubr.f32.mxu0 0.0
  %v6003 = vand.u32 %v5021, 4294901760
  %6004 = vmatmul.mubr.f32.gmra.mxu0 %v6003
  %v6005 = vpop.f32.mrf.mxu0
  %v6006 = vadd.f32 %v5803, %v6005
  %v6007 = vpop.f32.mrf.mxu0
  %6008 = vmatprep.mubr.f32.mxu0 0.0
  %v6009 = vand.u32 %v5024, 4294901760
  %6010 = vmatmul.mubr.f32.gmra.mxu0 %v6009
  %v6011 = vpop.f32.mrf.mxu0
  %v6012 = vadd.f32 %v5811, %v6011
  %v6013 = vpop.f32.mrf.mxu0
  %6014 = vmatprep.mubr.f32.mxu0 0.0
  %v6015 = vand.u32 %v5027, 4294901760
  %6016 = vmatmul.mubr.f32.gmra.mxu0 %v6015
  %v6017 = vpop.f32.mrf.mxu0
  %v6018 = vadd.f32 %v5819, %v6017
  %v6019 = vpop.f32.mrf.mxu0
  %6020 = vmatprep.mubr.f32.mxu0 0.0
  %v6021 = vand.u32 %v5030, 4294901760
  %6022 = vmatmul.mubr.f32.gmra.mxu0 %v6021
  %v6023 = vpop.f32.mrf.mxu0
  %v6024 = vadd.f32 %v5827, %v6023
  %v6025 = vpop.f32.mrf.mxu0
  %6026 = vmatprep.mubr.f32.mxu0 0.0
  %v6027 = vand.u32 %v5033, 4294901760
  %6028 = vmatmul.mubr.f32.gmra.mxu0 %v6027
  %v6029 = vpop.f32.mrf.mxu0
  %v6030 = vadd.f32 %v5835, %v6029
  %v6031 = vpop.f32.mrf.mxu0
  %6032 = vmatprep.mubr.f32.mxu0 0.0
  %v6033 = vand.u32 %v5036, 4294901760
  %6034 = vmatmul.mubr.f32.gmra.mxu0 %v6033
  %v6035 = vpop.f32.mrf.mxu0
  %v6036 = vadd.f32 %v5843, %v6035
  %v6037 = vpop.f32.mrf.mxu0
  %6038 = vmatprep.mubr.f32.mxu0 0.0
  %v6039 = vand.u32 %v5039, 4294901760
  %6040 = vmatmul.mubr.f32.gmra.mxu0 %v6039
  %v6041 = vpop.f32.mrf.mxu0
  %v6042 = vadd.f32 %v5851, %v6041
  %v6043 = vpop.f32.mrf.mxu0
  %6044 = vmatprep.mubr.f32.mxu0 0.0
  %v6045 = vand.u32 %v5042, 4294901760
  %6046 = vmatmul.mubr.f32.gmra.mxu0 %v6045
  %v6047 = vpop.f32.mrf.mxu0
  %v6048 = vadd.f32 %v5859, %v6047
  %v6049 = vpop.f32.mrf.mxu0
  %6050 = vmatprep.mubr.f32.mxu0 0.0
  %v6051 = vand.u32 %v5045, 4294901760
  %6052 = vmatmul.mubr.f32.gmra.mxu0 %v6051
  %v6053 = vpop.f32.mrf.mxu0
  %v6054 = vadd.f32 %v5867, %v6053
  %v6055 = vpop.f32.mrf.mxu0
  %6056 = vmatprep.mubr.f32.mxu0 0.0
  %v6057 = vand.u32 %v5048, 4294901760
  %6058 = vmatmul.mubr.f32.gmra.mxu0 %v6057
  %v6059 = vpop.f32.mrf.mxu0
  %v6060 = vadd.f32 %v5875, %v6059
  %v6061 = vpop.f32.mrf.mxu0
  %6062 = vdwg.mxu0
  %6063 = vmatprep.subr.mxu0 0.0
  %6064 = vmatpush1.msra.mxu0 0.0
  %6065 = vmatprep.subr.mxu0 0.0
  %6066 = vmatpush1.msra.mxu0 0.0
  %6067 = vmatprep.subr.mxu0 0.0
  %6068 = vmatpush1.msra.mxu0 0.0
  %6069 = vmatprep.subr.mxu0 0.0
  %6070 = vmatpush1.msra.mxu0 0.0
  %6071 = vmatprep.subr.mxu0 0.0
  %6072 = vmatpush1.msra.mxu0 0.0
  %6073 = vmatprep.subr.mxu0 0.0
  %6074 = vmatpush1.msra.mxu0 0.0
  %6075 = vmatprep.subr.mxu0 0.0
  %6076 = vmatpush1.msra.mxu0 0.0
  %6077 = vmatprep.subr.mxu0 0.0
  %6078 = vmatpush1.msra.mxu0 0.0
  %6079 = vmatprep.subr.mxu0 0.0
  %v6080 = vand.u32 %v4994, 4294901760
  %6081 = vmatpush1.msra.mxu0 %v6080
  %6082 = vmatprep.subr.mxu0 0.0
  %v6083 = vand.u32 %v4993, 4294901760
  %6084 = vmatpush1.msra.mxu0 %v6083
  %6085 = vmatprep.subr.mxu0 0.0
  %v6086 = vand.u32 %v4992, 4294901760
  %6087 = vmatpush1.msra.mxu0 %v6086
  %6088 = vmatprep.subr.mxu0 0.0
  %v6089 = vand.u32 %v4991, 4294901760
  %6090 = vmatpush1.msra.mxu0 %v6089
  %6091 = vmatprep.subr.mxu0 0.0
  %v6092 = vand.u32 %v4990, 4294901760
  %6093 = vmatpush1.msra.mxu0 %v6092
  %6094 = vmatprep.subr.mxu0 0.0
  %v6095 = vand.u32 %v4989, 4294901760
  %6096 = vmatpush1.msra.mxu0 %v6095
  %6097 = vmatprep.subr.mxu0 0.0
  %v6098 = vand.u32 %v4988, 4294901760
  %6099 = vmatpush1.msra.mxu0 %v6098
  %6100 = vmatprep.subr.mxu0 0.0
  %v6101 = vand.u32 %v4987, 4294901760
  %6102 = vmatpush1.msra.mxu0 %v6101
  %6103 = vmatprep.subr.mxu0 0.0
  %6104 = vmatpush2.msra.mxu0 0.0
  %6105 = vmatprep.subr.mxu0 0.0
  %6106 = vmatpush2.msra.mxu0 0.0
  %6107 = vmatprep.subr.mxu0 0.0
  %6108 = vmatpush2.msra.mxu0 0.0
  %6109 = vmatprep.subr.mxu0 0.0
  %6110 = vmatpush2.msra.mxu0 0.0
  %6111 = vmatprep.subr.mxu0 0.0
  %6112 = vmatpush2.msra.mxu0 0.0
  %6113 = vmatprep.subr.mxu0 0.0
  %6114 = vmatpush2.msra.mxu0 0.0
  %6115 = vmatprep.subr.mxu0 0.0
  %6116 = vmatpush2.msra.mxu0 0.0
  %6117 = vmatprep.subr.mxu0 0.0
  %6118 = vmatpush2.msra.mxu0 0.0
  %6119 = vmatprep.subr.mxu0 0.0
  %6120 = vmatpush2.msra.mxu0 0.0
  %6121 = vmatprep.subr.mxu0 0.0
  %6122 = vmatpush2.msra.mxu0 0.0
  %6123 = vmatprep.subr.mxu0 0.0
  %6124 = vmatpush2.msra.mxu0 0.0
  %6125 = vmatprep.subr.mxu0 0.0
  %6126 = vmatpush2.msra.mxu0 0.0
  %6127 = vmatprep.subr.mxu0 0.0
  %6128 = vmatpush2.msra.mxu0 0.0
  %6129 = vmatprep.subr.mxu0 0.0
  %6130 = vmatpush2.msra.mxu0 0.0
  %6131 = vmatprep.subr.mxu0 0.0
  %6132 = vmatpush2.msra.mxu0 0.0
  %6133 = vmatprep.subr.mxu0 0.0
  %6134 = vmatpush2.msra.mxu0 0.0
  %6135 = vmatprep.mubr.f32.mxu0 0.0
  %v6136 = vand.u32 %v5003, 4294901760
  %6137 = vmatmul.mubr.f32.gmra.mxu0 %v6136
  %v6138 = vpop.f32.mrf.mxu0
  %v6139 = vadd.f32 %v5970, %v6138
  %v6140 = vpop.f32.mrf.mxu0
  %6141 = vmatprep.mubr.f32.mxu0 0.0
  %v6142 = vand.u32 %v5006, 4294901760
  %6143 = vmatmul.mubr.f32.gmra.mxu0 %v6142
  %v6144 = vpop.f32.mrf.mxu0
  %v6145 = vadd.f32 %v5976, %v6144
  %v6146 = vpop.f32.mrf.mxu0
  %6147 = vmatprep.mubr.f32.mxu0 0.0
  %v6148 = vand.u32 %v5009, 4294901760
  %6149 = vmatmul.mubr.f32.gmra.mxu0 %v6148
  %v6150 = vpop.f32.mrf.mxu0
  %v6151 = vadd.f32 %v5982, %v6150
  %v6152 = vpop.f32.mrf.mxu0
  %6153 = vmatprep.mubr.f32.mxu0 0.0
  %v6154 = vand.u32 %v5012, 4294901760
  %6155 = vmatmul.mubr.f32.gmra.mxu0 %v6154
  %v6156 = vpop.f32.mrf.mxu0
  %v6157 = vadd.f32 %v5988, %v6156
  %v6158 = vpop.f32.mrf.mxu0
  %6159 = vmatprep.mubr.f32.mxu0 0.0
  %v6160 = vand.u32 %v5015, 4294901760
  %6161 = vmatmul.mubr.f32.gmra.mxu0 %v6160
  %v6162 = vpop.f32.mrf.mxu0
  %v6163 = vadd.f32 %v5994, %v6162
  %v6164 = vpop.f32.mrf.mxu0
  %6165 = vmatprep.mubr.f32.mxu0 0.0
  %v6166 = vand.u32 %v5018, 4294901760
  %6167 = vmatmul.mubr.f32.gmra.mxu0 %v6166
  %v6168 = vpop.f32.mrf.mxu0
  %v6169 = vadd.f32 %v6000, %v6168
  %v6170 = vpop.f32.mrf.mxu0
  %6171 = vmatprep.mubr.f32.mxu0 0.0
  %v6172 = vand.u32 %v5021, 4294901760
  %6173 = vmatmul.mubr.f32.gmra.mxu0 %v6172
  %v6174 = vpop.f32.mrf.mxu0
  %v6175 = vadd.f32 %v6006, %v6174
  %v6176 = vpop.f32.mrf.mxu0
  %6177 = vmatprep.mubr.f32.mxu0 0.0
  %v6178 = vand.u32 %v5024, 4294901760
  %6179 = vmatmul.mubr.f32.gmra.mxu0 %v6178
  %v6180 = vpop.f32.mrf.mxu0
  %v6181 = vadd.f32 %v6012, %v6180
  %v6182 = vpop.f32.mrf.mxu0
  %6183 = vmatprep.mubr.f32.mxu0 0.0
  %v6184 = vand.u32 %v5027, 4294901760
  %6185 = vmatmul.mubr.f32.gmra.mxu0 %v6184
  %v6186 = vpop.f32.mrf.mxu0
  %v6187 = vadd.f32 %v6018, %v6186
  %v6188 = vpop.f32.mrf.mxu0
  %6189 = vmatprep.mubr.f32.mxu0 0.0
  %v6190 = vand.u32 %v5030, 4294901760
  %6191 = vmatmul.mubr.f32.gmra.mxu0 %v6190
  %v6192 = vpop.f32.mrf.mxu0
  %v6193 = vadd.f32 %v6024, %v6192
  %v6194 = vpop.f32.mrf.mxu0
  %6195 = vmatprep.mubr.f32.mxu0 0.0
  %v6196 = vand.u32 %v5033, 4294901760
  %6197 = vmatmul.mubr.f32.gmra.mxu0 %v6196
  %v6198 = vpop.f32.mrf.mxu0
  %v6199 = vadd.f32 %v6030, %v6198
  %v6200 = vpop.f32.mrf.mxu0
  %6201 = vmatprep.mubr.f32.mxu0 0.0
  %v6202 = vand.u32 %v5036, 4294901760
  %6203 = vmatmul.mubr.f32.gmra.mxu0 %v6202
  %v6204 = vpop.f32.mrf.mxu0
  %v6205 = vadd.f32 %v6036, %v6204
  %v6206 = vpop.f32.mrf.mxu0
  %6207 = vmatprep.mubr.f32.mxu0 0.0
  %v6208 = vand.u32 %v5039, 4294901760
  %6209 = vmatmul.mubr.f32.gmra.mxu0 %v6208
  %v6210 = vpop.f32.mrf.mxu0
  %v6211 = vadd.f32 %v6042, %v6210
  %v6212 = vpop.f32.mrf.mxu0
  %6213 = vmatprep.mubr.f32.mxu0 0.0
  %v6214 = vand.u32 %v5042, 4294901760
  %6215 = vmatmul.mubr.f32.gmra.mxu0 %v6214
  %v6216 = vpop.f32.mrf.mxu0
  %v6217 = vadd.f32 %v6048, %v6216
  %v6218 = vpop.f32.mrf.mxu0
  %6219 = vmatprep.mubr.f32.mxu0 0.0
  %v6220 = vand.u32 %v5045, 4294901760
  %6221 = vmatmul.mubr.f32.gmra.mxu0 %v6220
  %v6222 = vpop.f32.mrf.mxu0
  %v6223 = vadd.f32 %v6054, %v6222
  %v6224 = vpop.f32.mrf.mxu0
  %6225 = vmatprep.mubr.f32.mxu0 0.0
  %v6226 = vand.u32 %v5048, 4294901760
  %6227 = vmatmul.mubr.f32.gmra.mxu0 %v6226
  %v6228 = vpop.f32.mrf.mxu0
  %v6229 = vadd.f32 %v6060, %v6228
  %v6230 = vpop.f32.mrf.mxu0
  %6231 = vdwg.mxu0
  %v6232 = vmax.f32 %v6139, 0.0
  %v6233 = vmax.f32 %v6145, 0.0
  %v6234 = vmax.f32 %v6151, 0.0
  %v6235 = vmax.f32 %v6157, 0.0
  %v6236 = vmax.f32 %v6163, 0.0
  %v6237 = vmax.f32 %v6169, 0.0
  %v6238 = vmax.f32 %v6175, 0.0
  %v6239 = vmax.f32 %v6181, 0.0
  %v6240 = vmax.f32 %v6187, 0.0
  %v6241 = vmax.f32 %v6193, 0.0
  %v6242 = vmax.f32 %v6199, 0.0
  %v6243 = vmax.f32 %v6205, 0.0
  %v6244 = vmax.f32 %v6211, 0.0
  %v6245 = vmax.f32 %v6217, 0.0
  %v6246 = vmax.f32 %v6223, 0.0
  %v6247 = vmax.f32 %v6229, 0.0
  %v6248 = vld [vmem:[%s11] sm:$0xff]
  %v6249 = vld [vmem:[%s11 + $0x8] sm:$0xff]
  %v6250 = vld [vmem:[%s11 + $0x10] sm:$0xff]
  %v6251 = vld [vmem:[%s11 + $0x18] sm:$0xff]
  %v6252 = vld [vmem:[%s11 + $0x20] sm:$0xff]
  %v6253 = vld [vmem:[%s11 + $0x28] sm:$0xff]
  %v6254 = vld [vmem:[%s11 + $0x30] sm:$0xff]
  %v6255 = vld [vmem:[%s11 + $0x38] sm:$0xff]
  %v6256 = vld [vmem:[#allocation2] sm:$0x1]
  %v6258 = vlaneseq
  %v6259 = vshrl.u32 %v6258, 7
  %v6260 = vsub.s32 0, %v6259
  %v6261 = vrot.slane %v6256, %v6260
  %v6264 = vsel %vm1326, %v6232, 0
  %v6267 = vsel %vm1326, %v6233, 0
  %v6270 = vsel %vm1326, %v6234, 0
  %v6273 = vsel %vm1326, %v6235, 0
  %v6276 = vsel %vm1326, %v6236, 0
  %v6279 = vsel %vm1326, %v6237, 0
  %v6282 = vsel %vm1326, %v6238, 0
  %v6285 = vsel %vm1326, %v6239, 0
  %v6288 = vsel %vm1326, %v6240, 0
  %v6291 = vsel %vm1326, %v6241, 0
  %v6294 = vsel %vm1326, %v6242, 0
  %v6297 = vsel %vm1326, %v6243, 0
  %v6300 = vsel %vm1326, %v6244, 0
  %v6303 = vsel %vm1326, %v6245, 0
  %v6306 = vsel %vm1326, %v6246, 0
  %v6309 = vsel %vm1326, %v6247, 0
  %6311 = vmatprep.subr.mxu0 0.0
  %6312 = vmatpush1.msra.mxu0 0.0
  %6313 = vmatprep.subr.mxu0 0.0
  %6314 = vmatpush1.msra.mxu0 0.0
  %6315 = vmatprep.subr.mxu0 0.0
  %6316 = vmatpush1.msra.mxu0 0.0
  %6317 = vmatprep.subr.mxu0 0.0
  %6318 = vmatpush1.msra.mxu0 0.0
  %6319 = vmatprep.subr.mxu0 0.0
  %6320 = vmatpush1.msra.mxu0 0.0
  %6321 = vmatprep.subr.mxu0 0.0
  %6322 = vmatpush1.msra.mxu0 0.0
  %6323 = vmatprep.subr.mxu0 0.0
  %6324 = vmatpush1.msra.mxu0 0.0
  %6325 = vmatprep.subr.mxu0 0.0
  %6326 = vmatpush1.msra.mxu0 0.0
  %6327 = vmatprep.subr.mxu0 0.0
  %v6328 = vand.u32 %v6255, 4294901760
  %6329 = vmatpush1.msra.mxu0 %v6328
  %6330 = vmatprep.subr.mxu0 0.0
  %v6331 = vand.u32 %v6254, 4294901760
  %6332 = vmatpush1.msra.mxu0 %v6331
  %6333 = vmatprep.subr.mxu0 0.0
  %v6334 = vand.u32 %v6253, 4294901760
  %6335 = vmatpush1.msra.mxu0 %v6334
  %6336 = vmatprep.subr.mxu0 0.0
  %v6337 = vand.u32 %v6252, 4294901760
  %6338 = vmatpush1.msra.mxu0 %v6337
  %6339 = vmatprep.subr.mxu0 0.0
  %v6340 = vand.u32 %v6251, 4294901760
  %6341 = vmatpush1.msra.mxu0 %v6340
  %6342 = vmatprep.subr.mxu0 0.0
  %v6343 = vand.u32 %v6250, 4294901760
  %6344 = vmatpush1.msra.mxu0 %v6343
  %6345 = vmatprep.subr.mxu0 0.0
  %v6346 = vand.u32 %v6249, 4294901760
  %6347 = vmatpush1.msra.mxu0 %v6346
  %6348 = vmatprep.subr.mxu0 0.0
  %v6349 = vand.u32 %v6248, 4294901760
  %6350 = vmatpush1.msra.mxu0 %v6349
  %6351 = vmatprep.subr.mxu0 0.0
  %6352 = vmatpush2.msra.mxu0 0.0
  %6353 = vmatprep.subr.mxu0 0.0
  %6354 = vmatpush2.msra.mxu0 0.0
  %6355 = vmatprep.subr.mxu0 0.0
  %6356 = vmatpush2.msra.mxu0 0.0
  %6357 = vmatprep.subr.mxu0 0.0
  %6358 = vmatpush2.msra.mxu0 0.0
  %6359 = vmatprep.subr.mxu0 0.0
  %6360 = vmatpush2.msra.mxu0 0.0
  %6361 = vmatprep.subr.mxu0 0.0
  %6362 = vmatpush2.msra.mxu0 0.0
  %6363 = vmatprep.subr.mxu0 0.0
  %6364 = vmatpush2.msra.mxu0 0.0
  %6365 = vmatprep.subr.mxu0 0.0
  %6366 = vmatpush2.msra.mxu0 0.0
  %6367 = vmatprep.subr.mxu0 0.0
  %6368 = vmatpush2.msra.mxu0 0.0
  %6369 = vmatprep.subr.mxu0 0.0
  %6370 = vmatpush2.msra.mxu0 0.0
  %6371 = vmatprep.subr.mxu0 0.0
  %6372 = vmatpush2.msra.mxu0 0.0
  %6373 = vmatprep.subr.mxu0 0.0
  %6374 = vmatpush2.msra.mxu0 0.0
  %6375 = vmatprep.subr.mxu0 0.0
  %6376 = vmatpush2.msra.mxu0 0.0
  %6377 = vmatprep.subr.mxu0 0.0
  %6378 = vmatpush2.msra.mxu0 0.0
  %6379 = vmatprep.subr.mxu0 0.0
  %6380 = vmatpush2.msra.mxu0 0.0
  %6381 = vmatprep.subr.mxu0 0.0
  %6382 = vmatpush2.msra.mxu0 0.0
  %6383 = vmatprep.mubr.f32.mxu0 0.0
  %v6384 = vand.u32 %v6264, 4294901760
  %v6385 = vsub.f32 %v6264, %v6384
  %v6386 = vand.u32 %v6385, 4294901760
  %v6387 = vsub.f32 %v6385, %v6386
  %v6388 = vand.u32 %v6387, 4294901760
  %6389 = vmatmul.mubr.f32.gmra.mxu0 %v6388
  %v6390 = vpop.f32.mrf.mxu0
  %v6391 = vadd.f32 %v6261, %v6390
  %v6392 = vpop.f32.mrf.mxu0
  %6393 = vmatprep.mubr.f32.mxu0 0.0
  %v6394 = vand.u32 %v6267, 4294901760
  %v6395 = vsub.f32 %v6267, %v6394
  %v6396 = vand.u32 %v6395, 4294901760
  %v6397 = vsub.f32 %v6395, %v6396
  %v6398 = vand.u32 %v6397, 4294901760
  %6399 = vmatmul.mubr.f32.gmra.mxu0 %v6398
  %v6400 = vpop.f32.mrf.mxu0
  %v6401 = vadd.f32 %v6261, %v6400
  %v6402 = vpop.f32.mrf.mxu0
  %6403 = vmatprep.mubr.f32.mxu0 0.0
  %v6404 = vand.u32 %v6270, 4294901760
  %v6405 = vsub.f32 %v6270, %v6404
  %v6406 = vand.u32 %v6405, 4294901760
  %v6407 = vsub.f32 %v6405, %v6406
  %v6408 = vand.u32 %v6407, 4294901760
  %6409 = vmatmul.mubr.f32.gmra.mxu0 %v6408
  %v6410 = vpop.f32.mrf.mxu0
  %v6411 = vadd.f32 %v6261, %v6410
  %v6412 = vpop.f32.mrf.mxu0
  %6413 = vmatprep.mubr.f32.mxu0 0.0
  %v6414 = vand.u32 %v6273, 4294901760
  %v6415 = vsub.f32 %v6273, %v6414
  %v6416 = vand.u32 %v6415, 4294901760
  %v6417 = vsub.f32 %v6415, %v6416
  %v6418 = vand.u32 %v6417, 4294901760
  %6419 = vmatmul.mubr.f32.gmra.mxu0 %v6418
  %v6420 = vpop.f32.mrf.mxu0
  %v6421 = vadd.f32 %v6261, %v6420
  %v6422 = vpop.f32.mrf.mxu0
  %6423 = vmatprep.mubr.f32.mxu0 0.0
  %v6424 = vand.u32 %v6276, 4294901760
  %v6425 = vsub.f32 %v6276, %v6424
  %v6426 = vand.u32 %v6425, 4294901760
  %v6427 = vsub.f32 %v6425, %v6426
  %v6428 = vand.u32 %v6427, 4294901760
  %6429 = vmatmul.mubr.f32.gmra.mxu0 %v6428
  %v6430 = vpop.f32.mrf.mxu0
  %v6431 = vadd.f32 %v6261, %v6430
  %v6432 = vpop.f32.mrf.mxu0
  %6433 = vmatprep.mubr.f32.mxu0 0.0
  %v6434 = vand.u32 %v6279, 4294901760
  %v6435 = vsub.f32 %v6279, %v6434
  %v6436 = vand.u32 %v6435, 4294901760
  %v6437 = vsub.f32 %v6435, %v6436
  %v6438 = vand.u32 %v6437, 4294901760
  %6439 = vmatmul.mubr.f32.gmra.mxu0 %v6438
  %v6440 = vpop.f32.mrf.mxu0
  %v6441 = vadd.f32 %v6261, %v6440
  %v6442 = vpop.f32.mrf.mxu0
  %6443 = vmatprep.mubr.f32.mxu0 0.0
  %v6444 = vand.u32 %v6282, 4294901760
  %v6445 = vsub.f32 %v6282, %v6444
  %v6446 = vand.u32 %v6445, 4294901760
  %v6447 = vsub.f32 %v6445, %v6446
  %v6448 = vand.u32 %v6447, 4294901760
  %6449 = vmatmul.mubr.f32.gmra.mxu0 %v6448
  %v6450 = vpop.f32.mrf.mxu0
  %v6451 = vadd.f32 %v6261, %v6450
  %v6452 = vpop.f32.mrf.mxu0
  %6453 = vmatprep.mubr.f32.mxu0 0.0
  %v6454 = vand.u32 %v6285, 4294901760
  %v6455 = vsub.f32 %v6285, %v6454
  %v6456 = vand.u32 %v6455, 4294901760
  %v6457 = vsub.f32 %v6455, %v6456
  %v6458 = vand.u32 %v6457, 4294901760
  %6459 = vmatmul.mubr.f32.gmra.mxu0 %v6458
  %v6460 = vpop.f32.mrf.mxu0
  %v6461 = vadd.f32 %v6261, %v6460
  %v6462 = vpop.f32.mrf.mxu0
  %6463 = vmatprep.mubr.f32.mxu0 0.0
  %v6464 = vand.u32 %v6288, 4294901760
  %v6465 = vsub.f32 %v6288, %v6464
  %v6466 = vand.u32 %v6465, 4294901760
  %v6467 = vsub.f32 %v6465, %v6466
  %v6468 = vand.u32 %v6467, 4294901760
  %6469 = vmatmul.mubr.f32.gmra.mxu0 %v6468
  %v6470 = vpop.f32.mrf.mxu0
  %v6471 = vadd.f32 %v6261, %v6470
  %v6472 = vpop.f32.mrf.mxu0
  %6473 = vmatprep.mubr.f32.mxu0 0.0
  %v6474 = vand.u32 %v6291, 4294901760
  %v6475 = vsub.f32 %v6291, %v6474
  %v6476 = vand.u32 %v6475, 4294901760
  %v6477 = vsub.f32 %v6475, %v6476
  %v6478 = vand.u32 %v6477, 4294901760
  %6479 = vmatmul.mubr.f32.gmra.mxu0 %v6478
  %v6480 = vpop.f32.mrf.mxu0
  %v6481 = vadd.f32 %v6261, %v6480
  %v6482 = vpop.f32.mrf.mxu0
  %6483 = vmatprep.mubr.f32.mxu0 0.0
  %v6484 = vand.u32 %v6294, 4294901760
  %v6485 = vsub.f32 %v6294, %v6484
  %v6486 = vand.u32 %v6485, 4294901760
  %v6487 = vsub.f32 %v6485, %v6486
  %v6488 = vand.u32 %v6487, 4294901760
  %6489 = vmatmul.mubr.f32.gmra.mxu0 %v6488
  %v6490 = vpop.f32.mrf.mxu0
  %v6491 = vadd.f32 %v6261, %v6490
  %v6492 = vpop.f32.mrf.mxu0
  %6493 = vmatprep.mubr.f32.mxu0 0.0
  %v6494 = vand.u32 %v6297, 4294901760
  %v6495 = vsub.f32 %v6297, %v6494
  %v6496 = vand.u32 %v6495, 4294901760
  %v6497 = vsub.f32 %v6495, %v6496
  %v6498 = vand.u32 %v6497, 4294901760
  %6499 = vmatmul.mubr.f32.gmra.mxu0 %v6498
  %v6500 = vpop.f32.mrf.mxu0
  %v6501 = vadd.f32 %v6261, %v6500
  %v6502 = vpop.f32.mrf.mxu0
  %6503 = vmatprep.mubr.f32.mxu0 0.0
  %v6504 = vand.u32 %v6300, 4294901760
  %v6505 = vsub.f32 %v6300, %v6504
  %v6506 = vand.u32 %v6505, 4294901760
  %v6507 = vsub.f32 %v6505, %v6506
  %v6508 = vand.u32 %v6507, 4294901760
  %6509 = vmatmul.mubr.f32.gmra.mxu0 %v6508
  %v6510 = vpop.f32.mrf.mxu0
  %v6511 = vadd.f32 %v6261, %v6510
  %v6512 = vpop.f32.mrf.mxu0
  %6513 = vmatprep.mubr.f32.mxu0 0.0
  %v6514 = vand.u32 %v6303, 4294901760
  %v6515 = vsub.f32 %v6303, %v6514
  %v6516 = vand.u32 %v6515, 4294901760
  %v6517 = vsub.f32 %v6515, %v6516
  %v6518 = vand.u32 %v6517, 4294901760
  %6519 = vmatmul.mubr.f32.gmra.mxu0 %v6518
  %v6520 = vpop.f32.mrf.mxu0
  %v6521 = vadd.f32 %v6261, %v6520
  %v6522 = vpop.f32.mrf.mxu0
  %6523 = vmatprep.mubr.f32.mxu0 0.0
  %v6524 = vand.u32 %v6306, 4294901760
  %v6525 = vsub.f32 %v6306, %v6524
  %v6526 = vand.u32 %v6525, 4294901760
  %v6527 = vsub.f32 %v6525, %v6526
  %v6528 = vand.u32 %v6527, 4294901760
  %6529 = vmatmul.mubr.f32.gmra.mxu0 %v6528
  %v6530 = vpop.f32.mrf.mxu0
  %v6531 = vadd.f32 %v6261, %v6530
  %v6532 = vpop.f32.mrf.mxu0
  %6533 = vmatprep.mubr.f32.mxu0 0.0
  %v6534 = vand.u32 %v6309, 4294901760
  %v6535 = vsub.f32 %v6309, %v6534
  %v6536 = vand.u32 %v6535, 4294901760
  %v6537 = vsub.f32 %v6535, %v6536
  %v6538 = vand.u32 %v6537, 4294901760
  %6539 = vmatmul.mubr.f32.gmra.mxu0 %v6538
  %v6540 = vpop.f32.mrf.mxu0
  %v6541 = vadd.f32 %v6261, %v6540
  %v6542 = vpop.f32.mrf.mxu0
  %6543 = vdwg.mxu0
  %6544 = vmatprep.subr.mxu0 0.0
  %6545 = vmatpush1.msra.mxu0 0.0
  %6546 = vmatprep.subr.mxu0 0.0
  %6547 = vmatpush1.msra.mxu0 0.0
  %6548 = vmatprep.subr.mxu0 0.0
  %6549 = vmatpush1.msra.mxu0 0.0
  %6550 = vmatprep.subr.mxu0 0.0
  %6551 = vmatpush1.msra.mxu0 0.0
  %6552 = vmatprep.subr.mxu0 0.0
  %6553 = vmatpush1.msra.mxu0 0.0
  %6554 = vmatprep.subr.mxu0 0.0
  %6555 = vmatpush1.msra.mxu0 0.0
  %6556 = vmatprep.subr.mxu0 0.0
  %6557 = vmatpush1.msra.mxu0 0.0
  %6558 = vmatprep.subr.mxu0 0.0
  %6559 = vmatpush1.msra.mxu0 0.0
  %6560 = vmatprep.subr.mxu0 0.0
  %v6561 = vand.u32 %v6255, 4294901760
  %v6562 = vsub.f32 %v6255, %v6561
  %v6563 = vand.u32 %v6562, 4294901760
  %v6564 = vsub.f32 %v6562, %v6563
  %v6565 = vand.u32 %v6564, 4294901760
  %6566 = vmatpush1.msra.mxu0 %v6565
  %6567 = vmatprep.subr.mxu0 0.0
  %v6568 = vand.u32 %v6254, 4294901760
  %v6569 = vsub.f32 %v6254, %v6568
  %v6570 = vand.u32 %v6569, 4294901760
  %v6571 = vsub.f32 %v6569, %v6570
  %v6572 = vand.u32 %v6571, 4294901760
  %6573 = vmatpush1.msra.mxu0 %v6572
  %6574 = vmatprep.subr.mxu0 0.0
  %v6575 = vand.u32 %v6253, 4294901760
  %v6576 = vsub.f32 %v6253, %v6575
  %v6577 = vand.u32 %v6576, 4294901760
  %v6578 = vsub.f32 %v6576, %v6577
  %v6579 = vand.u32 %v6578, 4294901760
  %6580 = vmatpush1.msra.mxu0 %v6579
  %6581 = vmatprep.subr.mxu0 0.0
  %v6582 = vand.u32 %v6252, 4294901760
  %v6583 = vsub.f32 %v6252, %v6582
  %v6584 = vand.u32 %v6583, 4294901760
  %v6585 = vsub.f32 %v6583, %v6584
  %v6586 = vand.u32 %v6585, 4294901760
  %6587 = vmatpush1.msra.mxu0 %v6586
  %6588 = vmatprep.subr.mxu0 0.0
  %v6589 = vand.u32 %v6251, 4294901760
  %v6590 = vsub.f32 %v6251, %v6589
  %v6591 = vand.u32 %v6590, 4294901760
  %v6592 = vsub.f32 %v6590, %v6591
  %v6593 = vand.u32 %v6592, 4294901760
  %6594 = vmatpush1.msra.mxu0 %v6593
  %6595 = vmatprep.subr.mxu0 0.0
  %v6596 = vand.u32 %v6250, 4294901760
  %v6597 = vsub.f32 %v6250, %v6596
  %v6598 = vand.u32 %v6597, 4294901760
  %v6599 = vsub.f32 %v6597, %v6598
  %v6600 = vand.u32 %v6599, 4294901760
  %6601 = vmatpush1.msra.mxu0 %v6600
  %6602 = vmatprep.subr.mxu0 0.0
  %v6603 = vand.u32 %v6249, 4294901760
  %v6604 = vsub.f32 %v6249, %v6603
  %v6605 = vand.u32 %v6604, 4294901760
  %v6606 = vsub.f32 %v6604, %v6605
  %v6607 = vand.u32 %v6606, 4294901760
  %6608 = vmatpush1.msra.mxu0 %v6607
  %6609 = vmatprep.subr.mxu0 0.0
  %v6610 = vand.u32 %v6248, 4294901760
  %v6611 = vsub.f32 %v6248, %v6610
  %v6612 = vand.u32 %v6611, 4294901760
  %v6613 = vsub.f32 %v6611, %v6612
  %v6614 = vand.u32 %v6613, 4294901760
  %6615 = vmatpush1.msra.mxu0 %v6614
  %6616 = vmatprep.subr.mxu0 0.0
  %6617 = vmatpush2.msra.mxu0 0.0
  %6618 = vmatprep.subr.mxu0 0.0
  %6619 = vmatpush2.msra.mxu0 0.0
  %6620 = vmatprep.subr.mxu0 0.0
  %6621 = vmatpush2.msra.mxu0 0.0
  %6622 = vmatprep.subr.mxu0 0.0
  %6623 = vmatpush2.msra.mxu0 0.0
  %6624 = vmatprep.subr.mxu0 0.0
  %6625 = vmatpush2.msra.mxu0 0.0
  %6626 = vmatprep.subr.mxu0 0.0
  %6627 = vmatpush2.msra.mxu0 0.0
  %6628 = vmatprep.subr.mxu0 0.0
  %6629 = vmatpush2.msra.mxu0 0.0
  %6630 = vmatprep.subr.mxu0 0.0
  %6631 = vmatpush2.msra.mxu0 0.0
  %6632 = vmatprep.subr.mxu0 0.0
  %6633 = vmatpush2.msra.mxu0 0.0
  %6634 = vmatprep.subr.mxu0 0.0
  %6635 = vmatpush2.msra.mxu0 0.0
  %6636 = vmatprep.subr.mxu0 0.0
  %6637 = vmatpush2.msra.mxu0 0.0
  %6638 = vmatprep.subr.mxu0 0.0
  %6639 = vmatpush2.msra.mxu0 0.0
  %6640 = vmatprep.subr.mxu0 0.0
  %6641 = vmatpush2.msra.mxu0 0.0
  %6642 = vmatprep.subr.mxu0 0.0
  %6643 = vmatpush2.msra.mxu0 0.0
  %6644 = vmatprep.subr.mxu0 0.0
  %6645 = vmatpush2.msra.mxu0 0.0
  %6646 = vmatprep.subr.mxu0 0.0
  %6647 = vmatpush2.msra.mxu0 0.0
  %6648 = vmatprep.mubr.f32.mxu0 0.0
  %v6649 = vand.u32 %v6264, 4294901760
  %6650 = vmatmul.mubr.f32.gmra.mxu0 %v6649
  %v6651 = vpop.f32.mrf.mxu0
  %v6652 = vadd.f32 %v6391, %v6651
  %v6653 = vpop.f32.mrf.mxu0
  %6654 = vmatprep.mubr.f32.mxu0 0.0
  %v6655 = vand.u32 %v6267, 4294901760
  %6656 = vmatmul.mubr.f32.gmra.mxu0 %v6655
  %v6657 = vpop.f32.mrf.mxu0
  %v6658 = vadd.f32 %v6401, %v6657
  %v6659 = vpop.f32.mrf.mxu0
  %6660 = vmatprep.mubr.f32.mxu0 0.0
  %v6661 = vand.u32 %v6270, 4294901760
  %6662 = vmatmul.mubr.f32.gmra.mxu0 %v6661
  %v6663 = vpop.f32.mrf.mxu0
  %v6664 = vadd.f32 %v6411, %v6663
  %v6665 = vpop.f32.mrf.mxu0
  %6666 = vmatprep.mubr.f32.mxu0 0.0
  %v6667 = vand.u32 %v6273, 4294901760
  %6668 = vmatmul.mubr.f32.gmra.mxu0 %v6667
  %v6669 = vpop.f32.mrf.mxu0
  %v6670 = vadd.f32 %v6421, %v6669
  %v6671 = vpop.f32.mrf.mxu0
  %6672 = vmatprep.mubr.f32.mxu0 0.0
  %v6673 = vand.u32 %v6276, 4294901760
  %6674 = vmatmul.mubr.f32.gmra.mxu0 %v6673
  %v6675 = vpop.f32.mrf.mxu0
  %v6676 = vadd.f32 %v6431, %v6675
  %v6677 = vpop.f32.mrf.mxu0
  %6678 = vmatprep.mubr.f32.mxu0 0.0
  %v6679 = vand.u32 %v6279, 4294901760
  %6680 = vmatmul.mubr.f32.gmra.mxu0 %v6679
  %v6681 = vpop.f32.mrf.mxu0
  %v6682 = vadd.f32 %v6441, %v6681
  %v6683 = vpop.f32.mrf.mxu0
  %6684 = vmatprep.mubr.f32.mxu0 0.0
  %v6685 = vand.u32 %v6282, 4294901760
  %6686 = vmatmul.mubr.f32.gmra.mxu0 %v6685
  %v6687 = vpop.f32.mrf.mxu0
  %v6688 = vadd.f32 %v6451, %v6687
  %v6689 = vpop.f32.mrf.mxu0
  %6690 = vmatprep.mubr.f32.mxu0 0.0
  %v6691 = vand.u32 %v6285, 4294901760
  %6692 = vmatmul.mubr.f32.gmra.mxu0 %v6691
  %v6693 = vpop.f32.mrf.mxu0
  %v6694 = vadd.f32 %v6461, %v6693
  %v6695 = vpop.f32.mrf.mxu0
  %6696 = vmatprep.mubr.f32.mxu0 0.0
  %v6697 = vand.u32 %v6288, 4294901760
  %6698 = vmatmul.mubr.f32.gmra.mxu0 %v6697
  %v6699 = vpop.f32.mrf.mxu0
  %v6700 = vadd.f32 %v6471, %v6699
  %v6701 = vpop.f32.mrf.mxu0
  %6702 = vmatprep.mubr.f32.mxu0 0.0
  %v6703 = vand.u32 %v6291, 4294901760
  %6704 = vmatmul.mubr.f32.gmra.mxu0 %v6703
  %v6705 = vpop.f32.mrf.mxu0
  %v6706 = vadd.f32 %v6481, %v6705
  %v6707 = vpop.f32.mrf.mxu0
  %6708 = vmatprep.mubr.f32.mxu0 0.0
  %v6709 = vand.u32 %v6294, 4294901760
  %6710 = vmatmul.mubr.f32.gmra.mxu0 %v6709
  %v6711 = vpop.f32.mrf.mxu0
  %v6712 = vadd.f32 %v6491, %v6711
  %v6713 = vpop.f32.mrf.mxu0
  %6714 = vmatprep.mubr.f32.mxu0 0.0
  %v6715 = vand.u32 %v6297, 4294901760
  %6716 = vmatmul.mubr.f32.gmra.mxu0 %v6715
  %v6717 = vpop.f32.mrf.mxu0
  %v6718 = vadd.f32 %v6501, %v6717
  %v6719 = vpop.f32.mrf.mxu0
  %6720 = vmatprep.mubr.f32.mxu0 0.0
  %v6721 = vand.u32 %v6300, 4294901760
  %6722 = vmatmul.mubr.f32.gmra.mxu0 %v6721
  %v6723 = vpop.f32.mrf.mxu0
  %v6724 = vadd.f32 %v6511, %v6723
  %v6725 = vpop.f32.mrf.mxu0
  %6726 = vmatprep.mubr.f32.mxu0 0.0
  %v6727 = vand.u32 %v6303, 4294901760
  %6728 = vmatmul.mubr.f32.gmra.mxu0 %v6727
  %v6729 = vpop.f32.mrf.mxu0
  %v6730 = vadd.f32 %v6521, %v6729
  %v6731 = vpop.f32.mrf.mxu0
  %6732 = vmatprep.mubr.f32.mxu0 0.0
  %v6733 = vand.u32 %v6306, 4294901760
  %6734 = vmatmul.mubr.f32.gmra.mxu0 %v6733
  %v6735 = vpop.f32.mrf.mxu0
  %v6736 = vadd.f32 %v6531, %v6735
  %v6737 = vpop.f32.mrf.mxu0
  %6738 = vmatprep.mubr.f32.mxu0 0.0
  %v6739 = vand.u32 %v6309, 4294901760
  %6740 = vmatmul.mubr.f32.gmra.mxu0 %v6739
  %v6741 = vpop.f32.mrf.mxu0
  %v6742 = vadd.f32 %v6541, %v6741
  %v6743 = vpop.f32.mrf.mxu0
  %6744 = vdwg.mxu0
  %6745 = vmatprep.subr.mxu0 0.0
  %6746 = vmatpush1.msra.mxu0 0.0
  %6747 = vmatprep.subr.mxu0 0.0
  %6748 = vmatpush1.msra.mxu0 0.0
  %6749 = vmatprep.subr.mxu0 0.0
  %6750 = vmatpush1.msra.mxu0 0.0
  %6751 = vmatprep.subr.mxu0 0.0
  %6752 = vmatpush1.msra.mxu0 0.0
  %6753 = vmatprep.subr.mxu0 0.0
  %6754 = vmatpush1.msra.mxu0 0.0
  %6755 = vmatprep.subr.mxu0 0.0
  %6756 = vmatpush1.msra.mxu0 0.0
  %6757 = vmatprep.subr.mxu0 0.0
  %6758 = vmatpush1.msra.mxu0 0.0
  %6759 = vmatprep.subr.mxu0 0.0
  %6760 = vmatpush1.msra.mxu0 0.0
  %6761 = vmatprep.subr.mxu0 0.0
  %v6762 = vand.u32 %v6255, 4294901760
  %v6763 = vsub.f32 %v6255, %v6762
  %6764 = vmatpush1.msra.mxu0 %v6763
  %6765 = vmatprep.subr.mxu0 0.0
  %v6766 = vand.u32 %v6254, 4294901760
  %v6767 = vsub.f32 %v6254, %v6766
  %6768 = vmatpush1.msra.mxu0 %v6767
  %6769 = vmatprep.subr.mxu0 0.0
  %v6770 = vand.u32 %v6253, 4294901760
  %v6771 = vsub.f32 %v6253, %v6770
  %6772 = vmatpush1.msra.mxu0 %v6771
  %6773 = vmatprep.subr.mxu0 0.0
  %v6774 = vand.u32 %v6252, 4294901760
  %v6775 = vsub.f32 %v6252, %v6774
  %6776 = vmatpush1.msra.mxu0 %v6775
  %6777 = vmatprep.subr.mxu0 0.0
  %v6778 = vand.u32 %v6251, 4294901760
  %v6779 = vsub.f32 %v6251, %v6778
  %6780 = vmatpush1.msra.mxu0 %v6779
  %6781 = vmatprep.subr.mxu0 0.0
  %v6782 = vand.u32 %v6250, 4294901760
  %v6783 = vsub.f32 %v6250, %v6782
  %6784 = vmatpush1.msra.mxu0 %v6783
  %6785 = vmatprep.subr.mxu0 0.0
  %v6786 = vand.u32 %v6249, 4294901760
  %v6787 = vsub.f32 %v6249, %v6786
  %6788 = vmatpush1.msra.mxu0 %v6787
  %6789 = vmatprep.subr.mxu0 0.0
  %v6790 = vand.u32 %v6248, 4294901760
  %v6791 = vsub.f32 %v6248, %v6790
  %6792 = vmatpush1.msra.mxu0 %v6791
  %6793 = vmatprep.subr.mxu0 0.0
  %6794 = vmatpush2.msra.mxu0 0.0
  %6795 = vmatprep.subr.mxu0 0.0
  %6796 = vmatpush2.msra.mxu0 0.0
  %6797 = vmatprep.subr.mxu0 0.0
  %6798 = vmatpush2.msra.mxu0 0.0
  %6799 = vmatprep.subr.mxu0 0.0
  %6800 = vmatpush2.msra.mxu0 0.0
  %6801 = vmatprep.subr.mxu0 0.0
  %6802 = vmatpush2.msra.mxu0 0.0
  %6803 = vmatprep.subr.mxu0 0.0
  %6804 = vmatpush2.msra.mxu0 0.0
  %6805 = vmatprep.subr.mxu0 0.0
  %6806 = vmatpush2.msra.mxu0 0.0
  %6807 = vmatprep.subr.mxu0 0.0
  %6808 = vmatpush2.msra.mxu0 0.0
  %6809 = vmatprep.subr.mxu0 0.0
  %6810 = vmatpush2.msra.mxu0 0.0
  %6811 = vmatprep.subr.mxu0 0.0
  %6812 = vmatpush2.msra.mxu0 0.0
  %6813 = vmatprep.subr.mxu0 0.0
  %6814 = vmatpush2.msra.mxu0 0.0
  %6815 = vmatprep.subr.mxu0 0.0
  %6816 = vmatpush2.msra.mxu0 0.0
  %6817 = vmatprep.subr.mxu0 0.0
  %6818 = vmatpush2.msra.mxu0 0.0
  %6819 = vmatprep.subr.mxu0 0.0
  %6820 = vmatpush2.msra.mxu0 0.0
  %6821 = vmatprep.subr.mxu0 0.0
  %6822 = vmatpush2.msra.mxu0 0.0
  %6823 = vmatprep.subr.mxu0 0.0
  %6824 = vmatpush2.msra.mxu0 0.0
  %6825 = vmatprep.mubr.f32.mxu0 0.0
  %v6826 = vand.u32 %v6264, 4294901760
  %v6827 = vsub.f32 %v6264, %v6826
  %6828 = vmatmul.mubr.f32.gmra.mxu0 %v6827
  %v6829 = vpop.f32.mrf.mxu0
  %v6830 = vadd.f32 %v6652, %v6829
  %v6831 = vpop.f32.mrf.mxu0
  %6832 = vmatprep.mubr.f32.mxu0 0.0
  %v6833 = vand.u32 %v6267, 4294901760
  %v6834 = vsub.f32 %v6267, %v6833
  %6835 = vmatmul.mubr.f32.gmra.mxu0 %v6834
  %v6836 = vpop.f32.mrf.mxu0
  %v6837 = vadd.f32 %v6658, %v6836
  %v6838 = vpop.f32.mrf.mxu0
  %6839 = vmatprep.mubr.f32.mxu0 0.0
  %v6840 = vand.u32 %v6270, 4294901760
  %v6841 = vsub.f32 %v6270, %v6840
  %6842 = vmatmul.mubr.f32.gmra.mxu0 %v6841
  %v6843 = vpop.f32.mrf.mxu0
  %v6844 = vadd.f32 %v6664, %v6843
  %v6845 = vpop.f32.mrf.mxu0
  %6846 = vmatprep.mubr.f32.mxu0 0.0
  %v6847 = vand.u32 %v6273, 4294901760
  %v6848 = vsub.f32 %v6273, %v6847
  %6849 = vmatmul.mubr.f32.gmra.mxu0 %v6848
  %v6850 = vpop.f32.mrf.mxu0
  %v6851 = vadd.f32 %v6670, %v6850
  %v6852 = vpop.f32.mrf.mxu0
  %6853 = vmatprep.mubr.f32.mxu0 0.0
  %v6854 = vand.u32 %v6276, 4294901760
  %v6855 = vsub.f32 %v6276, %v6854
  %6856 = vmatmul.mubr.f32.gmra.mxu0 %v6855
  %v6857 = vpop.f32.mrf.mxu0
  %v6858 = vadd.f32 %v6676, %v6857
  %v6859 = vpop.f32.mrf.mxu0
  %6860 = vmatprep.mubr.f32.mxu0 0.0
  %v6861 = vand.u32 %v6279, 4294901760
  %v6862 = vsub.f32 %v6279, %v6861
  %6863 = vmatmul.mubr.f32.gmra.mxu0 %v6862
  %v6864 = vpop.f32.mrf.mxu0
  %v6865 = vadd.f32 %v6682, %v6864
  %v6866 = vpop.f32.mrf.mxu0
  %6867 = vmatprep.mubr.f32.mxu0 0.0
  %v6868 = vand.u32 %v6282, 4294901760
  %v6869 = vsub.f32 %v6282, %v6868
  %6870 = vmatmul.mubr.f32.gmra.mxu0 %v6869
  %v6871 = vpop.f32.mrf.mxu0
  %v6872 = vadd.f32 %v6688, %v6871
  %v6873 = vpop.f32.mrf.mxu0
  %6874 = vmatprep.mubr.f32.mxu0 0.0
  %v6875 = vand.u32 %v6285, 4294901760
  %v6876 = vsub.f32 %v6285, %v6875
  %6877 = vmatmul.mubr.f32.gmra.mxu0 %v6876
  %v6878 = vpop.f32.mrf.mxu0
  %v6879 = vadd.f32 %v6694, %v6878
  %v6880 = vpop.f32.mrf.mxu0
  %6881 = vmatprep.mubr.f32.mxu0 0.0
  %v6882 = vand.u32 %v6288, 4294901760
  %v6883 = vsub.f32 %v6288, %v6882
  %6884 = vmatmul.mubr.f32.gmra.mxu0 %v6883
  %v6885 = vpop.f32.mrf.mxu0
  %v6886 = vadd.f32 %v6700, %v6885
  %v6887 = vpop.f32.mrf.mxu0
  %6888 = vmatprep.mubr.f32.mxu0 0.0
  %v6889 = vand.u32 %v6291, 4294901760
  %v6890 = vsub.f32 %v6291, %v6889
  %6891 = vmatmul.mubr.f32.gmra.mxu0 %v6890
  %v6892 = vpop.f32.mrf.mxu0
  %v6893 = vadd.f32 %v6706, %v6892
  %v6894 = vpop.f32.mrf.mxu0
  %6895 = vmatprep.mubr.f32.mxu0 0.0
  %v6896 = vand.u32 %v6294, 4294901760
  %v6897 = vsub.f32 %v6294, %v6896
  %6898 = vmatmul.mubr.f32.gmra.mxu0 %v6897
  %v6899 = vpop.f32.mrf.mxu0
  %v6900 = vadd.f32 %v6712, %v6899
  %v6901 = vpop.f32.mrf.mxu0
  %6902 = vmatprep.mubr.f32.mxu0 0.0
  %v6903 = vand.u32 %v6297, 4294901760
  %v6904 = vsub.f32 %v6297, %v6903
  %6905 = vmatmul.mubr.f32.gmra.mxu0 %v6904
  %v6906 = vpop.f32.mrf.mxu0
  %v6907 = vadd.f32 %v6718, %v6906
  %v6908 = vpop.f32.mrf.mxu0
  %6909 = vmatprep.mubr.f32.mxu0 0.0
  %v6910 = vand.u32 %v6300, 4294901760
  %v6911 = vsub.f32 %v6300, %v6910
  %6912 = vmatmul.mubr.f32.gmra.mxu0 %v6911
  %v6913 = vpop.f32.mrf.mxu0
  %v6914 = vadd.f32 %v6724, %v6913
  %v6915 = vpop.f32.mrf.mxu0
  %6916 = vmatprep.mubr.f32.mxu0 0.0
  %v6917 = vand.u32 %v6303, 4294901760
  %v6918 = vsub.f32 %v6303, %v6917
  %6919 = vmatmul.mubr.f32.gmra.mxu0 %v6918
  %v6920 = vpop.f32.mrf.mxu0
  %v6921 = vadd.f32 %v6730, %v6920
  %v6922 = vpop.f32.mrf.mxu0
  %6923 = vmatprep.mubr.f32.mxu0 0.0
  %v6924 = vand.u32 %v6306, 4294901760
  %v6925 = vsub.f32 %v6306, %v6924
  %6926 = vmatmul.mubr.f32.gmra.mxu0 %v6925
  %v6927 = vpop.f32.mrf.mxu0
  %v6928 = vadd.f32 %v6736, %v6927
  %v6929 = vpop.f32.mrf.mxu0
  %6930 = vmatprep.mubr.f32.mxu0 0.0
  %v6931 = vand.u32 %v6309, 4294901760
  %v6932 = vsub.f32 %v6309, %v6931
  %6933 = vmatmul.mubr.f32.gmra.mxu0 %v6932
  %v6934 = vpop.f32.mrf.mxu0
  %v6935 = vadd.f32 %v6742, %v6934
  %v6936 = vpop.f32.mrf.mxu0
  %6937 = vdwg.mxu0
  %6938 = vmatprep.subr.mxu0 0.0
  %6939 = vmatpush1.msra.mxu0 0.0
  %6940 = vmatprep.subr.mxu0 0.0
  %6941 = vmatpush1.msra.mxu0 0.0
  %6942 = vmatprep.subr.mxu0 0.0
  %6943 = vmatpush1.msra.mxu0 0.0
  %6944 = vmatprep.subr.mxu0 0.0
  %6945 = vmatpush1.msra.mxu0 0.0
  %6946 = vmatprep.subr.mxu0 0.0
  %6947 = vmatpush1.msra.mxu0 0.0
  %6948 = vmatprep.subr.mxu0 0.0
  %6949 = vmatpush1.msra.mxu0 0.0
  %6950 = vmatprep.subr.mxu0 0.0
  %6951 = vmatpush1.msra.mxu0 0.0
  %6952 = vmatprep.subr.mxu0 0.0
  %6953 = vmatpush1.msra.mxu0 0.0
  %6954 = vmatprep.subr.mxu0 0.0
  %v6955 = vand.u32 %v6255, 4294901760
  %6956 = vmatpush1.msra.mxu0 %v6955
  %6957 = vmatprep.subr.mxu0 0.0
  %v6958 = vand.u32 %v6254, 4294901760
  %6959 = vmatpush1.msra.mxu0 %v6958
  %6960 = vmatprep.subr.mxu0 0.0
  %v6961 = vand.u32 %v6253, 4294901760
  %6962 = vmatpush1.msra.mxu0 %v6961
  %6963 = vmatprep.subr.mxu0 0.0
  %v6964 = vand.u32 %v6252, 4294901760
  %6965 = vmatpush1.msra.mxu0 %v6964
  %6966 = vmatprep.subr.mxu0 0.0
  %v6967 = vand.u32 %v6251, 4294901760
  %6968 = vmatpush1.msra.mxu0 %v6967
  %6969 = vmatprep.subr.mxu0 0.0
  %v6970 = vand.u32 %v6250, 4294901760
  %6971 = vmatpush1.msra.mxu0 %v6970
  %6972 = vmatprep.subr.mxu0 0.0
  %v6973 = vand.u32 %v6249, 4294901760
  %6974 = vmatpush1.msra.mxu0 %v6973
  %6975 = vmatprep.subr.mxu0 0.0
  %v6976 = vand.u32 %v6248, 4294901760
  %6977 = vmatpush1.msra.mxu0 %v6976
  %6978 = vmatprep.subr.mxu0 0.0
  %6979 = vmatpush2.msra.mxu0 0.0
  %6980 = vmatprep.subr.mxu0 0.0
  %6981 = vmatpush2.msra.mxu0 0.0
  %6982 = vmatprep.subr.mxu0 0.0
  %6983 = vmatpush2.msra.mxu0 0.0
  %6984 = vmatprep.subr.mxu0 0.0
  %6985 = vmatpush2.msra.mxu0 0.0
  %6986 = vmatprep.subr.mxu0 0.0
  %6987 = vmatpush2.msra.mxu0 0.0
  %6988 = vmatprep.subr.mxu0 0.0
  %6989 = vmatpush2.msra.mxu0 0.0
  %6990 = vmatprep.subr.mxu0 0.0
  %6991 = vmatpush2.msra.mxu0 0.0
  %6992 = vmatprep.subr.mxu0 0.0
  %6993 = vmatpush2.msra.mxu0 0.0
  %6994 = vmatprep.subr.mxu0 0.0
  %6995 = vmatpush2.msra.mxu0 0.0
  %6996 = vmatprep.subr.mxu0 0.0
  %6997 = vmatpush2.msra.mxu0 0.0
  %6998 = vmatprep.subr.mxu0 0.0
  %6999 = vmatpush2.msra.mxu0 0.0
  %7000 = vmatprep.subr.mxu0 0.0
  %7001 = vmatpush2.msra.mxu0 0.0
  %7002 = vmatprep.subr.mxu0 0.0
  %7003 = vmatpush2.msra.mxu0 0.0
  %7004 = vmatprep.subr.mxu0 0.0
  %7005 = vmatpush2.msra.mxu0 0.0
  %7006 = vmatprep.subr.mxu0 0.0
  %7007 = vmatpush2.msra.mxu0 0.0
  %7008 = vmatprep.subr.mxu0 0.0
  %7009 = vmatpush2.msra.mxu0 0.0
  %7010 = vmatprep.mubr.f32.mxu0 0.0
  %v7011 = vand.u32 %v6264, 4294901760
  %v7012 = vsub.f32 %v6264, %v7011
  %v7013 = vand.u32 %v7012, 4294901760
  %7014 = vmatmul.mubr.f32.gmra.mxu0 %v7013
  %v7015 = vpop.f32.mrf.mxu0
  %v7016 = vadd.f32 %v6830, %v7015
  %v7017 = vpop.f32.mrf.mxu0
  %7018 = vmatprep.mubr.f32.mxu0 0.0
  %v7019 = vand.u32 %v6267, 4294901760
  %v7020 = vsub.f32 %v6267, %v7019
  %v7021 = vand.u32 %v7020, 4294901760
  %7022 = vmatmul.mubr.f32.gmra.mxu0 %v7021
  %v7023 = vpop.f32.mrf.mxu0
  %v7024 = vadd.f32 %v6837, %v7023
  %v7025 = vpop.f32.mrf.mxu0
  %7026 = vmatprep.mubr.f32.mxu0 0.0
  %v7027 = vand.u32 %v6270, 4294901760
  %v7028 = vsub.f32 %v6270, %v7027
  %v7029 = vand.u32 %v7028, 4294901760
  %7030 = vmatmul.mubr.f32.gmra.mxu0 %v7029
  %v7031 = vpop.f32.mrf.mxu0
  %v7032 = vadd.f32 %v6844, %v7031
  %v7033 = vpop.f32.mrf.mxu0
  %7034 = vmatprep.mubr.f32.mxu0 0.0
  %v7035 = vand.u32 %v6273, 4294901760
  %v7036 = vsub.f32 %v6273, %v7035
  %v7037 = vand.u32 %v7036, 4294901760
  %7038 = vmatmul.mubr.f32.gmra.mxu0 %v7037
  %v7039 = vpop.f32.mrf.mxu0
  %v7040 = vadd.f32 %v6851, %v7039
  %v7041 = vpop.f32.mrf.mxu0
  %7042 = vmatprep.mubr.f32.mxu0 0.0
  %v7043 = vand.u32 %v6276, 4294901760
  %v7044 = vsub.f32 %v6276, %v7043
  %v7045 = vand.u32 %v7044, 4294901760
  %7046 = vmatmul.mubr.f32.gmra.mxu0 %v7045
  %v7047 = vpop.f32.mrf.mxu0
  %v7048 = vadd.f32 %v6858, %v7047
  %v7049 = vpop.f32.mrf.mxu0
  %7050 = vmatprep.mubr.f32.mxu0 0.0
  %v7051 = vand.u32 %v6279, 4294901760
  %v7052 = vsub.f32 %v6279, %v7051
  %v7053 = vand.u32 %v7052, 4294901760
  %7054 = vmatmul.mubr.f32.gmra.mxu0 %v7053
  %v7055 = vpop.f32.mrf.mxu0
  %v7056 = vadd.f32 %v6865, %v7055
  %v7057 = vpop.f32.mrf.mxu0
  %7058 = vmatprep.mubr.f32.mxu0 0.0
  %v7059 = vand.u32 %v6282, 4294901760
  %v7060 = vsub.f32 %v6282, %v7059
  %v7061 = vand.u32 %v7060, 4294901760
  %7062 = vmatmul.mubr.f32.gmra.mxu0 %v7061
  %v7063 = vpop.f32.mrf.mxu0
  %v7064 = vadd.f32 %v6872, %v7063
  %v7065 = vpop.f32.mrf.mxu0
  %7066 = vmatprep.mubr.f32.mxu0 0.0
  %v7067 = vand.u32 %v6285, 4294901760
  %v7068 = vsub.f32 %v6285, %v7067
  %v7069 = vand.u32 %v7068, 4294901760
  %7070 = vmatmul.mubr.f32.gmra.mxu0 %v7069
  %v7071 = vpop.f32.mrf.mxu0
  %v7072 = vadd.f32 %v6879, %v7071
  %v7073 = vpop.f32.mrf.mxu0
  %7074 = vmatprep.mubr.f32.mxu0 0.0
  %v7075 = vand.u32 %v6288, 4294901760
  %v7076 = vsub.f32 %v6288, %v7075
  %v7077 = vand.u32 %v7076, 4294901760
  %7078 = vmatmul.mubr.f32.gmra.mxu0 %v7077
  %v7079 = vpop.f32.mrf.mxu0
  %v7080 = vadd.f32 %v6886, %v7079
  %v7081 = vpop.f32.mrf.mxu0
  %7082 = vmatprep.mubr.f32.mxu0 0.0
  %v7083 = vand.u32 %v6291, 4294901760
  %v7084 = vsub.f32 %v6291, %v7083
  %v7085 = vand.u32 %v7084, 4294901760
  %7086 = vmatmul.mubr.f32.gmra.mxu0 %v7085
  %v7087 = vpop.f32.mrf.mxu0
  %v7088 = vadd.f32 %v6893, %v7087
  %v7089 = vpop.f32.mrf.mxu0
  %7090 = vmatprep.mubr.f32.mxu0 0.0
  %v7091 = vand.u32 %v6294, 4294901760
  %v7092 = vsub.f32 %v6294, %v7091
  %v7093 = vand.u32 %v7092, 4294901760
  %7094 = vmatmul.mubr.f32.gmra.mxu0 %v7093
  %v7095 = vpop.f32.mrf.mxu0
  %v7096 = vadd.f32 %v6900, %v7095
  %v7097 = vpop.f32.mrf.mxu0
  %7098 = vmatprep.mubr.f32.mxu0 0.0
  %v7099 = vand.u32 %v6297, 4294901760
  %v7100 = vsub.f32 %v6297, %v7099
  %v7101 = vand.u32 %v7100, 4294901760
  %7102 = vmatmul.mubr.f32.gmra.mxu0 %v7101
  %v7103 = vpop.f32.mrf.mxu0
  %v7104 = vadd.f32 %v6907, %v7103
  %v7105 = vpop.f32.mrf.mxu0
  %7106 = vmatprep.mubr.f32.mxu0 0.0
  %v7107 = vand.u32 %v6300, 4294901760
  %v7108 = vsub.f32 %v6300, %v7107
  %v7109 = vand.u32 %v7108, 4294901760
  %7110 = vmatmul.mubr.f32.gmra.mxu0 %v7109
  %v7111 = vpop.f32.mrf.mxu0
  %v7112 = vadd.f32 %v6914, %v7111
  %v7113 = vpop.f32.mrf.mxu0
  %7114 = vmatprep.mubr.f32.mxu0 0.0
  %v7115 = vand.u32 %v6303, 4294901760
  %v7116 = vsub.f32 %v6303, %v7115
  %v7117 = vand.u32 %v7116, 4294901760
  %7118 = vmatmul.mubr.f32.gmra.mxu0 %v7117
  %v7119 = vpop.f32.mrf.mxu0
  %v7120 = vadd.f32 %v6921, %v7119
  %v7121 = vpop.f32.mrf.mxu0
  %7122 = vmatprep.mubr.f32.mxu0 0.0
  %v7123 = vand.u32 %v6306, 4294901760
  %v7124 = vsub.f32 %v6306, %v7123
  %v7125 = vand.u32 %v7124, 4294901760
  %7126 = vmatmul.mubr.f32.gmra.mxu0 %v7125
  %v7127 = vpop.f32.mrf.mxu0
  %v7128 = vadd.f32 %v6928, %v7127
  %v7129 = vpop.f32.mrf.mxu0
  %7130 = vmatprep.mubr.f32.mxu0 0.0
  %v7131 = vand.u32 %v6309, 4294901760
  %v7132 = vsub.f32 %v6309, %v7131
  %v7133 = vand.u32 %v7132, 4294901760
  %7134 = vmatmul.mubr.f32.gmra.mxu0 %v7133
  %v7135 = vpop.f32.mrf.mxu0
  %v7136 = vadd.f32 %v6935, %v7135
  %v7137 = vpop.f32.mrf.mxu0
  %7138 = vdwg.mxu0
  %7139 = vmatprep.subr.mxu0 0.0
  %7140 = vmatpush1.msra.mxu0 0.0
  %7141 = vmatprep.subr.mxu0 0.0
  %7142 = vmatpush1.msra.mxu0 0.0
  %7143 = vmatprep.subr.mxu0 0.0
  %7144 = vmatpush1.msra.mxu0 0.0
  %7145 = vmatprep.subr.mxu0 0.0
  %7146 = vmatpush1.msra.mxu0 0.0
  %7147 = vmatprep.subr.mxu0 0.0
  %7148 = vmatpush1.msra.mxu0 0.0
  %7149 = vmatprep.subr.mxu0 0.0
  %7150 = vmatpush1.msra.mxu0 0.0
  %7151 = vmatprep.subr.mxu0 0.0
  %7152 = vmatpush1.msra.mxu0 0.0
  %7153 = vmatprep.subr.mxu0 0.0
  %7154 = vmatpush1.msra.mxu0 0.0
  %7155 = vmatprep.subr.mxu0 0.0
  %v7156 = vand.u32 %v6255, 4294901760
  %v7157 = vsub.f32 %v6255, %v7156
  %v7158 = vand.u32 %v7157, 4294901760
  %7159 = vmatpush1.msra.mxu0 %v7158
  %7160 = vmatprep.subr.mxu0 0.0
  %v7161 = vand.u32 %v6254, 4294901760
  %v7162 = vsub.f32 %v6254, %v7161
  %v7163 = vand.u32 %v7162, 4294901760
  %7164 = vmatpush1.msra.mxu0 %v7163
  %7165 = vmatprep.subr.mxu0 0.0
  %v7166 = vand.u32 %v6253, 4294901760
  %v7167 = vsub.f32 %v6253, %v7166
  %v7168 = vand.u32 %v7167, 4294901760
  %7169 = vmatpush1.msra.mxu0 %v7168
  %7170 = vmatprep.subr.mxu0 0.0
  %v7171 = vand.u32 %v6252, 4294901760
  %v7172 = vsub.f32 %v6252, %v7171
  %v7173 = vand.u32 %v7172, 4294901760
  %7174 = vmatpush1.msra.mxu0 %v7173
  %7175 = vmatprep.subr.mxu0 0.0
  %v7176 = vand.u32 %v6251, 4294901760
  %v7177 = vsub.f32 %v6251, %v7176
  %v7178 = vand.u32 %v7177, 4294901760
  %7179 = vmatpush1.msra.mxu0 %v7178
  %7180 = vmatprep.subr.mxu0 0.0
  %v7181 = vand.u32 %v6250, 4294901760
  %v7182 = vsub.f32 %v6250, %v7181
  %v7183 = vand.u32 %v7182, 4294901760
  %7184 = vmatpush1.msra.mxu0 %v7183
  %7185 = vmatprep.subr.mxu0 0.0
  %v7186 = vand.u32 %v6249, 4294901760
  %v7187 = vsub.f32 %v6249, %v7186
  %v7188 = vand.u32 %v7187, 4294901760
  %7189 = vmatpush1.msra.mxu0 %v7188
  %7190 = vmatprep.subr.mxu0 0.0
  %v7191 = vand.u32 %v6248, 4294901760
  %v7192 = vsub.f32 %v6248, %v7191
  %v7193 = vand.u32 %v7192, 4294901760
  %7194 = vmatpush1.msra.mxu0 %v7193
  %7195 = vmatprep.subr.mxu0 0.0
  %7196 = vmatpush2.msra.mxu0 0.0
  %7197 = vmatprep.subr.mxu0 0.0
  %7198 = vmatpush2.msra.mxu0 0.0
  %7199 = vmatprep.subr.mxu0 0.0
  %7200 = vmatpush2.msra.mxu0 0.0
  %7201 = vmatprep.subr.mxu0 0.0
  %7202 = vmatpush2.msra.mxu0 0.0
  %7203 = vmatprep.subr.mxu0 0.0
  %7204 = vmatpush2.msra.mxu0 0.0
  %7205 = vmatprep.subr.mxu0 0.0
  %7206 = vmatpush2.msra.mxu0 0.0
  %7207 = vmatprep.subr.mxu0 0.0
  %7208 = vmatpush2.msra.mxu0 0.0
  %7209 = vmatprep.subr.mxu0 0.0
  %7210 = vmatpush2.msra.mxu0 0.0
  %7211 = vmatprep.subr.mxu0 0.0
  %7212 = vmatpush2.msra.mxu0 0.0
  %7213 = vmatprep.subr.mxu0 0.0
  %7214 = vmatpush2.msra.mxu0 0.0
  %7215 = vmatprep.subr.mxu0 0.0
  %7216 = vmatpush2.msra.mxu0 0.0
  %7217 = vmatprep.subr.mxu0 0.0
  %7218 = vmatpush2.msra.mxu0 0.0
  %7219 = vmatprep.subr.mxu0 0.0
  %7220 = vmatpush2.msra.mxu0 0.0
  %7221 = vmatprep.subr.mxu0 0.0
  %7222 = vmatpush2.msra.mxu0 0.0
  %7223 = vmatprep.subr.mxu0 0.0
  %7224 = vmatpush2.msra.mxu0 0.0
  %7225 = vmatprep.subr.mxu0 0.0
  %7226 = vmatpush2.msra.mxu0 0.0
  %7227 = vmatprep.mubr.f32.mxu0 0.0
  %v7228 = vand.u32 %v6264, 4294901760
  %7229 = vmatmul.mubr.f32.gmra.mxu0 %v7228
  %v7230 = vpop.f32.mrf.mxu0
  %v7231 = vadd.f32 %v7016, %v7230
  %v7232 = vpop.f32.mrf.mxu0
  %7233 = vmatprep.mubr.f32.mxu0 0.0
  %v7234 = vand.u32 %v6267, 4294901760
  %7235 = vmatmul.mubr.f32.gmra.mxu0 %v7234
  %v7236 = vpop.f32.mrf.mxu0
  %v7237 = vadd.f32 %v7024, %v7236
  %v7238 = vpop.f32.mrf.mxu0
  %7239 = vmatprep.mubr.f32.mxu0 0.0
  %v7240 = vand.u32 %v6270, 4294901760
  %7241 = vmatmul.mubr.f32.gmra.mxu0 %v7240
  %v7242 = vpop.f32.mrf.mxu0
  %v7243 = vadd.f32 %v7032, %v7242
  %v7244 = vpop.f32.mrf.mxu0
  %7245 = vmatprep.mubr.f32.mxu0 0.0
  %v7246 = vand.u32 %v6273, 4294901760
  %7247 = vmatmul.mubr.f32.gmra.mxu0 %v7246
  %v7248 = vpop.f32.mrf.mxu0
  %v7249 = vadd.f32 %v7040, %v7248
  %v7250 = vpop.f32.mrf.mxu0
  %7251 = vmatprep.mubr.f32.mxu0 0.0
  %v7252 = vand.u32 %v6276, 4294901760
  %7253 = vmatmul.mubr.f32.gmra.mxu0 %v7252
  %v7254 = vpop.f32.mrf.mxu0
  %v7255 = vadd.f32 %v7048, %v7254
  %v7256 = vpop.f32.mrf.mxu0
  %7257 = vmatprep.mubr.f32.mxu0 0.0
  %v7258 = vand.u32 %v6279, 4294901760
  %7259 = vmatmul.mubr.f32.gmra.mxu0 %v7258
  %v7260 = vpop.f32.mrf.mxu0
  %v7261 = vadd.f32 %v7056, %v7260
  %v7262 = vpop.f32.mrf.mxu0
  %7263 = vmatprep.mubr.f32.mxu0 0.0
  %v7264 = vand.u32 %v6282, 4294901760
  %7265 = vmatmul.mubr.f32.gmra.mxu0 %v7264
  %v7266 = vpop.f32.mrf.mxu0
  %v7267 = vadd.f32 %v7064, %v7266
  %v7268 = vpop.f32.mrf.mxu0
  %7269 = vmatprep.mubr.f32.mxu0 0.0
  %v7270 = vand.u32 %v6285, 4294901760
  %7271 = vmatmul.mubr.f32.gmra.mxu0 %v7270
  %v7272 = vpop.f32.mrf.mxu0
  %v7273 = vadd.f32 %v7072, %v7272
  %v7274 = vpop.f32.mrf.mxu0
  %7275 = vmatprep.mubr.f32.mxu0 0.0
  %v7276 = vand.u32 %v6288, 4294901760
  %7277 = vmatmul.mubr.f32.gmra.mxu0 %v7276
  %v7278 = vpop.f32.mrf.mxu0
  %v7279 = vadd.f32 %v7080, %v7278
  %v7280 = vpop.f32.mrf.mxu0
  %7281 = vmatprep.mubr.f32.mxu0 0.0
  %v7282 = vand.u32 %v6291, 4294901760
  %7283 = vmatmul.mubr.f32.gmra.mxu0 %v7282
  %v7284 = vpop.f32.mrf.mxu0
  %v7285 = vadd.f32 %v7088, %v7284
  %v7286 = vpop.f32.mrf.mxu0
  %7287 = vmatprep.mubr.f32.mxu0 0.0
  %v7288 = vand.u32 %v6294, 4294901760
  %7289 = vmatmul.mubr.f32.gmra.mxu0 %v7288
  %v7290 = vpop.f32.mrf.mxu0
  %v7291 = vadd.f32 %v7096, %v7290
  %v7292 = vpop.f32.mrf.mxu0
  %7293 = vmatprep.mubr.f32.mxu0 0.0
  %v7294 = vand.u32 %v6297, 4294901760
  %7295 = vmatmul.mubr.f32.gmra.mxu0 %v7294
  %v7296 = vpop.f32.mrf.mxu0
  %v7297 = vadd.f32 %v7104, %v7296
  %v7298 = vpop.f32.mrf.mxu0
  %7299 = vmatprep.mubr.f32.mxu0 0.0
  %v7300 = vand.u32 %v6300, 4294901760
  %7301 = vmatmul.mubr.f32.gmra.mxu0 %v7300
  %v7302 = vpop.f32.mrf.mxu0
  %v7303 = vadd.f32 %v7112, %v7302
  %v7304 = vpop.f32.mrf.mxu0
  %7305 = vmatprep.mubr.f32.mxu0 0.0
  %v7306 = vand.u32 %v6303, 4294901760
  %7307 = vmatmul.mubr.f32.gmra.mxu0 %v7306
  %v7308 = vpop.f32.mrf.mxu0
  %v7309 = vadd.f32 %v7120, %v7308
  %v7310 = vpop.f32.mrf.mxu0
  %7311 = vmatprep.mubr.f32.mxu0 0.0
  %v7312 = vand.u32 %v6306, 4294901760
  %7313 = vmatmul.mubr.f32.gmra.mxu0 %v7312
  %v7314 = vpop.f32.mrf.mxu0
  %v7315 = vadd.f32 %v7128, %v7314
  %v7316 = vpop.f32.mrf.mxu0
  %7317 = vmatprep.mubr.f32.mxu0 0.0
  %v7318 = vand.u32 %v6309, 4294901760
  %7319 = vmatmul.mubr.f32.gmra.mxu0 %v7318
  %v7320 = vpop.f32.mrf.mxu0
  %v7321 = vadd.f32 %v7136, %v7320
  %v7322 = vpop.f32.mrf.mxu0
  %7323 = vdwg.mxu0
  %7324 = vmatprep.subr.mxu0 0.0
  %7325 = vmatpush1.msra.mxu0 0.0
  %7326 = vmatprep.subr.mxu0 0.0
  %7327 = vmatpush1.msra.mxu0 0.0
  %7328 = vmatprep.subr.mxu0 0.0
  %7329 = vmatpush1.msra.mxu0 0.0
  %7330 = vmatprep.subr.mxu0 0.0
  %7331 = vmatpush1.msra.mxu0 0.0
  %7332 = vmatprep.subr.mxu0 0.0
  %7333 = vmatpush1.msra.mxu0 0.0
  %7334 = vmatprep.subr.mxu0 0.0
  %7335 = vmatpush1.msra.mxu0 0.0
  %7336 = vmatprep.subr.mxu0 0.0
  %7337 = vmatpush1.msra.mxu0 0.0
  %7338 = vmatprep.subr.mxu0 0.0
  %7339 = vmatpush1.msra.mxu0 0.0
  %7340 = vmatprep.subr.mxu0 0.0
  %v7341 = vand.u32 %v6255, 4294901760
  %7342 = vmatpush1.msra.mxu0 %v7341
  %7343 = vmatprep.subr.mxu0 0.0
  %v7344 = vand.u32 %v6254, 4294901760
  %7345 = vmatpush1.msra.mxu0 %v7344
  %7346 = vmatprep.subr.mxu0 0.0
  %v7347 = vand.u32 %v6253, 4294901760
  %7348 = vmatpush1.msra.mxu0 %v7347
  %7349 = vmatprep.subr.mxu0 0.0
  %v7350 = vand.u32 %v6252, 4294901760
  %7351 = vmatpush1.msra.mxu0 %v7350
  %7352 = vmatprep.subr.mxu0 0.0
  %v7353 = vand.u32 %v6251, 4294901760
  %7354 = vmatpush1.msra.mxu0 %v7353
  %7355 = vmatprep.subr.mxu0 0.0
  %v7356 = vand.u32 %v6250, 4294901760
  %7357 = vmatpush1.msra.mxu0 %v7356
  %7358 = vmatprep.subr.mxu0 0.0
  %v7359 = vand.u32 %v6249, 4294901760
  %7360 = vmatpush1.msra.mxu0 %v7359
  %7361 = vmatprep.subr.mxu0 0.0
  %v7362 = vand.u32 %v6248, 4294901760
  %7363 = vmatpush1.msra.mxu0 %v7362
  %7364 = vmatprep.subr.mxu0 0.0
  %7365 = vmatpush2.msra.mxu0 0.0
  %7366 = vmatprep.subr.mxu0 0.0
  %7367 = vmatpush2.msra.mxu0 0.0
  %7368 = vmatprep.subr.mxu0 0.0
  %7369 = vmatpush2.msra.mxu0 0.0
  %7370 = vmatprep.subr.mxu0 0.0
  %7371 = vmatpush2.msra.mxu0 0.0
  %7372 = vmatprep.subr.mxu0 0.0
  %7373 = vmatpush2.msra.mxu0 0.0
  %7374 = vmatprep.subr.mxu0 0.0
  %7375 = vmatpush2.msra.mxu0 0.0
  %7376 = vmatprep.subr.mxu0 0.0
  %7377 = vmatpush2.msra.mxu0 0.0
  %7378 = vmatprep.subr.mxu0 0.0
  %7379 = vmatpush2.msra.mxu0 0.0
  %7380 = vmatprep.subr.mxu0 0.0
  %7381 = vmatpush2.msra.mxu0 0.0
  %7382 = vmatprep.subr.mxu0 0.0
  %7383 = vmatpush2.msra.mxu0 0.0
  %7384 = vmatprep.subr.mxu0 0.0
  %7385 = vmatpush2.msra.mxu0 0.0
  %7386 = vmatprep.subr.mxu0 0.0
  %7387 = vmatpush2.msra.mxu0 0.0
  %7388 = vmatprep.subr.mxu0 0.0
  %7389 = vmatpush2.msra.mxu0 0.0
  %7390 = vmatprep.subr.mxu0 0.0
  %7391 = vmatpush2.msra.mxu0 0.0
  %7392 = vmatprep.subr.mxu0 0.0
  %7393 = vmatpush2.msra.mxu0 0.0
  %7394 = vmatprep.subr.mxu0 0.0
  %7395 = vmatpush2.msra.mxu0 0.0
  %7396 = vmatprep.mubr.f32.mxu0 0.0
  %v7397 = vand.u32 %v6264, 4294901760
  %7398 = vmatmul.mubr.f32.gmra.mxu0 %v7397
  %v7399 = vpop.f32.mrf.mxu0
  %v7400 = vadd.f32 %v7231, %v7399
  %v7401 = vpop.f32.mrf.mxu0
  %7402 = vmatprep.mubr.f32.mxu0 0.0
  %v7403 = vand.u32 %v6267, 4294901760
  %7404 = vmatmul.mubr.f32.gmra.mxu0 %v7403
  %v7405 = vpop.f32.mrf.mxu0
  %v7406 = vadd.f32 %v7237, %v7405
  %v7407 = vpop.f32.mrf.mxu0
  %7408 = vmatprep.mubr.f32.mxu0 0.0
  %v7409 = vand.u32 %v6270, 4294901760
  %7410 = vmatmul.mubr.f32.gmra.mxu0 %v7409
  %v7411 = vpop.f32.mrf.mxu0
  %v7412 = vadd.f32 %v7243, %v7411
  %v7413 = vpop.f32.mrf.mxu0
  %7414 = vmatprep.mubr.f32.mxu0 0.0
  %v7415 = vand.u32 %v6273, 4294901760
  %7416 = vmatmul.mubr.f32.gmra.mxu0 %v7415
  %v7417 = vpop.f32.mrf.mxu0
  %v7418 = vadd.f32 %v7249, %v7417
  %v7419 = vpop.f32.mrf.mxu0
  %7420 = vmatprep.mubr.f32.mxu0 0.0
  %v7421 = vand.u32 %v6276, 4294901760
  %7422 = vmatmul.mubr.f32.gmra.mxu0 %v7421
  %v7423 = vpop.f32.mrf.mxu0
  %v7424 = vadd.f32 %v7255, %v7423
  %v7425 = vpop.f32.mrf.mxu0
  %7426 = vmatprep.mubr.f32.mxu0 0.0
  %v7427 = vand.u32 %v6279, 4294901760
  %7428 = vmatmul.mubr.f32.gmra.mxu0 %v7427
  %v7429 = vpop.f32.mrf.mxu0
  %v7430 = vadd.f32 %v7261, %v7429
  %v7431 = vpop.f32.mrf.mxu0
  %7432 = vmatprep.mubr.f32.mxu0 0.0
  %v7433 = vand.u32 %v6282, 4294901760
  %7434 = vmatmul.mubr.f32.gmra.mxu0 %v7433
  %v7435 = vpop.f32.mrf.mxu0
  %v7436 = vadd.f32 %v7267, %v7435
  %v7437 = vpop.f32.mrf.mxu0
  %7438 = vmatprep.mubr.f32.mxu0 0.0
  %v7439 = vand.u32 %v6285, 4294901760
  %7440 = vmatmul.mubr.f32.gmra.mxu0 %v7439
  %v7441 = vpop.f32.mrf.mxu0
  %v7442 = vadd.f32 %v7273, %v7441
  %v7443 = vpop.f32.mrf.mxu0
  %7444 = vmatprep.mubr.f32.mxu0 0.0
  %v7445 = vand.u32 %v6288, 4294901760
  %7446 = vmatmul.mubr.f32.gmra.mxu0 %v7445
  %v7447 = vpop.f32.mrf.mxu0
  %v7448 = vadd.f32 %v7279, %v7447
  %v7449 = vpop.f32.mrf.mxu0
  %7450 = vmatprep.mubr.f32.mxu0 0.0
  %v7451 = vand.u32 %v6291, 4294901760
  %7452 = vmatmul.mubr.f32.gmra.mxu0 %v7451
  %v7453 = vpop.f32.mrf.mxu0
  %v7454 = vadd.f32 %v7285, %v7453
  %v7455 = vpop.f32.mrf.mxu0
  %7456 = vmatprep.mubr.f32.mxu0 0.0
  %v7457 = vand.u32 %v6294, 4294901760
  %7458 = vmatmul.mubr.f32.gmra.mxu0 %v7457
  %v7459 = vpop.f32.mrf.mxu0
  %v7460 = vadd.f32 %v7291, %v7459
  %v7461 = vpop.f32.mrf.mxu0
  %7462 = vmatprep.mubr.f32.mxu0 0.0
  %v7463 = vand.u32 %v6297, 4294901760
  %7464 = vmatmul.mubr.f32.gmra.mxu0 %v7463
  %v7465 = vpop.f32.mrf.mxu0
  %v7466 = vadd.f32 %v7297, %v7465
  %v7467 = vpop.f32.mrf.mxu0
  %7468 = vmatprep.mubr.f32.mxu0 0.0
  %v7469 = vand.u32 %v6300, 4294901760
  %7470 = vmatmul.mubr.f32.gmra.mxu0 %v7469
  %v7471 = vpop.f32.mrf.mxu0
  %v7472 = vadd.f32 %v7303, %v7471
  %v7473 = vpop.f32.mrf.mxu0
  %7474 = vmatprep.mubr.f32.mxu0 0.0
  %v7475 = vand.u32 %v6303, 4294901760
  %7476 = vmatmul.mubr.f32.gmra.mxu0 %v7475
  %v7477 = vpop.f32.mrf.mxu0
  %v7478 = vadd.f32 %v7309, %v7477
  %v7479 = vpop.f32.mrf.mxu0
  %7480 = vmatprep.mubr.f32.mxu0 0.0
  %v7481 = vand.u32 %v6306, 4294901760
  %7482 = vmatmul.mubr.f32.gmra.mxu0 %v7481
  %v7483 = vpop.f32.mrf.mxu0
  %v7484 = vadd.f32 %v7315, %v7483
  %v7485 = vpop.f32.mrf.mxu0
  %7486 = vmatprep.mubr.f32.mxu0 0.0
  %v7487 = vand.u32 %v6309, 4294901760
  %7488 = vmatmul.mubr.f32.gmra.mxu0 %v7487
  %v7489 = vpop.f32.mrf.mxu0
  %v7490 = vadd.f32 %v7321, %v7489
  %v7491 = vpop.f32.mrf.mxu0
  %7492 = vdwg.mxu0
  %vm7493 = vcmask 7168
  %7494 = vst.msk [vmem:[%s20] sm:$0xff] %vm7493, %v7400
  %7495 = vst.msk [vmem:[%s20 + $0x8] sm:$0xff] %vm7493, %v7406
  %7496 = vst.msk [vmem:[%s20 + $0x10] sm:$0xff] %vm7493, %v7412
  %7497 = vst.msk [vmem:[%s20 + $0x18] sm:$0xff] %vm7493, %v7418
  %7498 = vst.msk [vmem:[%s20 + $0x20] sm:$0xff] %vm7493, %v7424
  %7499 = vst.msk [vmem:[%s20 + $0x28] sm:$0xff] %vm7493, %v7430
  %7500 = vst.msk [vmem:[%s20 + $0x30] sm:$0xff] %vm7493, %v7436
  %7501 = vst.msk [vmem:[%s20 + $0x38] sm:$0xff] %vm7493, %v7442
  %7502 = vst.msk [vmem:[%s20 + $0x40] sm:$0xff] %vm7493, %v7448
  %7503 = vst.msk [vmem:[%s20 + $0x48] sm:$0xff] %vm7493, %v7454
  %7504 = vst.msk [vmem:[%s20 + $0x50] sm:$0xff] %vm7493, %v7460
  %7505 = vst.msk [vmem:[%s20 + $0x58] sm:$0xff] %vm7493, %v7466
  %7506 = vst.msk [vmem:[%s20 + $0x60] sm:$0xff] %vm7493, %v7472
  %7507 = vst.msk [vmem:[%s20 + $0x68] sm:$0xff] %vm7493, %v7478
  %7508 = vst.msk [vmem:[%s20 + $0x70] sm:$0xff] %vm7493, %v7484
  %7509 = vst.msk [vmem:[%s20 + $0x78] sm:$0xff] %vm7493, %v7490
  %v7510 = vld [vmem:[%s13] sm:$0xff]
  %v7511 = vld [vmem:[%s13 + $0x8] sm:$0xff]
  %v7512 = vld [vmem:[%s13 + $0x10] sm:$0xff]
  %v7513 = vld [vmem:[%s13 + $0x18] sm:$0xff]
  %v7514 = vld [vmem:[%s13 + $0x20] sm:$0xff]
  %v7515 = vld [vmem:[%s13 + $0x28] sm:$0xff]
  %v7516 = vld [vmem:[%s13 + $0x30] sm:$0xff]
  %v7517 = vld [vmem:[%s13 + $0x38] sm:$0xff]
  %v7518 = vld [vmem:[%s14] sm:$0x1]
  %v7520 = vlaneseq
  %v7521 = vshrl.u32 %v7520, 7
  %v7522 = vsub.s32 0, %v7521
  %v7523 = vrot.slane %v7518, %v7522
  %7525 = vmatprep.subr.mxu0 0.0
  %7526 = vmatpush1.msra.mxu0 0.0
  %7527 = vmatprep.subr.mxu0 0.0
  %7528 = vmatpush1.msra.mxu0 0.0
  %7529 = vmatprep.subr.mxu0 0.0
  %7530 = vmatpush1.msra.mxu0 0.0
  %7531 = vmatprep.subr.mxu0 0.0
  %7532 = vmatpush1.msra.mxu0 0.0
  %7533 = vmatprep.subr.mxu0 0.0
  %7534 = vmatpush1.msra.mxu0 0.0
  %7535 = vmatprep.subr.mxu0 0.0
  %7536 = vmatpush1.msra.mxu0 0.0
  %7537 = vmatprep.subr.mxu0 0.0
  %7538 = vmatpush1.msra.mxu0 0.0
  %7539 = vmatprep.subr.mxu0 0.0
  %7540 = vmatpush1.msra.mxu0 0.0
  %7541 = vmatprep.subr.mxu0 0.0
  %v7542 = vand.u32 %v7517, 4294901760
  %7543 = vmatpush1.msra.mxu0 %v7542
  %7544 = vmatprep.subr.mxu0 0.0
  %v7545 = vand.u32 %v7516, 4294901760
  %7546 = vmatpush1.msra.mxu0 %v7545
  %7547 = vmatprep.subr.mxu0 0.0
  %v7548 = vand.u32 %v7515, 4294901760
  %7549 = vmatpush1.msra.mxu0 %v7548
  %7550 = vmatprep.subr.mxu0 0.0
  %v7551 = vand.u32 %v7514, 4294901760
  %7552 = vmatpush1.msra.mxu0 %v7551
  %7553 = vmatprep.subr.mxu0 0.0
  %v7554 = vand.u32 %v7513, 4294901760
  %7555 = vmatpush1.msra.mxu0 %v7554
  %7556 = vmatprep.subr.mxu0 0.0
  %v7557 = vand.u32 %v7512, 4294901760
  %7558 = vmatpush1.msra.mxu0 %v7557
  %7559 = vmatprep.subr.mxu0 0.0
  %v7560 = vand.u32 %v7511, 4294901760
  %7561 = vmatpush1.msra.mxu0 %v7560
  %7562 = vmatprep.subr.mxu0 0.0
  %v7563 = vand.u32 %v7510, 4294901760
  %7564 = vmatpush1.msra.mxu0 %v7563
  %7565 = vmatprep.subr.mxu0 0.0
  %7566 = vmatpush2.msra.mxu0 0.0
  %7567 = vmatprep.subr.mxu0 0.0
  %7568 = vmatpush2.msra.mxu0 0.0
  %7569 = vmatprep.subr.mxu0 0.0
  %7570 = vmatpush2.msra.mxu0 0.0
  %7571 = vmatprep.subr.mxu0 0.0
  %7572 = vmatpush2.msra.mxu0 0.0
  %7573 = vmatprep.subr.mxu0 0.0
  %7574 = vmatpush2.msra.mxu0 0.0
  %7575 = vmatprep.subr.mxu0 0.0
  %7576 = vmatpush2.msra.mxu0 0.0
  %7577 = vmatprep.subr.mxu0 0.0
  %7578 = vmatpush2.msra.mxu0 0.0
  %7579 = vmatprep.subr.mxu0 0.0
  %7580 = vmatpush2.msra.mxu0 0.0
  %7581 = vmatprep.subr.mxu0 0.0
  %7582 = vmatpush2.msra.mxu0 0.0
  %7583 = vmatprep.subr.mxu0 0.0
  %7584 = vmatpush2.msra.mxu0 0.0
  %7585 = vmatprep.subr.mxu0 0.0
  %7586 = vmatpush2.msra.mxu0 0.0
  %7587 = vmatprep.subr.mxu0 0.0
  %7588 = vmatpush2.msra.mxu0 0.0
  %7589 = vmatprep.subr.mxu0 0.0
  %7590 = vmatpush2.msra.mxu0 0.0
  %7591 = vmatprep.subr.mxu0 0.0
  %7592 = vmatpush2.msra.mxu0 0.0
  %7593 = vmatprep.subr.mxu0 0.0
  %7594 = vmatpush2.msra.mxu0 0.0
  %7595 = vmatprep.subr.mxu0 0.0
  %7596 = vmatpush2.msra.mxu0 0.0
  %7597 = vmatprep.mubr.f32.mxu0 0.0
  %v7598 = vand.u32 %v6264, 4294901760
  %v7599 = vsub.f32 %v6264, %v7598
  %v7600 = vand.u32 %v7599, 4294901760
  %v7601 = vsub.f32 %v7599, %v7600
  %v7602 = vand.u32 %v7601, 4294901760
  %7603 = vmatmul.mubr.f32.gmra.mxu0 %v7602
  %v7604 = vpop.f32.mrf.mxu0
  %v7605 = vadd.f32 %v7523, %v7604
  %v7606 = vpop.f32.mrf.mxu0
  %7607 = vmatprep.mubr.f32.mxu0 0.0
  %v7608 = vand.u32 %v6267, 4294901760
  %v7609 = vsub.f32 %v6267, %v7608
  %v7610 = vand.u32 %v7609, 4294901760
  %v7611 = vsub.f32 %v7609, %v7610
  %v7612 = vand.u32 %v7611, 4294901760
  %7613 = vmatmul.mubr.f32.gmra.mxu0 %v7612
  %v7614 = vpop.f32.mrf.mxu0
  %v7615 = vadd.f32 %v7523, %v7614
  %v7616 = vpop.f32.mrf.mxu0
  %7617 = vmatprep.mubr.f32.mxu0 0.0
  %v7618 = vand.u32 %v6270, 4294901760
  %v7619 = vsub.f32 %v6270, %v7618
  %v7620 = vand.u32 %v7619, 4294901760
  %v7621 = vsub.f32 %v7619, %v7620
  %v7622 = vand.u32 %v7621, 4294901760
  %7623 = vmatmul.mubr.f32.gmra.mxu0 %v7622
  %v7624 = vpop.f32.mrf.mxu0
  %v7625 = vadd.f32 %v7523, %v7624
  %v7626 = vpop.f32.mrf.mxu0
  %7627 = vmatprep.mubr.f32.mxu0 0.0
  %v7628 = vand.u32 %v6273, 4294901760
  %v7629 = vsub.f32 %v6273, %v7628
  %v7630 = vand.u32 %v7629, 4294901760
  %v7631 = vsub.f32 %v7629, %v7630
  %v7632 = vand.u32 %v7631, 4294901760
  %7633 = vmatmul.mubr.f32.gmra.mxu0 %v7632
  %v7634 = vpop.f32.mrf.mxu0
  %v7635 = vadd.f32 %v7523, %v7634
  %v7636 = vpop.f32.mrf.mxu0
  %7637 = vmatprep.mubr.f32.mxu0 0.0
  %v7638 = vand.u32 %v6276, 4294901760
  %v7639 = vsub.f32 %v6276, %v7638
  %v7640 = vand.u32 %v7639, 4294901760
  %v7641 = vsub.f32 %v7639, %v7640
  %v7642 = vand.u32 %v7641, 4294901760
  %7643 = vmatmul.mubr.f32.gmra.mxu0 %v7642
  %v7644 = vpop.f32.mrf.mxu0
  %v7645 = vadd.f32 %v7523, %v7644
  %v7646 = vpop.f32.mrf.mxu0
  %7647 = vmatprep.mubr.f32.mxu0 0.0
  %v7648 = vand.u32 %v6279, 4294901760
  %v7649 = vsub.f32 %v6279, %v7648
  %v7650 = vand.u32 %v7649, 4294901760
  %v7651 = vsub.f32 %v7649, %v7650
  %v7652 = vand.u32 %v7651, 4294901760
  %7653 = vmatmul.mubr.f32.gmra.mxu0 %v7652
  %v7654 = vpop.f32.mrf.mxu0
  %v7655 = vadd.f32 %v7523, %v7654
  %v7656 = vpop.f32.mrf.mxu0
  %7657 = vmatprep.mubr.f32.mxu0 0.0
  %v7658 = vand.u32 %v6282, 4294901760
  %v7659 = vsub.f32 %v6282, %v7658
  %v7660 = vand.u32 %v7659, 4294901760
  %v7661 = vsub.f32 %v7659, %v7660
  %v7662 = vand.u32 %v7661, 4294901760
  %7663 = vmatmul.mubr.f32.gmra.mxu0 %v7662
  %v7664 = vpop.f32.mrf.mxu0
  %v7665 = vadd.f32 %v7523, %v7664
  %v7666 = vpop.f32.mrf.mxu0
  %7667 = vmatprep.mubr.f32.mxu0 0.0
  %v7668 = vand.u32 %v6285, 4294901760
  %v7669 = vsub.f32 %v6285, %v7668
  %v7670 = vand.u32 %v7669, 4294901760
  %v7671 = vsub.f32 %v7669, %v7670
  %v7672 = vand.u32 %v7671, 4294901760
  %7673 = vmatmul.mubr.f32.gmra.mxu0 %v7672
  %v7674 = vpop.f32.mrf.mxu0
  %v7675 = vadd.f32 %v7523, %v7674
  %v7676 = vpop.f32.mrf.mxu0
  %7677 = vmatprep.mubr.f32.mxu0 0.0
  %v7678 = vand.u32 %v6288, 4294901760
  %v7679 = vsub.f32 %v6288, %v7678
  %v7680 = vand.u32 %v7679, 4294901760
  %v7681 = vsub.f32 %v7679, %v7680
  %v7682 = vand.u32 %v7681, 4294901760
  %7683 = vmatmul.mubr.f32.gmra.mxu0 %v7682
  %v7684 = vpop.f32.mrf.mxu0
  %v7685 = vadd.f32 %v7523, %v7684
  %v7686 = vpop.f32.mrf.mxu0
  %7687 = vmatprep.mubr.f32.mxu0 0.0
  %v7688 = vand.u32 %v6291, 4294901760
  %v7689 = vsub.f32 %v6291, %v7688
  %v7690 = vand.u32 %v7689, 4294901760
  %v7691 = vsub.f32 %v7689, %v7690
  %v7692 = vand.u32 %v7691, 4294901760
  %7693 = vmatmul.mubr.f32.gmra.mxu0 %v7692
  %v7694 = vpop.f32.mrf.mxu0
  %v7695 = vadd.f32 %v7523, %v7694
  %v7696 = vpop.f32.mrf.mxu0
  %7697 = vmatprep.mubr.f32.mxu0 0.0
  %v7698 = vand.u32 %v6294, 4294901760
  %v7699 = vsub.f32 %v6294, %v7698
  %v7700 = vand.u32 %v7699, 4294901760
  %v7701 = vsub.f32 %v7699, %v7700
  %v7702 = vand.u32 %v7701, 4294901760
  %7703 = vmatmul.mubr.f32.gmra.mxu0 %v7702
  %v7704 = vpop.f32.mrf.mxu0
  %v7705 = vadd.f32 %v7523, %v7704
  %v7706 = vpop.f32.mrf.mxu0
  %7707 = vmatprep.mubr.f32.mxu0 0.0
  %v7708 = vand.u32 %v6297, 4294901760
  %v7709 = vsub.f32 %v6297, %v7708
  %v7710 = vand.u32 %v7709, 4294901760
  %v7711 = vsub.f32 %v7709, %v7710
  %v7712 = vand.u32 %v7711, 4294901760
  %7713 = vmatmul.mubr.f32.gmra.mxu0 %v7712
  %v7714 = vpop.f32.mrf.mxu0
  %v7715 = vadd.f32 %v7523, %v7714
  %v7716 = vpop.f32.mrf.mxu0
  %7717 = vmatprep.mubr.f32.mxu0 0.0
  %v7718 = vand.u32 %v6300, 4294901760
  %v7719 = vsub.f32 %v6300, %v7718
  %v7720 = vand.u32 %v7719, 4294901760
  %v7721 = vsub.f32 %v7719, %v7720
  %v7722 = vand.u32 %v7721, 4294901760
  %7723 = vmatmul.mubr.f32.gmra.mxu0 %v7722
  %v7724 = vpop.f32.mrf.mxu0
  %v7725 = vadd.f32 %v7523, %v7724
  %v7726 = vpop.f32.mrf.mxu0
  %7727 = vmatprep.mubr.f32.mxu0 0.0
  %v7728 = vand.u32 %v6303, 4294901760
  %v7729 = vsub.f32 %v6303, %v7728
  %v7730 = vand.u32 %v7729, 4294901760
  %v7731 = vsub.f32 %v7729, %v7730
  %v7732 = vand.u32 %v7731, 4294901760
  %7733 = vmatmul.mubr.f32.gmra.mxu0 %v7732
  %v7734 = vpop.f32.mrf.mxu0
  %v7735 = vadd.f32 %v7523, %v7734
  %v7736 = vpop.f32.mrf.mxu0
  %7737 = vmatprep.mubr.f32.mxu0 0.0
  %v7738 = vand.u32 %v6306, 4294901760
  %v7739 = vsub.f32 %v6306, %v7738
  %v7740 = vand.u32 %v7739, 4294901760
  %v7741 = vsub.f32 %v7739, %v7740
  %v7742 = vand.u32 %v7741, 4294901760
  %7743 = vmatmul.mubr.f32.gmra.mxu0 %v7742
  %v7744 = vpop.f32.mrf.mxu0
  %v7745 = vadd.f32 %v7523, %v7744
  %v7746 = vpop.f32.mrf.mxu0
  %7747 = vmatprep.mubr.f32.mxu0 0.0
  %v7748 = vand.u32 %v6309, 4294901760
  %v7749 = vsub.f32 %v6309, %v7748
  %v7750 = vand.u32 %v7749, 4294901760
  %v7751 = vsub.f32 %v7749, %v7750
  %v7752 = vand.u32 %v7751, 4294901760
  %7753 = vmatmul.mubr.f32.gmra.mxu0 %v7752
  %v7754 = vpop.f32.mrf.mxu0
  %v7755 = vadd.f32 %v7523, %v7754
  %v7756 = vpop.f32.mrf.mxu0
  %7757 = vdwg.mxu0
  %7758 = vmatprep.subr.mxu0 0.0
  %7759 = vmatpush1.msra.mxu0 0.0
  %7760 = vmatprep.subr.mxu0 0.0
  %7761 = vmatpush1.msra.mxu0 0.0
  %7762 = vmatprep.subr.mxu0 0.0
  %7763 = vmatpush1.msra.mxu0 0.0
  %7764 = vmatprep.subr.mxu0 0.0
  %7765 = vmatpush1.msra.mxu0 0.0
  %7766 = vmatprep.subr.mxu0 0.0
  %7767 = vmatpush1.msra.mxu0 0.0
  %7768 = vmatprep.subr.mxu0 0.0
  %7769 = vmatpush1.msra.mxu0 0.0
  %7770 = vmatprep.subr.mxu0 0.0
  %7771 = vmatpush1.msra.mxu0 0.0
  %7772 = vmatprep.subr.mxu0 0.0
  %7773 = vmatpush1.msra.mxu0 0.0
  %7774 = vmatprep.subr.mxu0 0.0
  %v7775 = vand.u32 %v7517, 4294901760
  %v7776 = vsub.f32 %v7517, %v7775
  %v7777 = vand.u32 %v7776, 4294901760
  %v7778 = vsub.f32 %v7776, %v7777
  %v7779 = vand.u32 %v7778, 4294901760
  %7780 = vmatpush1.msra.mxu0 %v7779
  %7781 = vmatprep.subr.mxu0 0.0
  %v7782 = vand.u32 %v7516, 4294901760
  %v7783 = vsub.f32 %v7516, %v7782
  %v7784 = vand.u32 %v7783, 4294901760
  %v7785 = vsub.f32 %v7783, %v7784
  %v7786 = vand.u32 %v7785, 4294901760
  %7787 = vmatpush1.msra.mxu0 %v7786
  %7788 = vmatprep.subr.mxu0 0.0
  %v7789 = vand.u32 %v7515, 4294901760
  %v7790 = vsub.f32 %v7515, %v7789
  %v7791 = vand.u32 %v7790, 4294901760
  %v7792 = vsub.f32 %v7790, %v7791
  %v7793 = vand.u32 %v7792, 4294901760
  %7794 = vmatpush1.msra.mxu0 %v7793
  %7795 = vmatprep.subr.mxu0 0.0
  %v7796 = vand.u32 %v7514, 4294901760
  %v7797 = vsub.f32 %v7514, %v7796
  %v7798 = vand.u32 %v7797, 4294901760
  %v7799 = vsub.f32 %v7797, %v7798
  %v7800 = vand.u32 %v7799, 4294901760
  %7801 = vmatpush1.msra.mxu0 %v7800
  %7802 = vmatprep.subr.mxu0 0.0
  %v7803 = vand.u32 %v7513, 4294901760
  %v7804 = vsub.f32 %v7513, %v7803
  %v7805 = vand.u32 %v7804, 4294901760
  %v7806 = vsub.f32 %v7804, %v7805
  %v7807 = vand.u32 %v7806, 4294901760
  %7808 = vmatpush1.msra.mxu0 %v7807
  %7809 = vmatprep.subr.mxu0 0.0
  %v7810 = vand.u32 %v7512, 4294901760
  %v7811 = vsub.f32 %v7512, %v7810
  %v7812 = vand.u32 %v7811, 4294901760
  %v7813 = vsub.f32 %v7811, %v7812
  %v7814 = vand.u32 %v7813, 4294901760
  %7815 = vmatpush1.msra.mxu0 %v7814
  %7816 = vmatprep.subr.mxu0 0.0
  %v7817 = vand.u32 %v7511, 4294901760
  %v7818 = vsub.f32 %v7511, %v7817
  %v7819 = vand.u32 %v7818, 4294901760
  %v7820 = vsub.f32 %v7818, %v7819
  %v7821 = vand.u32 %v7820, 4294901760
  %7822 = vmatpush1.msra.mxu0 %v7821
  %7823 = vmatprep.subr.mxu0 0.0
  %v7824 = vand.u32 %v7510, 4294901760
  %v7825 = vsub.f32 %v7510, %v7824
  %v7826 = vand.u32 %v7825, 4294901760
  %v7827 = vsub.f32 %v7825, %v7826
  %v7828 = vand.u32 %v7827, 4294901760
  %7829 = vmatpush1.msra.mxu0 %v7828
  %7830 = vmatprep.subr.mxu0 0.0
  %7831 = vmatpush2.msra.mxu0 0.0
  %7832 = vmatprep.subr.mxu0 0.0
  %7833 = vmatpush2.msra.mxu0 0.0
  %7834 = vmatprep.subr.mxu0 0.0
  %7835 = vmatpush2.msra.mxu0 0.0
  %7836 = vmatprep.subr.mxu0 0.0
  %7837 = vmatpush2.msra.mxu0 0.0
  %7838 = vmatprep.subr.mxu0 0.0
  %7839 = vmatpush2.msra.mxu0 0.0
  %7840 = vmatprep.subr.mxu0 0.0
  %7841 = vmatpush2.msra.mxu0 0.0
  %7842 = vmatprep.subr.mxu0 0.0
  %7843 = vmatpush2.msra.mxu0 0.0
  %7844 = vmatprep.subr.mxu0 0.0
  %7845 = vmatpush2.msra.mxu0 0.0
  %7846 = vmatprep.subr.mxu0 0.0
  %7847 = vmatpush2.msra.mxu0 0.0
  %7848 = vmatprep.subr.mxu0 0.0
  %7849 = vmatpush2.msra.mxu0 0.0
  %7850 = vmatprep.subr.mxu0 0.0
  %7851 = vmatpush2.msra.mxu0 0.0
  %7852 = vmatprep.subr.mxu0 0.0
  %7853 = vmatpush2.msra.mxu0 0.0
  %7854 = vmatprep.subr.mxu0 0.0
  %7855 = vmatpush2.msra.mxu0 0.0
  %7856 = vmatprep.subr.mxu0 0.0
  %7857 = vmatpush2.msra.mxu0 0.0
  %7858 = vmatprep.subr.mxu0 0.0
  %7859 = vmatpush2.msra.mxu0 0.0
  %7860 = vmatprep.subr.mxu0 0.0
  %7861 = vmatpush2.msra.mxu0 0.0
  %7862 = vmatprep.mubr.f32.mxu0 0.0
  %v7863 = vand.u32 %v6264, 4294901760
  %7864 = vmatmul.mubr.f32.gmra.mxu0 %v7863
  %v7865 = vpop.f32.mrf.mxu0
  %v7866 = vadd.f32 %v7605, %v7865
  %v7867 = vpop.f32.mrf.mxu0
  %7868 = vmatprep.mubr.f32.mxu0 0.0
  %v7869 = vand.u32 %v6267, 4294901760
  %7870 = vmatmul.mubr.f32.gmra.mxu0 %v7869
  %v7871 = vpop.f32.mrf.mxu0
  %v7872 = vadd.f32 %v7615, %v7871
  %v7873 = vpop.f32.mrf.mxu0
  %7874 = vmatprep.mubr.f32.mxu0 0.0
  %v7875 = vand.u32 %v6270, 4294901760
  %7876 = vmatmul.mubr.f32.gmra.mxu0 %v7875
  %v7877 = vpop.f32.mrf.mxu0
  %v7878 = vadd.f32 %v7625, %v7877
  %v7879 = vpop.f32.mrf.mxu0
  %7880 = vmatprep.mubr.f32.mxu0 0.0
  %v7881 = vand.u32 %v6273, 4294901760
  %7882 = vmatmul.mubr.f32.gmra.mxu0 %v7881
  %v7883 = vpop.f32.mrf.mxu0
  %v7884 = vadd.f32 %v7635, %v7883
  %v7885 = vpop.f32.mrf.mxu0
  %7886 = vmatprep.mubr.f32.mxu0 0.0
  %v7887 = vand.u32 %v6276, 4294901760
  %7888 = vmatmul.mubr.f32.gmra.mxu0 %v7887
  %v7889 = vpop.f32.mrf.mxu0
  %v7890 = vadd.f32 %v7645, %v7889
  %v7891 = vpop.f32.mrf.mxu0
  %7892 = vmatprep.mubr.f32.mxu0 0.0
  %v7893 = vand.u32 %v6279, 4294901760
  %7894 = vmatmul.mubr.f32.gmra.mxu0 %v7893
  %v7895 = vpop.f32.mrf.mxu0
  %v7896 = vadd.f32 %v7655, %v7895
  %v7897 = vpop.f32.mrf.mxu0
  %7898 = vmatprep.mubr.f32.mxu0 0.0
  %v7899 = vand.u32 %v6282, 4294901760
  %7900 = vmatmul.mubr.f32.gmra.mxu0 %v7899
  %v7901 = vpop.f32.mrf.mxu0
  %v7902 = vadd.f32 %v7665, %v7901
  %v7903 = vpop.f32.mrf.mxu0
  %7904 = vmatprep.mubr.f32.mxu0 0.0
  %v7905 = vand.u32 %v6285, 4294901760
  %7906 = vmatmul.mubr.f32.gmra.mxu0 %v7905
  %v7907 = vpop.f32.mrf.mxu0
  %v7908 = vadd.f32 %v7675, %v7907
  %v7909 = vpop.f32.mrf.mxu0
  %7910 = vmatprep.mubr.f32.mxu0 0.0
  %v7911 = vand.u32 %v6288, 4294901760
  %7912 = vmatmul.mubr.f32.gmra.mxu0 %v7911
  %v7913 = vpop.f32.mrf.mxu0
  %v7914 = vadd.f32 %v7685, %v7913
  %v7915 = vpop.f32.mrf.mxu0
  %7916 = vmatprep.mubr.f32.mxu0 0.0
  %v7917 = vand.u32 %v6291, 4294901760
  %7918 = vmatmul.mubr.f32.gmra.mxu0 %v7917
  %v7919 = vpop.f32.mrf.mxu0
  %v7920 = vadd.f32 %v7695, %v7919
  %v7921 = vpop.f32.mrf.mxu0
  %7922 = vmatprep.mubr.f32.mxu0 0.0
  %v7923 = vand.u32 %v6294, 4294901760
  %7924 = vmatmul.mubr.f32.gmra.mxu0 %v7923
  %v7925 = vpop.f32.mrf.mxu0
  %v7926 = vadd.f32 %v7705, %v7925
  %v7927 = vpop.f32.mrf.mxu0
  %7928 = vmatprep.mubr.f32.mxu0 0.0
  %v7929 = vand.u32 %v6297, 4294901760
  %7930 = vmatmul.mubr.f32.gmra.mxu0 %v7929
  %v7931 = vpop.f32.mrf.mxu0
  %v7932 = vadd.f32 %v7715, %v7931
  %v7933 = vpop.f32.mrf.mxu0
  %7934 = vmatprep.mubr.f32.mxu0 0.0
  %v7935 = vand.u32 %v6300, 4294901760
  %7936 = vmatmul.mubr.f32.gmra.mxu0 %v7935
  %v7937 = vpop.f32.mrf.mxu0
  %v7938 = vadd.f32 %v7725, %v7937
  %v7939 = vpop.f32.mrf.mxu0
  %7940 = vmatprep.mubr.f32.mxu0 0.0
  %v7941 = vand.u32 %v6303, 4294901760
  %7942 = vmatmul.mubr.f32.gmra.mxu0 %v7941
  %v7943 = vpop.f32.mrf.mxu0
  %v7944 = vadd.f32 %v7735, %v7943
  %v7945 = vpop.f32.mrf.mxu0
  %7946 = vmatprep.mubr.f32.mxu0 0.0
  %v7947 = vand.u32 %v6306, 4294901760
  %7948 = vmatmul.mubr.f32.gmra.mxu0 %v7947
  %v7949 = vpop.f32.mrf.mxu0
  %v7950 = vadd.f32 %v7745, %v7949
  %v7951 = vpop.f32.mrf.mxu0
  %7952 = vmatprep.mubr.f32.mxu0 0.0
  %v7953 = vand.u32 %v6309, 4294901760
  %7954 = vmatmul.mubr.f32.gmra.mxu0 %v7953
  %v7955 = vpop.f32.mrf.mxu0
  %v7956 = vadd.f32 %v7755, %v7955
  %v7957 = vpop.f32.mrf.mxu0
  %7958 = vdwg.mxu0
  %7959 = vmatprep.subr.mxu0 0.0
  %7960 = vmatpush1.msra.mxu0 0.0
  %7961 = vmatprep.subr.mxu0 0.0
  %7962 = vmatpush1.msra.mxu0 0.0
  %7963 = vmatprep.subr.mxu0 0.0
  %7964 = vmatpush1.msra.mxu0 0.0
  %7965 = vmatprep.subr.mxu0 0.0
  %7966 = vmatpush1.msra.mxu0 0.0
  %7967 = vmatprep.subr.mxu0 0.0
  %7968 = vmatpush1.msra.mxu0 0.0
  %7969 = vmatprep.subr.mxu0 0.0
  %7970 = vmatpush1.msra.mxu0 0.0
  %7971 = vmatprep.subr.mxu0 0.0
  %7972 = vmatpush1.msra.mxu0 0.0
  %7973 = vmatprep.subr.mxu0 0.0
  %7974 = vmatpush1.msra.mxu0 0.0
  %7975 = vmatprep.subr.mxu0 0.0
  %v7976 = vand.u32 %v7517, 4294901760
  %v7977 = vsub.f32 %v7517, %v7976
  %7978 = vmatpush1.msra.mxu0 %v7977
  %7979 = vmatprep.subr.mxu0 0.0
  %v7980 = vand.u32 %v7516, 4294901760
  %v7981 = vsub.f32 %v7516, %v7980
  %7982 = vmatpush1.msra.mxu0 %v7981
  %7983 = vmatprep.subr.mxu0 0.0
  %v7984 = vand.u32 %v7515, 4294901760
  %v7985 = vsub.f32 %v7515, %v7984
  %7986 = vmatpush1.msra.mxu0 %v7985
  %7987 = vmatprep.subr.mxu0 0.0
  %v7988 = vand.u32 %v7514, 4294901760
  %v7989 = vsub.f32 %v7514, %v7988
  %7990 = vmatpush1.msra.mxu0 %v7989
  %7991 = vmatprep.subr.mxu0 0.0
  %v7992 = vand.u32 %v7513, 4294901760
  %v7993 = vsub.f32 %v7513, %v7992
  %7994 = vmatpush1.msra.mxu0 %v7993
  %7995 = vmatprep.subr.mxu0 0.0
  %v7996 = vand.u32 %v7512, 4294901760
  %v7997 = vsub.f32 %v7512, %v7996
  %7998 = vmatpush1.msra.mxu0 %v7997
  %7999 = vmatprep.subr.mxu0 0.0
  %v8000 = vand.u32 %v7511, 4294901760
  %v8001 = vsub.f32 %v7511, %v8000
  %8002 = vmatpush1.msra.mxu0 %v8001
  %8003 = vmatprep.subr.mxu0 0.0
  %v8004 = vand.u32 %v7510, 4294901760
  %v8005 = vsub.f32 %v7510, %v8004
  %8006 = vmatpush1.msra.mxu0 %v8005
  %8007 = vmatprep.subr.mxu0 0.0
  %8008 = vmatpush2.msra.mxu0 0.0
  %8009 = vmatprep.subr.mxu0 0.0
  %8010 = vmatpush2.msra.mxu0 0.0
  %8011 = vmatprep.subr.mxu0 0.0
  %8012 = vmatpush2.msra.mxu0 0.0
  %8013 = vmatprep.subr.mxu0 0.0
  %8014 = vmatpush2.msra.mxu0 0.0
  %8015 = vmatprep.subr.mxu0 0.0
  %8016 = vmatpush2.msra.mxu0 0.0
  %8017 = vmatprep.subr.mxu0 0.0
  %8018 = vmatpush2.msra.mxu0 0.0
  %8019 = vmatprep.subr.mxu0 0.0
  %8020 = vmatpush2.msra.mxu0 0.0
  %8021 = vmatprep.subr.mxu0 0.0
  %8022 = vmatpush2.msra.mxu0 0.0
  %8023 = vmatprep.subr.mxu0 0.0
  %8024 = vmatpush2.msra.mxu0 0.0
  %8025 = vmatprep.subr.mxu0 0.0
  %8026 = vmatpush2.msra.mxu0 0.0
  %8027 = vmatprep.subr.mxu0 0.0
  %8028 = vmatpush2.msra.mxu0 0.0
  %8029 = vmatprep.subr.mxu0 0.0
  %8030 = vmatpush2.msra.mxu0 0.0
  %8031 = vmatprep.subr.mxu0 0.0
  %8032 = vmatpush2.msra.mxu0 0.0
  %8033 = vmatprep.subr.mxu0 0.0
  %8034 = vmatpush2.msra.mxu0 0.0
  %8035 = vmatprep.subr.mxu0 0.0
  %8036 = vmatpush2.msra.mxu0 0.0
  %8037 = vmatprep.subr.mxu0 0.0
  %8038 = vmatpush2.msra.mxu0 0.0
  %8039 = vmatprep.mubr.f32.mxu0 0.0
  %v8040 = vand.u32 %v6264, 4294901760
  %v8041 = vsub.f32 %v6264, %v8040
  %8042 = vmatmul.mubr.f32.gmra.mxu0 %v8041
  %v8043 = vpop.f32.mrf.mxu0
  %v8044 = vadd.f32 %v7866, %v8043
  %v8045 = vpop.f32.mrf.mxu0
  %8046 = vmatprep.mubr.f32.mxu0 0.0
  %v8047 = vand.u32 %v6267, 4294901760
  %v8048 = vsub.f32 %v6267, %v8047
  %8049 = vmatmul.mubr.f32.gmra.mxu0 %v8048
  %v8050 = vpop.f32.mrf.mxu0
  %v8051 = vadd.f32 %v7872, %v8050
  %v8052 = vpop.f32.mrf.mxu0
  %8053 = vmatprep.mubr.f32.mxu0 0.0
  %v8054 = vand.u32 %v6270, 4294901760
  %v8055 = vsub.f32 %v6270, %v8054
  %8056 = vmatmul.mubr.f32.gmra.mxu0 %v8055
  %v8057 = vpop.f32.mrf.mxu0
  %v8058 = vadd.f32 %v7878, %v8057
  %v8059 = vpop.f32.mrf.mxu0
  %8060 = vmatprep.mubr.f32.mxu0 0.0
  %v8061 = vand.u32 %v6273, 4294901760
  %v8062 = vsub.f32 %v6273, %v8061
  %8063 = vmatmul.mubr.f32.gmra.mxu0 %v8062
  %v8064 = vpop.f32.mrf.mxu0
  %v8065 = vadd.f32 %v7884, %v8064
  %v8066 = vpop.f32.mrf.mxu0
  %8067 = vmatprep.mubr.f32.mxu0 0.0
  %v8068 = vand.u32 %v6276, 4294901760
  %v8069 = vsub.f32 %v6276, %v8068
  %8070 = vmatmul.mubr.f32.gmra.mxu0 %v8069
  %v8071 = vpop.f32.mrf.mxu0
  %v8072 = vadd.f32 %v7890, %v8071
  %v8073 = vpop.f32.mrf.mxu0
  %8074 = vmatprep.mubr.f32.mxu0 0.0
  %v8075 = vand.u32 %v6279, 4294901760
  %v8076 = vsub.f32 %v6279, %v8075
  %8077 = vmatmul.mubr.f32.gmra.mxu0 %v8076
  %v8078 = vpop.f32.mrf.mxu0
  %v8079 = vadd.f32 %v7896, %v8078
  %v8080 = vpop.f32.mrf.mxu0
  %8081 = vmatprep.mubr.f32.mxu0 0.0
  %v8082 = vand.u32 %v6282, 4294901760
  %v8083 = vsub.f32 %v6282, %v8082
  %8084 = vmatmul.mubr.f32.gmra.mxu0 %v8083
  %v8085 = vpop.f32.mrf.mxu0
  %v8086 = vadd.f32 %v7902, %v8085
  %v8087 = vpop.f32.mrf.mxu0
  %8088 = vmatprep.mubr.f32.mxu0 0.0
  %v8089 = vand.u32 %v6285, 4294901760
  %v8090 = vsub.f32 %v6285, %v8089
  %8091 = vmatmul.mubr.f32.gmra.mxu0 %v8090
  %v8092 = vpop.f32.mrf.mxu0
  %v8093 = vadd.f32 %v7908, %v8092
  %v8094 = vpop.f32.mrf.mxu0
  %8095 = vmatprep.mubr.f32.mxu0 0.0
  %v8096 = vand.u32 %v6288, 4294901760
  %v8097 = vsub.f32 %v6288, %v8096
  %8098 = vmatmul.mubr.f32.gmra.mxu0 %v8097
  %v8099 = vpop.f32.mrf.mxu0
  %v8100 = vadd.f32 %v7914, %v8099
  %v8101 = vpop.f32.mrf.mxu0
  %8102 = vmatprep.mubr.f32.mxu0 0.0
  %v8103 = vand.u32 %v6291, 4294901760
  %v8104 = vsub.f32 %v6291, %v8103
  %8105 = vmatmul.mubr.f32.gmra.mxu0 %v8104
  %v8106 = vpop.f32.mrf.mxu0
  %v8107 = vadd.f32 %v7920, %v8106
  %v8108 = vpop.f32.mrf.mxu0
  %8109 = vmatprep.mubr.f32.mxu0 0.0
  %v8110 = vand.u32 %v6294, 4294901760
  %v8111 = vsub.f32 %v6294, %v8110
  %8112 = vmatmul.mubr.f32.gmra.mxu0 %v8111
  %v8113 = vpop.f32.mrf.mxu0
  %v8114 = vadd.f32 %v7926, %v8113
  %v8115 = vpop.f32.mrf.mxu0
  %8116 = vmatprep.mubr.f32.mxu0 0.0
  %v8117 = vand.u32 %v6297, 4294901760
  %v8118 = vsub.f32 %v6297, %v8117
  %8119 = vmatmul.mubr.f32.gmra.mxu0 %v8118
  %v8120 = vpop.f32.mrf.mxu0
  %v8121 = vadd.f32 %v7932, %v8120
  %v8122 = vpop.f32.mrf.mxu0
  %8123 = vmatprep.mubr.f32.mxu0 0.0
  %v8124 = vand.u32 %v6300, 4294901760
  %v8125 = vsub.f32 %v6300, %v8124
  %8126 = vmatmul.mubr.f32.gmra.mxu0 %v8125
  %v8127 = vpop.f32.mrf.mxu0
  %v8128 = vadd.f32 %v7938, %v8127
  %v8129 = vpop.f32.mrf.mxu0
  %8130 = vmatprep.mubr.f32.mxu0 0.0
  %v8131 = vand.u32 %v6303, 4294901760
  %v8132 = vsub.f32 %v6303, %v8131
  %8133 = vmatmul.mubr.f32.gmra.mxu0 %v8132
  %v8134 = vpop.f32.mrf.mxu0
  %v8135 = vadd.f32 %v7944, %v8134
  %v8136 = vpop.f32.mrf.mxu0
  %8137 = vmatprep.mubr.f32.mxu0 0.0
  %v8138 = vand.u32 %v6306, 4294901760
  %v8139 = vsub.f32 %v6306, %v8138
  %8140 = vmatmul.mubr.f32.gmra.mxu0 %v8139
  %v8141 = vpop.f32.mrf.mxu0
  %v8142 = vadd.f32 %v7950, %v8141
  %v8143 = vpop.f32.mrf.mxu0
  %8144 = vmatprep.mubr.f32.mxu0 0.0
  %v8145 = vand.u32 %v6309, 4294901760
  %v8146 = vsub.f32 %v6309, %v8145
  %8147 = vmatmul.mubr.f32.gmra.mxu0 %v8146
  %v8148 = vpop.f32.mrf.mxu0
  %v8149 = vadd.f32 %v7956, %v8148
  %v8150 = vpop.f32.mrf.mxu0
  %8151 = vdwg.mxu0
  %8152 = vmatprep.subr.mxu0 0.0
  %8153 = vmatpush1.msra.mxu0 0.0
  %8154 = vmatprep.subr.mxu0 0.0
  %8155 = vmatpush1.msra.mxu0 0.0
  %8156 = vmatprep.subr.mxu0 0.0
  %8157 = vmatpush1.msra.mxu0 0.0
  %8158 = vmatprep.subr.mxu0 0.0
  %8159 = vmatpush1.msra.mxu0 0.0
  %8160 = vmatprep.subr.mxu0 0.0
  %8161 = vmatpush1.msra.mxu0 0.0
  %8162 = vmatprep.subr.mxu0 0.0
  %8163 = vmatpush1.msra.mxu0 0.0
  %8164 = vmatprep.subr.mxu0 0.0
  %8165 = vmatpush1.msra.mxu0 0.0
  %8166 = vmatprep.subr.mxu0 0.0
  %8167 = vmatpush1.msra.mxu0 0.0
  %8168 = vmatprep.subr.mxu0 0.0
  %v8169 = vand.u32 %v7517, 4294901760
  %8170 = vmatpush1.msra.mxu0 %v8169
  %8171 = vmatprep.subr.mxu0 0.0
  %v8172 = vand.u32 %v7516, 4294901760
  %8173 = vmatpush1.msra.mxu0 %v8172
  %8174 = vmatprep.subr.mxu0 0.0
  %v8175 = vand.u32 %v7515, 4294901760
  %8176 = vmatpush1.msra.mxu0 %v8175
  %8177 = vmatprep.subr.mxu0 0.0
  %v8178 = vand.u32 %v7514, 4294901760
  %8179 = vmatpush1.msra.mxu0 %v8178
  %8180 = vmatprep.subr.mxu0 0.0
  %v8181 = vand.u32 %v7513, 4294901760
  %8182 = vmatpush1.msra.mxu0 %v8181
  %8183 = vmatprep.subr.mxu0 0.0
  %v8184 = vand.u32 %v7512, 4294901760
  %8185 = vmatpush1.msra.mxu0 %v8184
  %8186 = vmatprep.subr.mxu0 0.0
  %v8187 = vand.u32 %v7511, 4294901760
  %8188 = vmatpush1.msra.mxu0 %v8187
  %8189 = vmatprep.subr.mxu0 0.0
  %v8190 = vand.u32 %v7510, 4294901760
  %8191 = vmatpush1.msra.mxu0 %v8190
  %8192 = vmatprep.subr.mxu0 0.0
  %8193 = vmatpush2.msra.mxu0 0.0
  %8194 = vmatprep.subr.mxu0 0.0
  %8195 = vmatpush2.msra.mxu0 0.0
  %8196 = vmatprep.subr.mxu0 0.0
  %8197 = vmatpush2.msra.mxu0 0.0
  %8198 = vmatprep.subr.mxu0 0.0
  %8199 = vmatpush2.msra.mxu0 0.0
  %8200 = vmatprep.subr.mxu0 0.0
  %8201 = vmatpush2.msra.mxu0 0.0
  %8202 = vmatprep.subr.mxu0 0.0
  %8203 = vmatpush2.msra.mxu0 0.0
  %8204 = vmatprep.subr.mxu0 0.0
  %8205 = vmatpush2.msra.mxu0 0.0
  %8206 = vmatprep.subr.mxu0 0.0
  %8207 = vmatpush2.msra.mxu0 0.0
  %8208 = vmatprep.subr.mxu0 0.0
  %8209 = vmatpush2.msra.mxu0 0.0
  %8210 = vmatprep.subr.mxu0 0.0
  %8211 = vmatpush2.msra.mxu0 0.0
  %8212 = vmatprep.subr.mxu0 0.0
  %8213 = vmatpush2.msra.mxu0 0.0
  %8214 = vmatprep.subr.mxu0 0.0
  %8215 = vmatpush2.msra.mxu0 0.0
  %8216 = vmatprep.subr.mxu0 0.0
  %8217 = vmatpush2.msra.mxu0 0.0
  %8218 = vmatprep.subr.mxu0 0.0
  %8219 = vmatpush2.msra.mxu0 0.0
  %8220 = vmatprep.subr.mxu0 0.0
  %8221 = vmatpush2.msra.mxu0 0.0
  %8222 = vmatprep.subr.mxu0 0.0
  %8223 = vmatpush2.msra.mxu0 0.0
  %8224 = vmatprep.mubr.f32.mxu0 0.0
  %v8225 = vand.u32 %v6264, 4294901760
  %v8226 = vsub.f32 %v6264, %v8225
  %v8227 = vand.u32 %v8226, 4294901760
  %8228 = vmatmul.mubr.f32.gmra.mxu0 %v8227
  %v8229 = vpop.f32.mrf.mxu0
  %v8230 = vadd.f32 %v8044, %v8229
  %v8231 = vpop.f32.mrf.mxu0
  %8232 = vmatprep.mubr.f32.mxu0 0.0
  %v8233 = vand.u32 %v6267, 4294901760
  %v8234 = vsub.f32 %v6267, %v8233
  %v8235 = vand.u32 %v8234, 4294901760
  %8236 = vmatmul.mubr.f32.gmra.mxu0 %v8235
  %v8237 = vpop.f32.mrf.mxu0
  %v8238 = vadd.f32 %v8051, %v8237
  %v8239 = vpop.f32.mrf.mxu0
  %8240 = vmatprep.mubr.f32.mxu0 0.0
  %v8241 = vand.u32 %v6270, 4294901760
  %v8242 = vsub.f32 %v6270, %v8241
  %v8243 = vand.u32 %v8242, 4294901760
  %8244 = vmatmul.mubr.f32.gmra.mxu0 %v8243
  %v8245 = vpop.f32.mrf.mxu0
  %v8246 = vadd.f32 %v8058, %v8245
  %v8247 = vpop.f32.mrf.mxu0
  %8248 = vmatprep.mubr.f32.mxu0 0.0
  %v8249 = vand.u32 %v6273, 4294901760
  %v8250 = vsub.f32 %v6273, %v8249
  %v8251 = vand.u32 %v8250, 4294901760
  %8252 = vmatmul.mubr.f32.gmra.mxu0 %v8251
  %v8253 = vpop.f32.mrf.mxu0
  %v8254 = vadd.f32 %v8065, %v8253
  %v8255 = vpop.f32.mrf.mxu0
  %8256 = vmatprep.mubr.f32.mxu0 0.0
  %v8257 = vand.u32 %v6276, 4294901760
  %v8258 = vsub.f32 %v6276, %v8257
  %v8259 = vand.u32 %v8258, 4294901760
  %8260 = vmatmul.mubr.f32.gmra.mxu0 %v8259
  %v8261 = vpop.f32.mrf.mxu0
  %v8262 = vadd.f32 %v8072, %v8261
  %v8263 = vpop.f32.mrf.mxu0
  %8264 = vmatprep.mubr.f32.mxu0 0.0
  %v8265 = vand.u32 %v6279, 4294901760
  %v8266 = vsub.f32 %v6279, %v8265
  %v8267 = vand.u32 %v8266, 4294901760
  %8268 = vmatmul.mubr.f32.gmra.mxu0 %v8267
  %v8269 = vpop.f32.mrf.mxu0
  %v8270 = vadd.f32 %v8079, %v8269
  %v8271 = vpop.f32.mrf.mxu0
  %8272 = vmatprep.mubr.f32.mxu0 0.0
  %v8273 = vand.u32 %v6282, 4294901760
  %v8274 = vsub.f32 %v6282, %v8273
  %v8275 = vand.u32 %v8274, 4294901760
  %8276 = vmatmul.mubr.f32.gmra.mxu0 %v8275
  %v8277 = vpop.f32.mrf.mxu0
  %v8278 = vadd.f32 %v8086, %v8277
  %v8279 = vpop.f32.mrf.mxu0
  %8280 = vmatprep.mubr.f32.mxu0 0.0
  %v8281 = vand.u32 %v6285, 4294901760
  %v8282 = vsub.f32 %v6285, %v8281
  %v8283 = vand.u32 %v8282, 4294901760
  %8284 = vmatmul.mubr.f32.gmra.mxu0 %v8283
  %v8285 = vpop.f32.mrf.mxu0
  %v8286 = vadd.f32 %v8093, %v8285
  %v8287 = vpop.f32.mrf.mxu0
  %8288 = vmatprep.mubr.f32.mxu0 0.0
  %v8289 = vand.u32 %v6288, 4294901760
  %v8290 = vsub.f32 %v6288, %v8289
  %v8291 = vand.u32 %v8290, 4294901760
  %8292 = vmatmul.mubr.f32.gmra.mxu0 %v8291
  %v8293 = vpop.f32.mrf.mxu0
  %v8294 = vadd.f32 %v8100, %v8293
  %v8295 = vpop.f32.mrf.mxu0
  %8296 = vmatprep.mubr.f32.mxu0 0.0
  %v8297 = vand.u32 %v6291, 4294901760
  %v8298 = vsub.f32 %v6291, %v8297
  %v8299 = vand.u32 %v8298, 4294901760
  %8300 = vmatmul.mubr.f32.gmra.mxu0 %v8299
  %v8301 = vpop.f32.mrf.mxu0
  %v8302 = vadd.f32 %v8107, %v8301
  %v8303 = vpop.f32.mrf.mxu0
  %8304 = vmatprep.mubr.f32.mxu0 0.0
  %v8305 = vand.u32 %v6294, 4294901760
  %v8306 = vsub.f32 %v6294, %v8305
  %v8307 = vand.u32 %v8306, 4294901760
  %8308 = vmatmul.mubr.f32.gmra.mxu0 %v8307
  %v8309 = vpop.f32.mrf.mxu0
  %v8310 = vadd.f32 %v8114, %v8309
  %v8311 = vpop.f32.mrf.mxu0
  %8312 = vmatprep.mubr.f32.mxu0 0.0
  %v8313 = vand.u32 %v6297, 4294901760
  %v8314 = vsub.f32 %v6297, %v8313
  %v8315 = vand.u32 %v8314, 4294901760
  %8316 = vmatmul.mubr.f32.gmra.mxu0 %v8315
  %v8317 = vpop.f32.mrf.mxu0
  %v8318 = vadd.f32 %v8121, %v8317
  %v8319 = vpop.f32.mrf.mxu0
  %8320 = vmatprep.mubr.f32.mxu0 0.0
  %v8321 = vand.u32 %v6300, 4294901760
  %v8322 = vsub.f32 %v6300, %v8321
  %v8323 = vand.u32 %v8322, 4294901760
  %8324 = vmatmul.mubr.f32.gmra.mxu0 %v8323
  %v8325 = vpop.f32.mrf.mxu0
  %v8326 = vadd.f32 %v8128, %v8325
  %v8327 = vpop.f32.mrf.mxu0
  %8328 = vmatprep.mubr.f32.mxu0 0.0
  %v8329 = vand.u32 %v6303, 4294901760
  %v8330 = vsub.f32 %v6303, %v8329
  %v8331 = vand.u32 %v8330, 4294901760
  %8332 = vmatmul.mubr.f32.gmra.mxu0 %v8331
  %v8333 = vpop.f32.mrf.mxu0
  %v8334 = vadd.f32 %v8135, %v8333
  %v8335 = vpop.f32.mrf.mxu0
  %8336 = vmatprep.mubr.f32.mxu0 0.0
  %v8337 = vand.u32 %v6306, 4294901760
  %v8338 = vsub.f32 %v6306, %v8337
  %v8339 = vand.u32 %v8338, 4294901760
  %8340 = vmatmul.mubr.f32.gmra.mxu0 %v8339
  %v8341 = vpop.f32.mrf.mxu0
  %v8342 = vadd.f32 %v8142, %v8341
  %v8343 = vpop.f32.mrf.mxu0
  %8344 = vmatprep.mubr.f32.mxu0 0.0
  %v8345 = vand.u32 %v6309, 4294901760
  %v8346 = vsub.f32 %v6309, %v8345
  %v8347 = vand.u32 %v8346, 4294901760
  %8348 = vmatmul.mubr.f32.gmra.mxu0 %v8347
  %v8349 = vpop.f32.mrf.mxu0
  %v8350 = vadd.f32 %v8149, %v8349
  %v8351 = vpop.f32.mrf.mxu0
  %8352 = vdwg.mxu0
  %8353 = vmatprep.subr.mxu0 0.0
  %8354 = vmatpush1.msra.mxu0 0.0
  %8355 = vmatprep.subr.mxu0 0.0
  %8356 = vmatpush1.msra.mxu0 0.0
  %8357 = vmatprep.subr.mxu0 0.0
  %8358 = vmatpush1.msra.mxu0 0.0
  %8359 = vmatprep.subr.mxu0 0.0
  %8360 = vmatpush1.msra.mxu0 0.0
  %8361 = vmatprep.subr.mxu0 0.0
  %8362 = vmatpush1.msra.mxu0 0.0
  %8363 = vmatprep.subr.mxu0 0.0
  %8364 = vmatpush1.msra.mxu0 0.0
  %8365 = vmatprep.subr.mxu0 0.0
  %8366 = vmatpush1.msra.mxu0 0.0
  %8367 = vmatprep.subr.mxu0 0.0
  %8368 = vmatpush1.msra.mxu0 0.0
  %8369 = vmatprep.subr.mxu0 0.0
  %v8370 = vand.u32 %v7517, 4294901760
  %v8371 = vsub.f32 %v7517, %v8370
  %v8372 = vand.u32 %v8371, 4294901760
  %8373 = vmatpush1.msra.mxu0 %v8372
  %8374 = vmatprep.subr.mxu0 0.0
  %v8375 = vand.u32 %v7516, 4294901760
  %v8376 = vsub.f32 %v7516, %v8375
  %v8377 = vand.u32 %v8376, 4294901760
  %8378 = vmatpush1.msra.mxu0 %v8377
  %8379 = vmatprep.subr.mxu0 0.0
  %v8380 = vand.u32 %v7515, 4294901760
  %v8381 = vsub.f32 %v7515, %v8380
  %v8382 = vand.u32 %v8381, 4294901760
  %8383 = vmatpush1.msra.mxu0 %v8382
  %8384 = vmatprep.subr.mxu0 0.0
  %v8385 = vand.u32 %v7514, 4294901760
  %v8386 = vsub.f32 %v7514, %v8385
  %v8387 = vand.u32 %v8386, 4294901760
  %8388 = vmatpush1.msra.mxu0 %v8387
  %8389 = vmatprep.subr.mxu0 0.0
  %v8390 = vand.u32 %v7513, 4294901760
  %v8391 = vsub.f32 %v7513, %v8390
  %v8392 = vand.u32 %v8391, 4294901760
  %8393 = vmatpush1.msra.mxu0 %v8392
  %8394 = vmatprep.subr.mxu0 0.0
  %v8395 = vand.u32 %v7512, 4294901760
  %v8396 = vsub.f32 %v7512, %v8395
  %v8397 = vand.u32 %v8396, 4294901760
  %8398 = vmatpush1.msra.mxu0 %v8397
  %8399 = vmatprep.subr.mxu0 0.0
  %v8400 = vand.u32 %v7511, 4294901760
  %v8401 = vsub.f32 %v7511, %v8400
  %v8402 = vand.u32 %v8401, 4294901760
  %8403 = vmatpush1.msra.mxu0 %v8402
  %8404 = vmatprep.subr.mxu0 0.0
  %v8405 = vand.u32 %v7510, 4294901760
  %v8406 = vsub.f32 %v7510, %v8405
  %v8407 = vand.u32 %v8406, 4294901760
  %8408 = vmatpush1.msra.mxu0 %v8407
  %8409 = vmatprep.subr.mxu0 0.0
  %8410 = vmatpush2.msra.mxu0 0.0
  %8411 = vmatprep.subr.mxu0 0.0
  %8412 = vmatpush2.msra.mxu0 0.0
  %8413 = vmatprep.subr.mxu0 0.0
  %8414 = vmatpush2.msra.mxu0 0.0
  %8415 = vmatprep.subr.mxu0 0.0
  %8416 = vmatpush2.msra.mxu0 0.0
  %8417 = vmatprep.subr.mxu0 0.0
  %8418 = vmatpush2.msra.mxu0 0.0
  %8419 = vmatprep.subr.mxu0 0.0
  %8420 = vmatpush2.msra.mxu0 0.0
  %8421 = vmatprep.subr.mxu0 0.0
  %8422 = vmatpush2.msra.mxu0 0.0
  %8423 = vmatprep.subr.mxu0 0.0
  %8424 = vmatpush2.msra.mxu0 0.0
  %8425 = vmatprep.subr.mxu0 0.0
  %8426 = vmatpush2.msra.mxu0 0.0
  %8427 = vmatprep.subr.mxu0 0.0
  %8428 = vmatpush2.msra.mxu0 0.0
  %8429 = vmatprep.subr.mxu0 0.0
  %8430 = vmatpush2.msra.mxu0 0.0
  %8431 = vmatprep.subr.mxu0 0.0
  %8432 = vmatpush2.msra.mxu0 0.0
  %8433 = vmatprep.subr.mxu0 0.0
  %8434 = vmatpush2.msra.mxu0 0.0
  %8435 = vmatprep.subr.mxu0 0.0
  %8436 = vmatpush2.msra.mxu0 0.0
  %8437 = vmatprep.subr.mxu0 0.0
  %8438 = vmatpush2.msra.mxu0 0.0
  %8439 = vmatprep.subr.mxu0 0.0
  %8440 = vmatpush2.msra.mxu0 0.0
  %8441 = vmatprep.mubr.f32.mxu0 0.0
  %v8442 = vand.u32 %v6264, 4294901760
  %8443 = vmatmul.mubr.f32.gmra.mxu0 %v8442
  %v8444 = vpop.f32.mrf.mxu0
  %v8445 = vadd.f32 %v8230, %v8444
  %v8446 = vpop.f32.mrf.mxu0
  %8447 = vmatprep.mubr.f32.mxu0 0.0
  %v8448 = vand.u32 %v6267, 4294901760
  %8449 = vmatmul.mubr.f32.gmra.mxu0 %v8448
  %v8450 = vpop.f32.mrf.mxu0
  %v8451 = vadd.f32 %v8238, %v8450
  %v8452 = vpop.f32.mrf.mxu0
  %8453 = vmatprep.mubr.f32.mxu0 0.0
  %v8454 = vand.u32 %v6270, 4294901760
  %8455 = vmatmul.mubr.f32.gmra.mxu0 %v8454
  %v8456 = vpop.f32.mrf.mxu0
  %v8457 = vadd.f32 %v8246, %v8456
  %v8458 = vpop.f32.mrf.mxu0
  %8459 = vmatprep.mubr.f32.mxu0 0.0
  %v8460 = vand.u32 %v6273, 4294901760
  %8461 = vmatmul.mubr.f32.gmra.mxu0 %v8460
  %v8462 = vpop.f32.mrf.mxu0
  %v8463 = vadd.f32 %v8254, %v8462
  %v8464 = vpop.f32.mrf.mxu0
  %8465 = vmatprep.mubr.f32.mxu0 0.0
  %v8466 = vand.u32 %v6276, 4294901760
  %8467 = vmatmul.mubr.f32.gmra.mxu0 %v8466
  %v8468 = vpop.f32.mrf.mxu0
  %v8469 = vadd.f32 %v8262, %v8468
  %v8470 = vpop.f32.mrf.mxu0
  %8471 = vmatprep.mubr.f32.mxu0 0.0
  %v8472 = vand.u32 %v6279, 4294901760
  %8473 = vmatmul.mubr.f32.gmra.mxu0 %v8472
  %v8474 = vpop.f32.mrf.mxu0
  %v8475 = vadd.f32 %v8270, %v8474
  %v8476 = vpop.f32.mrf.mxu0
  %8477 = vmatprep.mubr.f32.mxu0 0.0
  %v8478 = vand.u32 %v6282, 4294901760
  %8479 = vmatmul.mubr.f32.gmra.mxu0 %v8478
  %v8480 = vpop.f32.mrf.mxu0
  %v8481 = vadd.f32 %v8278, %v8480
  %v8482 = vpop.f32.mrf.mxu0
  %8483 = vmatprep.mubr.f32.mxu0 0.0
  %v8484 = vand.u32 %v6285, 4294901760
  %8485 = vmatmul.mubr.f32.gmra.mxu0 %v8484
  %v8486 = vpop.f32.mrf.mxu0
  %v8487 = vadd.f32 %v8286, %v8486
  %v8488 = vpop.f32.mrf.mxu0
  %8489 = vmatprep.mubr.f32.mxu0 0.0
  %v8490 = vand.u32 %v6288, 4294901760
  %8491 = vmatmul.mubr.f32.gmra.mxu0 %v8490
  %v8492 = vpop.f32.mrf.mxu0
  %v8493 = vadd.f32 %v8294, %v8492
  %v8494 = vpop.f32.mrf.mxu0
  %8495 = vmatprep.mubr.f32.mxu0 0.0
  %v8496 = vand.u32 %v6291, 4294901760
  %8497 = vmatmul.mubr.f32.gmra.mxu0 %v8496
  %v8498 = vpop.f32.mrf.mxu0
  %v8499 = vadd.f32 %v8302, %v8498
  %v8500 = vpop.f32.mrf.mxu0
  %8501 = vmatprep.mubr.f32.mxu0 0.0
  %v8502 = vand.u32 %v6294, 4294901760
  %8503 = vmatmul.mubr.f32.gmra.mxu0 %v8502
  %v8504 = vpop.f32.mrf.mxu0
  %v8505 = vadd.f32 %v8310, %v8504
  %v8506 = vpop.f32.mrf.mxu0
  %8507 = vmatprep.mubr.f32.mxu0 0.0
  %v8508 = vand.u32 %v6297, 4294901760
  %8509 = vmatmul.mubr.f32.gmra.mxu0 %v8508
  %v8510 = vpop.f32.mrf.mxu0
  %v8511 = vadd.f32 %v8318, %v8510
  %v8512 = vpop.f32.mrf.mxu0
  %8513 = vmatprep.mubr.f32.mxu0 0.0
  %v8514 = vand.u32 %v6300, 4294901760
  %8515 = vmatmul.mubr.f32.gmra.mxu0 %v8514
  %v8516 = vpop.f32.mrf.mxu0
  %v8517 = vadd.f32 %v8326, %v8516
  %v8518 = vpop.f32.mrf.mxu0
  %8519 = vmatprep.mubr.f32.mxu0 0.0
  %v8520 = vand.u32 %v6303, 4294901760
  %8521 = vmatmul.mubr.f32.gmra.mxu0 %v8520
  %v8522 = vpop.f32.mrf.mxu0
  %v8523 = vadd.f32 %v8334, %v8522
  %v8524 = vpop.f32.mrf.mxu0
  %8525 = vmatprep.mubr.f32.mxu0 0.0
  %v8526 = vand.u32 %v6306, 4294901760
  %8527 = vmatmul.mubr.f32.gmra.mxu0 %v8526
  %v8528 = vpop.f32.mrf.mxu0
  %v8529 = vadd.f32 %v8342, %v8528
  %v8530 = vpop.f32.mrf.mxu0
  %8531 = vmatprep.mubr.f32.mxu0 0.0
  %v8532 = vand.u32 %v6309, 4294901760
  %8533 = vmatmul.mubr.f32.gmra.mxu0 %v8532
  %v8534 = vpop.f32.mrf.mxu0
  %v8535 = vadd.f32 %v8350, %v8534
  %v8536 = vpop.f32.mrf.mxu0
  %8537 = vdwg.mxu0
  %8538 = vmatprep.subr.mxu0 0.0
  %8539 = vmatpush1.msra.mxu0 0.0
  %8540 = vmatprep.subr.mxu0 0.0
  %8541 = vmatpush1.msra.mxu0 0.0
  %8542 = vmatprep.subr.mxu0 0.0
  %8543 = vmatpush1.msra.mxu0 0.0
  %8544 = vmatprep.subr.mxu0 0.0
  %8545 = vmatpush1.msra.mxu0 0.0
  %8546 = vmatprep.subr.mxu0 0.0
  %8547 = vmatpush1.msra.mxu0 0.0
  %8548 = vmatprep.subr.mxu0 0.0
  %8549 = vmatpush1.msra.mxu0 0.0
  %8550 = vmatprep.subr.mxu0 0.0
  %8551 = vmatpush1.msra.mxu0 0.0
  %8552 = vmatprep.subr.mxu0 0.0
  %8553 = vmatpush1.msra.mxu0 0.0
  %8554 = vmatprep.subr.mxu0 0.0
  %v8555 = vand.u32 %v7517, 4294901760
  %8556 = vmatpush1.msra.mxu0 %v8555
  %8557 = vmatprep.subr.mxu0 0.0
  %v8558 = vand.u32 %v7516, 4294901760
  %8559 = vmatpush1.msra.mxu0 %v8558
  %8560 = vmatprep.subr.mxu0 0.0
  %v8561 = vand.u32 %v7515, 4294901760
  %8562 = vmatpush1.msra.mxu0 %v8561
  %8563 = vmatprep.subr.mxu0 0.0
  %v8564 = vand.u32 %v7514, 4294901760
  %8565 = vmatpush1.msra.mxu0 %v8564
  %8566 = vmatprep.subr.mxu0 0.0
  %v8567 = vand.u32 %v7513, 4294901760
  %8568 = vmatpush1.msra.mxu0 %v8567
  %8569 = vmatprep.subr.mxu0 0.0
  %v8570 = vand.u32 %v7512, 4294901760
  %8571 = vmatpush1.msra.mxu0 %v8570
  %8572 = vmatprep.subr.mxu0 0.0
  %v8573 = vand.u32 %v7511, 4294901760
  %8574 = vmatpush1.msra.mxu0 %v8573
  %8575 = vmatprep.subr.mxu0 0.0
  %v8576 = vand.u32 %v7510, 4294901760
  %8577 = vmatpush1.msra.mxu0 %v8576
  %8578 = vmatprep.subr.mxu0 0.0
  %8579 = vmatpush2.msra.mxu0 0.0
  %8580 = vmatprep.subr.mxu0 0.0
  %8581 = vmatpush2.msra.mxu0 0.0
  %8582 = vmatprep.subr.mxu0 0.0
  %8583 = vmatpush2.msra.mxu0 0.0
  %8584 = vmatprep.subr.mxu0 0.0
  %8585 = vmatpush2.msra.mxu0 0.0
  %8586 = vmatprep.subr.mxu0 0.0
  %8587 = vmatpush2.msra.mxu0 0.0
  %8588 = vmatprep.subr.mxu0 0.0
  %8589 = vmatpush2.msra.mxu0 0.0
  %8590 = vmatprep.subr.mxu0 0.0
  %8591 = vmatpush2.msra.mxu0 0.0
  %8592 = vmatprep.subr.mxu0 0.0
  %8593 = vmatpush2.msra.mxu0 0.0
  %8594 = vmatprep.subr.mxu0 0.0
  %8595 = vmatpush2.msra.mxu0 0.0
  %8596 = vmatprep.subr.mxu0 0.0
  %8597 = vmatpush2.msra.mxu0 0.0
  %8598 = vmatprep.subr.mxu0 0.0
  %8599 = vmatpush2.msra.mxu0 0.0
  %8600 = vmatprep.subr.mxu0 0.0
  %8601 = vmatpush2.msra.mxu0 0.0
  %8602 = vmatprep.subr.mxu0 0.0
  %8603 = vmatpush2.msra.mxu0 0.0
  %8604 = vmatprep.subr.mxu0 0.0
  %8605 = vmatpush2.msra.mxu0 0.0
  %8606 = vmatprep.subr.mxu0 0.0
  %8607 = vmatpush2.msra.mxu0 0.0
  %8608 = vmatprep.subr.mxu0 0.0
  %8609 = vmatpush2.msra.mxu0 0.0
  %8610 = vmatprep.mubr.f32.mxu0 0.0
  %v8611 = vand.u32 %v6264, 4294901760
  %8612 = vmatmul.mubr.f32.gmra.mxu0 %v8611
  %v8613 = vpop.f32.mrf.mxu0
  %v8614 = vadd.f32 %v8445, %v8613
  %v8615 = vpop.f32.mrf.mxu0
  %8616 = vmatprep.mubr.f32.mxu0 0.0
  %v8617 = vand.u32 %v6267, 4294901760
  %8618 = vmatmul.mubr.f32.gmra.mxu0 %v8617
  %v8619 = vpop.f32.mrf.mxu0
  %v8620 = vadd.f32 %v8451, %v8619
  %v8621 = vpop.f32.mrf.mxu0
  %8622 = vmatprep.mubr.f32.mxu0 0.0
  %v8623 = vand.u32 %v6270, 4294901760
  %8624 = vmatmul.mubr.f32.gmra.mxu0 %v8623
  %v8625 = vpop.f32.mrf.mxu0
  %v8626 = vadd.f32 %v8457, %v8625
  %v8627 = vpop.f32.mrf.mxu0
  %8628 = vmatprep.mubr.f32.mxu0 0.0
  %v8629 = vand.u32 %v6273, 4294901760
  %8630 = vmatmul.mubr.f32.gmra.mxu0 %v8629
  %v8631 = vpop.f32.mrf.mxu0
  %v8632 = vadd.f32 %v8463, %v8631
  %v8633 = vpop.f32.mrf.mxu0
  %8634 = vmatprep.mubr.f32.mxu0 0.0
  %v8635 = vand.u32 %v6276, 4294901760
  %8636 = vmatmul.mubr.f32.gmra.mxu0 %v8635
  %v8637 = vpop.f32.mrf.mxu0
  %v8638 = vadd.f32 %v8469, %v8637
  %v8639 = vpop.f32.mrf.mxu0
  %8640 = vmatprep.mubr.f32.mxu0 0.0
  %v8641 = vand.u32 %v6279, 4294901760
  %8642 = vmatmul.mubr.f32.gmra.mxu0 %v8641
  %v8643 = vpop.f32.mrf.mxu0
  %v8644 = vadd.f32 %v8475, %v8643
  %v8645 = vpop.f32.mrf.mxu0
  %8646 = vmatprep.mubr.f32.mxu0 0.0
  %v8647 = vand.u32 %v6282, 4294901760
  %8648 = vmatmul.mubr.f32.gmra.mxu0 %v8647
  %v8649 = vpop.f32.mrf.mxu0
  %v8650 = vadd.f32 %v8481, %v8649
  %v8651 = vpop.f32.mrf.mxu0
  %8652 = vmatprep.mubr.f32.mxu0 0.0
  %v8653 = vand.u32 %v6285, 4294901760
  %8654 = vmatmul.mubr.f32.gmra.mxu0 %v8653
  %v8655 = vpop.f32.mrf.mxu0
  %v8656 = vadd.f32 %v8487, %v8655
  %v8657 = vpop.f32.mrf.mxu0
  %8658 = vmatprep.mubr.f32.mxu0 0.0
  %v8659 = vand.u32 %v6288, 4294901760
  %8660 = vmatmul.mubr.f32.gmra.mxu0 %v8659
  %v8661 = vpop.f32.mrf.mxu0
  %v8662 = vadd.f32 %v8493, %v8661
  %v8663 = vpop.f32.mrf.mxu0
  %8664 = vmatprep.mubr.f32.mxu0 0.0
  %v8665 = vand.u32 %v6291, 4294901760
  %8666 = vmatmul.mubr.f32.gmra.mxu0 %v8665
  %v8667 = vpop.f32.mrf.mxu0
  %v8668 = vadd.f32 %v8499, %v8667
  %v8669 = vpop.f32.mrf.mxu0
  %8670 = vmatprep.mubr.f32.mxu0 0.0
  %v8671 = vand.u32 %v6294, 4294901760
  %8672 = vmatmul.mubr.f32.gmra.mxu0 %v8671
  %v8673 = vpop.f32.mrf.mxu0
  %v8674 = vadd.f32 %v8505, %v8673
  %v8675 = vpop.f32.mrf.mxu0
  %8676 = vmatprep.mubr.f32.mxu0 0.0
  %v8677 = vand.u32 %v6297, 4294901760
  %8678 = vmatmul.mubr.f32.gmra.mxu0 %v8677
  %v8679 = vpop.f32.mrf.mxu0
  %v8680 = vadd.f32 %v8511, %v8679
  %v8681 = vpop.f32.mrf.mxu0
  %8682 = vmatprep.mubr.f32.mxu0 0.0
  %v8683 = vand.u32 %v6300, 4294901760
  %8684 = vmatmul.mubr.f32.gmra.mxu0 %v8683
  %v8685 = vpop.f32.mrf.mxu0
  %v8686 = vadd.f32 %v8517, %v8685
  %v8687 = vpop.f32.mrf.mxu0
  %8688 = vmatprep.mubr.f32.mxu0 0.0
  %v8689 = vand.u32 %v6303, 4294901760
  %8690 = vmatmul.mubr.f32.gmra.mxu0 %v8689
  %v8691 = vpop.f32.mrf.mxu0
  %v8692 = vadd.f32 %v8523, %v8691
  %v8693 = vpop.f32.mrf.mxu0
  %8694 = vmatprep.mubr.f32.mxu0 0.0
  %v8695 = vand.u32 %v6306, 4294901760
  %8696 = vmatmul.mubr.f32.gmra.mxu0 %v8695
  %v8697 = vpop.f32.mrf.mxu0
  %v8698 = vadd.f32 %v8529, %v8697
  %v8699 = vpop.f32.mrf.mxu0
  %8700 = vmatprep.mubr.f32.mxu0 0.0
  %v8701 = vand.u32 %v6309, 4294901760
  %8702 = vmatmul.mubr.f32.gmra.mxu0 %v8701
  %v8703 = vpop.f32.mrf.mxu0
  %v8704 = vadd.f32 %v8535, %v8703
  %v8705 = vpop.f32.mrf.mxu0
  %8706 = vdwg.mxu0
  %v8707 = vld [vmem:[%s15] sm:$0xff]
  %v8708 = vld [vmem:[%s15 + $0x8] sm:$0xff]
  %v8709 = vld [vmem:[%s15 + $0x10] sm:$0xff]
  %v8710 = vld [vmem:[%s15 + $0x18] sm:$0xff]
  %v8711 = vld [vmem:[%s15 + $0x20] sm:$0xff]
  %v8712 = vld [vmem:[%s15 + $0x28] sm:$0xff]
  %v8713 = vld [vmem:[%s15 + $0x30] sm:$0xff]
  %v8714 = vld [vmem:[%s15 + $0x38] sm:$0xff]
  %v8715 = vld [vmem:[%s16] sm:$0xff]
  %v8716 = vld [vmem:[%s16 + $0x8] sm:$0x7f]
  %vm8717 = vcmask 121856
  %v8719 = vsel %vm8717, %v85, 0
  %v8722 = vsel %vm8717, %v86, 0
  %v8725 = vsel %vm8717, %v87, 0
  %v8728 = vsel %vm8717, %v88, 0
  %v8731 = vsel %vm8717, %v89, 0
  %v8734 = vsel %vm8717, %v90, 0
  %v8737 = vsel %vm8717, %v91, 0
  %v8740 = vsel %vm8717, %v92, 0
  %v8743 = vsel %vm8717, %v93, 0
  %v8746 = vsel %vm8717, %v94, 0
  %v8749 = vsel %vm8717, %v95, 0
  %v8752 = vsel %vm8717, %v96, 0
  %v8755 = vsel %vm8717, %v97, 0
  %v8758 = vsel %vm8717, %v98, 0
  %v8761 = vsel %vm8717, %v99, 0
  %v8764 = vsel %vm8717, %v100, 0
  %vm8766 = vcmask 1046528
  %v8768 = vsel %vm8766, %v8716, 0
  %8770 = vmatprep.subr.mxu0 0.0
  %8771 = vmatpush1.msra.mxu0 0.0
  %8772 = vmatprep.subr.mxu0 0.0
  %8773 = vmatpush1.msra.mxu0 0.0
  %8774 = vmatprep.subr.mxu0 0.0
  %8775 = vmatpush1.msra.mxu0 0.0
  %8776 = vmatprep.subr.mxu0 0.0
  %8777 = vmatpush1.msra.mxu0 0.0
  %8778 = vmatprep.subr.mxu0 0.0
  %8779 = vmatpush1.msra.mxu0 0.0
  %8780 = vmatprep.subr.mxu0 0.0
  %8781 = vmatpush1.msra.mxu0 0.0
  %8782 = vmatprep.subr.mxu0 0.0
  %8783 = vmatpush1.msra.mxu0 0.0
  %8784 = vmatprep.subr.mxu0 0.0
  %8785 = vmatpush1.msra.mxu0 0.0
  %8786 = vmatprep.subr.mxu0 0.0
  %8787 = vmatpush1.msra.mxu0 0.0
  %8788 = vmatprep.subr.mxu0 0.0
  %8789 = vmatpush1.msra.mxu0 0.0
  %8790 = vmatprep.subr.mxu0 0.0
  %8791 = vmatpush1.msra.mxu0 0.0
  %8792 = vmatprep.subr.mxu0 0.0
  %8793 = vmatpush1.msra.mxu0 0.0
  %8794 = vmatprep.subr.mxu0 0.0
  %8795 = vmatpush1.msra.mxu0 0.0
  %8796 = vmatprep.subr.mxu0 0.0
  %8797 = vmatpush1.msra.mxu0 0.0
  %8798 = vmatprep.subr.mxu0 0.0
  %v8799 = vand.u32 %v8768, 4294901760
  %8800 = vmatpush1.msra.mxu0 %v8799
  %8801 = vmatprep.subr.mxu0 0.0
  %v8802 = vand.u32 %v8715, 4294901760
  %8803 = vmatpush1.msra.mxu0 %v8802
  %8804 = vmatprep.subr.mxu0 0.0
  %8805 = vmatpush2.msra.mxu0 0.0
  %8806 = vmatprep.subr.mxu0 0.0
  %8807 = vmatpush2.msra.mxu0 0.0
  %8808 = vmatprep.subr.mxu0 0.0
  %8809 = vmatpush2.msra.mxu0 0.0
  %8810 = vmatprep.subr.mxu0 0.0
  %8811 = vmatpush2.msra.mxu0 0.0
  %8812 = vmatprep.subr.mxu0 0.0
  %8813 = vmatpush2.msra.mxu0 0.0
  %8814 = vmatprep.subr.mxu0 0.0
  %8815 = vmatpush2.msra.mxu0 0.0
  %8816 = vmatprep.subr.mxu0 0.0
  %8817 = vmatpush2.msra.mxu0 0.0
  %8818 = vmatprep.subr.mxu0 0.0
  %8819 = vmatpush2.msra.mxu0 0.0
  %8820 = vmatprep.subr.mxu0 0.0
  %8821 = vmatpush2.msra.mxu0 0.0
  %8822 = vmatprep.subr.mxu0 0.0
  %8823 = vmatpush2.msra.mxu0 0.0
  %8824 = vmatprep.subr.mxu0 0.0
  %8825 = vmatpush2.msra.mxu0 0.0
  %8826 = vmatprep.subr.mxu0 0.0
  %8827 = vmatpush2.msra.mxu0 0.0
  %8828 = vmatprep.subr.mxu0 0.0
  %8829 = vmatpush2.msra.mxu0 0.0
  %8830 = vmatprep.subr.mxu0 0.0
  %8831 = vmatpush2.msra.mxu0 0.0
  %8832 = vmatprep.subr.mxu0 0.0
  %8833 = vmatpush2.msra.mxu0 0.0
  %8834 = vmatprep.subr.mxu0 0.0
  %8835 = vmatpush2.msra.mxu0 0.0
  %8836 = vmatprep.mubr.f32.mxu0 0.0
  %v8837 = vand.u32 %v8719, 4294901760
  %v8838 = vsub.f32 %v8719, %v8837
  %v8839 = vand.u32 %v8838, 4294901760
  %v8840 = vsub.f32 %v8838, %v8839
  %v8841 = vand.u32 %v8840, 4294901760
  %8842 = vmatmul.mubr.f32.gmra.mxu0 %v8841
  %v8843 = vpop.f32.mrf.mxu0
  %v8844 = vadd.f32 0.0, %v8843
  %v8845 = vpop.f32.mrf.mxu0
  %8846 = vmatprep.mubr.f32.mxu0 0.0
  %v8847 = vand.u32 %v8722, 4294901760
  %v8848 = vsub.f32 %v8722, %v8847
  %v8849 = vand.u32 %v8848, 4294901760
  %v8850 = vsub.f32 %v8848, %v8849
  %v8851 = vand.u32 %v8850, 4294901760
  %8852 = vmatmul.mubr.f32.gmra.mxu0 %v8851
  %v8853 = vpop.f32.mrf.mxu0
  %v8854 = vadd.f32 0.0, %v8853
  %v8855 = vpop.f32.mrf.mxu0
  %8856 = vmatprep.mubr.f32.mxu0 0.0
  %v8857 = vand.u32 %v8725, 4294901760
  %v8858 = vsub.f32 %v8725, %v8857
  %v8859 = vand.u32 %v8858, 4294901760
  %v8860 = vsub.f32 %v8858, %v8859
  %v8861 = vand.u32 %v8860, 4294901760
  %8862 = vmatmul.mubr.f32.gmra.mxu0 %v8861
  %v8863 = vpop.f32.mrf.mxu0
  %v8864 = vadd.f32 0.0, %v8863
  %v8865 = vpop.f32.mrf.mxu0
  %8866 = vmatprep.mubr.f32.mxu0 0.0
  %v8867 = vand.u32 %v8728, 4294901760
  %v8868 = vsub.f32 %v8728, %v8867
  %v8869 = vand.u32 %v8868, 4294901760
  %v8870 = vsub.f32 %v8868, %v8869
  %v8871 = vand.u32 %v8870, 4294901760
  %8872 = vmatmul.mubr.f32.gmra.mxu0 %v8871
  %v8873 = vpop.f32.mrf.mxu0
  %v8874 = vadd.f32 0.0, %v8873
  %v8875 = vpop.f32.mrf.mxu0
  %8876 = vmatprep.mubr.f32.mxu0 0.0
  %v8877 = vand.u32 %v8731, 4294901760
  %v8878 = vsub.f32 %v8731, %v8877
  %v8879 = vand.u32 %v8878, 4294901760
  %v8880 = vsub.f32 %v8878, %v8879
  %v8881 = vand.u32 %v8880, 4294901760
  %8882 = vmatmul.mubr.f32.gmra.mxu0 %v8881
  %v8883 = vpop.f32.mrf.mxu0
  %v8884 = vadd.f32 0.0, %v8883
  %v8885 = vpop.f32.mrf.mxu0
  %8886 = vmatprep.mubr.f32.mxu0 0.0
  %v8887 = vand.u32 %v8734, 4294901760
  %v8888 = vsub.f32 %v8734, %v8887
  %v8889 = vand.u32 %v8888, 4294901760
  %v8890 = vsub.f32 %v8888, %v8889
  %v8891 = vand.u32 %v8890, 4294901760
  %8892 = vmatmul.mubr.f32.gmra.mxu0 %v8891
  %v8893 = vpop.f32.mrf.mxu0
  %v8894 = vadd.f32 0.0, %v8893
  %v8895 = vpop.f32.mrf.mxu0
  %8896 = vmatprep.mubr.f32.mxu0 0.0
  %v8897 = vand.u32 %v8737, 4294901760
  %v8898 = vsub.f32 %v8737, %v8897
  %v8899 = vand.u32 %v8898, 4294901760
  %v8900 = vsub.f32 %v8898, %v8899
  %v8901 = vand.u32 %v8900, 4294901760
  %8902 = vmatmul.mubr.f32.gmra.mxu0 %v8901
  %v8903 = vpop.f32.mrf.mxu0
  %v8904 = vadd.f32 0.0, %v8903
  %v8905 = vpop.f32.mrf.mxu0
  %8906 = vmatprep.mubr.f32.mxu0 0.0
  %v8907 = vand.u32 %v8740, 4294901760
  %v8908 = vsub.f32 %v8740, %v8907
  %v8909 = vand.u32 %v8908, 4294901760
  %v8910 = vsub.f32 %v8908, %v8909
  %v8911 = vand.u32 %v8910, 4294901760
  %8912 = vmatmul.mubr.f32.gmra.mxu0 %v8911
  %v8913 = vpop.f32.mrf.mxu0
  %v8914 = vadd.f32 0.0, %v8913
  %v8915 = vpop.f32.mrf.mxu0
  %8916 = vmatprep.mubr.f32.mxu0 0.0
  %v8917 = vand.u32 %v8743, 4294901760
  %v8918 = vsub.f32 %v8743, %v8917
  %v8919 = vand.u32 %v8918, 4294901760
  %v8920 = vsub.f32 %v8918, %v8919
  %v8921 = vand.u32 %v8920, 4294901760
  %8922 = vmatmul.mubr.f32.gmra.mxu0 %v8921
  %v8923 = vpop.f32.mrf.mxu0
  %v8924 = vadd.f32 0.0, %v8923
  %v8925 = vpop.f32.mrf.mxu0
  %8926 = vmatprep.mubr.f32.mxu0 0.0
  %v8927 = vand.u32 %v8746, 4294901760
  %v8928 = vsub.f32 %v8746, %v8927
  %v8929 = vand.u32 %v8928, 4294901760
  %v8930 = vsub.f32 %v8928, %v8929
  %v8931 = vand.u32 %v8930, 4294901760
  %8932 = vmatmul.mubr.f32.gmra.mxu0 %v8931
  %v8933 = vpop.f32.mrf.mxu0
  %v8934 = vadd.f32 0.0, %v8933
  %v8935 = vpop.f32.mrf.mxu0
  %8936 = vmatprep.mubr.f32.mxu0 0.0
  %v8937 = vand.u32 %v8749, 4294901760
  %v8938 = vsub.f32 %v8749, %v8937
  %v8939 = vand.u32 %v8938, 4294901760
  %v8940 = vsub.f32 %v8938, %v8939
  %v8941 = vand.u32 %v8940, 4294901760
  %8942 = vmatmul.mubr.f32.gmra.mxu0 %v8941
  %v8943 = vpop.f32.mrf.mxu0
  %v8944 = vadd.f32 0.0, %v8943
  %v8945 = vpop.f32.mrf.mxu0
  %8946 = vmatprep.mubr.f32.mxu0 0.0
  %v8947 = vand.u32 %v8752, 4294901760
  %v8948 = vsub.f32 %v8752, %v8947
  %v8949 = vand.u32 %v8948, 4294901760
  %v8950 = vsub.f32 %v8948, %v8949
  %v8951 = vand.u32 %v8950, 4294901760
  %8952 = vmatmul.mubr.f32.gmra.mxu0 %v8951
  %v8953 = vpop.f32.mrf.mxu0
  %v8954 = vadd.f32 0.0, %v8953
  %v8955 = vpop.f32.mrf.mxu0
  %8956 = vmatprep.mubr.f32.mxu0 0.0
  %v8957 = vand.u32 %v8755, 4294901760
  %v8958 = vsub.f32 %v8755, %v8957
  %v8959 = vand.u32 %v8958, 4294901760
  %v8960 = vsub.f32 %v8958, %v8959
  %v8961 = vand.u32 %v8960, 4294901760
  %8962 = vmatmul.mubr.f32.gmra.mxu0 %v8961
  %v8963 = vpop.f32.mrf.mxu0
  %v8964 = vadd.f32 0.0, %v8963
  %v8965 = vpop.f32.mrf.mxu0
  %8966 = vmatprep.mubr.f32.mxu0 0.0
  %v8967 = vand.u32 %v8758, 4294901760
  %v8968 = vsub.f32 %v8758, %v8967
  %v8969 = vand.u32 %v8968, 4294901760
  %v8970 = vsub.f32 %v8968, %v8969
  %v8971 = vand.u32 %v8970, 4294901760
  %8972 = vmatmul.mubr.f32.gmra.mxu0 %v8971
  %v8973 = vpop.f32.mrf.mxu0
  %v8974 = vadd.f32 0.0, %v8973
  %v8975 = vpop.f32.mrf.mxu0
  %8976 = vmatprep.mubr.f32.mxu0 0.0
  %v8977 = vand.u32 %v8761, 4294901760
  %v8978 = vsub.f32 %v8761, %v8977
  %v8979 = vand.u32 %v8978, 4294901760
  %v8980 = vsub.f32 %v8978, %v8979
  %v8981 = vand.u32 %v8980, 4294901760
  %8982 = vmatmul.mubr.f32.gmra.mxu0 %v8981
  %v8983 = vpop.f32.mrf.mxu0
  %v8984 = vadd.f32 0.0, %v8983
  %v8985 = vpop.f32.mrf.mxu0
  %8986 = vmatprep.mubr.f32.mxu0 0.0
  %v8987 = vand.u32 %v8764, 4294901760
  %v8988 = vsub.f32 %v8764, %v8987
  %v8989 = vand.u32 %v8988, 4294901760
  %v8990 = vsub.f32 %v8988, %v8989
  %v8991 = vand.u32 %v8990, 4294901760
  %8992 = vmatmul.mubr.f32.gmra.mxu0 %v8991
  %v8993 = vpop.f32.mrf.mxu0
  %v8994 = vadd.f32 0.0, %v8993
  %v8995 = vpop.f32.mrf.mxu0
  %8996 = vdwg.mxu0
  %8997 = vmatprep.subr.mxu0 0.0
  %8998 = vmatpush1.msra.mxu0 0.0
  %8999 = vmatprep.subr.mxu0 0.0
  %9000 = vmatpush1.msra.mxu0 0.0
  %9001 = vmatprep.subr.mxu0 0.0
  %9002 = vmatpush1.msra.mxu0 0.0
  %9003 = vmatprep.subr.mxu0 0.0
  %9004 = vmatpush1.msra.mxu0 0.0
  %9005 = vmatprep.subr.mxu0 0.0
  %9006 = vmatpush1.msra.mxu0 0.0
  %9007 = vmatprep.subr.mxu0 0.0
  %9008 = vmatpush1.msra.mxu0 0.0
  %9009 = vmatprep.subr.mxu0 0.0
  %9010 = vmatpush1.msra.mxu0 0.0
  %9011 = vmatprep.subr.mxu0 0.0
  %9012 = vmatpush1.msra.mxu0 0.0
  %9013 = vmatprep.subr.mxu0 0.0
  %9014 = vmatpush1.msra.mxu0 0.0
  %9015 = vmatprep.subr.mxu0 0.0
  %9016 = vmatpush1.msra.mxu0 0.0
  %9017 = vmatprep.subr.mxu0 0.0
  %9018 = vmatpush1.msra.mxu0 0.0
  %9019 = vmatprep.subr.mxu0 0.0
  %9020 = vmatpush1.msra.mxu0 0.0
  %9021 = vmatprep.subr.mxu0 0.0
  %9022 = vmatpush1.msra.mxu0 0.0
  %9023 = vmatprep.subr.mxu0 0.0
  %9024 = vmatpush1.msra.mxu0 0.0
  %9025 = vmatprep.subr.mxu0 0.0
  %v9026 = vand.u32 %v8768, 4294901760
  %v9027 = vsub.f32 %v8768, %v9026
  %v9028 = vand.u32 %v9027, 4294901760
  %v9029 = vsub.f32 %v9027, %v9028
  %v9030 = vand.u32 %v9029, 4294901760
  %9031 = vmatpush1.msra.mxu0 %v9030
  %9032 = vmatprep.subr.mxu0 0.0
  %v9033 = vand.u32 %v8715, 4294901760
  %v9034 = vsub.f32 %v8715, %v9033
  %v9035 = vand.u32 %v9034, 4294901760
  %v9036 = vsub.f32 %v9034, %v9035
  %v9037 = vand.u32 %v9036, 4294901760
  %9038 = vmatpush1.msra.mxu0 %v9037
  %9039 = vmatprep.subr.mxu0 0.0
  %9040 = vmatpush2.msra.mxu0 0.0
  %9041 = vmatprep.subr.mxu0 0.0
  %9042 = vmatpush2.msra.mxu0 0.0
  %9043 = vmatprep.subr.mxu0 0.0
  %9044 = vmatpush2.msra.mxu0 0.0
  %9045 = vmatprep.subr.mxu0 0.0
  %9046 = vmatpush2.msra.mxu0 0.0
  %9047 = vmatprep.subr.mxu0 0.0
  %9048 = vmatpush2.msra.mxu0 0.0
  %9049 = vmatprep.subr.mxu0 0.0
  %9050 = vmatpush2.msra.mxu0 0.0
  %9051 = vmatprep.subr.mxu0 0.0
  %9052 = vmatpush2.msra.mxu0 0.0
  %9053 = vmatprep.subr.mxu0 0.0
  %9054 = vmatpush2.msra.mxu0 0.0
  %9055 = vmatprep.subr.mxu0 0.0
  %9056 = vmatpush2.msra.mxu0 0.0
  %9057 = vmatprep.subr.mxu0 0.0
  %9058 = vmatpush2.msra.mxu0 0.0
  %9059 = vmatprep.subr.mxu0 0.0
  %9060 = vmatpush2.msra.mxu0 0.0
  %9061 = vmatprep.subr.mxu0 0.0
  %9062 = vmatpush2.msra.mxu0 0.0
  %9063 = vmatprep.subr.mxu0 0.0
  %9064 = vmatpush2.msra.mxu0 0.0
  %9065 = vmatprep.subr.mxu0 0.0
  %9066 = vmatpush2.msra.mxu0 0.0
  %9067 = vmatprep.subr.mxu0 0.0
  %9068 = vmatpush2.msra.mxu0 0.0
  %9069 = vmatprep.subr.mxu0 0.0
  %9070 = vmatpush2.msra.mxu0 0.0
  %9071 = vmatprep.mubr.f32.mxu0 0.0
  %v9072 = vand.u32 %v8719, 4294901760
  %9073 = vmatmul.mubr.f32.gmra.mxu0 %v9072
  %v9074 = vpop.f32.mrf.mxu0
  %v9075 = vadd.f32 %v8844, %v9074
  %v9076 = vpop.f32.mrf.mxu0
  %9077 = vmatprep.mubr.f32.mxu0 0.0
  %v9078 = vand.u32 %v8722, 4294901760
  %9079 = vmatmul.mubr.f32.gmra.mxu0 %v9078
  %v9080 = vpop.f32.mrf.mxu0
  %v9081 = vadd.f32 %v8854, %v9080
  %v9082 = vpop.f32.mrf.mxu0
  %9083 = vmatprep.mubr.f32.mxu0 0.0
  %v9084 = vand.u32 %v8725, 4294901760
  %9085 = vmatmul.mubr.f32.gmra.mxu0 %v9084
  %v9086 = vpop.f32.mrf.mxu0
  %v9087 = vadd.f32 %v8864, %v9086
  %v9088 = vpop.f32.mrf.mxu0
  %9089 = vmatprep.mubr.f32.mxu0 0.0
  %v9090 = vand.u32 %v8728, 4294901760
  %9091 = vmatmul.mubr.f32.gmra.mxu0 %v9090
  %v9092 = vpop.f32.mrf.mxu0
  %v9093 = vadd.f32 %v8874, %v9092
  %v9094 = vpop.f32.mrf.mxu0
  %9095 = vmatprep.mubr.f32.mxu0 0.0
  %v9096 = vand.u32 %v8731, 4294901760
  %9097 = vmatmul.mubr.f32.gmra.mxu0 %v9096
  %v9098 = vpop.f32.mrf.mxu0
  %v9099 = vadd.f32 %v8884, %v9098
  %v9100 = vpop.f32.mrf.mxu0
  %9101 = vmatprep.mubr.f32.mxu0 0.0
  %v9102 = vand.u32 %v8734, 4294901760
  %9103 = vmatmul.mubr.f32.gmra.mxu0 %v9102
  %v9104 = vpop.f32.mrf.mxu0
  %v9105 = vadd.f32 %v8894, %v9104
  %v9106 = vpop.f32.mrf.mxu0
  %9107 = vmatprep.mubr.f32.mxu0 0.0
  %v9108 = vand.u32 %v8737, 4294901760
  %9109 = vmatmul.mubr.f32.gmra.mxu0 %v9108
  %v9110 = vpop.f32.mrf.mxu0
  %v9111 = vadd.f32 %v8904, %v9110
  %v9112 = vpop.f32.mrf.mxu0
  %9113 = vmatprep.mubr.f32.mxu0 0.0
  %v9114 = vand.u32 %v8740, 4294901760
  %9115 = vmatmul.mubr.f32.gmra.mxu0 %v9114
  %v9116 = vpop.f32.mrf.mxu0
  %v9117 = vadd.f32 %v8914, %v9116
  %v9118 = vpop.f32.mrf.mxu0
  %9119 = vmatprep.mubr.f32.mxu0 0.0
  %v9120 = vand.u32 %v8743, 4294901760
  %9121 = vmatmul.mubr.f32.gmra.mxu0 %v9120
  %v9122 = vpop.f32.mrf.mxu0
  %v9123 = vadd.f32 %v8924, %v9122
  %v9124 = vpop.f32.mrf.mxu0
  %9125 = vmatprep.mubr.f32.mxu0 0.0
  %v9126 = vand.u32 %v8746, 4294901760
  %9127 = vmatmul.mubr.f32.gmra.mxu0 %v9126
  %v9128 = vpop.f32.mrf.mxu0
  %v9129 = vadd.f32 %v8934, %v9128
  %v9130 = vpop.f32.mrf.mxu0
  %9131 = vmatprep.mubr.f32.mxu0 0.0
  %v9132 = vand.u32 %v8749, 4294901760
  %9133 = vmatmul.mubr.f32.gmra.mxu0 %v9132
  %v9134 = vpop.f32.mrf.mxu0
  %v9135 = vadd.f32 %v8944, %v9134
  %v9136 = vpop.f32.mrf.mxu0
  %9137 = vmatprep.mubr.f32.mxu0 0.0
  %v9138 = vand.u32 %v8752, 4294901760
  %9139 = vmatmul.mubr.f32.gmra.mxu0 %v9138
  %v9140 = vpop.f32.mrf.mxu0
  %v9141 = vadd.f32 %v8954, %v9140
  %v9142 = vpop.f32.mrf.mxu0
  %9143 = vmatprep.mubr.f32.mxu0 0.0
  %v9144 = vand.u32 %v8755, 4294901760
  %9145 = vmatmul.mubr.f32.gmra.mxu0 %v9144
  %v9146 = vpop.f32.mrf.mxu0
  %v9147 = vadd.f32 %v8964, %v9146
  %v9148 = vpop.f32.mrf.mxu0
  %9149 = vmatprep.mubr.f32.mxu0 0.0
  %v9150 = vand.u32 %v8758, 4294901760
  %9151 = vmatmul.mubr.f32.gmra.mxu0 %v9150
  %v9152 = vpop.f32.mrf.mxu0
  %v9153 = vadd.f32 %v8974, %v9152
  %v9154 = vpop.f32.mrf.mxu0
  %9155 = vmatprep.mubr.f32.mxu0 0.0
  %v9156 = vand.u32 %v8761, 4294901760
  %9157 = vmatmul.mubr.f32.gmra.mxu0 %v9156
  %v9158 = vpop.f32.mrf.mxu0
  %v9159 = vadd.f32 %v8984, %v9158
  %v9160 = vpop.f32.mrf.mxu0
  %9161 = vmatprep.mubr.f32.mxu0 0.0
  %v9162 = vand.u32 %v8764, 4294901760
  %9163 = vmatmul.mubr.f32.gmra.mxu0 %v9162
  %v9164 = vpop.f32.mrf.mxu0
  %v9165 = vadd.f32 %v8994, %v9164
  %v9166 = vpop.f32.mrf.mxu0
  %9167 = vdwg.mxu0
  %9168 = vmatprep.subr.mxu0 0.0
  %9169 = vmatpush1.msra.mxu0 0.0
  %9170 = vmatprep.subr.mxu0 0.0
  %9171 = vmatpush1.msra.mxu0 0.0
  %9172 = vmatprep.subr.mxu0 0.0
  %9173 = vmatpush1.msra.mxu0 0.0
  %9174 = vmatprep.subr.mxu0 0.0
  %9175 = vmatpush1.msra.mxu0 0.0
  %9176 = vmatprep.subr.mxu0 0.0
  %9177 = vmatpush1.msra.mxu0 0.0
  %9178 = vmatprep.subr.mxu0 0.0
  %9179 = vmatpush1.msra.mxu0 0.0
  %9180 = vmatprep.subr.mxu0 0.0
  %9181 = vmatpush1.msra.mxu0 0.0
  %9182 = vmatprep.subr.mxu0 0.0
  %9183 = vmatpush1.msra.mxu0 0.0
  %9184 = vmatprep.subr.mxu0 0.0
  %9185 = vmatpush1.msra.mxu0 0.0
  %9186 = vmatprep.subr.mxu0 0.0
  %9187 = vmatpush1.msra.mxu0 0.0
  %9188 = vmatprep.subr.mxu0 0.0
  %9189 = vmatpush1.msra.mxu0 0.0
  %9190 = vmatprep.subr.mxu0 0.0
  %9191 = vmatpush1.msra.mxu0 0.0
  %9192 = vmatprep.subr.mxu0 0.0
  %9193 = vmatpush1.msra.mxu0 0.0
  %9194 = vmatprep.subr.mxu0 0.0
  %9195 = vmatpush1.msra.mxu0 0.0
  %9196 = vmatprep.subr.mxu0 0.0
  %v9197 = vand.u32 %v8768, 4294901760
  %v9198 = vsub.f32 %v8768, %v9197
  %9199 = vmatpush1.msra.mxu0 %v9198
  %9200 = vmatprep.subr.mxu0 0.0
  %v9201 = vand.u32 %v8715, 4294901760
  %v9202 = vsub.f32 %v8715, %v9201
  %9203 = vmatpush1.msra.mxu0 %v9202
  %9204 = vmatprep.subr.mxu0 0.0
  %9205 = vmatpush2.msra.mxu0 0.0
  %9206 = vmatprep.subr.mxu0 0.0
  %9207 = vmatpush2.msra.mxu0 0.0
  %9208 = vmatprep.subr.mxu0 0.0
  %9209 = vmatpush2.msra.mxu0 0.0
  %9210 = vmatprep.subr.mxu0 0.0
  %9211 = vmatpush2.msra.mxu0 0.0
  %9212 = vmatprep.subr.mxu0 0.0
  %9213 = vmatpush2.msra.mxu0 0.0
  %9214 = vmatprep.subr.mxu0 0.0
  %9215 = vmatpush2.msra.mxu0 0.0
  %9216 = vmatprep.subr.mxu0 0.0
  %9217 = vmatpush2.msra.mxu0 0.0
  %9218 = vmatprep.subr.mxu0 0.0
  %9219 = vmatpush2.msra.mxu0 0.0
  %9220 = vmatprep.subr.mxu0 0.0
  %9221 = vmatpush2.msra.mxu0 0.0
  %9222 = vmatprep.subr.mxu0 0.0
  %9223 = vmatpush2.msra.mxu0 0.0
  %9224 = vmatprep.subr.mxu0 0.0
  %9225 = vmatpush2.msra.mxu0 0.0
  %9226 = vmatprep.subr.mxu0 0.0
  %9227 = vmatpush2.msra.mxu0 0.0
  %9228 = vmatprep.subr.mxu0 0.0
  %9229 = vmatpush2.msra.mxu0 0.0
  %9230 = vmatprep.subr.mxu0 0.0
  %9231 = vmatpush2.msra.mxu0 0.0
  %9232 = vmatprep.subr.mxu0 0.0
  %9233 = vmatpush2.msra.mxu0 0.0
  %9234 = vmatprep.subr.mxu0 0.0
  %9235 = vmatpush2.msra.mxu0 0.0
  %9236 = vmatprep.mubr.f32.mxu0 0.0
  %v9237 = vand.u32 %v8719, 4294901760
  %v9238 = vsub.f32 %v8719, %v9237
  %9239 = vmatmul.mubr.f32.gmra.mxu0 %v9238
  %v9240 = vpop.f32.mrf.mxu0
  %v9241 = vadd.f32 %v9075, %v9240
  %v9242 = vpop.f32.mrf.mxu0
  %9243 = vmatprep.mubr.f32.mxu0 0.0
  %v9244 = vand.u32 %v8722, 4294901760
  %v9245 = vsub.f32 %v8722, %v9244
  %9246 = vmatmul.mubr.f32.gmra.mxu0 %v9245
  %v9247 = vpop.f32.mrf.mxu0
  %v9248 = vadd.f32 %v9081, %v9247
  %v9249 = vpop.f32.mrf.mxu0
  %9250 = vmatprep.mubr.f32.mxu0 0.0
  %v9251 = vand.u32 %v8725, 4294901760
  %v9252 = vsub.f32 %v8725, %v9251
  %9253 = vmatmul.mubr.f32.gmra.mxu0 %v9252
  %v9254 = vpop.f32.mrf.mxu0
  %v9255 = vadd.f32 %v9087, %v9254
  %v9256 = vpop.f32.mrf.mxu0
  %9257 = vmatprep.mubr.f32.mxu0 0.0
  %v9258 = vand.u32 %v8728, 4294901760
  %v9259 = vsub.f32 %v8728, %v9258
  %9260 = vmatmul.mubr.f32.gmra.mxu0 %v9259
  %v9261 = vpop.f32.mrf.mxu0
  %v9262 = vadd.f32 %v9093, %v9261
  %v9263 = vpop.f32.mrf.mxu0
  %9264 = vmatprep.mubr.f32.mxu0 0.0
  %v9265 = vand.u32 %v8731, 4294901760
  %v9266 = vsub.f32 %v8731, %v9265
  %9267 = vmatmul.mubr.f32.gmra.mxu0 %v9266
  %v9268 = vpop.f32.mrf.mxu0
  %v9269 = vadd.f32 %v9099, %v9268
  %v9270 = vpop.f32.mrf.mxu0
  %9271 = vmatprep.mubr.f32.mxu0 0.0
  %v9272 = vand.u32 %v8734, 4294901760
  %v9273 = vsub.f32 %v8734, %v9272
  %9274 = vmatmul.mubr.f32.gmra.mxu0 %v9273
  %v9275 = vpop.f32.mrf.mxu0
  %v9276 = vadd.f32 %v9105, %v9275
  %v9277 = vpop.f32.mrf.mxu0
  %9278 = vmatprep.mubr.f32.mxu0 0.0
  %v9279 = vand.u32 %v8737, 4294901760
  %v9280 = vsub.f32 %v8737, %v9279
  %9281 = vmatmul.mubr.f32.gmra.mxu0 %v9280
  %v9282 = vpop.f32.mrf.mxu0
  %v9283 = vadd.f32 %v9111, %v9282
  %v9284 = vpop.f32.mrf.mxu0
  %9285 = vmatprep.mubr.f32.mxu0 0.0
  %v9286 = vand.u32 %v8740, 4294901760
  %v9287 = vsub.f32 %v8740, %v9286
  %9288 = vmatmul.mubr.f32.gmra.mxu0 %v9287
  %v9289 = vpop.f32.mrf.mxu0
  %v9290 = vadd.f32 %v9117, %v9289
  %v9291 = vpop.f32.mrf.mxu0
  %9292 = vmatprep.mubr.f32.mxu0 0.0
  %v9293 = vand.u32 %v8743, 4294901760
  %v9294 = vsub.f32 %v8743, %v9293
  %9295 = vmatmul.mubr.f32.gmra.mxu0 %v9294
  %v9296 = vpop.f32.mrf.mxu0
  %v9297 = vadd.f32 %v9123, %v9296
  %v9298 = vpop.f32.mrf.mxu0
  %9299 = vmatprep.mubr.f32.mxu0 0.0
  %v9300 = vand.u32 %v8746, 4294901760
  %v9301 = vsub.f32 %v8746, %v9300
  %9302 = vmatmul.mubr.f32.gmra.mxu0 %v9301
  %v9303 = vpop.f32.mrf.mxu0
  %v9304 = vadd.f32 %v9129, %v9303
  %v9305 = vpop.f32.mrf.mxu0
  %9306 = vmatprep.mubr.f32.mxu0 0.0
  %v9307 = vand.u32 %v8749, 4294901760
  %v9308 = vsub.f32 %v8749, %v9307
  %9309 = vmatmul.mubr.f32.gmra.mxu0 %v9308
  %v9310 = vpop.f32.mrf.mxu0
  %v9311 = vadd.f32 %v9135, %v9310
  %v9312 = vpop.f32.mrf.mxu0
  %9313 = vmatprep.mubr.f32.mxu0 0.0
  %v9314 = vand.u32 %v8752, 4294901760
  %v9315 = vsub.f32 %v8752, %v9314
  %9316 = vmatmul.mubr.f32.gmra.mxu0 %v9315
  %v9317 = vpop.f32.mrf.mxu0
  %v9318 = vadd.f32 %v9141, %v9317
  %v9319 = vpop.f32.mrf.mxu0
  %9320 = vmatprep.mubr.f32.mxu0 0.0
  %v9321 = vand.u32 %v8755, 4294901760
  %v9322 = vsub.f32 %v8755, %v9321
  %9323 = vmatmul.mubr.f32.gmra.mxu0 %v9322
  %v9324 = vpop.f32.mrf.mxu0
  %v9325 = vadd.f32 %v9147, %v9324
  %v9326 = vpop.f32.mrf.mxu0
  %9327 = vmatprep.mubr.f32.mxu0 0.0
  %v9328 = vand.u32 %v8758, 4294901760
  %v9329 = vsub.f32 %v8758, %v9328
  %9330 = vmatmul.mubr.f32.gmra.mxu0 %v9329
  %v9331 = vpop.f32.mrf.mxu0
  %v9332 = vadd.f32 %v9153, %v9331
  %v9333 = vpop.f32.mrf.mxu0
  %9334 = vmatprep.mubr.f32.mxu0 0.0
  %v9335 = vand.u32 %v8761, 4294901760
  %v9336 = vsub.f32 %v8761, %v9335
  %9337 = vmatmul.mubr.f32.gmra.mxu0 %v9336
  %v9338 = vpop.f32.mrf.mxu0
  %v9339 = vadd.f32 %v9159, %v9338
  %v9340 = vpop.f32.mrf.mxu0
  %9341 = vmatprep.mubr.f32.mxu0 0.0
  %v9342 = vand.u32 %v8764, 4294901760
  %v9343 = vsub.f32 %v8764, %v9342
  %9344 = vmatmul.mubr.f32.gmra.mxu0 %v9343
  %v9345 = vpop.f32.mrf.mxu0
  %v9346 = vadd.f32 %v9165, %v9345
  %v9347 = vpop.f32.mrf.mxu0
  %9348 = vdwg.mxu0
  %9349 = vmatprep.subr.mxu0 0.0
  %9350 = vmatpush1.msra.mxu0 0.0
  %9351 = vmatprep.subr.mxu0 0.0
  %9352 = vmatpush1.msra.mxu0 0.0
  %9353 = vmatprep.subr.mxu0 0.0
  %9354 = vmatpush1.msra.mxu0 0.0
  %9355 = vmatprep.subr.mxu0 0.0
  %9356 = vmatpush1.msra.mxu0 0.0
  %9357 = vmatprep.subr.mxu0 0.0
  %9358 = vmatpush1.msra.mxu0 0.0
  %9359 = vmatprep.subr.mxu0 0.0
  %9360 = vmatpush1.msra.mxu0 0.0
  %9361 = vmatprep.subr.mxu0 0.0
  %9362 = vmatpush1.msra.mxu0 0.0
  %9363 = vmatprep.subr.mxu0 0.0
  %9364 = vmatpush1.msra.mxu0 0.0
  %9365 = vmatprep.subr.mxu0 0.0
  %9366 = vmatpush1.msra.mxu0 0.0
  %9367 = vmatprep.subr.mxu0 0.0
  %9368 = vmatpush1.msra.mxu0 0.0
  %9369 = vmatprep.subr.mxu0 0.0
  %9370 = vmatpush1.msra.mxu0 0.0
  %9371 = vmatprep.subr.mxu0 0.0
  %9372 = vmatpush1.msra.mxu0 0.0
  %9373 = vmatprep.subr.mxu0 0.0
  %9374 = vmatpush1.msra.mxu0 0.0
  %9375 = vmatprep.subr.mxu0 0.0
  %9376 = vmatpush1.msra.mxu0 0.0
  %9377 = vmatprep.subr.mxu0 0.0
  %v9378 = vand.u32 %v8768, 4294901760
  %9379 = vmatpush1.msra.mxu0 %v9378
  %9380 = vmatprep.subr.mxu0 0.0
  %v9381 = vand.u32 %v8715, 4294901760
  %9382 = vmatpush1.msra.mxu0 %v9381
  %9383 = vmatprep.subr.mxu0 0.0
  %9384 = vmatpush2.msra.mxu0 0.0
  %9385 = vmatprep.subr.mxu0 0.0
  %9386 = vmatpush2.msra.mxu0 0.0
  %9387 = vmatprep.subr.mxu0 0.0
  %9388 = vmatpush2.msra.mxu0 0.0
  %9389 = vmatprep.subr.mxu0 0.0
  %9390 = vmatpush2.msra.mxu0 0.0
  %9391 = vmatprep.subr.mxu0 0.0
  %9392 = vmatpush2.msra.mxu0 0.0
  %9393 = vmatprep.subr.mxu0 0.0
  %9394 = vmatpush2.msra.mxu0 0.0
  %9395 = vmatprep.subr.mxu0 0.0
  %9396 = vmatpush2.msra.mxu0 0.0
  %9397 = vmatprep.subr.mxu0 0.0
  %9398 = vmatpush2.msra.mxu0 0.0
  %9399 = vmatprep.subr.mxu0 0.0
  %9400 = vmatpush2.msra.mxu0 0.0
  %9401 = vmatprep.subr.mxu0 0.0
  %9402 = vmatpush2.msra.mxu0 0.0
  %9403 = vmatprep.subr.mxu0 0.0
  %9404 = vmatpush2.msra.mxu0 0.0
  %9405 = vmatprep.subr.mxu0 0.0
  %9406 = vmatpush2.msra.mxu0 0.0
  %9407 = vmatprep.subr.mxu0 0.0
  %9408 = vmatpush2.msra.mxu0 0.0
  %9409 = vmatprep.subr.mxu0 0.0
  %9410 = vmatpush2.msra.mxu0 0.0
  %9411 = vmatprep.subr.mxu0 0.0
  %9412 = vmatpush2.msra.mxu0 0.0
  %9413 = vmatprep.subr.mxu0 0.0
  %9414 = vmatpush2.msra.mxu0 0.0
  %9415 = vmatprep.mubr.f32.mxu0 0.0
  %v9416 = vand.u32 %v8719, 4294901760
  %v9417 = vsub.f32 %v8719, %v9416
  %v9418 = vand.u32 %v9417, 4294901760
  %9419 = vmatmul.mubr.f32.gmra.mxu0 %v9418
  %v9420 = vpop.f32.mrf.mxu0
  %v9421 = vadd.f32 %v9241, %v9420
  %v9422 = vpop.f32.mrf.mxu0
  %9423 = vmatprep.mubr.f32.mxu0 0.0
  %v9424 = vand.u32 %v8722, 4294901760
  %v9425 = vsub.f32 %v8722, %v9424
  %v9426 = vand.u32 %v9425, 4294901760
  %9427 = vmatmul.mubr.f32.gmra.mxu0 %v9426
  %v9428 = vpop.f32.mrf.mxu0
  %v9429 = vadd.f32 %v9248, %v9428
  %v9430 = vpop.f32.mrf.mxu0
  %9431 = vmatprep.mubr.f32.mxu0 0.0
  %v9432 = vand.u32 %v8725, 4294901760
  %v9433 = vsub.f32 %v8725, %v9432
  %v9434 = vand.u32 %v9433, 4294901760
  %9435 = vmatmul.mubr.f32.gmra.mxu0 %v9434
  %v9436 = vpop.f32.mrf.mxu0
  %v9437 = vadd.f32 %v9255, %v9436
  %v9438 = vpop.f32.mrf.mxu0
  %9439 = vmatprep.mubr.f32.mxu0 0.0
  %v9440 = vand.u32 %v8728, 4294901760
  %v9441 = vsub.f32 %v8728, %v9440
  %v9442 = vand.u32 %v9441, 4294901760
  %9443 = vmatmul.mubr.f32.gmra.mxu0 %v9442
  %v9444 = vpop.f32.mrf.mxu0
  %v9445 = vadd.f32 %v9262, %v9444
  %v9446 = vpop.f32.mrf.mxu0
  %9447 = vmatprep.mubr.f32.mxu0 0.0
  %v9448 = vand.u32 %v8731, 4294901760
  %v9449 = vsub.f32 %v8731, %v9448
  %v9450 = vand.u32 %v9449, 4294901760
  %9451 = vmatmul.mubr.f32.gmra.mxu0 %v9450
  %v9452 = vpop.f32.mrf.mxu0
  %v9453 = vadd.f32 %v9269, %v9452
  %v9454 = vpop.f32.mrf.mxu0
  %9455 = vmatprep.mubr.f32.mxu0 0.0
  %v9456 = vand.u32 %v8734, 4294901760
  %v9457 = vsub.f32 %v8734, %v9456
  %v9458 = vand.u32 %v9457, 4294901760
  %9459 = vmatmul.mubr.f32.gmra.mxu0 %v9458
  %v9460 = vpop.f32.mrf.mxu0
  %v9461 = vadd.f32 %v9276, %v9460
  %v9462 = vpop.f32.mrf.mxu0
  %9463 = vmatprep.mubr.f32.mxu0 0.0
  %v9464 = vand.u32 %v8737, 4294901760
  %v9465 = vsub.f32 %v8737, %v9464
  %v9466 = vand.u32 %v9465, 4294901760
  %9467 = vmatmul.mubr.f32.gmra.mxu0 %v9466
  %v9468 = vpop.f32.mrf.mxu0
  %v9469 = vadd.f32 %v9283, %v9468
  %v9470 = vpop.f32.mrf.mxu0
  %9471 = vmatprep.mubr.f32.mxu0 0.0
  %v9472 = vand.u32 %v8740, 4294901760
  %v9473 = vsub.f32 %v8740, %v9472
  %v9474 = vand.u32 %v9473, 4294901760
  %9475 = vmatmul.mubr.f32.gmra.mxu0 %v9474
  %v9476 = vpop.f32.mrf.mxu0
  %v9477 = vadd.f32 %v9290, %v9476
  %v9478 = vpop.f32.mrf.mxu0
  %9479 = vmatprep.mubr.f32.mxu0 0.0
  %v9480 = vand.u32 %v8743, 4294901760
  %v9481 = vsub.f32 %v8743, %v9480
  %v9482 = vand.u32 %v9481, 4294901760
  %9483 = vmatmul.mubr.f32.gmra.mxu0 %v9482
  %v9484 = vpop.f32.mrf.mxu0
  %v9485 = vadd.f32 %v9297, %v9484
  %v9486 = vpop.f32.mrf.mxu0
  %9487 = vmatprep.mubr.f32.mxu0 0.0
  %v9488 = vand.u32 %v8746, 4294901760
  %v9489 = vsub.f32 %v8746, %v9488
  %v9490 = vand.u32 %v9489, 4294901760
  %9491 = vmatmul.mubr.f32.gmra.mxu0 %v9490
  %v9492 = vpop.f32.mrf.mxu0
  %v9493 = vadd.f32 %v9304, %v9492
  %v9494 = vpop.f32.mrf.mxu0
  %9495 = vmatprep.mubr.f32.mxu0 0.0
  %v9496 = vand.u32 %v8749, 4294901760
  %v9497 = vsub.f32 %v8749, %v9496
  %v9498 = vand.u32 %v9497, 4294901760
  %9499 = vmatmul.mubr.f32.gmra.mxu0 %v9498
  %v9500 = vpop.f32.mrf.mxu0
  %v9501 = vadd.f32 %v9311, %v9500
  %v9502 = vpop.f32.mrf.mxu0
  %9503 = vmatprep.mubr.f32.mxu0 0.0
  %v9504 = vand.u32 %v8752, 4294901760
  %v9505 = vsub.f32 %v8752, %v9504
  %v9506 = vand.u32 %v9505, 4294901760
  %9507 = vmatmul.mubr.f32.gmra.mxu0 %v9506
  %v9508 = vpop.f32.mrf.mxu0
  %v9509 = vadd.f32 %v9318, %v9508
  %v9510 = vpop.f32.mrf.mxu0
  %9511 = vmatprep.mubr.f32.mxu0 0.0
  %v9512 = vand.u32 %v8755, 4294901760
  %v9513 = vsub.f32 %v8755, %v9512
  %v9514 = vand.u32 %v9513, 4294901760
  %9515 = vmatmul.mubr.f32.gmra.mxu0 %v9514
  %v9516 = vpop.f32.mrf.mxu0
  %v9517 = vadd.f32 %v9325, %v9516
  %v9518 = vpop.f32.mrf.mxu0
  %9519 = vmatprep.mubr.f32.mxu0 0.0
  %v9520 = vand.u32 %v8758, 4294901760
  %v9521 = vsub.f32 %v8758, %v9520
  %v9522 = vand.u32 %v9521, 4294901760
  %9523 = vmatmul.mubr.f32.gmra.mxu0 %v9522
  %v9524 = vpop.f32.mrf.mxu0
  %v9525 = vadd.f32 %v9332, %v9524
  %v9526 = vpop.f32.mrf.mxu0
  %9527 = vmatprep.mubr.f32.mxu0 0.0
  %v9528 = vand.u32 %v8761, 4294901760
  %v9529 = vsub.f32 %v8761, %v9528
  %v9530 = vand.u32 %v9529, 4294901760
  %9531 = vmatmul.mubr.f32.gmra.mxu0 %v9530
  %v9532 = vpop.f32.mrf.mxu0
  %v9533 = vadd.f32 %v9339, %v9532
  %v9534 = vpop.f32.mrf.mxu0
  %9535 = vmatprep.mubr.f32.mxu0 0.0
  %v9536 = vand.u32 %v8764, 4294901760
  %v9537 = vsub.f32 %v8764, %v9536
  %v9538 = vand.u32 %v9537, 4294901760
  %9539 = vmatmul.mubr.f32.gmra.mxu0 %v9538
  %v9540 = vpop.f32.mrf.mxu0
  %v9541 = vadd.f32 %v9346, %v9540
  %v9542 = vpop.f32.mrf.mxu0
  %9543 = vdwg.mxu0
  %9544 = vmatprep.subr.mxu0 0.0
  %9545 = vmatpush1.msra.mxu0 0.0
  %9546 = vmatprep.subr.mxu0 0.0
  %9547 = vmatpush1.msra.mxu0 0.0
  %9548 = vmatprep.subr.mxu0 0.0
  %9549 = vmatpush1.msra.mxu0 0.0
  %9550 = vmatprep.subr.mxu0 0.0
  %9551 = vmatpush1.msra.mxu0 0.0
  %9552 = vmatprep.subr.mxu0 0.0
  %9553 = vmatpush1.msra.mxu0 0.0
  %9554 = vmatprep.subr.mxu0 0.0
  %9555 = vmatpush1.msra.mxu0 0.0
  %9556 = vmatprep.subr.mxu0 0.0
  %9557 = vmatpush1.msra.mxu0 0.0
  %9558 = vmatprep.subr.mxu0 0.0
  %9559 = vmatpush1.msra.mxu0 0.0
  %9560 = vmatprep.subr.mxu0 0.0
  %9561 = vmatpush1.msra.mxu0 0.0
  %9562 = vmatprep.subr.mxu0 0.0
  %9563 = vmatpush1.msra.mxu0 0.0
  %9564 = vmatprep.subr.mxu0 0.0
  %9565 = vmatpush1.msra.mxu0 0.0
  %9566 = vmatprep.subr.mxu0 0.0
  %9567 = vmatpush1.msra.mxu0 0.0
  %9568 = vmatprep.subr.mxu0 0.0
  %9569 = vmatpush1.msra.mxu0 0.0
  %9570 = vmatprep.subr.mxu0 0.0
  %9571 = vmatpush1.msra.mxu0 0.0
  %9572 = vmatprep.subr.mxu0 0.0
  %v9573 = vand.u32 %v8768, 4294901760
  %v9574 = vsub.f32 %v8768, %v9573
  %v9575 = vand.u32 %v9574, 4294901760
  %9576 = vmatpush1.msra.mxu0 %v9575
  %9577 = vmatprep.subr.mxu0 0.0
  %v9578 = vand.u32 %v8715, 4294901760
  %v9579 = vsub.f32 %v8715, %v9578
  %v9580 = vand.u32 %v9579, 4294901760
  %9581 = vmatpush1.msra.mxu0 %v9580
  %9582 = vmatprep.subr.mxu0 0.0
  %9583 = vmatpush2.msra.mxu0 0.0
  %9584 = vmatprep.subr.mxu0 0.0
  %9585 = vmatpush2.msra.mxu0 0.0
  %9586 = vmatprep.subr.mxu0 0.0
  %9587 = vmatpush2.msra.mxu0 0.0
  %9588 = vmatprep.subr.mxu0 0.0
  %9589 = vmatpush2.msra.mxu0 0.0
  %9590 = vmatprep.subr.mxu0 0.0
  %9591 = vmatpush2.msra.mxu0 0.0
  %9592 = vmatprep.subr.mxu0 0.0
  %9593 = vmatpush2.msra.mxu0 0.0
  %9594 = vmatprep.subr.mxu0 0.0
  %9595 = vmatpush2.msra.mxu0 0.0
  %9596 = vmatprep.subr.mxu0 0.0
  %9597 = vmatpush2.msra.mxu0 0.0
  %9598 = vmatprep.subr.mxu0 0.0
  %9599 = vmatpush2.msra.mxu0 0.0
  %9600 = vmatprep.subr.mxu0 0.0
  %9601 = vmatpush2.msra.mxu0 0.0
  %9602 = vmatprep.subr.mxu0 0.0
  %9603 = vmatpush2.msra.mxu0 0.0
  %9604 = vmatprep.subr.mxu0 0.0
  %9605 = vmatpush2.msra.mxu0 0.0
  %9606 = vmatprep.subr.mxu0 0.0
  %9607 = vmatpush2.msra.mxu0 0.0
  %9608 = vmatprep.subr.mxu0 0.0
  %9609 = vmatpush2.msra.mxu0 0.0
  %9610 = vmatprep.subr.mxu0 0.0
  %9611 = vmatpush2.msra.mxu0 0.0
  %9612 = vmatprep.subr.mxu0 0.0
  %9613 = vmatpush2.msra.mxu0 0.0
  %9614 = vmatprep.mubr.f32.mxu0 0.0
  %v9615 = vand.u32 %v8719, 4294901760
  %9616 = vmatmul.mubr.f32.gmra.mxu0 %v9615
  %v9617 = vpop.f32.mrf.mxu0
  %v9618 = vadd.f32 %v9421, %v9617
  %v9619 = vpop.f32.mrf.mxu0
  %9620 = vmatprep.mubr.f32.mxu0 0.0
  %v9621 = vand.u32 %v8722, 4294901760
  %9622 = vmatmul.mubr.f32.gmra.mxu0 %v9621
  %v9623 = vpop.f32.mrf.mxu0
  %v9624 = vadd.f32 %v9429, %v9623
  %v9625 = vpop.f32.mrf.mxu0
  %9626 = vmatprep.mubr.f32.mxu0 0.0
  %v9627 = vand.u32 %v8725, 4294901760
  %9628 = vmatmul.mubr.f32.gmra.mxu0 %v9627
  %v9629 = vpop.f32.mrf.mxu0
  %v9630 = vadd.f32 %v9437, %v9629
  %v9631 = vpop.f32.mrf.mxu0
  %9632 = vmatprep.mubr.f32.mxu0 0.0
  %v9633 = vand.u32 %v8728, 4294901760
  %9634 = vmatmul.mubr.f32.gmra.mxu0 %v9633
  %v9635 = vpop.f32.mrf.mxu0
  %v9636 = vadd.f32 %v9445, %v9635
  %v9637 = vpop.f32.mrf.mxu0
  %9638 = vmatprep.mubr.f32.mxu0 0.0
  %v9639 = vand.u32 %v8731, 4294901760
  %9640 = vmatmul.mubr.f32.gmra.mxu0 %v9639
  %v9641 = vpop.f32.mrf.mxu0
  %v9642 = vadd.f32 %v9453, %v9641
  %v9643 = vpop.f32.mrf.mxu0
  %9644 = vmatprep.mubr.f32.mxu0 0.0
  %v9645 = vand.u32 %v8734, 4294901760
  %9646 = vmatmul.mubr.f32.gmra.mxu0 %v9645
  %v9647 = vpop.f32.mrf.mxu0
  %v9648 = vadd.f32 %v9461, %v9647
  %v9649 = vpop.f32.mrf.mxu0
  %9650 = vmatprep.mubr.f32.mxu0 0.0
  %v9651 = vand.u32 %v8737, 4294901760
  %9652 = vmatmul.mubr.f32.gmra.mxu0 %v9651
  %v9653 = vpop.f32.mrf.mxu0
  %v9654 = vadd.f32 %v9469, %v9653
  %v9655 = vpop.f32.mrf.mxu0
  %9656 = vmatprep.mubr.f32.mxu0 0.0
  %v9657 = vand.u32 %v8740, 4294901760
  %9658 = vmatmul.mubr.f32.gmra.mxu0 %v9657
  %v9659 = vpop.f32.mrf.mxu0
  %v9660 = vadd.f32 %v9477, %v9659
  %v9661 = vpop.f32.mrf.mxu0
  %9662 = vmatprep.mubr.f32.mxu0 0.0
  %v9663 = vand.u32 %v8743, 4294901760
  %9664 = vmatmul.mubr.f32.gmra.mxu0 %v9663
  %v9665 = vpop.f32.mrf.mxu0
  %v9666 = vadd.f32 %v9485, %v9665
  %v9667 = vpop.f32.mrf.mxu0
  %9668 = vmatprep.mubr.f32.mxu0 0.0
  %v9669 = vand.u32 %v8746, 4294901760
  %9670 = vmatmul.mubr.f32.gmra.mxu0 %v9669
  %v9671 = vpop.f32.mrf.mxu0
  %v9672 = vadd.f32 %v9493, %v9671
  %v9673 = vpop.f32.mrf.mxu0
  %9674 = vmatprep.mubr.f32.mxu0 0.0
  %v9675 = vand.u32 %v8749, 4294901760
  %9676 = vmatmul.mubr.f32.gmra.mxu0 %v9675
  %v9677 = vpop.f32.mrf.mxu0
  %v9678 = vadd.f32 %v9501, %v9677
  %v9679 = vpop.f32.mrf.mxu0
  %9680 = vmatprep.mubr.f32.mxu0 0.0
  %v9681 = vand.u32 %v8752, 4294901760
  %9682 = vmatmul.mubr.f32.gmra.mxu0 %v9681
  %v9683 = vpop.f32.mrf.mxu0
  %v9684 = vadd.f32 %v9509, %v9683
  %v9685 = vpop.f32.mrf.mxu0
  %9686 = vmatprep.mubr.f32.mxu0 0.0
  %v9687 = vand.u32 %v8755, 4294901760
  %9688 = vmatmul.mubr.f32.gmra.mxu0 %v9687
  %v9689 = vpop.f32.mrf.mxu0
  %v9690 = vadd.f32 %v9517, %v9689
  %v9691 = vpop.f32.mrf.mxu0
  %9692 = vmatprep.mubr.f32.mxu0 0.0
  %v9693 = vand.u32 %v8758, 4294901760
  %9694 = vmatmul.mubr.f32.gmra.mxu0 %v9693
  %v9695 = vpop.f32.mrf.mxu0
  %v9696 = vadd.f32 %v9525, %v9695
  %v9697 = vpop.f32.mrf.mxu0
  %9698 = vmatprep.mubr.f32.mxu0 0.0
  %v9699 = vand.u32 %v8761, 4294901760
  %9700 = vmatmul.mubr.f32.gmra.mxu0 %v9699
  %v9701 = vpop.f32.mrf.mxu0
  %v9702 = vadd.f32 %v9533, %v9701
  %v9703 = vpop.f32.mrf.mxu0
  %9704 = vmatprep.mubr.f32.mxu0 0.0
  %v9705 = vand.u32 %v8764, 4294901760
  %9706 = vmatmul.mubr.f32.gmra.mxu0 %v9705
  %v9707 = vpop.f32.mrf.mxu0
  %v9708 = vadd.f32 %v9541, %v9707
  %v9709 = vpop.f32.mrf.mxu0
  %9710 = vdwg.mxu0
  %9711 = vmatprep.subr.mxu0 0.0
  %9712 = vmatpush1.msra.mxu0 0.0
  %9713 = vmatprep.subr.mxu0 0.0
  %9714 = vmatpush1.msra.mxu0 0.0
  %9715 = vmatprep.subr.mxu0 0.0
  %9716 = vmatpush1.msra.mxu0 0.0
  %9717 = vmatprep.subr.mxu0 0.0
  %9718 = vmatpush1.msra.mxu0 0.0
  %9719 = vmatprep.subr.mxu0 0.0
  %9720 = vmatpush1.msra.mxu0 0.0
  %9721 = vmatprep.subr.mxu0 0.0
  %9722 = vmatpush1.msra.mxu0 0.0
  %9723 = vmatprep.subr.mxu0 0.0
  %9724 = vmatpush1.msra.mxu0 0.0
  %9725 = vmatprep.subr.mxu0 0.0
  %9726 = vmatpush1.msra.mxu0 0.0
  %9727 = vmatprep.subr.mxu0 0.0
  %9728 = vmatpush1.msra.mxu0 0.0
  %9729 = vmatprep.subr.mxu0 0.0
  %9730 = vmatpush1.msra.mxu0 0.0
  %9731 = vmatprep.subr.mxu0 0.0
  %9732 = vmatpush1.msra.mxu0 0.0
  %9733 = vmatprep.subr.mxu0 0.0
  %9734 = vmatpush1.msra.mxu0 0.0
  %9735 = vmatprep.subr.mxu0 0.0
  %9736 = vmatpush1.msra.mxu0 0.0
  %9737 = vmatprep.subr.mxu0 0.0
  %9738 = vmatpush1.msra.mxu0 0.0
  %9739 = vmatprep.subr.mxu0 0.0
  %v9740 = vand.u32 %v8768, 4294901760
  %9741 = vmatpush1.msra.mxu0 %v9740
  %9742 = vmatprep.subr.mxu0 0.0
  %v9743 = vand.u32 %v8715, 4294901760
  %9744 = vmatpush1.msra.mxu0 %v9743
  %9745 = vmatprep.subr.mxu0 0.0
  %9746 = vmatpush2.msra.mxu0 0.0
  %9747 = vmatprep.subr.mxu0 0.0
  %9748 = vmatpush2.msra.mxu0 0.0
  %9749 = vmatprep.subr.mxu0 0.0
  %9750 = vmatpush2.msra.mxu0 0.0
  %9751 = vmatprep.subr.mxu0 0.0
  %9752 = vmatpush2.msra.mxu0 0.0
  %9753 = vmatprep.subr.mxu0 0.0
  %9754 = vmatpush2.msra.mxu0 0.0
  %9755 = vmatprep.subr.mxu0 0.0
  %9756 = vmatpush2.msra.mxu0 0.0
  %9757 = vmatprep.subr.mxu0 0.0
  %9758 = vmatpush2.msra.mxu0 0.0
  %9759 = vmatprep.subr.mxu0 0.0
  %9760 = vmatpush2.msra.mxu0 0.0
  %9761 = vmatprep.subr.mxu0 0.0
  %9762 = vmatpush2.msra.mxu0 0.0
  %9763 = vmatprep.subr.mxu0 0.0
  %9764 = vmatpush2.msra.mxu0 0.0
  %9765 = vmatprep.subr.mxu0 0.0
  %9766 = vmatpush2.msra.mxu0 0.0
  %9767 = vmatprep.subr.mxu0 0.0
  %9768 = vmatpush2.msra.mxu0 0.0
  %9769 = vmatprep.subr.mxu0 0.0
  %9770 = vmatpush2.msra.mxu0 0.0
  %9771 = vmatprep.subr.mxu0 0.0
  %9772 = vmatpush2.msra.mxu0 0.0
  %9773 = vmatprep.subr.mxu0 0.0
  %9774 = vmatpush2.msra.mxu0 0.0
  %9775 = vmatprep.subr.mxu0 0.0
  %9776 = vmatpush2.msra.mxu0 0.0
  %9777 = vmatprep.mubr.f32.mxu0 0.0
  %v9778 = vand.u32 %v8719, 4294901760
  %9779 = vmatmul.mubr.f32.gmra.mxu0 %v9778
  %v9780 = vpop.f32.mrf.mxu0
  %v9781 = vadd.f32 %v9618, %v9780
  %v9782 = vpop.f32.mrf.mxu0
  %9783 = vmatprep.mubr.f32.mxu0 0.0
  %v9784 = vand.u32 %v8722, 4294901760
  %9785 = vmatmul.mubr.f32.gmra.mxu0 %v9784
  %v9786 = vpop.f32.mrf.mxu0
  %v9787 = vadd.f32 %v9624, %v9786
  %v9788 = vpop.f32.mrf.mxu0
  %9789 = vmatprep.mubr.f32.mxu0 0.0
  %v9790 = vand.u32 %v8725, 4294901760
  %9791 = vmatmul.mubr.f32.gmra.mxu0 %v9790
  %v9792 = vpop.f32.mrf.mxu0
  %v9793 = vadd.f32 %v9630, %v9792
  %v9794 = vpop.f32.mrf.mxu0
  %9795 = vmatprep.mubr.f32.mxu0 0.0
  %v9796 = vand.u32 %v8728, 4294901760
  %9797 = vmatmul.mubr.f32.gmra.mxu0 %v9796
  %v9798 = vpop.f32.mrf.mxu0
  %v9799 = vadd.f32 %v9636, %v9798
  %v9800 = vpop.f32.mrf.mxu0
  %9801 = vmatprep.mubr.f32.mxu0 0.0
  %v9802 = vand.u32 %v8731, 4294901760
  %9803 = vmatmul.mubr.f32.gmra.mxu0 %v9802
  %v9804 = vpop.f32.mrf.mxu0
  %v9805 = vadd.f32 %v9642, %v9804
  %v9806 = vpop.f32.mrf.mxu0
  %9807 = vmatprep.mubr.f32.mxu0 0.0
  %v9808 = vand.u32 %v8734, 4294901760
  %9809 = vmatmul.mubr.f32.gmra.mxu0 %v9808
  %v9810 = vpop.f32.mrf.mxu0
  %v9811 = vadd.f32 %v9648, %v9810
  %v9812 = vpop.f32.mrf.mxu0
  %9813 = vmatprep.mubr.f32.mxu0 0.0
  %v9814 = vand.u32 %v8737, 4294901760
  %9815 = vmatmul.mubr.f32.gmra.mxu0 %v9814
  %v9816 = vpop.f32.mrf.mxu0
  %v9817 = vadd.f32 %v9654, %v9816
  %v9818 = vpop.f32.mrf.mxu0
  %9819 = vmatprep.mubr.f32.mxu0 0.0
  %v9820 = vand.u32 %v8740, 4294901760
  %9821 = vmatmul.mubr.f32.gmra.mxu0 %v9820
  %v9822 = vpop.f32.mrf.mxu0
  %v9823 = vadd.f32 %v9660, %v9822
  %v9824 = vpop.f32.mrf.mxu0
  %9825 = vmatprep.mubr.f32.mxu0 0.0
  %v9826 = vand.u32 %v8743, 4294901760
  %9827 = vmatmul.mubr.f32.gmra.mxu0 %v9826
  %v9828 = vpop.f32.mrf.mxu0
  %v9829 = vadd.f32 %v9666, %v9828
  %v9830 = vpop.f32.mrf.mxu0
  %9831 = vmatprep.mubr.f32.mxu0 0.0
  %v9832 = vand.u32 %v8746, 4294901760
  %9833 = vmatmul.mubr.f32.gmra.mxu0 %v9832
  %v9834 = vpop.f32.mrf.mxu0
  %v9835 = vadd.f32 %v9672, %v9834
  %v9836 = vpop.f32.mrf.mxu0
  %9837 = vmatprep.mubr.f32.mxu0 0.0
  %v9838 = vand.u32 %v8749, 4294901760
  %9839 = vmatmul.mubr.f32.gmra.mxu0 %v9838
  %v9840 = vpop.f32.mrf.mxu0
  %v9841 = vadd.f32 %v9678, %v9840
  %v9842 = vpop.f32.mrf.mxu0
  %9843 = vmatprep.mubr.f32.mxu0 0.0
  %v9844 = vand.u32 %v8752, 4294901760
  %9845 = vmatmul.mubr.f32.gmra.mxu0 %v9844
  %v9846 = vpop.f32.mrf.mxu0
  %v9847 = vadd.f32 %v9684, %v9846
  %v9848 = vpop.f32.mrf.mxu0
  %9849 = vmatprep.mubr.f32.mxu0 0.0
  %v9850 = vand.u32 %v8755, 4294901760
  %9851 = vmatmul.mubr.f32.gmra.mxu0 %v9850
  %v9852 = vpop.f32.mrf.mxu0
  %v9853 = vadd.f32 %v9690, %v9852
  %v9854 = vpop.f32.mrf.mxu0
  %9855 = vmatprep.mubr.f32.mxu0 0.0
  %v9856 = vand.u32 %v8758, 4294901760
  %9857 = vmatmul.mubr.f32.gmra.mxu0 %v9856
  %v9858 = vpop.f32.mrf.mxu0
  %v9859 = vadd.f32 %v9696, %v9858
  %v9860 = vpop.f32.mrf.mxu0
  %9861 = vmatprep.mubr.f32.mxu0 0.0
  %v9862 = vand.u32 %v8761, 4294901760
  %9863 = vmatmul.mubr.f32.gmra.mxu0 %v9862
  %v9864 = vpop.f32.mrf.mxu0
  %v9865 = vadd.f32 %v9702, %v9864
  %v9866 = vpop.f32.mrf.mxu0
  %9867 = vmatprep.mubr.f32.mxu0 0.0
  %v9868 = vand.u32 %v8764, 4294901760
  %9869 = vmatmul.mubr.f32.gmra.mxu0 %v9868
  %v9870 = vpop.f32.mrf.mxu0
  %v9871 = vadd.f32 %v9708, %v9870
  %v9872 = vpop.f32.mrf.mxu0
  %9873 = vdwg.mxu0
  %v9875 = vsel %vm1326, %v8614, 0
  %v9878 = vsel %vm1326, %v8620, 0
  %v9881 = vsel %vm1326, %v8626, 0
  %v9884 = vsel %vm1326, %v8632, 0
  %v9887 = vsel %vm1326, %v8638, 0
  %v9890 = vsel %vm1326, %v8644, 0
  %v9893 = vsel %vm1326, %v8650, 0
  %v9896 = vsel %vm1326, %v8656, 0
  %v9899 = vsel %vm1326, %v8662, 0
  %v9902 = vsel %vm1326, %v8668, 0
  %v9905 = vsel %vm1326, %v8674, 0
  %v9908 = vsel %vm1326, %v8680, 0
  %v9911 = vsel %vm1326, %v8686, 0
  %v9914 = vsel %vm1326, %v8692, 0
  %v9917 = vsel %vm1326, %v8698, 0
  %v9920 = vsel %vm1326, %v8704, 0
  %9922 = vmatprep.subr.mxu0 0.0
  %9923 = vmatpush1.msra.mxu0 0.0
  %9924 = vmatprep.subr.mxu0 0.0
  %9925 = vmatpush1.msra.mxu0 0.0
  %9926 = vmatprep.subr.mxu0 0.0
  %9927 = vmatpush1.msra.mxu0 0.0
  %9928 = vmatprep.subr.mxu0 0.0
  %9929 = vmatpush1.msra.mxu0 0.0
  %9930 = vmatprep.subr.mxu0 0.0
  %9931 = vmatpush1.msra.mxu0 0.0
  %9932 = vmatprep.subr.mxu0 0.0
  %9933 = vmatpush1.msra.mxu0 0.0
  %9934 = vmatprep.subr.mxu0 0.0
  %9935 = vmatpush1.msra.mxu0 0.0
  %9936 = vmatprep.subr.mxu0 0.0
  %9937 = vmatpush1.msra.mxu0 0.0
  %9938 = vmatprep.subr.mxu0 0.0
  %v9939 = vand.u32 %v8714, 4294901760
  %9940 = vmatpush1.msra.mxu0 %v9939
  %9941 = vmatprep.subr.mxu0 0.0
  %v9942 = vand.u32 %v8713, 4294901760
  %9943 = vmatpush1.msra.mxu0 %v9942
  %9944 = vmatprep.subr.mxu0 0.0
  %v9945 = vand.u32 %v8712, 4294901760
  %9946 = vmatpush1.msra.mxu0 %v9945
  %9947 = vmatprep.subr.mxu0 0.0
  %v9948 = vand.u32 %v8711, 4294901760
  %9949 = vmatpush1.msra.mxu0 %v9948
  %9950 = vmatprep.subr.mxu0 0.0
  %v9951 = vand.u32 %v8710, 4294901760
  %9952 = vmatpush1.msra.mxu0 %v9951
  %9953 = vmatprep.subr.mxu0 0.0
  %v9954 = vand.u32 %v8709, 4294901760
  %9955 = vmatpush1.msra.mxu0 %v9954
  %9956 = vmatprep.subr.mxu0 0.0
  %v9957 = vand.u32 %v8708, 4294901760
  %9958 = vmatpush1.msra.mxu0 %v9957
  %9959 = vmatprep.subr.mxu0 0.0
  %v9960 = vand.u32 %v8707, 4294901760
  %9961 = vmatpush1.msra.mxu0 %v9960
  %9962 = vmatprep.subr.mxu0 0.0
  %9963 = vmatpush2.msra.mxu0 0.0
  %9964 = vmatprep.subr.mxu0 0.0
  %9965 = vmatpush2.msra.mxu0 0.0
  %9966 = vmatprep.subr.mxu0 0.0
  %9967 = vmatpush2.msra.mxu0 0.0
  %9968 = vmatprep.subr.mxu0 0.0
  %9969 = vmatpush2.msra.mxu0 0.0
  %9970 = vmatprep.subr.mxu0 0.0
  %9971 = vmatpush2.msra.mxu0 0.0
  %9972 = vmatprep.subr.mxu0 0.0
  %9973 = vmatpush2.msra.mxu0 0.0
  %9974 = vmatprep.subr.mxu0 0.0
  %9975 = vmatpush2.msra.mxu0 0.0
  %9976 = vmatprep.subr.mxu0 0.0
  %9977 = vmatpush2.msra.mxu0 0.0
  %9978 = vmatprep.subr.mxu0 0.0
  %9979 = vmatpush2.msra.mxu0 0.0
  %9980 = vmatprep.subr.mxu0 0.0
  %9981 = vmatpush2.msra.mxu0 0.0
  %9982 = vmatprep.subr.mxu0 0.0
  %9983 = vmatpush2.msra.mxu0 0.0
  %9984 = vmatprep.subr.mxu0 0.0
  %9985 = vmatpush2.msra.mxu0 0.0
  %9986 = vmatprep.subr.mxu0 0.0
  %9987 = vmatpush2.msra.mxu0 0.0
  %9988 = vmatprep.subr.mxu0 0.0
  %9989 = vmatpush2.msra.mxu0 0.0
  %9990 = vmatprep.subr.mxu0 0.0
  %9991 = vmatpush2.msra.mxu0 0.0
  %9992 = vmatprep.subr.mxu0 0.0
  %9993 = vmatpush2.msra.mxu0 0.0
  %9994 = vmatprep.mubr.f32.mxu0 0.0
  %v9995 = vand.u32 %v9875, 4294901760
  %v9996 = vsub.f32 %v9875, %v9995
  %v9997 = vand.u32 %v9996, 4294901760
  %v9998 = vsub.f32 %v9996, %v9997
  %v9999 = vand.u32 %v9998, 4294901760
  %10000 = vmatmul.mubr.f32.gmra.mxu0 %v9999
  %v10001 = vpop.f32.mrf.mxu0
  %v10002 = vadd.f32 %v9781, %v10001
  %v10003 = vpop.f32.mrf.mxu0
  %10004 = vmatprep.mubr.f32.mxu0 0.0
  %v10005 = vand.u32 %v9878, 4294901760
  %v10006 = vsub.f32 %v9878, %v10005
  %v10007 = vand.u32 %v10006, 4294901760
  %v10008 = vsub.f32 %v10006, %v10007
  %v10009 = vand.u32 %v10008, 4294901760
  %10010 = vmatmul.mubr.f32.gmra.mxu0 %v10009
  %v10011 = vpop.f32.mrf.mxu0
  %v10012 = vadd.f32 %v9787, %v10011
  %v10013 = vpop.f32.mrf.mxu0
  %10014 = vmatprep.mubr.f32.mxu0 0.0
  %v10015 = vand.u32 %v9881, 4294901760
  %v10016 = vsub.f32 %v9881, %v10015
  %v10017 = vand.u32 %v10016, 4294901760
  %v10018 = vsub.f32 %v10016, %v10017
  %v10019 = vand.u32 %v10018, 4294901760
  %10020 = vmatmul.mubr.f32.gmra.mxu0 %v10019
  %v10021 = vpop.f32.mrf.mxu0
  %v10022 = vadd.f32 %v9793, %v10021
  %v10023 = vpop.f32.mrf.mxu0
  %10024 = vmatprep.mubr.f32.mxu0 0.0
  %v10025 = vand.u32 %v9884, 4294901760
  %v10026 = vsub.f32 %v9884, %v10025
  %v10027 = vand.u32 %v10026, 4294901760
  %v10028 = vsub.f32 %v10026, %v10027
  %v10029 = vand.u32 %v10028, 4294901760
  %10030 = vmatmul.mubr.f32.gmra.mxu0 %v10029
  %v10031 = vpop.f32.mrf.mxu0
  %v10032 = vadd.f32 %v9799, %v10031
  %v10033 = vpop.f32.mrf.mxu0
  %10034 = vmatprep.mubr.f32.mxu0 0.0
  %v10035 = vand.u32 %v9887, 4294901760
  %v10036 = vsub.f32 %v9887, %v10035
  %v10037 = vand.u32 %v10036, 4294901760
  %v10038 = vsub.f32 %v10036, %v10037
  %v10039 = vand.u32 %v10038, 4294901760
  %10040 = vmatmul.mubr.f32.gmra.mxu0 %v10039
  %v10041 = vpop.f32.mrf.mxu0
  %v10042 = vadd.f32 %v9805, %v10041
  %v10043 = vpop.f32.mrf.mxu0
  %10044 = vmatprep.mubr.f32.mxu0 0.0
  %v10045 = vand.u32 %v9890, 4294901760
  %v10046 = vsub.f32 %v9890, %v10045
  %v10047 = vand.u32 %v10046, 4294901760
  %v10048 = vsub.f32 %v10046, %v10047
  %v10049 = vand.u32 %v10048, 4294901760
  %10050 = vmatmul.mubr.f32.gmra.mxu0 %v10049
  %v10051 = vpop.f32.mrf.mxu0
  %v10052 = vadd.f32 %v9811, %v10051
  %v10053 = vpop.f32.mrf.mxu0
  %10054 = vmatprep.mubr.f32.mxu0 0.0
  %v10055 = vand.u32 %v9893, 4294901760
  %v10056 = vsub.f32 %v9893, %v10055
  %v10057 = vand.u32 %v10056, 4294901760
  %v10058 = vsub.f32 %v10056, %v10057
  %v10059 = vand.u32 %v10058, 4294901760
  %10060 = vmatmul.mubr.f32.gmra.mxu0 %v10059
  %v10061 = vpop.f32.mrf.mxu0
  %v10062 = vadd.f32 %v9817, %v10061
  %v10063 = vpop.f32.mrf.mxu0
  %10064 = vmatprep.mubr.f32.mxu0 0.0
  %v10065 = vand.u32 %v9896, 4294901760
  %v10066 = vsub.f32 %v9896, %v10065
  %v10067 = vand.u32 %v10066, 4294901760
  %v10068 = vsub.f32 %v10066, %v10067
  %v10069 = vand.u32 %v10068, 4294901760
  %10070 = vmatmul.mubr.f32.gmra.mxu0 %v10069
  %v10071 = vpop.f32.mrf.mxu0
  %v10072 = vadd.f32 %v9823, %v10071
  %v10073 = vpop.f32.mrf.mxu0
  %10074 = vmatprep.mubr.f32.mxu0 0.0
  %v10075 = vand.u32 %v9899, 4294901760
  %v10076 = vsub.f32 %v9899, %v10075
  %v10077 = vand.u32 %v10076, 4294901760
  %v10078 = vsub.f32 %v10076, %v10077
  %v10079 = vand.u32 %v10078, 4294901760
  %10080 = vmatmul.mubr.f32.gmra.mxu0 %v10079
  %v10081 = vpop.f32.mrf.mxu0
  %v10082 = vadd.f32 %v9829, %v10081
  %v10083 = vpop.f32.mrf.mxu0
  %10084 = vmatprep.mubr.f32.mxu0 0.0
  %v10085 = vand.u32 %v9902, 4294901760
  %v10086 = vsub.f32 %v9902, %v10085
  %v10087 = vand.u32 %v10086, 4294901760
  %v10088 = vsub.f32 %v10086, %v10087
  %v10089 = vand.u32 %v10088, 4294901760
  %10090 = vmatmul.mubr.f32.gmra.mxu0 %v10089
  %v10091 = vpop.f32.mrf.mxu0
  %v10092 = vadd.f32 %v9835, %v10091
  %v10093 = vpop.f32.mrf.mxu0
  %10094 = vmatprep.mubr.f32.mxu0 0.0
  %v10095 = vand.u32 %v9905, 4294901760
  %v10096 = vsub.f32 %v9905, %v10095
  %v10097 = vand.u32 %v10096, 4294901760
  %v10098 = vsub.f32 %v10096, %v10097
  %v10099 = vand.u32 %v10098, 4294901760
  %10100 = vmatmul.mubr.f32.gmra.mxu0 %v10099
  %v10101 = vpop.f32.mrf.mxu0
  %v10102 = vadd.f32 %v9841, %v10101
  %v10103 = vpop.f32.mrf.mxu0
  %10104 = vmatprep.mubr.f32.mxu0 0.0
  %v10105 = vand.u32 %v9908, 4294901760
  %v10106 = vsub.f32 %v9908, %v10105
  %v10107 = vand.u32 %v10106, 4294901760
  %v10108 = vsub.f32 %v10106, %v10107
  %v10109 = vand.u32 %v10108, 4294901760
  %10110 = vmatmul.mubr.f32.gmra.mxu0 %v10109
  %v10111 = vpop.f32.mrf.mxu0
  %v10112 = vadd.f32 %v9847, %v10111
  %v10113 = vpop.f32.mrf.mxu0
  %10114 = vmatprep.mubr.f32.mxu0 0.0
  %v10115 = vand.u32 %v9911, 4294901760
  %v10116 = vsub.f32 %v9911, %v10115
  %v10117 = vand.u32 %v10116, 4294901760
  %v10118 = vsub.f32 %v10116, %v10117
  %v10119 = vand.u32 %v10118, 4294901760
  %10120 = vmatmul.mubr.f32.gmra.mxu0 %v10119
  %v10121 = vpop.f32.mrf.mxu0
  %v10122 = vadd.f32 %v9853, %v10121
  %v10123 = vpop.f32.mrf.mxu0
  %10124 = vmatprep.mubr.f32.mxu0 0.0
  %v10125 = vand.u32 %v9914, 4294901760
  %v10126 = vsub.f32 %v9914, %v10125
  %v10127 = vand.u32 %v10126, 4294901760
  %v10128 = vsub.f32 %v10126, %v10127
  %v10129 = vand.u32 %v10128, 4294901760
  %10130 = vmatmul.mubr.f32.gmra.mxu0 %v10129
  %v10131 = vpop.f32.mrf.mxu0
  %v10132 = vadd.f32 %v9859, %v10131
  %v10133 = vpop.f32.mrf.mxu0
  %10134 = vmatprep.mubr.f32.mxu0 0.0
  %v10135 = vand.u32 %v9917, 4294901760
  %v10136 = vsub.f32 %v9917, %v10135
  %v10137 = vand.u32 %v10136, 4294901760
  %v10138 = vsub.f32 %v10136, %v10137
  %v10139 = vand.u32 %v10138, 4294901760
  %10140 = vmatmul.mubr.f32.gmra.mxu0 %v10139
  %v10141 = vpop.f32.mrf.mxu0
  %v10142 = vadd.f32 %v9865, %v10141
  %v10143 = vpop.f32.mrf.mxu0
  %10144 = vmatprep.mubr.f32.mxu0 0.0
  %v10145 = vand.u32 %v9920, 4294901760
  %v10146 = vsub.f32 %v9920, %v10145
  %v10147 = vand.u32 %v10146, 4294901760
  %v10148 = vsub.f32 %v10146, %v10147
  %v10149 = vand.u32 %v10148, 4294901760
  %10150 = vmatmul.mubr.f32.gmra.mxu0 %v10149
  %v10151 = vpop.f32.mrf.mxu0
  %v10152 = vadd.f32 %v9871, %v10151
  %v10153 = vpop.f32.mrf.mxu0
  %10154 = vdwg.mxu0
  %10155 = vmatprep.subr.mxu0 0.0
  %10156 = vmatpush1.msra.mxu0 0.0
  %10157 = vmatprep.subr.mxu0 0.0
  %10158 = vmatpush1.msra.mxu0 0.0
  %10159 = vmatprep.subr.mxu0 0.0
  %10160 = vmatpush1.msra.mxu0 0.0
  %10161 = vmatprep.subr.mxu0 0.0
  %10162 = vmatpush1.msra.mxu0 0.0
  %10163 = vmatprep.subr.mxu0 0.0
  %10164 = vmatpush1.msra.mxu0 0.0
  %10165 = vmatprep.subr.mxu0 0.0
  %10166 = vmatpush1.msra.mxu0 0.0
  %10167 = vmatprep.subr.mxu0 0.0
  %10168 = vmatpush1.msra.mxu0 0.0
  %10169 = vmatprep.subr.mxu0 0.0
  %10170 = vmatpush1.msra.mxu0 0.0
  %10171 = vmatprep.subr.mxu0 0.0
  %v10172 = vand.u32 %v8714, 4294901760
  %v10173 = vsub.f32 %v8714, %v10172
  %v10174 = vand.u32 %v10173, 4294901760
  %v10175 = vsub.f32 %v10173, %v10174
  %v10176 = vand.u32 %v10175, 4294901760
  %10177 = vmatpush1.msra.mxu0 %v10176
  %10178 = vmatprep.subr.mxu0 0.0
  %v10179 = vand.u32 %v8713, 4294901760
  %v10180 = vsub.f32 %v8713, %v10179
  %v10181 = vand.u32 %v10180, 4294901760
  %v10182 = vsub.f32 %v10180, %v10181
  %v10183 = vand.u32 %v10182, 4294901760
  %10184 = vmatpush1.msra.mxu0 %v10183
  %10185 = vmatprep.subr.mxu0 0.0
  %v10186 = vand.u32 %v8712, 4294901760
  %v10187 = vsub.f32 %v8712, %v10186
  %v10188 = vand.u32 %v10187, 4294901760
  %v10189 = vsub.f32 %v10187, %v10188
  %v10190 = vand.u32 %v10189, 4294901760
  %10191 = vmatpush1.msra.mxu0 %v10190
  %10192 = vmatprep.subr.mxu0 0.0
  %v10193 = vand.u32 %v8711, 4294901760
  %v10194 = vsub.f32 %v8711, %v10193
  %v10195 = vand.u32 %v10194, 4294901760
  %v10196 = vsub.f32 %v10194, %v10195
  %v10197 = vand.u32 %v10196, 4294901760
  %10198 = vmatpush1.msra.mxu0 %v10197
  %10199 = vmatprep.subr.mxu0 0.0
  %v10200 = vand.u32 %v8710, 4294901760
  %v10201 = vsub.f32 %v8710, %v10200
  %v10202 = vand.u32 %v10201, 4294901760
  %v10203 = vsub.f32 %v10201, %v10202
  %v10204 = vand.u32 %v10203, 4294901760
  %10205 = vmatpush1.msra.mxu0 %v10204
  %10206 = vmatprep.subr.mxu0 0.0
  %v10207 = vand.u32 %v8709, 4294901760
  %v10208 = vsub.f32 %v8709, %v10207
  %v10209 = vand.u32 %v10208, 4294901760
  %v10210 = vsub.f32 %v10208, %v10209
  %v10211 = vand.u32 %v10210, 4294901760
  %10212 = vmatpush1.msra.mxu0 %v10211
  %10213 = vmatprep.subr.mxu0 0.0
  %v10214 = vand.u32 %v8708, 4294901760
  %v10215 = vsub.f32 %v8708, %v10214
  %v10216 = vand.u32 %v10215, 4294901760
  %v10217 = vsub.f32 %v10215, %v10216
  %v10218 = vand.u32 %v10217, 4294901760
  %10219 = vmatpush1.msra.mxu0 %v10218
  %10220 = vmatprep.subr.mxu0 0.0
  %v10221 = vand.u32 %v8707, 4294901760
  %v10222 = vsub.f32 %v8707, %v10221
  %v10223 = vand.u32 %v10222, 4294901760
  %v10224 = vsub.f32 %v10222, %v10223
  %v10225 = vand.u32 %v10224, 4294901760
  %10226 = vmatpush1.msra.mxu0 %v10225
  %10227 = vmatprep.subr.mxu0 0.0
  %10228 = vmatpush2.msra.mxu0 0.0
  %10229 = vmatprep.subr.mxu0 0.0
  %10230 = vmatpush2.msra.mxu0 0.0
  %10231 = vmatprep.subr.mxu0 0.0
  %10232 = vmatpush2.msra.mxu0 0.0
  %10233 = vmatprep.subr.mxu0 0.0
  %10234 = vmatpush2.msra.mxu0 0.0
  %10235 = vmatprep.subr.mxu0 0.0
  %10236 = vmatpush2.msra.mxu0 0.0
  %10237 = vmatprep.subr.mxu0 0.0
  %10238 = vmatpush2.msra.mxu0 0.0
  %10239 = vmatprep.subr.mxu0 0.0
  %10240 = vmatpush2.msra.mxu0 0.0
  %10241 = vmatprep.subr.mxu0 0.0
  %10242 = vmatpush2.msra.mxu0 0.0
  %10243 = vmatprep.subr.mxu0 0.0
  %10244 = vmatpush2.msra.mxu0 0.0
  %10245 = vmatprep.subr.mxu0 0.0
  %10246 = vmatpush2.msra.mxu0 0.0
  %10247 = vmatprep.subr.mxu0 0.0
  %10248 = vmatpush2.msra.mxu0 0.0
  %10249 = vmatprep.subr.mxu0 0.0
  %10250 = vmatpush2.msra.mxu0 0.0
  %10251 = vmatprep.subr.mxu0 0.0
  %10252 = vmatpush2.msra.mxu0 0.0
  %10253 = vmatprep.subr.mxu0 0.0
  %10254 = vmatpush2.msra.mxu0 0.0
  %10255 = vmatprep.subr.mxu0 0.0
  %10256 = vmatpush2.msra.mxu0 0.0
  %10257 = vmatprep.subr.mxu0 0.0
  %10258 = vmatpush2.msra.mxu0 0.0
  %10259 = vmatprep.mubr.f32.mxu0 0.0
  %v10260 = vand.u32 %v9875, 4294901760
  %10261 = vmatmul.mubr.f32.gmra.mxu0 %v10260
  %v10262 = vpop.f32.mrf.mxu0
  %v10263 = vadd.f32 %v10002, %v10262
  %v10264 = vpop.f32.mrf.mxu0
  %10265 = vmatprep.mubr.f32.mxu0 0.0
  %v10266 = vand.u32 %v9878, 4294901760
  %10267 = vmatmul.mubr.f32.gmra.mxu0 %v10266
  %v10268 = vpop.f32.mrf.mxu0
  %v10269 = vadd.f32 %v10012, %v10268
  %v10270 = vpop.f32.mrf.mxu0
  %10271 = vmatprep.mubr.f32.mxu0 0.0
  %v10272 = vand.u32 %v9881, 4294901760
  %10273 = vmatmul.mubr.f32.gmra.mxu0 %v10272
  %v10274 = vpop.f32.mrf.mxu0
  %v10275 = vadd.f32 %v10022, %v10274
  %v10276 = vpop.f32.mrf.mxu0
  %10277 = vmatprep.mubr.f32.mxu0 0.0
  %v10278 = vand.u32 %v9884, 4294901760
  %10279 = vmatmul.mubr.f32.gmra.mxu0 %v10278
  %v10280 = vpop.f32.mrf.mxu0
  %v10281 = vadd.f32 %v10032, %v10280
  %v10282 = vpop.f32.mrf.mxu0
  %10283 = vmatprep.mubr.f32.mxu0 0.0
  %v10284 = vand.u32 %v9887, 4294901760
  %10285 = vmatmul.mubr.f32.gmra.mxu0 %v10284
  %v10286 = vpop.f32.mrf.mxu0
  %v10287 = vadd.f32 %v10042, %v10286
  %v10288 = vpop.f32.mrf.mxu0
  %10289 = vmatprep.mubr.f32.mxu0 0.0
  %v10290 = vand.u32 %v9890, 4294901760
  %10291 = vmatmul.mubr.f32.gmra.mxu0 %v10290
  %v10292 = vpop.f32.mrf.mxu0
  %v10293 = vadd.f32 %v10052, %v10292
  %v10294 = vpop.f32.mrf.mxu0
  %10295 = vmatprep.mubr.f32.mxu0 0.0
  %v10296 = vand.u32 %v9893, 4294901760
  %10297 = vmatmul.mubr.f32.gmra.mxu0 %v10296
  %v10298 = vpop.f32.mrf.mxu0
  %v10299 = vadd.f32 %v10062, %v10298
  %v10300 = vpop.f32.mrf.mxu0
  %10301 = vmatprep.mubr.f32.mxu0 0.0
  %v10302 = vand.u32 %v9896, 4294901760
  %10303 = vmatmul.mubr.f32.gmra.mxu0 %v10302
  %v10304 = vpop.f32.mrf.mxu0
  %v10305 = vadd.f32 %v10072, %v10304
  %v10306 = vpop.f32.mrf.mxu0
  %10307 = vmatprep.mubr.f32.mxu0 0.0
  %v10308 = vand.u32 %v9899, 4294901760
  %10309 = vmatmul.mubr.f32.gmra.mxu0 %v10308
  %v10310 = vpop.f32.mrf.mxu0
  %v10311 = vadd.f32 %v10082, %v10310
  %v10312 = vpop.f32.mrf.mxu0
  %10313 = vmatprep.mubr.f32.mxu0 0.0
  %v10314 = vand.u32 %v9902, 4294901760
  %10315 = vmatmul.mubr.f32.gmra.mxu0 %v10314
  %v10316 = vpop.f32.mrf.mxu0
  %v10317 = vadd.f32 %v10092, %v10316
  %v10318 = vpop.f32.mrf.mxu0
  %10319 = vmatprep.mubr.f32.mxu0 0.0
  %v10320 = vand.u32 %v9905, 4294901760
  %10321 = vmatmul.mubr.f32.gmra.mxu0 %v10320
  %v10322 = vpop.f32.mrf.mxu0
  %v10323 = vadd.f32 %v10102, %v10322
  %v10324 = vpop.f32.mrf.mxu0
  %10325 = vmatprep.mubr.f32.mxu0 0.0
  %v10326 = vand.u32 %v9908, 4294901760
  %10327 = vmatmul.mubr.f32.gmra.mxu0 %v10326
  %v10328 = vpop.f32.mrf.mxu0
  %v10329 = vadd.f32 %v10112, %v10328
  %v10330 = vpop.f32.mrf.mxu0
  %10331 = vmatprep.mubr.f32.mxu0 0.0
  %v10332 = vand.u32 %v9911, 4294901760
  %10333 = vmatmul.mubr.f32.gmra.mxu0 %v10332
  %v10334 = vpop.f32.mrf.mxu0
  %v10335 = vadd.f32 %v10122, %v10334
  %v10336 = vpop.f32.mrf.mxu0
  %10337 = vmatprep.mubr.f32.mxu0 0.0
  %v10338 = vand.u32 %v9914, 4294901760
  %10339 = vmatmul.mubr.f32.gmra.mxu0 %v10338
  %v10340 = vpop.f32.mrf.mxu0
  %v10341 = vadd.f32 %v10132, %v10340
  %v10342 = vpop.f32.mrf.mxu0
  %10343 = vmatprep.mubr.f32.mxu0 0.0
  %v10344 = vand.u32 %v9917, 4294901760
  %10345 = vmatmul.mubr.f32.gmra.mxu0 %v10344
  %v10346 = vpop.f32.mrf.mxu0
  %v10347 = vadd.f32 %v10142, %v10346
  %v10348 = vpop.f32.mrf.mxu0
  %10349 = vmatprep.mubr.f32.mxu0 0.0
  %v10350 = vand.u32 %v9920, 4294901760
  %10351 = vmatmul.mubr.f32.gmra.mxu0 %v10350
  %v10352 = vpop.f32.mrf.mxu0
  %v10353 = vadd.f32 %v10152, %v10352
  %v10354 = vpop.f32.mrf.mxu0
  %10355 = vdwg.mxu0
  %10356 = vmatprep.subr.mxu0 0.0
  %10357 = vmatpush1.msra.mxu0 0.0
  %10358 = vmatprep.subr.mxu0 0.0
  %10359 = vmatpush1.msra.mxu0 0.0
  %10360 = vmatprep.subr.mxu0 0.0
  %10361 = vmatpush1.msra.mxu0 0.0
  %10362 = vmatprep.subr.mxu0 0.0
  %10363 = vmatpush1.msra.mxu0 0.0
  %10364 = vmatprep.subr.mxu0 0.0
  %10365 = vmatpush1.msra.mxu0 0.0
  %10366 = vmatprep.subr.mxu0 0.0
  %10367 = vmatpush1.msra.mxu0 0.0
  %10368 = vmatprep.subr.mxu0 0.0
  %10369 = vmatpush1.msra.mxu0 0.0
  %10370 = vmatprep.subr.mxu0 0.0
  %10371 = vmatpush1.msra.mxu0 0.0
  %10372 = vmatprep.subr.mxu0 0.0
  %v10373 = vand.u32 %v8714, 4294901760
  %v10374 = vsub.f32 %v8714, %v10373
  %10375 = vmatpush1.msra.mxu0 %v10374
  %10376 = vmatprep.subr.mxu0 0.0
  %v10377 = vand.u32 %v8713, 4294901760
  %v10378 = vsub.f32 %v8713, %v10377
  %10379 = vmatpush1.msra.mxu0 %v10378
  %10380 = vmatprep.subr.mxu0 0.0
  %v10381 = vand.u32 %v8712, 4294901760
  %v10382 = vsub.f32 %v8712, %v10381
  %10383 = vmatpush1.msra.mxu0 %v10382
  %10384 = vmatprep.subr.mxu0 0.0
  %v10385 = vand.u32 %v8711, 4294901760
  %v10386 = vsub.f32 %v8711, %v10385
  %10387 = vmatpush1.msra.mxu0 %v10386
  %10388 = vmatprep.subr.mxu0 0.0
  %v10389 = vand.u32 %v8710, 4294901760
  %v10390 = vsub.f32 %v8710, %v10389
  %10391 = vmatpush1.msra.mxu0 %v10390
  %10392 = vmatprep.subr.mxu0 0.0
  %v10393 = vand.u32 %v8709, 4294901760
  %v10394 = vsub.f32 %v8709, %v10393
  %10395 = vmatpush1.msra.mxu0 %v10394
  %10396 = vmatprep.subr.mxu0 0.0
  %v10397 = vand.u32 %v8708, 4294901760
  %v10398 = vsub.f32 %v8708, %v10397
  %10399 = vmatpush1.msra.mxu0 %v10398
  %10400 = vmatprep.subr.mxu0 0.0
  %v10401 = vand.u32 %v8707, 4294901760
  %v10402 = vsub.f32 %v8707, %v10401
  %10403 = vmatpush1.msra.mxu0 %v10402
  %10404 = vmatprep.subr.mxu0 0.0
  %10405 = vmatpush2.msra.mxu0 0.0
  %10406 = vmatprep.subr.mxu0 0.0
  %10407 = vmatpush2.msra.mxu0 0.0
  %10408 = vmatprep.subr.mxu0 0.0
  %10409 = vmatpush2.msra.mxu0 0.0
  %10410 = vmatprep.subr.mxu0 0.0
  %10411 = vmatpush2.msra.mxu0 0.0
  %10412 = vmatprep.subr.mxu0 0.0
  %10413 = vmatpush2.msra.mxu0 0.0
  %10414 = vmatprep.subr.mxu0 0.0
  %10415 = vmatpush2.msra.mxu0 0.0
  %10416 = vmatprep.subr.mxu0 0.0
  %10417 = vmatpush2.msra.mxu0 0.0
  %10418 = vmatprep.subr.mxu0 0.0
  %10419 = vmatpush2.msra.mxu0 0.0
  %10420 = vmatprep.subr.mxu0 0.0
  %10421 = vmatpush2.msra.mxu0 0.0
  %10422 = vmatprep.subr.mxu0 0.0
  %10423 = vmatpush2.msra.mxu0 0.0
  %10424 = vmatprep.subr.mxu0 0.0
  %10425 = vmatpush2.msra.mxu0 0.0
  %10426 = vmatprep.subr.mxu0 0.0
  %10427 = vmatpush2.msra.mxu0 0.0
  %10428 = vmatprep.subr.mxu0 0.0
  %10429 = vmatpush2.msra.mxu0 0.0
  %10430 = vmatprep.subr.mxu0 0.0
  %10431 = vmatpush2.msra.mxu0 0.0
  %10432 = vmatprep.subr.mxu0 0.0
  %10433 = vmatpush2.msra.mxu0 0.0
  %10434 = vmatprep.subr.mxu0 0.0
  %10435 = vmatpush2.msra.mxu0 0.0
  %10436 = vmatprep.mubr.f32.mxu0 0.0
  %v10437 = vand.u32 %v9875, 4294901760
  %v10438 = vsub.f32 %v9875, %v10437
  %10439 = vmatmul.mubr.f32.gmra.mxu0 %v10438
  %v10440 = vpop.f32.mrf.mxu0
  %v10441 = vadd.f32 %v10263, %v10440
  %v10442 = vpop.f32.mrf.mxu0
  %10443 = vmatprep.mubr.f32.mxu0 0.0
  %v10444 = vand.u32 %v9878, 4294901760
  %v10445 = vsub.f32 %v9878, %v10444
  %10446 = vmatmul.mubr.f32.gmra.mxu0 %v10445
  %v10447 = vpop.f32.mrf.mxu0
  %v10448 = vadd.f32 %v10269, %v10447
  %v10449 = vpop.f32.mrf.mxu0
  %10450 = vmatprep.mubr.f32.mxu0 0.0
  %v10451 = vand.u32 %v9881, 4294901760
  %v10452 = vsub.f32 %v9881, %v10451
  %10453 = vmatmul.mubr.f32.gmra.mxu0 %v10452
  %v10454 = vpop.f32.mrf.mxu0
  %v10455 = vadd.f32 %v10275, %v10454
  %v10456 = vpop.f32.mrf.mxu0
  %10457 = vmatprep.mubr.f32.mxu0 0.0
  %v10458 = vand.u32 %v9884, 4294901760
  %v10459 = vsub.f32 %v9884, %v10458
  %10460 = vmatmul.mubr.f32.gmra.mxu0 %v10459
  %v10461 = vpop.f32.mrf.mxu0
  %v10462 = vadd.f32 %v10281, %v10461
  %v10463 = vpop.f32.mrf.mxu0
  %10464 = vmatprep.mubr.f32.mxu0 0.0
  %v10465 = vand.u32 %v9887, 4294901760
  %v10466 = vsub.f32 %v9887, %v10465
  %10467 = vmatmul.mubr.f32.gmra.mxu0 %v10466
  %v10468 = vpop.f32.mrf.mxu0
  %v10469 = vadd.f32 %v10287, %v10468
  %v10470 = vpop.f32.mrf.mxu0
  %10471 = vmatprep.mubr.f32.mxu0 0.0
  %v10472 = vand.u32 %v9890, 4294901760
  %v10473 = vsub.f32 %v9890, %v10472
  %10474 = vmatmul.mubr.f32.gmra.mxu0 %v10473
  %v10475 = vpop.f32.mrf.mxu0
  %v10476 = vadd.f32 %v10293, %v10475
  %v10477 = vpop.f32.mrf.mxu0
  %10478 = vmatprep.mubr.f32.mxu0 0.0
  %v10479 = vand.u32 %v9893, 4294901760
  %v10480 = vsub.f32 %v9893, %v10479
  %10481 = vmatmul.mubr.f32.gmra.mxu0 %v10480
  %v10482 = vpop.f32.mrf.mxu0
  %v10483 = vadd.f32 %v10299, %v10482
  %v10484 = vpop.f32.mrf.mxu0
  %10485 = vmatprep.mubr.f32.mxu0 0.0
  %v10486 = vand.u32 %v9896, 4294901760
  %v10487 = vsub.f32 %v9896, %v10486
  %10488 = vmatmul.mubr.f32.gmra.mxu0 %v10487
  %v10489 = vpop.f32.mrf.mxu0
  %v10490 = vadd.f32 %v10305, %v10489
  %v10491 = vpop.f32.mrf.mxu0
  %10492 = vmatprep.mubr.f32.mxu0 0.0
  %v10493 = vand.u32 %v9899, 4294901760
  %v10494 = vsub.f32 %v9899, %v10493
  %10495 = vmatmul.mubr.f32.gmra.mxu0 %v10494
  %v10496 = vpop.f32.mrf.mxu0
  %v10497 = vadd.f32 %v10311, %v10496
  %v10498 = vpop.f32.mrf.mxu0
  %10499 = vmatprep.mubr.f32.mxu0 0.0
  %v10500 = vand.u32 %v9902, 4294901760
  %v10501 = vsub.f32 %v9902, %v10500
  %10502 = vmatmul.mubr.f32.gmra.mxu0 %v10501
  %v10503 = vpop.f32.mrf.mxu0
  %v10504 = vadd.f32 %v10317, %v10503
  %v10505 = vpop.f32.mrf.mxu0
  %10506 = vmatprep.mubr.f32.mxu0 0.0
  %v10507 = vand.u32 %v9905, 4294901760
  %v10508 = vsub.f32 %v9905, %v10507
  %10509 = vmatmul.mubr.f32.gmra.mxu0 %v10508
  %v10510 = vpop.f32.mrf.mxu0
  %v10511 = vadd.f32 %v10323, %v10510
  %v10512 = vpop.f32.mrf.mxu0
  %10513 = vmatprep.mubr.f32.mxu0 0.0
  %v10514 = vand.u32 %v9908, 4294901760
  %v10515 = vsub.f32 %v9908, %v10514
  %10516 = vmatmul.mubr.f32.gmra.mxu0 %v10515
  %v10517 = vpop.f32.mrf.mxu0
  %v10518 = vadd.f32 %v10329, %v10517
  %v10519 = vpop.f32.mrf.mxu0
  %10520 = vmatprep.mubr.f32.mxu0 0.0
  %v10521 = vand.u32 %v9911, 4294901760
  %v10522 = vsub.f32 %v9911, %v10521
  %10523 = vmatmul.mubr.f32.gmra.mxu0 %v10522
  %v10524 = vpop.f32.mrf.mxu0
  %v10525 = vadd.f32 %v10335, %v10524
  %v10526 = vpop.f32.mrf.mxu0
  %10527 = vmatprep.mubr.f32.mxu0 0.0
  %v10528 = vand.u32 %v9914, 4294901760
  %v10529 = vsub.f32 %v9914, %v10528
  %10530 = vmatmul.mubr.f32.gmra.mxu0 %v10529
  %v10531 = vpop.f32.mrf.mxu0
  %v10532 = vadd.f32 %v10341, %v10531
  %v10533 = vpop.f32.mrf.mxu0
  %10534 = vmatprep.mubr.f32.mxu0 0.0
  %v10535 = vand.u32 %v9917, 4294901760
  %v10536 = vsub.f32 %v9917, %v10535
  %10537 = vmatmul.mubr.f32.gmra.mxu0 %v10536
  %v10538 = vpop.f32.mrf.mxu0
  %v10539 = vadd.f32 %v10347, %v10538
  %v10540 = vpop.f32.mrf.mxu0
  %10541 = vmatprep.mubr.f32.mxu0 0.0
  %v10542 = vand.u32 %v9920, 4294901760
  %v10543 = vsub.f32 %v9920, %v10542
  %10544 = vmatmul.mubr.f32.gmra.mxu0 %v10543
  %v10545 = vpop.f32.mrf.mxu0
  %v10546 = vadd.f32 %v10353, %v10545
  %v10547 = vpop.f32.mrf.mxu0
  %10548 = vdwg.mxu0
  %10549 = vmatprep.subr.mxu0 0.0
  %10550 = vmatpush1.msra.mxu0 0.0
  %10551 = vmatprep.subr.mxu0 0.0
  %10552 = vmatpush1.msra.mxu0 0.0
  %10553 = vmatprep.subr.mxu0 0.0
  %10554 = vmatpush1.msra.mxu0 0.0
  %10555 = vmatprep.subr.mxu0 0.0
  %10556 = vmatpush1.msra.mxu0 0.0
  %10557 = vmatprep.subr.mxu0 0.0
  %10558 = vmatpush1.msra.mxu0 0.0
  %10559 = vmatprep.subr.mxu0 0.0
  %10560 = vmatpush1.msra.mxu0 0.0
  %10561 = vmatprep.subr.mxu0 0.0
  %10562 = vmatpush1.msra.mxu0 0.0
  %10563 = vmatprep.subr.mxu0 0.0
  %10564 = vmatpush1.msra.mxu0 0.0
  %10565 = vmatprep.subr.mxu0 0.0
  %v10566 = vand.u32 %v8714, 4294901760
  %10567 = vmatpush1.msra.mxu0 %v10566
  %10568 = vmatprep.subr.mxu0 0.0
  %v10569 = vand.u32 %v8713, 4294901760
  %10570 = vmatpush1.msra.mxu0 %v10569
  %10571 = vmatprep.subr.mxu0 0.0
  %v10572 = vand.u32 %v8712, 4294901760
  %10573 = vmatpush1.msra.mxu0 %v10572
  %10574 = vmatprep.subr.mxu0 0.0
  %v10575 = vand.u32 %v8711, 4294901760
  %10576 = vmatpush1.msra.mxu0 %v10575
  %10577 = vmatprep.subr.mxu0 0.0
  %v10578 = vand.u32 %v8710, 4294901760
  %10579 = vmatpush1.msra.mxu0 %v10578
  %10580 = vmatprep.subr.mxu0 0.0
  %v10581 = vand.u32 %v8709, 4294901760
  %10582 = vmatpush1.msra.mxu0 %v10581
  %10583 = vmatprep.subr.mxu0 0.0
  %v10584 = vand.u32 %v8708, 4294901760
  %10585 = vmatpush1.msra.mxu0 %v10584
  %10586 = vmatprep.subr.mxu0 0.0
  %v10587 = vand.u32 %v8707, 4294901760
  %10588 = vmatpush1.msra.mxu0 %v10587
  %10589 = vmatprep.subr.mxu0 0.0
  %10590 = vmatpush2.msra.mxu0 0.0
  %10591 = vmatprep.subr.mxu0 0.0
  %10592 = vmatpush2.msra.mxu0 0.0
  %10593 = vmatprep.subr.mxu0 0.0
  %10594 = vmatpush2.msra.mxu0 0.0
  %10595 = vmatprep.subr.mxu0 0.0
  %10596 = vmatpush2.msra.mxu0 0.0
  %10597 = vmatprep.subr.mxu0 0.0
  %10598 = vmatpush2.msra.mxu0 0.0
  %10599 = vmatprep.subr.mxu0 0.0
  %10600 = vmatpush2.msra.mxu0 0.0
  %10601 = vmatprep.subr.mxu0 0.0
  %10602 = vmatpush2.msra.mxu0 0.0
  %10603 = vmatprep.subr.mxu0 0.0
  %10604 = vmatpush2.msra.mxu0 0.0
  %10605 = vmatprep.subr.mxu0 0.0
  %10606 = vmatpush2.msra.mxu0 0.0
  %10607 = vmatprep.subr.mxu0 0.0
  %10608 = vmatpush2.msra.mxu0 0.0
  %10609 = vmatprep.subr.mxu0 0.0
  %10610 = vmatpush2.msra.mxu0 0.0
  %10611 = vmatprep.subr.mxu0 0.0
  %10612 = vmatpush2.msra.mxu0 0.0
  %10613 = vmatprep.subr.mxu0 0.0
  %10614 = vmatpush2.msra.mxu0 0.0
  %10615 = vmatprep.subr.mxu0 0.0
  %10616 = vmatpush2.msra.mxu0 0.0
  %10617 = vmatprep.subr.mxu0 0.0
  %10618 = vmatpush2.msra.mxu0 0.0
  %10619 = vmatprep.subr.mxu0 0.0
  %10620 = vmatpush2.msra.mxu0 0.0
  %10621 = vmatprep.mubr.f32.mxu0 0.0
  %v10622 = vand.u32 %v9875, 4294901760
  %v10623 = vsub.f32 %v9875, %v10622
  %v10624 = vand.u32 %v10623, 4294901760
  %10625 = vmatmul.mubr.f32.gmra.mxu0 %v10624
  %v10626 = vpop.f32.mrf.mxu0
  %v10627 = vadd.f32 %v10441, %v10626
  %v10628 = vpop.f32.mrf.mxu0
  %10629 = vmatprep.mubr.f32.mxu0 0.0
  %v10630 = vand.u32 %v9878, 4294901760
  %v10631 = vsub.f32 %v9878, %v10630
  %v10632 = vand.u32 %v10631, 4294901760
  %10633 = vmatmul.mubr.f32.gmra.mxu0 %v10632
  %v10634 = vpop.f32.mrf.mxu0
  %v10635 = vadd.f32 %v10448, %v10634
  %v10636 = vpop.f32.mrf.mxu0
  %10637 = vmatprep.mubr.f32.mxu0 0.0
  %v10638 = vand.u32 %v9881, 4294901760
  %v10639 = vsub.f32 %v9881, %v10638
  %v10640 = vand.u32 %v10639, 4294901760
  %10641 = vmatmul.mubr.f32.gmra.mxu0 %v10640
  %v10642 = vpop.f32.mrf.mxu0
  %v10643 = vadd.f32 %v10455, %v10642
  %v10644 = vpop.f32.mrf.mxu0
  %10645 = vmatprep.mubr.f32.mxu0 0.0
  %v10646 = vand.u32 %v9884, 4294901760
  %v10647 = vsub.f32 %v9884, %v10646
  %v10648 = vand.u32 %v10647, 4294901760
  %10649 = vmatmul.mubr.f32.gmra.mxu0 %v10648
  %v10650 = vpop.f32.mrf.mxu0
  %v10651 = vadd.f32 %v10462, %v10650
  %v10652 = vpop.f32.mrf.mxu0
  %10653 = vmatprep.mubr.f32.mxu0 0.0
  %v10654 = vand.u32 %v9887, 4294901760
  %v10655 = vsub.f32 %v9887, %v10654
  %v10656 = vand.u32 %v10655, 4294901760
  %10657 = vmatmul.mubr.f32.gmra.mxu0 %v10656
  %v10658 = vpop.f32.mrf.mxu0
  %v10659 = vadd.f32 %v10469, %v10658
  %v10660 = vpop.f32.mrf.mxu0
  %10661 = vmatprep.mubr.f32.mxu0 0.0
  %v10662 = vand.u32 %v9890, 4294901760
  %v10663 = vsub.f32 %v9890, %v10662
  %v10664 = vand.u32 %v10663, 4294901760
  %10665 = vmatmul.mubr.f32.gmra.mxu0 %v10664
  %v10666 = vpop.f32.mrf.mxu0
  %v10667 = vadd.f32 %v10476, %v10666
  %v10668 = vpop.f32.mrf.mxu0
  %10669 = vmatprep.mubr.f32.mxu0 0.0
  %v10670 = vand.u32 %v9893, 4294901760
  %v10671 = vsub.f32 %v9893, %v10670
  %v10672 = vand.u32 %v10671, 4294901760
  %10673 = vmatmul.mubr.f32.gmra.mxu0 %v10672
  %v10674 = vpop.f32.mrf.mxu0
  %v10675 = vadd.f32 %v10483, %v10674
  %v10676 = vpop.f32.mrf.mxu0
  %10677 = vmatprep.mubr.f32.mxu0 0.0
  %v10678 = vand.u32 %v9896, 4294901760
  %v10679 = vsub.f32 %v9896, %v10678
  %v10680 = vand.u32 %v10679, 4294901760
  %10681 = vmatmul.mubr.f32.gmra.mxu0 %v10680
  %v10682 = vpop.f32.mrf.mxu0
  %v10683 = vadd.f32 %v10490, %v10682
  %v10684 = vpop.f32.mrf.mxu0
  %10685 = vmatprep.mubr.f32.mxu0 0.0
  %v10686 = vand.u32 %v9899, 4294901760
  %v10687 = vsub.f32 %v9899, %v10686
  %v10688 = vand.u32 %v10687, 4294901760
  %10689 = vmatmul.mubr.f32.gmra.mxu0 %v10688
  %v10690 = vpop.f32.mrf.mxu0
  %v10691 = vadd.f32 %v10497, %v10690
  %v10692 = vpop.f32.mrf.mxu0
  %10693 = vmatprep.mubr.f32.mxu0 0.0
  %v10694 = vand.u32 %v9902, 4294901760
  %v10695 = vsub.f32 %v9902, %v10694
  %v10696 = vand.u32 %v10695, 4294901760
  %10697 = vmatmul.mubr.f32.gmra.mxu0 %v10696
  %v10698 = vpop.f32.mrf.mxu0
  %v10699 = vadd.f32 %v10504, %v10698
  %v10700 = vpop.f32.mrf.mxu0
  %10701 = vmatprep.mubr.f32.mxu0 0.0
  %v10702 = vand.u32 %v9905, 4294901760
  %v10703 = vsub.f32 %v9905, %v10702
  %v10704 = vand.u32 %v10703, 4294901760
  %10705 = vmatmul.mubr.f32.gmra.mxu0 %v10704
  %v10706 = vpop.f32.mrf.mxu0
  %v10707 = vadd.f32 %v10511, %v10706
  %v10708 = vpop.f32.mrf.mxu0
  %10709 = vmatprep.mubr.f32.mxu0 0.0
  %v10710 = vand.u32 %v9908, 4294901760
  %v10711 = vsub.f32 %v9908, %v10710
  %v10712 = vand.u32 %v10711, 4294901760
  %10713 = vmatmul.mubr.f32.gmra.mxu0 %v10712
  %v10714 = vpop.f32.mrf.mxu0
  %v10715 = vadd.f32 %v10518, %v10714
  %v10716 = vpop.f32.mrf.mxu0
  %10717 = vmatprep.mubr.f32.mxu0 0.0
  %v10718 = vand.u32 %v9911, 4294901760
  %v10719 = vsub.f32 %v9911, %v10718
  %v10720 = vand.u32 %v10719, 4294901760
  %10721 = vmatmul.mubr.f32.gmra.mxu0 %v10720
  %v10722 = vpop.f32.mrf.mxu0
  %v10723 = vadd.f32 %v10525, %v10722
  %v10724 = vpop.f32.mrf.mxu0
  %10725 = vmatprep.mubr.f32.mxu0 0.0
  %v10726 = vand.u32 %v9914, 4294901760
  %v10727 = vsub.f32 %v9914, %v10726
  %v10728 = vand.u32 %v10727, 4294901760
  %10729 = vmatmul.mubr.f32.gmra.mxu0 %v10728
  %v10730 = vpop.f32.mrf.mxu0
  %v10731 = vadd.f32 %v10532, %v10730
  %v10732 = vpop.f32.mrf.mxu0
  %10733 = vmatprep.mubr.f32.mxu0 0.0
  %v10734 = vand.u32 %v9917, 4294901760
  %v10735 = vsub.f32 %v9917, %v10734
  %v10736 = vand.u32 %v10735, 4294901760
  %10737 = vmatmul.mubr.f32.gmra.mxu0 %v10736
  %v10738 = vpop.f32.mrf.mxu0
  %v10739 = vadd.f32 %v10539, %v10738
  %v10740 = vpop.f32.mrf.mxu0
  %10741 = vmatprep.mubr.f32.mxu0 0.0
  %v10742 = vand.u32 %v9920, 4294901760
  %v10743 = vsub.f32 %v9920, %v10742
  %v10744 = vand.u32 %v10743, 4294901760
  %10745 = vmatmul.mubr.f32.gmra.mxu0 %v10744
  %v10746 = vpop.f32.mrf.mxu0
  %v10747 = vadd.f32 %v10546, %v10746
  %v10748 = vpop.f32.mrf.mxu0
  %10749 = vdwg.mxu0
  %10750 = vmatprep.subr.mxu0 0.0
  %10751 = vmatpush1.msra.mxu0 0.0
  %10752 = vmatprep.subr.mxu0 0.0
  %10753 = vmatpush1.msra.mxu0 0.0
  %10754 = vmatprep.subr.mxu0 0.0
  %10755 = vmatpush1.msra.mxu0 0.0
  %10756 = vmatprep.subr.mxu0 0.0
  %10757 = vmatpush1.msra.mxu0 0.0
  %10758 = vmatprep.subr.mxu0 0.0
  %10759 = vmatpush1.msra.mxu0 0.0
  %10760 = vmatprep.subr.mxu0 0.0
  %10761 = vmatpush1.msra.mxu0 0.0
  %10762 = vmatprep.subr.mxu0 0.0
  %10763 = vmatpush1.msra.mxu0 0.0
  %10764 = vmatprep.subr.mxu0 0.0
  %10765 = vmatpush1.msra.mxu0 0.0
  %10766 = vmatprep.subr.mxu0 0.0
  %v10767 = vand.u32 %v8714, 4294901760
  %v10768 = vsub.f32 %v8714, %v10767
  %v10769 = vand.u32 %v10768, 4294901760
  %10770 = vmatpush1.msra.mxu0 %v10769
  %10771 = vmatprep.subr.mxu0 0.0
  %v10772 = vand.u32 %v8713, 4294901760
  %v10773 = vsub.f32 %v8713, %v10772
  %v10774 = vand.u32 %v10773, 4294901760
  %10775 = vmatpush1.msra.mxu0 %v10774
  %10776 = vmatprep.subr.mxu0 0.0
  %v10777 = vand.u32 %v8712, 4294901760
  %v10778 = vsub.f32 %v8712, %v10777
  %v10779 = vand.u32 %v10778, 4294901760
  %10780 = vmatpush1.msra.mxu0 %v10779
  %10781 = vmatprep.subr.mxu0 0.0
  %v10782 = vand.u32 %v8711, 4294901760
  %v10783 = vsub.f32 %v8711, %v10782
  %v10784 = vand.u32 %v10783, 4294901760
  %10785 = vmatpush1.msra.mxu0 %v10784
  %10786 = vmatprep.subr.mxu0 0.0
  %v10787 = vand.u32 %v8710, 4294901760
  %v10788 = vsub.f32 %v8710, %v10787
  %v10789 = vand.u32 %v10788, 4294901760
  %10790 = vmatpush1.msra.mxu0 %v10789
  %10791 = vmatprep.subr.mxu0 0.0
  %v10792 = vand.u32 %v8709, 4294901760
  %v10793 = vsub.f32 %v8709, %v10792
  %v10794 = vand.u32 %v10793, 4294901760
  %10795 = vmatpush1.msra.mxu0 %v10794
  %10796 = vmatprep.subr.mxu0 0.0
  %v10797 = vand.u32 %v8708, 4294901760
  %v10798 = vsub.f32 %v8708, %v10797
  %v10799 = vand.u32 %v10798, 4294901760
  %10800 = vmatpush1.msra.mxu0 %v10799
  %10801 = vmatprep.subr.mxu0 0.0
  %v10802 = vand.u32 %v8707, 4294901760
  %v10803 = vsub.f32 %v8707, %v10802
  %v10804 = vand.u32 %v10803, 4294901760
  %10805 = vmatpush1.msra.mxu0 %v10804
  %10806 = vmatprep.subr.mxu0 0.0
  %10807 = vmatpush2.msra.mxu0 0.0
  %10808 = vmatprep.subr.mxu0 0.0
  %10809 = vmatpush2.msra.mxu0 0.0
  %10810 = vmatprep.subr.mxu0 0.0
  %10811 = vmatpush2.msra.mxu0 0.0
  %10812 = vmatprep.subr.mxu0 0.0
  %10813 = vmatpush2.msra.mxu0 0.0
  %10814 = vmatprep.subr.mxu0 0.0
  %10815 = vmatpush2.msra.mxu0 0.0
  %10816 = vmatprep.subr.mxu0 0.0
  %10817 = vmatpush2.msra.mxu0 0.0
  %10818 = vmatprep.subr.mxu0 0.0
  %10819 = vmatpush2.msra.mxu0 0.0
  %10820 = vmatprep.subr.mxu0 0.0
  %10821 = vmatpush2.msra.mxu0 0.0
  %10822 = vmatprep.subr.mxu0 0.0
  %10823 = vmatpush2.msra.mxu0 0.0
  %10824 = vmatprep.subr.mxu0 0.0
  %10825 = vmatpush2.msra.mxu0 0.0
  %10826 = vmatprep.subr.mxu0 0.0
  %10827 = vmatpush2.msra.mxu0 0.0
  %10828 = vmatprep.subr.mxu0 0.0
  %10829 = vmatpush2.msra.mxu0 0.0
  %10830 = vmatprep.subr.mxu0 0.0
  %10831 = vmatpush2.msra.mxu0 0.0
  %10832 = vmatprep.subr.mxu0 0.0
  %10833 = vmatpush2.msra.mxu0 0.0
  %10834 = vmatprep.subr.mxu0 0.0
  %10835 = vmatpush2.msra.mxu0 0.0
  %10836 = vmatprep.subr.mxu0 0.0
  %10837 = vmatpush2.msra.mxu0 0.0
  %10838 = vmatprep.mubr.f32.mxu0 0.0
  %v10839 = vand.u32 %v9875, 4294901760
  %10840 = vmatmul.mubr.f32.gmra.mxu0 %v10839
  %v10841 = vpop.f32.mrf.mxu0
  %v10842 = vadd.f32 %v10627, %v10841
  %v10843 = vpop.f32.mrf.mxu0
  %10844 = vmatprep.mubr.f32.mxu0 0.0
  %v10845 = vand.u32 %v9878, 4294901760
  %10846 = vmatmul.mubr.f32.gmra.mxu0 %v10845
  %v10847 = vpop.f32.mrf.mxu0
  %v10848 = vadd.f32 %v10635, %v10847
  %v10849 = vpop.f32.mrf.mxu0
  %10850 = vmatprep.mubr.f32.mxu0 0.0
  %v10851 = vand.u32 %v9881, 4294901760
  %10852 = vmatmul.mubr.f32.gmra.mxu0 %v10851
  %v10853 = vpop.f32.mrf.mxu0
  %v10854 = vadd.f32 %v10643, %v10853
  %v10855 = vpop.f32.mrf.mxu0
  %10856 = vmatprep.mubr.f32.mxu0 0.0
  %v10857 = vand.u32 %v9884, 4294901760
  %10858 = vmatmul.mubr.f32.gmra.mxu0 %v10857
  %v10859 = vpop.f32.mrf.mxu0
  %v10860 = vadd.f32 %v10651, %v10859
  %v10861 = vpop.f32.mrf.mxu0
  %10862 = vmatprep.mubr.f32.mxu0 0.0
  %v10863 = vand.u32 %v9887, 4294901760
  %10864 = vmatmul.mubr.f32.gmra.mxu0 %v10863
  %v10865 = vpop.f32.mrf.mxu0
  %v10866 = vadd.f32 %v10659, %v10865
  %v10867 = vpop.f32.mrf.mxu0
  %10868 = vmatprep.mubr.f32.mxu0 0.0
  %v10869 = vand.u32 %v9890, 4294901760
  %10870 = vmatmul.mubr.f32.gmra.mxu0 %v10869
  %v10871 = vpop.f32.mrf.mxu0
  %v10872 = vadd.f32 %v10667, %v10871
  %v10873 = vpop.f32.mrf.mxu0
  %10874 = vmatprep.mubr.f32.mxu0 0.0
  %v10875 = vand.u32 %v9893, 4294901760
  %10876 = vmatmul.mubr.f32.gmra.mxu0 %v10875
  %v10877 = vpop.f32.mrf.mxu0
  %v10878 = vadd.f32 %v10675, %v10877
  %v10879 = vpop.f32.mrf.mxu0
  %10880 = vmatprep.mubr.f32.mxu0 0.0
  %v10881 = vand.u32 %v9896, 4294901760
  %10882 = vmatmul.mubr.f32.gmra.mxu0 %v10881
  %v10883 = vpop.f32.mrf.mxu0
  %v10884 = vadd.f32 %v10683, %v10883
  %v10885 = vpop.f32.mrf.mxu0
  %10886 = vmatprep.mubr.f32.mxu0 0.0
  %v10887 = vand.u32 %v9899, 4294901760
  %10888 = vmatmul.mubr.f32.gmra.mxu0 %v10887
  %v10889 = vpop.f32.mrf.mxu0
  %v10890 = vadd.f32 %v10691, %v10889
  %v10891 = vpop.f32.mrf.mxu0
  %10892 = vmatprep.mubr.f32.mxu0 0.0
  %v10893 = vand.u32 %v9902, 4294901760
  %10894 = vmatmul.mubr.f32.gmra.mxu0 %v10893
  %v10895 = vpop.f32.mrf.mxu0
  %v10896 = vadd.f32 %v10699, %v10895
  %v10897 = vpop.f32.mrf.mxu0
  %10898 = vmatprep.mubr.f32.mxu0 0.0
  %v10899 = vand.u32 %v9905, 4294901760
  %10900 = vmatmul.mubr.f32.gmra.mxu0 %v10899
  %v10901 = vpop.f32.mrf.mxu0
  %v10902 = vadd.f32 %v10707, %v10901
  %v10903 = vpop.f32.mrf.mxu0
  %10904 = vmatprep.mubr.f32.mxu0 0.0
  %v10905 = vand.u32 %v9908, 4294901760
  %10906 = vmatmul.mubr.f32.gmra.mxu0 %v10905
  %v10907 = vpop.f32.mrf.mxu0
  %v10908 = vadd.f32 %v10715, %v10907
  %v10909 = vpop.f32.mrf.mxu0
  %10910 = vmatprep.mubr.f32.mxu0 0.0
  %v10911 = vand.u32 %v9911, 4294901760
  %10912 = vmatmul.mubr.f32.gmra.mxu0 %v10911
  %v10913 = vpop.f32.mrf.mxu0
  %v10914 = vadd.f32 %v10723, %v10913
  %v10915 = vpop.f32.mrf.mxu0
  %10916 = vmatprep.mubr.f32.mxu0 0.0
  %v10917 = vand.u32 %v9914, 4294901760
  %10918 = vmatmul.mubr.f32.gmra.mxu0 %v10917
  %v10919 = vpop.f32.mrf.mxu0
  %v10920 = vadd.f32 %v10731, %v10919
  %v10921 = vpop.f32.mrf.mxu0
  %10922 = vmatprep.mubr.f32.mxu0 0.0
  %v10923 = vand.u32 %v9917, 4294901760
  %10924 = vmatmul.mubr.f32.gmra.mxu0 %v10923
  %v10925 = vpop.f32.mrf.mxu0
  %v10926 = vadd.f32 %v10739, %v10925
  %v10927 = vpop.f32.mrf.mxu0
  %10928 = vmatprep.mubr.f32.mxu0 0.0
  %v10929 = vand.u32 %v9920, 4294901760
  %10930 = vmatmul.mubr.f32.gmra.mxu0 %v10929
  %v10931 = vpop.f32.mrf.mxu0
  %v10932 = vadd.f32 %v10747, %v10931
  %v10933 = vpop.f32.mrf.mxu0
  %10934 = vdwg.mxu0
  %10935 = vmatprep.subr.mxu0 0.0
  %10936 = vmatpush1.msra.mxu0 0.0
  %10937 = vmatprep.subr.mxu0 0.0
  %10938 = vmatpush1.msra.mxu0 0.0
  %10939 = vmatprep.subr.mxu0 0.0
  %10940 = vmatpush1.msra.mxu0 0.0
  %10941 = vmatprep.subr.mxu0 0.0
  %10942 = vmatpush1.msra.mxu0 0.0
  %10943 = vmatprep.subr.mxu0 0.0
  %10944 = vmatpush1.msra.mxu0 0.0
  %10945 = vmatprep.subr.mxu0 0.0
  %10946 = vmatpush1.msra.mxu0 0.0
  %10947 = vmatprep.subr.mxu0 0.0
  %10948 = vmatpush1.msra.mxu0 0.0
  %10949 = vmatprep.subr.mxu0 0.0
  %10950 = vmatpush1.msra.mxu0 0.0
  %10951 = vmatprep.subr.mxu0 0.0
  %v10952 = vand.u32 %v8714, 4294901760
  %10953 = vmatpush1.msra.mxu0 %v10952
  %10954 = vmatprep.subr.mxu0 0.0
  %v10955 = vand.u32 %v8713, 4294901760
  %10956 = vmatpush1.msra.mxu0 %v10955
  %10957 = vmatprep.subr.mxu0 0.0
  %v10958 = vand.u32 %v8712, 4294901760
  %10959 = vmatpush1.msra.mxu0 %v10958
  %10960 = vmatprep.subr.mxu0 0.0
  %v10961 = vand.u32 %v8711, 4294901760
  %10962 = vmatpush1.msra.mxu0 %v10961
  %10963 = vmatprep.subr.mxu0 0.0
  %v10964 = vand.u32 %v8710, 4294901760
  %10965 = vmatpush1.msra.mxu0 %v10964
  %10966 = vmatprep.subr.mxu0 0.0
  %v10967 = vand.u32 %v8709, 4294901760
  %10968 = vmatpush1.msra.mxu0 %v10967
  %10969 = vmatprep.subr.mxu0 0.0
  %v10970 = vand.u32 %v8708, 4294901760
  %10971 = vmatpush1.msra.mxu0 %v10970
  %10972 = vmatprep.subr.mxu0 0.0
  %v10973 = vand.u32 %v8707, 4294901760
  %10974 = vmatpush1.msra.mxu0 %v10973
  %10975 = vmatprep.subr.mxu0 0.0
  %10976 = vmatpush2.msra.mxu0 0.0
  %10977 = vmatprep.subr.mxu0 0.0
  %10978 = vmatpush2.msra.mxu0 0.0
  %10979 = vmatprep.subr.mxu0 0.0
  %10980 = vmatpush2.msra.mxu0 0.0
  %10981 = vmatprep.subr.mxu0 0.0
  %10982 = vmatpush2.msra.mxu0 0.0
  %10983 = vmatprep.subr.mxu0 0.0
  %10984 = vmatpush2.msra.mxu0 0.0
  %10985 = vmatprep.subr.mxu0 0.0
  %10986 = vmatpush2.msra.mxu0 0.0
  %10987 = vmatprep.subr.mxu0 0.0
  %10988 = vmatpush2.msra.mxu0 0.0
  %10989 = vmatprep.subr.mxu0 0.0
  %10990 = vmatpush2.msra.mxu0 0.0
  %10991 = vmatprep.subr.mxu0 0.0
  %10992 = vmatpush2.msra.mxu0 0.0
  %10993 = vmatprep.subr.mxu0 0.0
  %10994 = vmatpush2.msra.mxu0 0.0
  %10995 = vmatprep.subr.mxu0 0.0
  %10996 = vmatpush2.msra.mxu0 0.0
  %10997 = vmatprep.subr.mxu0 0.0
  %10998 = vmatpush2.msra.mxu0 0.0
  %10999 = vmatprep.subr.mxu0 0.0
  %11000 = vmatpush2.msra.mxu0 0.0
  %11001 = vmatprep.subr.mxu0 0.0
  %11002 = vmatpush2.msra.mxu0 0.0
  %11003 = vmatprep.subr.mxu0 0.0
  %11004 = vmatpush2.msra.mxu0 0.0
  %11005 = vmatprep.subr.mxu0 0.0
  %11006 = vmatpush2.msra.mxu0 0.0
  %11007 = vmatprep.mubr.f32.mxu0 0.0
  %v11008 = vand.u32 %v9875, 4294901760
  %11009 = vmatmul.mubr.f32.gmra.mxu0 %v11008
  %v11010 = vpop.f32.mrf.mxu0
  %v11011 = vadd.f32 %v10842, %v11010
  %v11012 = vpop.f32.mrf.mxu0
  %11013 = vmatprep.mubr.f32.mxu0 0.0
  %v11014 = vand.u32 %v9878, 4294901760
  %11015 = vmatmul.mubr.f32.gmra.mxu0 %v11014
  %v11016 = vpop.f32.mrf.mxu0
  %v11017 = vadd.f32 %v10848, %v11016
  %v11018 = vpop.f32.mrf.mxu0
  %11019 = vmatprep.mubr.f32.mxu0 0.0
  %v11020 = vand.u32 %v9881, 4294901760
  %11021 = vmatmul.mubr.f32.gmra.mxu0 %v11020
  %v11022 = vpop.f32.mrf.mxu0
  %v11023 = vadd.f32 %v10854, %v11022
  %v11024 = vpop.f32.mrf.mxu0
  %11025 = vmatprep.mubr.f32.mxu0 0.0
  %v11026 = vand.u32 %v9884, 4294901760
  %11027 = vmatmul.mubr.f32.gmra.mxu0 %v11026
  %v11028 = vpop.f32.mrf.mxu0
  %v11029 = vadd.f32 %v10860, %v11028
  %v11030 = vpop.f32.mrf.mxu0
  %11031 = vmatprep.mubr.f32.mxu0 0.0
  %v11032 = vand.u32 %v9887, 4294901760
  %11033 = vmatmul.mubr.f32.gmra.mxu0 %v11032
  %v11034 = vpop.f32.mrf.mxu0
  %v11035 = vadd.f32 %v10866, %v11034
  %v11036 = vpop.f32.mrf.mxu0
  %11037 = vmatprep.mubr.f32.mxu0 0.0
  %v11038 = vand.u32 %v9890, 4294901760
  %11039 = vmatmul.mubr.f32.gmra.mxu0 %v11038
  %v11040 = vpop.f32.mrf.mxu0
  %v11041 = vadd.f32 %v10872, %v11040
  %v11042 = vpop.f32.mrf.mxu0
  %11043 = vmatprep.mubr.f32.mxu0 0.0
  %v11044 = vand.u32 %v9893, 4294901760
  %11045 = vmatmul.mubr.f32.gmra.mxu0 %v11044
  %v11046 = vpop.f32.mrf.mxu0
  %v11047 = vadd.f32 %v10878, %v11046
  %v11048 = vpop.f32.mrf.mxu0
  %11049 = vmatprep.mubr.f32.mxu0 0.0
  %v11050 = vand.u32 %v9896, 4294901760
  %11051 = vmatmul.mubr.f32.gmra.mxu0 %v11050
  %v11052 = vpop.f32.mrf.mxu0
  %v11053 = vadd.f32 %v10884, %v11052
  %v11054 = vpop.f32.mrf.mxu0
  %11055 = vmatprep.mubr.f32.mxu0 0.0
  %v11056 = vand.u32 %v9899, 4294901760
  %11057 = vmatmul.mubr.f32.gmra.mxu0 %v11056
  %v11058 = vpop.f32.mrf.mxu0
  %v11059 = vadd.f32 %v10890, %v11058
  %v11060 = vpop.f32.mrf.mxu0
  %11061 = vmatprep.mubr.f32.mxu0 0.0
  %v11062 = vand.u32 %v9902, 4294901760
  %11063 = vmatmul.mubr.f32.gmra.mxu0 %v11062
  %v11064 = vpop.f32.mrf.mxu0
  %v11065 = vadd.f32 %v10896, %v11064
  %v11066 = vpop.f32.mrf.mxu0
  %11067 = vmatprep.mubr.f32.mxu0 0.0
  %v11068 = vand.u32 %v9905, 4294901760
  %11069 = vmatmul.mubr.f32.gmra.mxu0 %v11068
  %v11070 = vpop.f32.mrf.mxu0
  %v11071 = vadd.f32 %v10902, %v11070
  %v11072 = vpop.f32.mrf.mxu0
  %11073 = vmatprep.mubr.f32.mxu0 0.0
  %v11074 = vand.u32 %v9908, 4294901760
  %11075 = vmatmul.mubr.f32.gmra.mxu0 %v11074
  %v11076 = vpop.f32.mrf.mxu0
  %v11077 = vadd.f32 %v10908, %v11076
  %v11078 = vpop.f32.mrf.mxu0
  %11079 = vmatprep.mubr.f32.mxu0 0.0
  %v11080 = vand.u32 %v9911, 4294901760
  %11081 = vmatmul.mubr.f32.gmra.mxu0 %v11080
  %v11082 = vpop.f32.mrf.mxu0
  %v11083 = vadd.f32 %v10914, %v11082
  %v11084 = vpop.f32.mrf.mxu0
  %11085 = vmatprep.mubr.f32.mxu0 0.0
  %v11086 = vand.u32 %v9914, 4294901760
  %11087 = vmatmul.mubr.f32.gmra.mxu0 %v11086
  %v11088 = vpop.f32.mrf.mxu0
  %v11089 = vadd.f32 %v10920, %v11088
  %v11090 = vpop.f32.mrf.mxu0
  %11091 = vmatprep.mubr.f32.mxu0 0.0
  %v11092 = vand.u32 %v9917, 4294901760
  %11093 = vmatmul.mubr.f32.gmra.mxu0 %v11092
  %v11094 = vpop.f32.mrf.mxu0
  %v11095 = vadd.f32 %v10926, %v11094
  %v11096 = vpop.f32.mrf.mxu0
  %11097 = vmatprep.mubr.f32.mxu0 0.0
  %v11098 = vand.u32 %v9920, 4294901760
  %11099 = vmatmul.mubr.f32.gmra.mxu0 %v11098
  %v11100 = vpop.f32.mrf.mxu0
  %v11101 = vadd.f32 %v10932, %v11100
  %v11102 = vpop.f32.mrf.mxu0
  %11103 = vdwg.mxu0
  %v11104 = vld [vmem:[%s17] sm:$0x1]
  %v11106 = vlaneseq
  %v11107 = vshrl.u32 %v11106, 7
  %v11108 = vsub.s32 0, %v11107
  %v11109 = vrot.slane %v11104, %v11108
  %v11111 = vadd.f32 %v11011, %v11109
  %v11112 = vadd.f32 %v11017, %v11109
  %v11113 = vadd.f32 %v11023, %v11109
  %v11114 = vadd.f32 %v11029, %v11109
  %v11115 = vadd.f32 %v11035, %v11109
  %v11116 = vadd.f32 %v11041, %v11109
  %v11117 = vadd.f32 %v11047, %v11109
  %v11118 = vadd.f32 %v11053, %v11109
  %v11119 = vadd.f32 %v11059, %v11109
  %v11120 = vadd.f32 %v11065, %v11109
  %v11121 = vadd.f32 %v11071, %v11109
  %v11122 = vadd.f32 %v11077, %v11109
  %v11123 = vadd.f32 %v11083, %v11109
  %v11124 = vadd.f32 %v11089, %v11109
  %v11125 = vadd.f32 %v11095, %v11109
  %v11126 = vadd.f32 %v11101, %v11109
  %v11127 = vmax.f32 %v11111, 0.0
  %v11128 = vmax.f32 %v11112, 0.0
  %v11129 = vmax.f32 %v11113, 0.0
  %v11130 = vmax.f32 %v11114, 0.0
  %v11131 = vmax.f32 %v11115, 0.0
  %v11132 = vmax.f32 %v11116, 0.0
  %v11133 = vmax.f32 %v11117, 0.0
  %v11134 = vmax.f32 %v11118, 0.0
  %v11135 = vmax.f32 %v11119, 0.0
  %v11136 = vmax.f32 %v11120, 0.0
  %v11137 = vmax.f32 %v11121, 0.0
  %v11138 = vmax.f32 %v11122, 0.0
  %v11139 = vmax.f32 %v11123, 0.0
  %v11140 = vmax.f32 %v11124, 0.0
  %v11141 = vmax.f32 %v11125, 0.0
  %v11142 = vmax.f32 %v11126, 0.0
  %v11143 = vld [vmem:[%s18] sm:$0xff]
  %v11144 = vld [vmem:[%s18 + $0x8] sm:$0xff]
  %v11145 = vld [vmem:[%s18 + $0x10] sm:$0xff]
  %v11146 = vld [vmem:[%s18 + $0x18] sm:$0xff]
  %v11147 = vld [vmem:[%s19] sm:$0x1]
  %v11149 = vlaneseq
  %v11150 = vshrl.u32 %v11149, 7
  %v11151 = vsub.s32 0, %v11150
  %v11152 = vrot.slane %v11147, %v11151
  %vm11154 = vcmask 261120
  %v11156 = vsel %vm11154, %v11127, 0
  %v11159 = vsel %vm11154, %v11128, 0
  %v11162 = vsel %vm11154, %v11129, 0
  %v11165 = vsel %vm11154, %v11130, 0
  %v11168 = vsel %vm11154, %v11131, 0
  %v11171 = vsel %vm11154, %v11132, 0
  %v11174 = vsel %vm11154, %v11133, 0
  %v11177 = vsel %vm11154, %v11134, 0
  %v11180 = vsel %vm11154, %v11135, 0
  %v11183 = vsel %vm11154, %v11136, 0
  %v11186 = vsel %vm11154, %v11137, 0
  %v11189 = vsel %vm11154, %v11138, 0
  %v11192 = vsel %vm11154, %v11139, 0
  %v11195 = vsel %vm11154, %v11140, 0
  %v11198 = vsel %vm11154, %v11141, 0
  %v11201 = vsel %vm11154, %v11142, 0
  %11203 = vmatprep.subr.mxu0 0.0
  %11204 = vmatpush1.msra.mxu0 0.0
  %11205 = vmatprep.subr.mxu0 0.0
  %11206 = vmatpush1.msra.mxu0 0.0
  %11207 = vmatprep.subr.mxu0 0.0
  %11208 = vmatpush1.msra.mxu0 0.0
  %11209 = vmatprep.subr.mxu0 0.0
  %11210 = vmatpush1.msra.mxu0 0.0
  %11211 = vmatprep.subr.mxu0 0.0
  %11212 = vmatpush1.msra.mxu0 0.0
  %11213 = vmatprep.subr.mxu0 0.0
  %11214 = vmatpush1.msra.mxu0 0.0
  %11215 = vmatprep.subr.mxu0 0.0
  %11216 = vmatpush1.msra.mxu0 0.0
  %11217 = vmatprep.subr.mxu0 0.0
  %11218 = vmatpush1.msra.mxu0 0.0
  %11219 = vmatprep.subr.mxu0 0.0
  %11220 = vmatpush1.msra.mxu0 0.0
  %11221 = vmatprep.subr.mxu0 0.0
  %11222 = vmatpush1.msra.mxu0 0.0
  %11223 = vmatprep.subr.mxu0 0.0
  %11224 = vmatpush1.msra.mxu0 0.0
  %11225 = vmatprep.subr.mxu0 0.0
  %11226 = vmatpush1.msra.mxu0 0.0
  %11227 = vmatprep.subr.mxu0 0.0
  %v11228 = vand.u32 %v11146, 4294901760
  %11229 = vmatpush1.msra.mxu0 %v11228
  %11230 = vmatprep.subr.mxu0 0.0
  %v11231 = vand.u32 %v11145, 4294901760
  %11232 = vmatpush1.msra.mxu0 %v11231
  %11233 = vmatprep.subr.mxu0 0.0
  %v11234 = vand.u32 %v11144, 4294901760
  %11235 = vmatpush1.msra.mxu0 %v11234
  %11236 = vmatprep.subr.mxu0 0.0
  %v11237 = vand.u32 %v11143, 4294901760
  %11238 = vmatpush1.msra.mxu0 %v11237
  %11239 = vmatprep.subr.mxu0 0.0
  %11240 = vmatpush2.msra.mxu0 0.0
  %11241 = vmatprep.subr.mxu0 0.0
  %11242 = vmatpush2.msra.mxu0 0.0
  %11243 = vmatprep.subr.mxu0 0.0
  %11244 = vmatpush2.msra.mxu0 0.0
  %11245 = vmatprep.subr.mxu0 0.0
  %11246 = vmatpush2.msra.mxu0 0.0
  %11247 = vmatprep.subr.mxu0 0.0
  %11248 = vmatpush2.msra.mxu0 0.0
  %11249 = vmatprep.subr.mxu0 0.0
  %11250 = vmatpush2.msra.mxu0 0.0
  %11251 = vmatprep.subr.mxu0 0.0
  %11252 = vmatpush2.msra.mxu0 0.0
  %11253 = vmatprep.subr.mxu0 0.0
  %11254 = vmatpush2.msra.mxu0 0.0
  %11255 = vmatprep.subr.mxu0 0.0
  %11256 = vmatpush2.msra.mxu0 0.0
  %11257 = vmatprep.subr.mxu0 0.0
  %11258 = vmatpush2.msra.mxu0 0.0
  %11259 = vmatprep.subr.mxu0 0.0
  %11260 = vmatpush2.msra.mxu0 0.0
  %11261 = vmatprep.subr.mxu0 0.0
  %11262 = vmatpush2.msra.mxu0 0.0
  %11263 = vmatprep.subr.mxu0 0.0
  %11264 = vmatpush2.msra.mxu0 0.0
  %11265 = vmatprep.subr.mxu0 0.0
  %11266 = vmatpush2.msra.mxu0 0.0
  %11267 = vmatprep.subr.mxu0 0.0
  %11268 = vmatpush2.msra.mxu0 0.0
  %11269 = vmatprep.subr.mxu0 0.0
  %11270 = vmatpush2.msra.mxu0 0.0
  %11271 = vmatprep.mubr.f32.mxu0 0.0
  %v11272 = vand.u32 %v11156, 4294901760
  %v11273 = vsub.f32 %v11156, %v11272
  %v11274 = vand.u32 %v11273, 4294901760
  %v11275 = vsub.f32 %v11273, %v11274
  %v11276 = vand.u32 %v11275, 4294901760
  %11277 = vmatmul.mubr.f32.gmra.mxu0 %v11276
  %v11278 = vpop.f32.mrf.mxu0
  %v11279 = vadd.f32 %v11152, %v11278
  %v11280 = vpop.f32.mrf.mxu0
  %11281 = vmatprep.mubr.f32.mxu0 0.0
  %v11282 = vand.u32 %v11159, 4294901760
  %v11283 = vsub.f32 %v11159, %v11282
  %v11284 = vand.u32 %v11283, 4294901760
  %v11285 = vsub.f32 %v11283, %v11284
  %v11286 = vand.u32 %v11285, 4294901760
  %11287 = vmatmul.mubr.f32.gmra.mxu0 %v11286
  %v11288 = vpop.f32.mrf.mxu0
  %v11289 = vadd.f32 %v11152, %v11288
  %v11290 = vpop.f32.mrf.mxu0
  %11291 = vmatprep.mubr.f32.mxu0 0.0
  %v11292 = vand.u32 %v11162, 4294901760
  %v11293 = vsub.f32 %v11162, %v11292
  %v11294 = vand.u32 %v11293, 4294901760
  %v11295 = vsub.f32 %v11293, %v11294
  %v11296 = vand.u32 %v11295, 4294901760
  %11297 = vmatmul.mubr.f32.gmra.mxu0 %v11296
  %v11298 = vpop.f32.mrf.mxu0
  %v11299 = vadd.f32 %v11152, %v11298
  %v11300 = vpop.f32.mrf.mxu0
  %11301 = vmatprep.mubr.f32.mxu0 0.0
  %v11302 = vand.u32 %v11165, 4294901760
  %v11303 = vsub.f32 %v11165, %v11302
  %v11304 = vand.u32 %v11303, 4294901760
  %v11305 = vsub.f32 %v11303, %v11304
  %v11306 = vand.u32 %v11305, 4294901760
  %11307 = vmatmul.mubr.f32.gmra.mxu0 %v11306
  %v11308 = vpop.f32.mrf.mxu0
  %v11309 = vadd.f32 %v11152, %v11308
  %v11310 = vpop.f32.mrf.mxu0
  %11311 = vmatprep.mubr.f32.mxu0 0.0
  %v11312 = vand.u32 %v11168, 4294901760
  %v11313 = vsub.f32 %v11168, %v11312
  %v11314 = vand.u32 %v11313, 4294901760
  %v11315 = vsub.f32 %v11313, %v11314
  %v11316 = vand.u32 %v11315, 4294901760
  %11317 = vmatmul.mubr.f32.gmra.mxu0 %v11316
  %v11318 = vpop.f32.mrf.mxu0
  %v11319 = vadd.f32 %v11152, %v11318
  %v11320 = vpop.f32.mrf.mxu0
  %11321 = vmatprep.mubr.f32.mxu0 0.0
  %v11322 = vand.u32 %v11171, 4294901760
  %v11323 = vsub.f32 %v11171, %v11322
  %v11324 = vand.u32 %v11323, 4294901760
  %v11325 = vsub.f32 %v11323, %v11324
  %v11326 = vand.u32 %v11325, 4294901760
  %11327 = vmatmul.mubr.f32.gmra.mxu0 %v11326
  %v11328 = vpop.f32.mrf.mxu0
  %v11329 = vadd.f32 %v11152, %v11328
  %v11330 = vpop.f32.mrf.mxu0
  %11331 = vmatprep.mubr.f32.mxu0 0.0
  %v11332 = vand.u32 %v11174, 4294901760
  %v11333 = vsub.f32 %v11174, %v11332
  %v11334 = vand.u32 %v11333, 4294901760
  %v11335 = vsub.f32 %v11333, %v11334
  %v11336 = vand.u32 %v11335, 4294901760
  %11337 = vmatmul.mubr.f32.gmra.mxu0 %v11336
  %v11338 = vpop.f32.mrf.mxu0
  %v11339 = vadd.f32 %v11152, %v11338
  %v11340 = vpop.f32.mrf.mxu0
  %11341 = vmatprep.mubr.f32.mxu0 0.0
  %v11342 = vand.u32 %v11177, 4294901760
  %v11343 = vsub.f32 %v11177, %v11342
  %v11344 = vand.u32 %v11343, 4294901760
  %v11345 = vsub.f32 %v11343, %v11344
  %v11346 = vand.u32 %v11345, 4294901760
  %11347 = vmatmul.mubr.f32.gmra.mxu0 %v11346
  %v11348 = vpop.f32.mrf.mxu0
  %v11349 = vadd.f32 %v11152, %v11348
  %v11350 = vpop.f32.mrf.mxu0
  %11351 = vmatprep.mubr.f32.mxu0 0.0
  %v11352 = vand.u32 %v11180, 4294901760
  %v11353 = vsub.f32 %v11180, %v11352
  %v11354 = vand.u32 %v11353, 4294901760
  %v11355 = vsub.f32 %v11353, %v11354
  %v11356 = vand.u32 %v11355, 4294901760
  %11357 = vmatmul.mubr.f32.gmra.mxu0 %v11356
  %v11358 = vpop.f32.mrf.mxu0
  %v11359 = vadd.f32 %v11152, %v11358
  %v11360 = vpop.f32.mrf.mxu0
  %11361 = vmatprep.mubr.f32.mxu0 0.0
  %v11362 = vand.u32 %v11183, 4294901760
  %v11363 = vsub.f32 %v11183, %v11362
  %v11364 = vand.u32 %v11363, 4294901760
  %v11365 = vsub.f32 %v11363, %v11364
  %v11366 = vand.u32 %v11365, 4294901760
  %11367 = vmatmul.mubr.f32.gmra.mxu0 %v11366
  %v11368 = vpop.f32.mrf.mxu0
  %v11369 = vadd.f32 %v11152, %v11368
  %v11370 = vpop.f32.mrf.mxu0
  %11371 = vmatprep.mubr.f32.mxu0 0.0
  %v11372 = vand.u32 %v11186, 4294901760
  %v11373 = vsub.f32 %v11186, %v11372
  %v11374 = vand.u32 %v11373, 4294901760
  %v11375 = vsub.f32 %v11373, %v11374
  %v11376 = vand.u32 %v11375, 4294901760
  %11377 = vmatmul.mubr.f32.gmra.mxu0 %v11376
  %v11378 = vpop.f32.mrf.mxu0
  %v11379 = vadd.f32 %v11152, %v11378
  %v11380 = vpop.f32.mrf.mxu0
  %11381 = vmatprep.mubr.f32.mxu0 0.0
  %v11382 = vand.u32 %v11189, 4294901760
  %v11383 = vsub.f32 %v11189, %v11382
  %v11384 = vand.u32 %v11383, 4294901760
  %v11385 = vsub.f32 %v11383, %v11384
  %v11386 = vand.u32 %v11385, 4294901760
  %11387 = vmatmul.mubr.f32.gmra.mxu0 %v11386
  %v11388 = vpop.f32.mrf.mxu0
  %v11389 = vadd.f32 %v11152, %v11388
  %v11390 = vpop.f32.mrf.mxu0
  %11391 = vmatprep.mubr.f32.mxu0 0.0
  %v11392 = vand.u32 %v11192, 4294901760
  %v11393 = vsub.f32 %v11192, %v11392
  %v11394 = vand.u32 %v11393, 4294901760
  %v11395 = vsub.f32 %v11393, %v11394
  %v11396 = vand.u32 %v11395, 4294901760
  %11397 = vmatmul.mubr.f32.gmra.mxu0 %v11396
  %v11398 = vpop.f32.mrf.mxu0
  %v11399 = vadd.f32 %v11152, %v11398
  %v11400 = vpop.f32.mrf.mxu0
  %11401 = vmatprep.mubr.f32.mxu0 0.0
  %v11402 = vand.u32 %v11195, 4294901760
  %v11403 = vsub.f32 %v11195, %v11402
  %v11404 = vand.u32 %v11403, 4294901760
  %v11405 = vsub.f32 %v11403, %v11404
  %v11406 = vand.u32 %v11405, 4294901760
  %11407 = vmatmul.mubr.f32.gmra.mxu0 %v11406
  %v11408 = vpop.f32.mrf.mxu0
  %v11409 = vadd.f32 %v11152, %v11408
  %v11410 = vpop.f32.mrf.mxu0
  %11411 = vmatprep.mubr.f32.mxu0 0.0
  %v11412 = vand.u32 %v11198, 4294901760
  %v11413 = vsub.f32 %v11198, %v11412
  %v11414 = vand.u32 %v11413, 4294901760
  %v11415 = vsub.f32 %v11413, %v11414
  %v11416 = vand.u32 %v11415, 4294901760
  %11417 = vmatmul.mubr.f32.gmra.mxu0 %v11416
  %v11418 = vpop.f32.mrf.mxu0
  %v11419 = vadd.f32 %v11152, %v11418
  %v11420 = vpop.f32.mrf.mxu0
  %11421 = vmatprep.mubr.f32.mxu0 0.0
  %v11422 = vand.u32 %v11201, 4294901760
  %v11423 = vsub.f32 %v11201, %v11422
  %v11424 = vand.u32 %v11423, 4294901760
  %v11425 = vsub.f32 %v11423, %v11424
  %v11426 = vand.u32 %v11425, 4294901760
  %11427 = vmatmul.mubr.f32.gmra.mxu0 %v11426
  %v11428 = vpop.f32.mrf.mxu0
  %v11429 = vadd.f32 %v11152, %v11428
  %v11430 = vpop.f32.mrf.mxu0
  %11431 = vdwg.mxu0
  %11432 = vmatprep.subr.mxu0 0.0
  %11433 = vmatpush1.msra.mxu0 0.0
  %11434 = vmatprep.subr.mxu0 0.0
  %11435 = vmatpush1.msra.mxu0 0.0
  %11436 = vmatprep.subr.mxu0 0.0
  %11437 = vmatpush1.msra.mxu0 0.0
  %11438 = vmatprep.subr.mxu0 0.0
  %11439 = vmatpush1.msra.mxu0 0.0
  %11440 = vmatprep.subr.mxu0 0.0
  %11441 = vmatpush1.msra.mxu0 0.0
  %11442 = vmatprep.subr.mxu0 0.0
  %11443 = vmatpush1.msra.mxu0 0.0
  %11444 = vmatprep.subr.mxu0 0.0
  %11445 = vmatpush1.msra.mxu0 0.0
  %11446 = vmatprep.subr.mxu0 0.0
  %11447 = vmatpush1.msra.mxu0 0.0
  %11448 = vmatprep.subr.mxu0 0.0
  %11449 = vmatpush1.msra.mxu0 0.0
  %11450 = vmatprep.subr.mxu0 0.0
  %11451 = vmatpush1.msra.mxu0 0.0
  %11452 = vmatprep.subr.mxu0 0.0
  %11453 = vmatpush1.msra.mxu0 0.0
  %11454 = vmatprep.subr.mxu0 0.0
  %11455 = vmatpush1.msra.mxu0 0.0
  %11456 = vmatprep.subr.mxu0 0.0
  %v11457 = vand.u32 %v11146, 4294901760
  %v11458 = vsub.f32 %v11146, %v11457
  %v11459 = vand.u32 %v11458, 4294901760
  %v11460 = vsub.f32 %v11458, %v11459
  %v11461 = vand.u32 %v11460, 4294901760
  %11462 = vmatpush1.msra.mxu0 %v11461
  %11463 = vmatprep.subr.mxu0 0.0
  %v11464 = vand.u32 %v11145, 4294901760
  %v11465 = vsub.f32 %v11145, %v11464
  %v11466 = vand.u32 %v11465, 4294901760
  %v11467 = vsub.f32 %v11465, %v11466
  %v11468 = vand.u32 %v11467, 4294901760
  %11469 = vmatpush1.msra.mxu0 %v11468
  %11470 = vmatprep.subr.mxu0 0.0
  %v11471 = vand.u32 %v11144, 4294901760
  %v11472 = vsub.f32 %v11144, %v11471
  %v11473 = vand.u32 %v11472, 4294901760
  %v11474 = vsub.f32 %v11472, %v11473
  %v11475 = vand.u32 %v11474, 4294901760
  %11476 = vmatpush1.msra.mxu0 %v11475
  %11477 = vmatprep.subr.mxu0 0.0
  %v11478 = vand.u32 %v11143, 4294901760
  %v11479 = vsub.f32 %v11143, %v11478
  %v11480 = vand.u32 %v11479, 4294901760
  %v11481 = vsub.f32 %v11479, %v11480
  %v11482 = vand.u32 %v11481, 4294901760
  %11483 = vmatpush1.msra.mxu0 %v11482
  %11484 = vmatprep.subr.mxu0 0.0
  %11485 = vmatpush2.msra.mxu0 0.0
  %11486 = vmatprep.subr.mxu0 0.0
  %11487 = vmatpush2.msra.mxu0 0.0
  %11488 = vmatprep.subr.mxu0 0.0
  %11489 = vmatpush2.msra.mxu0 0.0
  %11490 = vmatprep.subr.mxu0 0.0
  %11491 = vmatpush2.msra.mxu0 0.0
  %11492 = vmatprep.subr.mxu0 0.0
  %11493 = vmatpush2.msra.mxu0 0.0
  %11494 = vmatprep.subr.mxu0 0.0
  %11495 = vmatpush2.msra.mxu0 0.0
  %11496 = vmatprep.subr.mxu0 0.0
  %11497 = vmatpush2.msra.mxu0 0.0
  %11498 = vmatprep.subr.mxu0 0.0
  %11499 = vmatpush2.msra.mxu0 0.0
  %11500 = vmatprep.subr.mxu0 0.0
  %11501 = vmatpush2.msra.mxu0 0.0
  %11502 = vmatprep.subr.mxu0 0.0
  %11503 = vmatpush2.msra.mxu0 0.0
  %11504 = vmatprep.subr.mxu0 0.0
  %11505 = vmatpush2.msra.mxu0 0.0
  %11506 = vmatprep.subr.mxu0 0.0
  %11507 = vmatpush2.msra.mxu0 0.0
  %11508 = vmatprep.subr.mxu0 0.0
  %11509 = vmatpush2.msra.mxu0 0.0
  %11510 = vmatprep.subr.mxu0 0.0
  %11511 = vmatpush2.msra.mxu0 0.0
  %11512 = vmatprep.subr.mxu0 0.0
  %11513 = vmatpush2.msra.mxu0 0.0
  %11514 = vmatprep.subr.mxu0 0.0
  %11515 = vmatpush2.msra.mxu0 0.0
  %11516 = vmatprep.mubr.f32.mxu0 0.0
  %v11517 = vand.u32 %v11156, 4294901760
  %11518 = vmatmul.mubr.f32.gmra.mxu0 %v11517
  %v11519 = vpop.f32.mrf.mxu0
  %v11520 = vadd.f32 %v11279, %v11519
  %v11521 = vpop.f32.mrf.mxu0
  %11522 = vmatprep.mubr.f32.mxu0 0.0
  %v11523 = vand.u32 %v11159, 4294901760
  %11524 = vmatmul.mubr.f32.gmra.mxu0 %v11523
  %v11525 = vpop.f32.mrf.mxu0
  %v11526 = vadd.f32 %v11289, %v11525
  %v11527 = vpop.f32.mrf.mxu0
  %11528 = vmatprep.mubr.f32.mxu0 0.0
  %v11529 = vand.u32 %v11162, 4294901760
  %11530 = vmatmul.mubr.f32.gmra.mxu0 %v11529
  %v11531 = vpop.f32.mrf.mxu0
  %v11532 = vadd.f32 %v11299, %v11531
  %v11533 = vpop.f32.mrf.mxu0
  %11534 = vmatprep.mubr.f32.mxu0 0.0
  %v11535 = vand.u32 %v11165, 4294901760
  %11536 = vmatmul.mubr.f32.gmra.mxu0 %v11535
  %v11537 = vpop.f32.mrf.mxu0
  %v11538 = vadd.f32 %v11309, %v11537
  %v11539 = vpop.f32.mrf.mxu0
  %11540 = vmatprep.mubr.f32.mxu0 0.0
  %v11541 = vand.u32 %v11168, 4294901760
  %11542 = vmatmul.mubr.f32.gmra.mxu0 %v11541
  %v11543 = vpop.f32.mrf.mxu0
  %v11544 = vadd.f32 %v11319, %v11543
  %v11545 = vpop.f32.mrf.mxu0
  %11546 = vmatprep.mubr.f32.mxu0 0.0
  %v11547 = vand.u32 %v11171, 4294901760
  %11548 = vmatmul.mubr.f32.gmra.mxu0 %v11547
  %v11549 = vpop.f32.mrf.mxu0
  %v11550 = vadd.f32 %v11329, %v11549
  %v11551 = vpop.f32.mrf.mxu0
  %11552 = vmatprep.mubr.f32.mxu0 0.0
  %v11553 = vand.u32 %v11174, 4294901760
  %11554 = vmatmul.mubr.f32.gmra.mxu0 %v11553
  %v11555 = vpop.f32.mrf.mxu0
  %v11556 = vadd.f32 %v11339, %v11555
  %v11557 = vpop.f32.mrf.mxu0
  %11558 = vmatprep.mubr.f32.mxu0 0.0
  %v11559 = vand.u32 %v11177, 4294901760
  %11560 = vmatmul.mubr.f32.gmra.mxu0 %v11559
  %v11561 = vpop.f32.mrf.mxu0
  %v11562 = vadd.f32 %v11349, %v11561
  %v11563 = vpop.f32.mrf.mxu0
  %11564 = vmatprep.mubr.f32.mxu0 0.0
  %v11565 = vand.u32 %v11180, 4294901760
  %11566 = vmatmul.mubr.f32.gmra.mxu0 %v11565
  %v11567 = vpop.f32.mrf.mxu0
  %v11568 = vadd.f32 %v11359, %v11567
  %v11569 = vpop.f32.mrf.mxu0
  %11570 = vmatprep.mubr.f32.mxu0 0.0
  %v11571 = vand.u32 %v11183, 4294901760
  %11572 = vmatmul.mubr.f32.gmra.mxu0 %v11571
  %v11573 = vpop.f32.mrf.mxu0
  %v11574 = vadd.f32 %v11369, %v11573
  %v11575 = vpop.f32.mrf.mxu0
  %11576 = vmatprep.mubr.f32.mxu0 0.0
  %v11577 = vand.u32 %v11186, 4294901760
  %11578 = vmatmul.mubr.f32.gmra.mxu0 %v11577
  %v11579 = vpop.f32.mrf.mxu0
  %v11580 = vadd.f32 %v11379, %v11579
  %v11581 = vpop.f32.mrf.mxu0
  %11582 = vmatprep.mubr.f32.mxu0 0.0
  %v11583 = vand.u32 %v11189, 4294901760
  %11584 = vmatmul.mubr.f32.gmra.mxu0 %v11583
  %v11585 = vpop.f32.mrf.mxu0
  %v11586 = vadd.f32 %v11389, %v11585
  %v11587 = vpop.f32.mrf.mxu0
  %11588 = vmatprep.mubr.f32.mxu0 0.0
  %v11589 = vand.u32 %v11192, 4294901760
  %11590 = vmatmul.mubr.f32.gmra.mxu0 %v11589
  %v11591 = vpop.f32.mrf.mxu0
  %v11592 = vadd.f32 %v11399, %v11591
  %v11593 = vpop.f32.mrf.mxu0
  %11594 = vmatprep.mubr.f32.mxu0 0.0
  %v11595 = vand.u32 %v11195, 4294901760
  %11596 = vmatmul.mubr.f32.gmra.mxu0 %v11595
  %v11597 = vpop.f32.mrf.mxu0
  %v11598 = vadd.f32 %v11409, %v11597
  %v11599 = vpop.f32.mrf.mxu0
  %11600 = vmatprep.mubr.f32.mxu0 0.0
  %v11601 = vand.u32 %v11198, 4294901760
  %11602 = vmatmul.mubr.f32.gmra.mxu0 %v11601
  %v11603 = vpop.f32.mrf.mxu0
  %v11604 = vadd.f32 %v11419, %v11603
  %v11605 = vpop.f32.mrf.mxu0
  %11606 = vmatprep.mubr.f32.mxu0 0.0
  %v11607 = vand.u32 %v11201, 4294901760
  %11608 = vmatmul.mubr.f32.gmra.mxu0 %v11607
  %v11609 = vpop.f32.mrf.mxu0
  %v11610 = vadd.f32 %v11429, %v11609
  %v11611 = vpop.f32.mrf.mxu0
  %11612 = vdwg.mxu0
  %11613 = vmatprep.subr.mxu0 0.0
  %11614 = vmatpush1.msra.mxu0 0.0
  %11615 = vmatprep.subr.mxu0 0.0
  %11616 = vmatpush1.msra.mxu0 0.0
  %11617 = vmatprep.subr.mxu0 0.0
  %11618 = vmatpush1.msra.mxu0 0.0
  %11619 = vmatprep.subr.mxu0 0.0
  %11620 = vmatpush1.msra.mxu0 0.0
  %11621 = vmatprep.subr.mxu0 0.0
  %11622 = vmatpush1.msra.mxu0 0.0
  %11623 = vmatprep.subr.mxu0 0.0
  %11624 = vmatpush1.msra.mxu0 0.0
  %11625 = vmatprep.subr.mxu0 0.0
  %11626 = vmatpush1.msra.mxu0 0.0
  %11627 = vmatprep.subr.mxu0 0.0
  %11628 = vmatpush1.msra.mxu0 0.0
  %11629 = vmatprep.subr.mxu0 0.0
  %11630 = vmatpush1.msra.mxu0 0.0
  %11631 = vmatprep.subr.mxu0 0.0
  %11632 = vmatpush1.msra.mxu0 0.0
  %11633 = vmatprep.subr.mxu0 0.0
  %11634 = vmatpush1.msra.mxu0 0.0
  %11635 = vmatprep.subr.mxu0 0.0
  %11636 = vmatpush1.msra.mxu0 0.0
  %11637 = vmatprep.subr.mxu0 0.0
  %v11638 = vand.u32 %v11146, 4294901760
  %v11639 = vsub.f32 %v11146, %v11638
  %11640 = vmatpush1.msra.mxu0 %v11639
  %11641 = vmatprep.subr.mxu0 0.0
  %v11642 = vand.u32 %v11145, 4294901760
  %v11643 = vsub.f32 %v11145, %v11642
  %11644 = vmatpush1.msra.mxu0 %v11643
  %11645 = vmatprep.subr.mxu0 0.0
  %v11646 = vand.u32 %v11144, 4294901760
  %v11647 = vsub.f32 %v11144, %v11646
  %11648 = vmatpush1.msra.mxu0 %v11647
  %11649 = vmatprep.subr.mxu0 0.0
  %v11650 = vand.u32 %v11143, 4294901760
  %v11651 = vsub.f32 %v11143, %v11650
  %11652 = vmatpush1.msra.mxu0 %v11651
  %11653 = vmatprep.subr.mxu0 0.0
  %11654 = vmatpush2.msra.mxu0 0.0
  %11655 = vmatprep.subr.mxu0 0.0
  %11656 = vmatpush2.msra.mxu0 0.0
  %11657 = vmatprep.subr.mxu0 0.0
  %11658 = vmatpush2.msra.mxu0 0.0
  %11659 = vmatprep.subr.mxu0 0.0
  %11660 = vmatpush2.msra.mxu0 0.0
  %11661 = vmatprep.subr.mxu0 0.0
  %11662 = vmatpush2.msra.mxu0 0.0
  %11663 = vmatprep.subr.mxu0 0.0
  %11664 = vmatpush2.msra.mxu0 0.0
  %11665 = vmatprep.subr.mxu0 0.0
  %11666 = vmatpush2.msra.mxu0 0.0
  %11667 = vmatprep.subr.mxu0 0.0
  %11668 = vmatpush2.msra.mxu0 0.0
  %11669 = vmatprep.subr.mxu0 0.0
  %11670 = vmatpush2.msra.mxu0 0.0
  %11671 = vmatprep.subr.mxu0 0.0
  %11672 = vmatpush2.msra.mxu0 0.0
  %11673 = vmatprep.subr.mxu0 0.0
  %11674 = vmatpush2.msra.mxu0 0.0
  %11675 = vmatprep.subr.mxu0 0.0
  %11676 = vmatpush2.msra.mxu0 0.0
  %11677 = vmatprep.subr.mxu0 0.0
  %11678 = vmatpush2.msra.mxu0 0.0
  %11679 = vmatprep.subr.mxu0 0.0
  %11680 = vmatpush2.msra.mxu0 0.0
  %11681 = vmatprep.subr.mxu0 0.0
  %11682 = vmatpush2.msra.mxu0 0.0
  %11683 = vmatprep.subr.mxu0 0.0
  %11684 = vmatpush2.msra.mxu0 0.0
  %11685 = vmatprep.mubr.f32.mxu0 0.0
  %v11686 = vand.u32 %v11156, 4294901760
  %v11687 = vsub.f32 %v11156, %v11686
  %11688 = vmatmul.mubr.f32.gmra.mxu0 %v11687
  %v11689 = vpop.f32.mrf.mxu0
  %v11690 = vadd.f32 %v11520, %v11689
  %v11691 = vpop.f32.mrf.mxu0
  %11692 = vmatprep.mubr.f32.mxu0 0.0
  %v11693 = vand.u32 %v11159, 4294901760
  %v11694 = vsub.f32 %v11159, %v11693
  %11695 = vmatmul.mubr.f32.gmra.mxu0 %v11694
  %v11696 = vpop.f32.mrf.mxu0
  %v11697 = vadd.f32 %v11526, %v11696
  %v11698 = vpop.f32.mrf.mxu0
  %11699 = vmatprep.mubr.f32.mxu0 0.0
  %v11700 = vand.u32 %v11162, 4294901760
  %v11701 = vsub.f32 %v11162, %v11700
  %11702 = vmatmul.mubr.f32.gmra.mxu0 %v11701
  %v11703 = vpop.f32.mrf.mxu0
  %v11704 = vadd.f32 %v11532, %v11703
  %v11705 = vpop.f32.mrf.mxu0
  %11706 = vmatprep.mubr.f32.mxu0 0.0
  %v11707 = vand.u32 %v11165, 4294901760
  %v11708 = vsub.f32 %v11165, %v11707
  %11709 = vmatmul.mubr.f32.gmra.mxu0 %v11708
  %v11710 = vpop.f32.mrf.mxu0
  %v11711 = vadd.f32 %v11538, %v11710
  %v11712 = vpop.f32.mrf.mxu0
  %11713 = vmatprep.mubr.f32.mxu0 0.0
  %v11714 = vand.u32 %v11168, 4294901760
  %v11715 = vsub.f32 %v11168, %v11714
  %11716 = vmatmul.mubr.f32.gmra.mxu0 %v11715
  %v11717 = vpop.f32.mrf.mxu0
  %v11718 = vadd.f32 %v11544, %v11717
  %v11719 = vpop.f32.mrf.mxu0
  %11720 = vmatprep.mubr.f32.mxu0 0.0
  %v11721 = vand.u32 %v11171, 4294901760
  %v11722 = vsub.f32 %v11171, %v11721
  %11723 = vmatmul.mubr.f32.gmra.mxu0 %v11722
  %v11724 = vpop.f32.mrf.mxu0
  %v11725 = vadd.f32 %v11550, %v11724
  %v11726 = vpop.f32.mrf.mxu0
  %11727 = vmatprep.mubr.f32.mxu0 0.0
  %v11728 = vand.u32 %v11174, 4294901760
  %v11729 = vsub.f32 %v11174, %v11728
  %11730 = vmatmul.mubr.f32.gmra.mxu0 %v11729
  %v11731 = vpop.f32.mrf.mxu0
  %v11732 = vadd.f32 %v11556, %v11731
  %v11733 = vpop.f32.mrf.mxu0
  %11734 = vmatprep.mubr.f32.mxu0 0.0
  %v11735 = vand.u32 %v11177, 4294901760
  %v11736 = vsub.f32 %v11177, %v11735
  %11737 = vmatmul.mubr.f32.gmra.mxu0 %v11736
  %v11738 = vpop.f32.mrf.mxu0
  %v11739 = vadd.f32 %v11562, %v11738
  %v11740 = vpop.f32.mrf.mxu0
  %11741 = vmatprep.mubr.f32.mxu0 0.0
  %v11742 = vand.u32 %v11180, 4294901760
  %v11743 = vsub.f32 %v11180, %v11742
  %11744 = vmatmul.mubr.f32.gmra.mxu0 %v11743
  %v11745 = vpop.f32.mrf.mxu0
  %v11746 = vadd.f32 %v11568, %v11745
  %v11747 = vpop.f32.mrf.mxu0
  %11748 = vmatprep.mubr.f32.mxu0 0.0
  %v11749 = vand.u32 %v11183, 4294901760
  %v11750 = vsub.f32 %v11183, %v11749
  %11751 = vmatmul.mubr.f32.gmra.mxu0 %v11750
  %v11752 = vpop.f32.mrf.mxu0
  %v11753 = vadd.f32 %v11574, %v11752
  %v11754 = vpop.f32.mrf.mxu0
  %11755 = vmatprep.mubr.f32.mxu0 0.0
  %v11756 = vand.u32 %v11186, 4294901760
  %v11757 = vsub.f32 %v11186, %v11756
  %11758 = vmatmul.mubr.f32.gmra.mxu0 %v11757
  %v11759 = vpop.f32.mrf.mxu0
  %v11760 = vadd.f32 %v11580, %v11759
  %v11761 = vpop.f32.mrf.mxu0
  %11762 = vmatprep.mubr.f32.mxu0 0.0
  %v11763 = vand.u32 %v11189, 4294901760
  %v11764 = vsub.f32 %v11189, %v11763
  %11765 = vmatmul.mubr.f32.gmra.mxu0 %v11764
  %v11766 = vpop.f32.mrf.mxu0
  %v11767 = vadd.f32 %v11586, %v11766
  %v11768 = vpop.f32.mrf.mxu0
  %11769 = vmatprep.mubr.f32.mxu0 0.0
  %v11770 = vand.u32 %v11192, 4294901760
  %v11771 = vsub.f32 %v11192, %v11770
  %11772 = vmatmul.mubr.f32.gmra.mxu0 %v11771
  %v11773 = vpop.f32.mrf.mxu0
  %v11774 = vadd.f32 %v11592, %v11773
  %v11775 = vpop.f32.mrf.mxu0
  %11776 = vmatprep.mubr.f32.mxu0 0.0
  %v11777 = vand.u32 %v11195, 4294901760
  %v11778 = vsub.f32 %v11195, %v11777
  %11779 = vmatmul.mubr.f32.gmra.mxu0 %v11778
  %v11780 = vpop.f32.mrf.mxu0
  %v11781 = vadd.f32 %v11598, %v11780
  %v11782 = vpop.f32.mrf.mxu0
  %11783 = vmatprep.mubr.f32.mxu0 0.0
  %v11784 = vand.u32 %v11198, 4294901760
  %v11785 = vsub.f32 %v11198, %v11784
  %11786 = vmatmul.mubr.f32.gmra.mxu0 %v11785
  %v11787 = vpop.f32.mrf.mxu0
  %v11788 = vadd.f32 %v11604, %v11787
  %v11789 = vpop.f32.mrf.mxu0
  %11790 = vmatprep.mubr.f32.mxu0 0.0
  %v11791 = vand.u32 %v11201, 4294901760
  %v11792 = vsub.f32 %v11201, %v11791
  %11793 = vmatmul.mubr.f32.gmra.mxu0 %v11792
  %v11794 = vpop.f32.mrf.mxu0
  %v11795 = vadd.f32 %v11610, %v11794
  %v11796 = vpop.f32.mrf.mxu0
  %11797 = vdwg.mxu0
  %11798 = vmatprep.subr.mxu0 0.0
  %11799 = vmatpush1.msra.mxu0 0.0
  %11800 = vmatprep.subr.mxu0 0.0
  %11801 = vmatpush1.msra.mxu0 0.0
  %11802 = vmatprep.subr.mxu0 0.0
  %11803 = vmatpush1.msra.mxu0 0.0
  %11804 = vmatprep.subr.mxu0 0.0
  %11805 = vmatpush1.msra.mxu0 0.0
  %11806 = vmatprep.subr.mxu0 0.0
  %11807 = vmatpush1.msra.mxu0 0.0
  %11808 = vmatprep.subr.mxu0 0.0
  %11809 = vmatpush1.msra.mxu0 0.0
  %11810 = vmatprep.subr.mxu0 0.0
  %11811 = vmatpush1.msra.mxu0 0.0
  %11812 = vmatprep.subr.mxu0 0.0
  %11813 = vmatpush1.msra.mxu0 0.0
  %11814 = vmatprep.subr.mxu0 0.0
  %11815 = vmatpush1.msra.mxu0 0.0
  %11816 = vmatprep.subr.mxu0 0.0
  %11817 = vmatpush1.msra.mxu0 0.0
  %11818 = vmatprep.subr.mxu0 0.0
  %11819 = vmatpush1.msra.mxu0 0.0
  %11820 = vmatprep.subr.mxu0 0.0
  %11821 = vmatpush1.msra.mxu0 0.0
  %11822 = vmatprep.subr.mxu0 0.0
  %v11823 = vand.u32 %v11146, 4294901760
  %11824 = vmatpush1.msra.mxu0 %v11823
  %11825 = vmatprep.subr.mxu0 0.0
  %v11826 = vand.u32 %v11145, 4294901760
  %11827 = vmatpush1.msra.mxu0 %v11826
  %11828 = vmatprep.subr.mxu0 0.0
  %v11829 = vand.u32 %v11144, 4294901760
  %11830 = vmatpush1.msra.mxu0 %v11829
  %11831 = vmatprep.subr.mxu0 0.0
  %v11832 = vand.u32 %v11143, 4294901760
  %11833 = vmatpush1.msra.mxu0 %v11832
  %11834 = vmatprep.subr.mxu0 0.0
  %11835 = vmatpush2.msra.mxu0 0.0
  %11836 = vmatprep.subr.mxu0 0.0
  %11837 = vmatpush2.msra.mxu0 0.0
  %11838 = vmatprep.subr.mxu0 0.0
  %11839 = vmatpush2.msra.mxu0 0.0
  %11840 = vmatprep.subr.mxu0 0.0
  %11841 = vmatpush2.msra.mxu0 0.0
  %11842 = vmatprep.subr.mxu0 0.0
  %11843 = vmatpush2.msra.mxu0 0.0
  %11844 = vmatprep.subr.mxu0 0.0
  %11845 = vmatpush2.msra.mxu0 0.0
  %11846 = vmatprep.subr.mxu0 0.0
  %11847 = vmatpush2.msra.mxu0 0.0
  %11848 = vmatprep.subr.mxu0 0.0
  %11849 = vmatpush2.msra.mxu0 0.0
  %11850 = vmatprep.subr.mxu0 0.0
  %11851 = vmatpush2.msra.mxu0 0.0
  %11852 = vmatprep.subr.mxu0 0.0
  %11853 = vmatpush2.msra.mxu0 0.0
  %11854 = vmatprep.subr.mxu0 0.0
  %11855 = vmatpush2.msra.mxu0 0.0
  %11856 = vmatprep.subr.mxu0 0.0
  %11857 = vmatpush2.msra.mxu0 0.0
  %11858 = vmatprep.subr.mxu0 0.0
  %11859 = vmatpush2.msra.mxu0 0.0
  %11860 = vmatprep.subr.mxu0 0.0
  %11861 = vmatpush2.msra.mxu0 0.0
  %11862 = vmatprep.subr.mxu0 0.0
  %11863 = vmatpush2.msra.mxu0 0.0
  %11864 = vmatprep.subr.mxu0 0.0
  %11865 = vmatpush2.msra.mxu0 0.0
  %11866 = vmatprep.mubr.f32.mxu0 0.0
  %v11867 = vand.u32 %v11156, 4294901760
  %v11868 = vsub.f32 %v11156, %v11867
  %v11869 = vand.u32 %v11868, 4294901760
  %11870 = vmatmul.mubr.f32.gmra.mxu0 %v11869
  %v11871 = vpop.f32.mrf.mxu0
  %v11872 = vadd.f32 %v11690, %v11871
  %v11873 = vpop.f32.mrf.mxu0
  %11874 = vmatprep.mubr.f32.mxu0 0.0
  %v11875 = vand.u32 %v11159, 4294901760
  %v11876 = vsub.f32 %v11159, %v11875
  %v11877 = vand.u32 %v11876, 4294901760
  %11878 = vmatmul.mubr.f32.gmra.mxu0 %v11877
  %v11879 = vpop.f32.mrf.mxu0
  %v11880 = vadd.f32 %v11697, %v11879
  %v11881 = vpop.f32.mrf.mxu0
  %11882 = vmatprep.mubr.f32.mxu0 0.0
  %v11883 = vand.u32 %v11162, 4294901760
  %v11884 = vsub.f32 %v11162, %v11883
  %v11885 = vand.u32 %v11884, 4294901760
  %11886 = vmatmul.mubr.f32.gmra.mxu0 %v11885
  %v11887 = vpop.f32.mrf.mxu0
  %v11888 = vadd.f32 %v11704, %v11887
  %v11889 = vpop.f32.mrf.mxu0
  %11890 = vmatprep.mubr.f32.mxu0 0.0
  %v11891 = vand.u32 %v11165, 4294901760
  %v11892 = vsub.f32 %v11165, %v11891
  %v11893 = vand.u32 %v11892, 4294901760
  %11894 = vmatmul.mubr.f32.gmra.mxu0 %v11893
  %v11895 = vpop.f32.mrf.mxu0
  %v11896 = vadd.f32 %v11711, %v11895
  %v11897 = vpop.f32.mrf.mxu0
  %11898 = vmatprep.mubr.f32.mxu0 0.0
  %v11899 = vand.u32 %v11168, 4294901760
  %v11900 = vsub.f32 %v11168, %v11899
  %v11901 = vand.u32 %v11900, 4294901760
  %11902 = vmatmul.mubr.f32.gmra.mxu0 %v11901
  %v11903 = vpop.f32.mrf.mxu0
  %v11904 = vadd.f32 %v11718, %v11903
  %v11905 = vpop.f32.mrf.mxu0
  %11906 = vmatprep.mubr.f32.mxu0 0.0
  %v11907 = vand.u32 %v11171, 4294901760
  %v11908 = vsub.f32 %v11171, %v11907
  %v11909 = vand.u32 %v11908, 4294901760
  %11910 = vmatmul.mubr.f32.gmra.mxu0 %v11909
  %v11911 = vpop.f32.mrf.mxu0
  %v11912 = vadd.f32 %v11725, %v11911
  %v11913 = vpop.f32.mrf.mxu0
  %11914 = vmatprep.mubr.f32.mxu0 0.0
  %v11915 = vand.u32 %v11174, 4294901760
  %v11916 = vsub.f32 %v11174, %v11915
  %v11917 = vand.u32 %v11916, 4294901760
  %11918 = vmatmul.mubr.f32.gmra.mxu0 %v11917
  %v11919 = vpop.f32.mrf.mxu0
  %v11920 = vadd.f32 %v11732, %v11919
  %v11921 = vpop.f32.mrf.mxu0
  %11922 = vmatprep.mubr.f32.mxu0 0.0
  %v11923 = vand.u32 %v11177, 4294901760
  %v11924 = vsub.f32 %v11177, %v11923
  %v11925 = vand.u32 %v11924, 4294901760
  %11926 = vmatmul.mubr.f32.gmra.mxu0 %v11925
  %v11927 = vpop.f32.mrf.mxu0
  %v11928 = vadd.f32 %v11739, %v11927
  %v11929 = vpop.f32.mrf.mxu0
  %11930 = vmatprep.mubr.f32.mxu0 0.0
  %v11931 = vand.u32 %v11180, 4294901760
  %v11932 = vsub.f32 %v11180, %v11931
  %v11933 = vand.u32 %v11932, 4294901760
  %11934 = vmatmul.mubr.f32.gmra.mxu0 %v11933
  %v11935 = vpop.f32.mrf.mxu0
  %v11936 = vadd.f32 %v11746, %v11935
  %v11937 = vpop.f32.mrf.mxu0
  %11938 = vmatprep.mubr.f32.mxu0 0.0
  %v11939 = vand.u32 %v11183, 4294901760
  %v11940 = vsub.f32 %v11183, %v11939
  %v11941 = vand.u32 %v11940, 4294901760
  %11942 = vmatmul.mubr.f32.gmra.mxu0 %v11941
  %v11943 = vpop.f32.mrf.mxu0
  %v11944 = vadd.f32 %v11753, %v11943
  %v11945 = vpop.f32.mrf.mxu0
  %11946 = vmatprep.mubr.f32.mxu0 0.0
  %v11947 = vand.u32 %v11186, 4294901760
  %v11948 = vsub.f32 %v11186, %v11947
  %v11949 = vand.u32 %v11948, 4294901760
  %11950 = vmatmul.mubr.f32.gmra.mxu0 %v11949
  %v11951 = vpop.f32.mrf.mxu0
  %v11952 = vadd.f32 %v11760, %v11951
  %v11953 = vpop.f32.mrf.mxu0
  %11954 = vmatprep.mubr.f32.mxu0 0.0
  %v11955 = vand.u32 %v11189, 4294901760
  %v11956 = vsub.f32 %v11189, %v11955
  %v11957 = vand.u32 %v11956, 4294901760
  %11958 = vmatmul.mubr.f32.gmra.mxu0 %v11957
  %v11959 = vpop.f32.mrf.mxu0
  %v11960 = vadd.f32 %v11767, %v11959
  %v11961 = vpop.f32.mrf.mxu0
  %11962 = vmatprep.mubr.f32.mxu0 0.0
  %v11963 = vand.u32 %v11192, 4294901760
  %v11964 = vsub.f32 %v11192, %v11963
  %v11965 = vand.u32 %v11964, 4294901760
  %11966 = vmatmul.mubr.f32.gmra.mxu0 %v11965
  %v11967 = vpop.f32.mrf.mxu0
  %v11968 = vadd.f32 %v11774, %v11967
  %v11969 = vpop.f32.mrf.mxu0
  %11970 = vmatprep.mubr.f32.mxu0 0.0
  %v11971 = vand.u32 %v11195, 4294901760
  %v11972 = vsub.f32 %v11195, %v11971
  %v11973 = vand.u32 %v11972, 4294901760
  %11974 = vmatmul.mubr.f32.gmra.mxu0 %v11973
  %v11975 = vpop.f32.mrf.mxu0
  %v11976 = vadd.f32 %v11781, %v11975
  %v11977 = vpop.f32.mrf.mxu0
  %11978 = vmatprep.mubr.f32.mxu0 0.0
  %v11979 = vand.u32 %v11198, 4294901760
  %v11980 = vsub.f32 %v11198, %v11979
  %v11981 = vand.u32 %v11980, 4294901760
  %11982 = vmatmul.mubr.f32.gmra.mxu0 %v11981
  %v11983 = vpop.f32.mrf.mxu0
  %v11984 = vadd.f32 %v11788, %v11983
  %v11985 = vpop.f32.mrf.mxu0
  %11986 = vmatprep.mubr.f32.mxu0 0.0
  %v11987 = vand.u32 %v11201, 4294901760
  %v11988 = vsub.f32 %v11201, %v11987
  %v11989 = vand.u32 %v11988, 4294901760
  %11990 = vmatmul.mubr.f32.gmra.mxu0 %v11989
  %v11991 = vpop.f32.mrf.mxu0
  %v11992 = vadd.f32 %v11795, %v11991
  %v11993 = vpop.f32.mrf.mxu0
  %11994 = vdwg.mxu0
  %11995 = vmatprep.subr.mxu0 0.0
  %11996 = vmatpush1.msra.mxu0 0.0
  %11997 = vmatprep.subr.mxu0 0.0
  %11998 = vmatpush1.msra.mxu0 0.0
  %11999 = vmatprep.subr.mxu0 0.0
  %12000 = vmatpush1.msra.mxu0 0.0
  %12001 = vmatprep.subr.mxu0 0.0
  %12002 = vmatpush1.msra.mxu0 0.0
  %12003 = vmatprep.subr.mxu0 0.0
  %12004 = vmatpush1.msra.mxu0 0.0
  %12005 = vmatprep.subr.mxu0 0.0
  %12006 = vmatpush1.msra.mxu0 0.0
  %12007 = vmatprep.subr.mxu0 0.0
  %12008 = vmatpush1.msra.mxu0 0.0
  %12009 = vmatprep.subr.mxu0 0.0
  %12010 = vmatpush1.msra.mxu0 0.0
  %12011 = vmatprep.subr.mxu0 0.0
  %12012 = vmatpush1.msra.mxu0 0.0
  %12013 = vmatprep.subr.mxu0 0.0
  %12014 = vmatpush1.msra.mxu0 0.0
  %12015 = vmatprep.subr.mxu0 0.0
  %12016 = vmatpush1.msra.mxu0 0.0
  %12017 = vmatprep.subr.mxu0 0.0
  %12018 = vmatpush1.msra.mxu0 0.0
  %12019 = vmatprep.subr.mxu0 0.0
  %v12020 = vand.u32 %v11146, 4294901760
  %v12021 = vsub.f32 %v11146, %v12020
  %v12022 = vand.u32 %v12021, 4294901760
  %12023 = vmatpush1.msra.mxu0 %v12022
  %12024 = vmatprep.subr.mxu0 0.0
  %v12025 = vand.u32 %v11145, 4294901760
  %v12026 = vsub.f32 %v11145, %v12025
  %v12027 = vand.u32 %v12026, 4294901760
  %12028 = vmatpush1.msra.mxu0 %v12027
  %12029 = vmatprep.subr.mxu0 0.0
  %v12030 = vand.u32 %v11144, 4294901760
  %v12031 = vsub.f32 %v11144, %v12030
  %v12032 = vand.u32 %v12031, 4294901760
  %12033 = vmatpush1.msra.mxu0 %v12032
  %12034 = vmatprep.subr.mxu0 0.0
  %v12035 = vand.u32 %v11143, 4294901760
  %v12036 = vsub.f32 %v11143, %v12035
  %v12037 = vand.u32 %v12036, 4294901760
  %12038 = vmatpush1.msra.mxu0 %v12037
  %12039 = vmatprep.subr.mxu0 0.0
  %12040 = vmatpush2.msra.mxu0 0.0
  %12041 = vmatprep.subr.mxu0 0.0
  %12042 = vmatpush2.msra.mxu0 0.0
  %12043 = vmatprep.subr.mxu0 0.0
  %12044 = vmatpush2.msra.mxu0 0.0
  %12045 = vmatprep.subr.mxu0 0.0
  %12046 = vmatpush2.msra.mxu0 0.0
  %12047 = vmatprep.subr.mxu0 0.0
  %12048 = vmatpush2.msra.mxu0 0.0
  %12049 = vmatprep.subr.mxu0 0.0
  %12050 = vmatpush2.msra.mxu0 0.0
  %12051 = vmatprep.subr.mxu0 0.0
  %12052 = vmatpush2.msra.mxu0 0.0
  %12053 = vmatprep.subr.mxu0 0.0
  %12054 = vmatpush2.msra.mxu0 0.0
  %12055 = vmatprep.subr.mxu0 0.0
  %12056 = vmatpush2.msra.mxu0 0.0
  %12057 = vmatprep.subr.mxu0 0.0
  %12058 = vmatpush2.msra.mxu0 0.0
  %12059 = vmatprep.subr.mxu0 0.0
  %12060 = vmatpush2.msra.mxu0 0.0
  %12061 = vmatprep.subr.mxu0 0.0
  %12062 = vmatpush2.msra.mxu0 0.0
  %12063 = vmatprep.subr.mxu0 0.0
  %12064 = vmatpush2.msra.mxu0 0.0
  %12065 = vmatprep.subr.mxu0 0.0
  %12066 = vmatpush2.msra.mxu0 0.0
  %12067 = vmatprep.subr.mxu0 0.0
  %12068 = vmatpush2.msra.mxu0 0.0
  %12069 = vmatprep.subr.mxu0 0.0
  %12070 = vmatpush2.msra.mxu0 0.0
  %12071 = vmatprep.mubr.f32.mxu0 0.0
  %v12072 = vand.u32 %v11156, 4294901760
  %12073 = vmatmul.mubr.f32.gmra.mxu0 %v12072
  %v12074 = vpop.f32.mrf.mxu0
  %v12075 = vadd.f32 %v11872, %v12074
  %v12076 = vpop.f32.mrf.mxu0
  %12077 = vmatprep.mubr.f32.mxu0 0.0
  %v12078 = vand.u32 %v11159, 4294901760
  %12079 = vmatmul.mubr.f32.gmra.mxu0 %v12078
  %v12080 = vpop.f32.mrf.mxu0
  %v12081 = vadd.f32 %v11880, %v12080
  %v12082 = vpop.f32.mrf.mxu0
  %12083 = vmatprep.mubr.f32.mxu0 0.0
  %v12084 = vand.u32 %v11162, 4294901760
  %12085 = vmatmul.mubr.f32.gmra.mxu0 %v12084
  %v12086 = vpop.f32.mrf.mxu0
  %v12087 = vadd.f32 %v11888, %v12086
  %v12088 = vpop.f32.mrf.mxu0
  %12089 = vmatprep.mubr.f32.mxu0 0.0
  %v12090 = vand.u32 %v11165, 4294901760
  %12091 = vmatmul.mubr.f32.gmra.mxu0 %v12090
  %v12092 = vpop.f32.mrf.mxu0
  %v12093 = vadd.f32 %v11896, %v12092
  %v12094 = vpop.f32.mrf.mxu0
  %12095 = vmatprep.mubr.f32.mxu0 0.0
  %v12096 = vand.u32 %v11168, 4294901760
  %12097 = vmatmul.mubr.f32.gmra.mxu0 %v12096
  %v12098 = vpop.f32.mrf.mxu0
  %v12099 = vadd.f32 %v11904, %v12098
  %v12100 = vpop.f32.mrf.mxu0
  %12101 = vmatprep.mubr.f32.mxu0 0.0
  %v12102 = vand.u32 %v11171, 4294901760
  %12103 = vmatmul.mubr.f32.gmra.mxu0 %v12102
  %v12104 = vpop.f32.mrf.mxu0
  %v12105 = vadd.f32 %v11912, %v12104
  %v12106 = vpop.f32.mrf.mxu0
  %12107 = vmatprep.mubr.f32.mxu0 0.0
  %v12108 = vand.u32 %v11174, 4294901760
  %12109 = vmatmul.mubr.f32.gmra.mxu0 %v12108
  %v12110 = vpop.f32.mrf.mxu0
  %v12111 = vadd.f32 %v11920, %v12110
  %v12112 = vpop.f32.mrf.mxu0
  %12113 = vmatprep.mubr.f32.mxu0 0.0
  %v12114 = vand.u32 %v11177, 4294901760
  %12115 = vmatmul.mubr.f32.gmra.mxu0 %v12114
  %v12116 = vpop.f32.mrf.mxu0
  %v12117 = vadd.f32 %v11928, %v12116
  %v12118 = vpop.f32.mrf.mxu0
  %12119 = vmatprep.mubr.f32.mxu0 0.0
  %v12120 = vand.u32 %v11180, 4294901760
  %12121 = vmatmul.mubr.f32.gmra.mxu0 %v12120
  %v12122 = vpop.f32.mrf.mxu0
  %v12123 = vadd.f32 %v11936, %v12122
  %v12124 = vpop.f32.mrf.mxu0
  %12125 = vmatprep.mubr.f32.mxu0 0.0
  %v12126 = vand.u32 %v11183, 4294901760
  %12127 = vmatmul.mubr.f32.gmra.mxu0 %v12126
  %v12128 = vpop.f32.mrf.mxu0
  %v12129 = vadd.f32 %v11944, %v12128
  %v12130 = vpop.f32.mrf.mxu0
  %12131 = vmatprep.mubr.f32.mxu0 0.0
  %v12132 = vand.u32 %v11186, 4294901760
  %12133 = vmatmul.mubr.f32.gmra.mxu0 %v12132
  %v12134 = vpop.f32.mrf.mxu0
  %v12135 = vadd.f32 %v11952, %v12134
  %v12136 = vpop.f32.mrf.mxu0
  %12137 = vmatprep.mubr.f32.mxu0 0.0
  %v12138 = vand.u32 %v11189, 4294901760
  %12139 = vmatmul.mubr.f32.gmra.mxu0 %v12138
  %v12140 = vpop.f32.mrf.mxu0
  %v12141 = vadd.f32 %v11960, %v12140
  %v12142 = vpop.f32.mrf.mxu0
  %12143 = vmatprep.mubr.f32.mxu0 0.0
  %v12144 = vand.u32 %v11192, 4294901760
  %12145 = vmatmul.mubr.f32.gmra.mxu0 %v12144
  %v12146 = vpop.f32.mrf.mxu0
  %v12147 = vadd.f32 %v11968, %v12146
  %v12148 = vpop.f32.mrf.mxu0
  %12149 = vmatprep.mubr.f32.mxu0 0.0
  %v12150 = vand.u32 %v11195, 4294901760
  %12151 = vmatmul.mubr.f32.gmra.mxu0 %v12150
  %v12152 = vpop.f32.mrf.mxu0
  %v12153 = vadd.f32 %v11976, %v12152
  %v12154 = vpop.f32.mrf.mxu0
  %12155 = vmatprep.mubr.f32.mxu0 0.0
  %v12156 = vand.u32 %v11198, 4294901760
  %12157 = vmatmul.mubr.f32.gmra.mxu0 %v12156
  %v12158 = vpop.f32.mrf.mxu0
  %v12159 = vadd.f32 %v11984, %v12158
  %v12160 = vpop.f32.mrf.mxu0
  %12161 = vmatprep.mubr.f32.mxu0 0.0
  %v12162 = vand.u32 %v11201, 4294901760
  %12163 = vmatmul.mubr.f32.gmra.mxu0 %v12162
  %v12164 = vpop.f32.mrf.mxu0
  %v12165 = vadd.f32 %v11992, %v12164
  %v12166 = vpop.f32.mrf.mxu0
  %12167 = vdwg.mxu0
  %12168 = vmatprep.subr.mxu0 0.0
  %12169 = vmatpush1.msra.mxu0 0.0
  %12170 = vmatprep.subr.mxu0 0.0
  %12171 = vmatpush1.msra.mxu0 0.0
  %12172 = vmatprep.subr.mxu0 0.0
  %12173 = vmatpush1.msra.mxu0 0.0
  %12174 = vmatprep.subr.mxu0 0.0
  %12175 = vmatpush1.msra.mxu0 0.0
  %12176 = vmatprep.subr.mxu0 0.0
  %12177 = vmatpush1.msra.mxu0 0.0
  %12178 = vmatprep.subr.mxu0 0.0
  %12179 = vmatpush1.msra.mxu0 0.0
  %12180 = vmatprep.subr.mxu0 0.0
  %12181 = vmatpush1.msra.mxu0 0.0
  %12182 = vmatprep.subr.mxu0 0.0
  %12183 = vmatpush1.msra.mxu0 0.0
  %12184 = vmatprep.subr.mxu0 0.0
  %12185 = vmatpush1.msra.mxu0 0.0
  %12186 = vmatprep.subr.mxu0 0.0
  %12187 = vmatpush1.msra.mxu0 0.0
  %12188 = vmatprep.subr.mxu0 0.0
  %12189 = vmatpush1.msra.mxu0 0.0
  %12190 = vmatprep.subr.mxu0 0.0
  %12191 = vmatpush1.msra.mxu0 0.0
  %12192 = vmatprep.subr.mxu0 0.0
  %v12193 = vand.u32 %v11146, 4294901760
  %12194 = vmatpush1.msra.mxu0 %v12193
  %12195 = vmatprep.subr.mxu0 0.0
  %v12196 = vand.u32 %v11145, 4294901760
  %12197 = vmatpush1.msra.mxu0 %v12196
  %12198 = vmatprep.subr.mxu0 0.0
  %v12199 = vand.u32 %v11144, 4294901760
  %12200 = vmatpush1.msra.mxu0 %v12199
  %12201 = vmatprep.subr.mxu0 0.0
  %v12202 = vand.u32 %v11143, 4294901760
  %12203 = vmatpush1.msra.mxu0 %v12202
  %12204 = vmatprep.subr.mxu0 0.0
  %12205 = vmatpush2.msra.mxu0 0.0
  %12206 = vmatprep.subr.mxu0 0.0
  %12207 = vmatpush2.msra.mxu0 0.0
  %12208 = vmatprep.subr.mxu0 0.0
  %12209 = vmatpush2.msra.mxu0 0.0
  %12210 = vmatprep.subr.mxu0 0.0
  %12211 = vmatpush2.msra.mxu0 0.0
  %12212 = vmatprep.subr.mxu0 0.0
  %12213 = vmatpush2.msra.mxu0 0.0
  %12214 = vmatprep.subr.mxu0 0.0
  %12215 = vmatpush2.msra.mxu0 0.0
  %12216 = vmatprep.subr.mxu0 0.0
  %12217 = vmatpush2.msra.mxu0 0.0
  %12218 = vmatprep.subr.mxu0 0.0
  %12219 = vmatpush2.msra.mxu0 0.0
  %12220 = vmatprep.subr.mxu0 0.0
  %12221 = vmatpush2.msra.mxu0 0.0
  %12222 = vmatprep.subr.mxu0 0.0
  %12223 = vmatpush2.msra.mxu0 0.0
  %12224 = vmatprep.subr.mxu0 0.0
  %12225 = vmatpush2.msra.mxu0 0.0
  %12226 = vmatprep.subr.mxu0 0.0
  %12227 = vmatpush2.msra.mxu0 0.0
  %12228 = vmatprep.subr.mxu0 0.0
  %12229 = vmatpush2.msra.mxu0 0.0
  %12230 = vmatprep.subr.mxu0 0.0
  %12231 = vmatpush2.msra.mxu0 0.0
  %12232 = vmatprep.subr.mxu0 0.0
  %12233 = vmatpush2.msra.mxu0 0.0
  %12234 = vmatprep.subr.mxu0 0.0
  %12235 = vmatpush2.msra.mxu0 0.0
  %12236 = vmatprep.mubr.f32.mxu0 0.0
  %v12237 = vand.u32 %v11156, 4294901760
  %12238 = vmatmul.mubr.f32.gmra.mxu0 %v12237
  %v12239 = vpop.f32.mrf.mxu0
  %v12240 = vadd.f32 %v12075, %v12239
  %v12241 = vpop.f32.mrf.mxu0
  %12242 = vmatprep.mubr.f32.mxu0 0.0
  %v12243 = vand.u32 %v11159, 4294901760
  %12244 = vmatmul.mubr.f32.gmra.mxu0 %v12243
  %v12245 = vpop.f32.mrf.mxu0
  %v12246 = vadd.f32 %v12081, %v12245
  %v12247 = vpop.f32.mrf.mxu0
  %12248 = vmatprep.mubr.f32.mxu0 0.0
  %v12249 = vand.u32 %v11162, 4294901760
  %12250 = vmatmul.mubr.f32.gmra.mxu0 %v12249
  %v12251 = vpop.f32.mrf.mxu0
  %v12252 = vadd.f32 %v12087, %v12251
  %v12253 = vpop.f32.mrf.mxu0
  %12254 = vmatprep.mubr.f32.mxu0 0.0
  %v12255 = vand.u32 %v11165, 4294901760
  %12256 = vmatmul.mubr.f32.gmra.mxu0 %v12255
  %v12257 = vpop.f32.mrf.mxu0
  %v12258 = vadd.f32 %v12093, %v12257
  %v12259 = vpop.f32.mrf.mxu0
  %12260 = vmatprep.mubr.f32.mxu0 0.0
  %v12261 = vand.u32 %v11168, 4294901760
  %12262 = vmatmul.mubr.f32.gmra.mxu0 %v12261
  %v12263 = vpop.f32.mrf.mxu0
  %v12264 = vadd.f32 %v12099, %v12263
  %v12265 = vpop.f32.mrf.mxu0
  %12266 = vmatprep.mubr.f32.mxu0 0.0
  %v12267 = vand.u32 %v11171, 4294901760
  %12268 = vmatmul.mubr.f32.gmra.mxu0 %v12267
  %v12269 = vpop.f32.mrf.mxu0
  %v12270 = vadd.f32 %v12105, %v12269
  %v12271 = vpop.f32.mrf.mxu0
  %12272 = vmatprep.mubr.f32.mxu0 0.0
  %v12273 = vand.u32 %v11174, 4294901760
  %12274 = vmatmul.mubr.f32.gmra.mxu0 %v12273
  %v12275 = vpop.f32.mrf.mxu0
  %v12276 = vadd.f32 %v12111, %v12275
  %v12277 = vpop.f32.mrf.mxu0
  %12278 = vmatprep.mubr.f32.mxu0 0.0
  %v12279 = vand.u32 %v11177, 4294901760
  %12280 = vmatmul.mubr.f32.gmra.mxu0 %v12279
  %v12281 = vpop.f32.mrf.mxu0
  %v12282 = vadd.f32 %v12117, %v12281
  %v12283 = vpop.f32.mrf.mxu0
  %12284 = vmatprep.mubr.f32.mxu0 0.0
  %v12285 = vand.u32 %v11180, 4294901760
  %12286 = vmatmul.mubr.f32.gmra.mxu0 %v12285
  %v12287 = vpop.f32.mrf.mxu0
  %v12288 = vadd.f32 %v12123, %v12287
  %v12289 = vpop.f32.mrf.mxu0
  %12290 = vmatprep.mubr.f32.mxu0 0.0
  %v12291 = vand.u32 %v11183, 4294901760
  %12292 = vmatmul.mubr.f32.gmra.mxu0 %v12291
  %v12293 = vpop.f32.mrf.mxu0
  %v12294 = vadd.f32 %v12129, %v12293
  %v12295 = vpop.f32.mrf.mxu0
  %12296 = vmatprep.mubr.f32.mxu0 0.0
  %v12297 = vand.u32 %v11186, 4294901760
  %12298 = vmatmul.mubr.f32.gmra.mxu0 %v12297
  %v12299 = vpop.f32.mrf.mxu0
  %v12300 = vadd.f32 %v12135, %v12299
  %v12301 = vpop.f32.mrf.mxu0
  %12302 = vmatprep.mubr.f32.mxu0 0.0
  %v12303 = vand.u32 %v11189, 4294901760
  %12304 = vmatmul.mubr.f32.gmra.mxu0 %v12303
  %v12305 = vpop.f32.mrf.mxu0
  %v12306 = vadd.f32 %v12141, %v12305
  %v12307 = vpop.f32.mrf.mxu0
  %12308 = vmatprep.mubr.f32.mxu0 0.0
  %v12309 = vand.u32 %v11192, 4294901760
  %12310 = vmatmul.mubr.f32.gmra.mxu0 %v12309
  %v12311 = vpop.f32.mrf.mxu0
  %v12312 = vadd.f32 %v12147, %v12311
  %v12313 = vpop.f32.mrf.mxu0
  %12314 = vmatprep.mubr.f32.mxu0 0.0
  %v12315 = vand.u32 %v11195, 4294901760
  %12316 = vmatmul.mubr.f32.gmra.mxu0 %v12315
  %v12317 = vpop.f32.mrf.mxu0
  %v12318 = vadd.f32 %v12153, %v12317
  %v12319 = vpop.f32.mrf.mxu0
  %12320 = vmatprep.mubr.f32.mxu0 0.0
  %v12321 = vand.u32 %v11198, 4294901760
  %12322 = vmatmul.mubr.f32.gmra.mxu0 %v12321
  %v12323 = vpop.f32.mrf.mxu0
  %v12324 = vadd.f32 %v12159, %v12323
  %v12325 = vpop.f32.mrf.mxu0
  %12326 = vmatprep.mubr.f32.mxu0 0.0
  %v12327 = vand.u32 %v11201, 4294901760
  %12328 = vmatmul.mubr.f32.gmra.mxu0 %v12327
  %v12329 = vpop.f32.mrf.mxu0
  %v12330 = vadd.f32 %v12165, %v12329
  %v12331 = vpop.f32.mrf.mxu0
  %12332 = vdwg.mxu0
  %v12333 = vxor.u32 %v12240, 2147483648
  %v12334 = vxor.u32 %v12246, 2147483648
  %v12335 = vxor.u32 %v12252, 2147483648
  %v12336 = vxor.u32 %v12258, 2147483648
  %v12337 = vxor.u32 %v12264, 2147483648
  %v12338 = vxor.u32 %v12270, 2147483648
  %v12339 = vxor.u32 %v12276, 2147483648
  %v12340 = vxor.u32 %v12282, 2147483648
  %v12341 = vxor.u32 %v12288, 2147483648
  %v12342 = vxor.u32 %v12294, 2147483648
  %v12343 = vxor.u32 %v12300, 2147483648
  %v12344 = vxor.u32 %v12306, 2147483648
  %v12345 = vxor.u32 %v12312, 2147483648
  %v12346 = vxor.u32 %v12318, 2147483648
  %v12347 = vxor.u32 %v12324, 2147483648
  %v12348 = vxor.u32 %v12330, 2147483648
  %v12349 = vmul.f32 %v12333, 1.442695
  %v12350 = vpow.pop %v12349
  %v12351 = vmul.f32 %v12334, 1.442695
  %v12352 = vpow.pop %v12351
  %v12353 = vmul.f32 %v12335, 1.442695
  %v12354 = vpow.pop %v12353
  %v12355 = vmul.f32 %v12336, 1.442695
  %v12356 = vpow.pop %v12355
  %v12357 = vmul.f32 %v12337, 1.442695
  %v12358 = vpow.pop %v12357
  %v12359 = vmul.f32 %v12338, 1.442695
  %v12360 = vpow.pop %v12359
  %v12361 = vmul.f32 %v12339, 1.442695
  %v12362 = vpow.pop %v12361
  %v12363 = vmul.f32 %v12340, 1.442695
  %v12364 = vpow.pop %v12363
  %v12365 = vmul.f32 %v12341, 1.442695
  %v12366 = vpow.pop %v12365
  %v12367 = vmul.f32 %v12342, 1.442695
  %v12368 = vpow.pop %v12367
  %v12369 = vmul.f32 %v12343, 1.442695
  %v12370 = vpow.pop %v12369
  %v12371 = vmul.f32 %v12344, 1.442695
  %v12372 = vpow.pop %v12371
  %v12373 = vmul.f32 %v12345, 1.442695
  %v12374 = vpow.pop %v12373
  %v12375 = vmul.f32 %v12346, 1.442695
  %v12376 = vpow.pop %v12375
  %v12377 = vmul.f32 %v12347, 1.442695
  %v12378 = vpow.pop %v12377
  %v12379 = vmul.f32 %v12348, 1.442695
  %v12380 = vpow.pop %v12379
  %v12381 = vadd.f32 %v12350, 1.0
  %v12382 = vadd.f32 %v12352, 1.0
  %v12383 = vadd.f32 %v12354, 1.0
  %v12384 = vadd.f32 %v12356, 1.0
  %v12385 = vadd.f32 %v12358, 1.0
  %v12386 = vadd.f32 %v12360, 1.0
  %v12387 = vadd.f32 %v12362, 1.0
  %v12388 = vadd.f32 %v12364, 1.0
  %v12389 = vadd.f32 %v12366, 1.0
  %v12390 = vadd.f32 %v12368, 1.0
  %v12391 = vadd.f32 %v12370, 1.0
  %v12392 = vadd.f32 %v12372, 1.0
  %v12393 = vadd.f32 %v12374, 1.0
  %v12394 = vadd.f32 %v12376, 1.0
  %v12395 = vadd.f32 %v12378, 1.0
  %v12396 = vadd.f32 %v12380, 1.0
  %v12397 = vrcp.pop %v12381
  %v12398 = vmul.f32 1.0, %v12397
  %v12399 = vrcp.pop %v12382
  %v12400 = vmul.f32 1.0, %v12399
  %v12401 = vrcp.pop %v12383
  %v12402 = vmul.f32 1.0, %v12401
  %v12403 = vrcp.pop %v12384
  %v12404 = vmul.f32 1.0, %v12403
  %v12405 = vrcp.pop %v12385
  %v12406 = vmul.f32 1.0, %v12405
  %v12407 = vrcp.pop %v12386
  %v12408 = vmul.f32 1.0, %v12407
  %v12409 = vrcp.pop %v12387
  %v12410 = vmul.f32 1.0, %v12409
  %v12411 = vrcp.pop %v12388
  %v12412 = vmul.f32 1.0, %v12411
  %v12413 = vrcp.pop %v12389
  %v12414 = vmul.f32 1.0, %v12413
  %v12415 = vrcp.pop %v12390
  %v12416 = vmul.f32 1.0, %v12415
  %v12417 = vrcp.pop %v12391
  %v12418 = vmul.f32 1.0, %v12417
  %v12419 = vrcp.pop %v12392
  %v12420 = vmul.f32 1.0, %v12419
  %v12421 = vrcp.pop %v12393
  %v12422 = vmul.f32 1.0, %v12421
  %v12423 = vrcp.pop %v12394
  %v12424 = vmul.f32 1.0, %v12423
  %v12425 = vrcp.pop %v12395
  %v12426 = vmul.f32 1.0, %v12425
  %v12427 = vrcp.pop %v12396
  %v12428 = vmul.f32 1.0, %v12427
  %vm12429 = vcmask 23552
  %12430 = vst.msk [vmem:[%s21] sm:$0xff] %vm12429, %v12398
  %12431 = vst.msk [vmem:[%s21 + $0x8] sm:$0xff] %vm12429, %v12400
  %12432 = vst.msk [vmem:[%s21 + $0x10] sm:$0xff] %vm12429, %v12402
  %12433 = vst.msk [vmem:[%s21 + $0x18] sm:$0xff] %vm12429, %v12404
  %12434 = vst.msk [vmem:[%s21 + $0x20] sm:$0xff] %vm12429, %v12406
  %12435 = vst.msk [vmem:[%s21 + $0x28] sm:$0xff] %vm12429, %v12408
  %12436 = vst.msk [vmem:[%s21 + $0x30] sm:$0xff] %vm12429, %v12410
  %12437 = vst.msk [vmem:[%s21 + $0x38] sm:$0xff] %vm12429, %v12412
  %12438 = vst.msk [vmem:[%s21 + $0x40] sm:$0xff] %vm12429, %v12414
  %12439 = vst.msk [vmem:[%s21 + $0x48] sm:$0xff] %vm12429, %v12416
  %12440 = vst.msk [vmem:[%s21 + $0x50] sm:$0xff] %vm12429, %v12418
  %12441 = vst.msk [vmem:[%s21 + $0x58] sm:$0xff] %vm12429, %v12420
  %12442 = vst.msk [vmem:[%s21 + $0x60] sm:$0xff] %vm12429, %v12422
  %12443 = vst.msk [vmem:[%s21 + $0x68] sm:$0xff] %vm12429, %v12424
  %12444 = vst.msk [vmem:[%s21 + $0x70] sm:$0xff] %vm12429, %v12426
  %12445 = vst.msk [vmem:[%s21 + $0x78] sm:$0xff] %vm12429, %v12428
  // Predicated region
  $region82: #{tpu_custom_call.1} parent=0 // pred_check
    _
  $region83: #{tpu_custom_call.1} parent=0 // pred_check_branch
    %12447 = sbr.rel (0) target = $region85
  $region84: #{tpu_custom_call.1} parent=0 // pred_region
    _
  $region85: #{tpu_custom_call.1} parent=0 // pred_fallthru
    _
  // Predicated region
  $region86: #{tpu_custom_call.1} parent=0 // pred_check
    _
  $region87: #{tpu_custom_call.1} parent=0 // pred_check_branch
    %12449 = sbr.rel (0) target = $region89
  $region88: #{tpu_custom_call.1} parent=0 // pred_region
    _
  $region89: #{tpu_custom_call.1} parent=0 // pred_fallthru
    _
  // Predicated region
  $region90: #{tpu_custom_call.1} parent=0 // pred_check
    _
  $region91: #{tpu_custom_call.1} parent=0 // pred_check_branch
    %12451 = sbr.rel (0) target = $region93
  $region92: #{tpu_custom_call.1} parent=0 // pred_region
    _
  $region93: #{tpu_custom_call.1} parent=0 // pred_fallthru
    _
  // Predicated region
  $region94: #{tpu_custom_call.1} parent=0 // pred_check
    _
  $region95: #{tpu_custom_call.1} parent=0 // pred_check_branch
    %12453 = sbr.rel (0) target = $region97
  $region96: #{tpu_custom_call.1} parent=0 // pred_region
    _
  $region97: #{tpu_custom_call.1} parent=0 // pred_fallthru
    _

</llo_original>
